<compile_context>
chip_gen: v6e
topology: v6e:2x2x1
jax: 0.10.0
libtpu: 0.0.40
codegen_flags: <defaults>
</compile_context>

<pallas_src>
import functools

import jax
import jax.numpy as jnp
import numpy as np
from jax.experimental import pallas as pl
from jax.experimental.pallas import tpu as pltpu

NUM_GROUPS = 32          # nn.GroupNorm(32, ...)
EPS = 1e-5               # PyTorch GroupNorm default eps


# ----------------------------- kernel helpers -----------------------------

def _group_norm(v, gamma, beta, groups):
    """GroupNorm over a (C, T) slab. Stats per group of C//groups channels."""
    C, T = v.shape
    cg = C // groups
    inv_n = 1.0 / float(cg * T)
    s = jnp.sum(v, axis=1, keepdims=True)          # (C, 1) per-channel sums
    q = jnp.sum(v * v, axis=1, keepdims=True)      # (C, 1) per-channel sq sums
    if cg == 1:
        mean = s * inv_n
        var = q * inv_n - mean * mean
        rstd = jax.lax.rsqrt(var + EPS)
    else:
        # Segmented reduce over each group's cg consecutive channels, then
        # broadcast the group stats back to per-channel rows (pure VPU/XLU).
        mean_rows, rstd_rows = [], []
        for g in range(groups):
            sg = jnp.sum(s[g * cg:(g + 1) * cg, :], axis=0, keepdims=True)
            qg = jnp.sum(q[g * cg:(g + 1) * cg, :], axis=0, keepdims=True)
            m = sg * inv_n
            var = qg * inv_n - m * m
            r = jax.lax.rsqrt(var + EPS)
            mean_rows.append(jnp.broadcast_to(m, (cg, 1)))
            rstd_rows.append(jnp.broadcast_to(r, (cg, 1)))
        mean = jnp.concatenate(mean_rows, axis=0)   # (C, 1)
        rstd = jnp.concatenate(rstd_rows, axis=0)   # (C, 1)
    return (v - mean) * rstd * gamma + beta


def _shifted(v, dy, dx, H, W):
    """v laid out (C, H*W). result[:, y*W+x] = v[:, (y+dy)*W+(x+dx)], with
    zeros wherever the source pixel falls outside the image (zero padding)."""
    C, T = v.shape
    s = dy * W + dx
    if s > 0:
        out = jnp.concatenate([v[:, s:], jnp.zeros((C, s), v.dtype)], axis=1)
    elif s < 0:
        out = jnp.concatenate([jnp.zeros((C, -s), v.dtype), v[:, :s]], axis=1)
    else:
        out = v
    if dx != 0:
        # mask columns whose source x+dx wrapped across a row boundary
        col = jax.lax.broadcasted_iota(jnp.int32, (1, T), 1) % W
        valid = (col < (W - dx)) if dx > 0 else (col >= -dx)
        out = jnp.where(valid, out, jnp.zeros_like(out))
    return out


def _conv3x3(v, w_taps_ref, H, W):
    """3x3 'same' conv as 9 shifted bf16 matmuls accumulated in f32.

    v:          (Cin, T) f32 activation
    w_taps_ref: (9, Cout, Cin) bf16 VMEM ref, tap k = weight[:, :, k//3, k%3]
    """
    cout = w_taps_ref.shape[1]
    T = v.shape[1]
    acc = jnp.zeros((cout, T), jnp.float32)
    for k in range(9):
        dy, dx = k // 3 - 1, k % 3 - 1
        tap = _shifted(v, dy, dx, H, W).astype(jnp.bfloat16)
        acc = acc + jnp.dot(w_taps_ref[k], tap,
                            preferred_element_type=jnp.float32)
    return acc


# -------------------------------- kernel ----------------------------------

def _resblock_kernel(x_ref, emb_ref, w1_ref, b1_ref, w2_ref, b2_ref,
                     wsc_ref, bsc_ref, wemb_ref, bemb_ref,
                     g1_ref, be1_ref, g2_ref, be2_ref, o_ref, *, H, W):
    x = x_ref[0]                                            # (Cin, T) f32

    # ---- emb_proj(relu(embedding)): tiny mat-vec done on the VPU/XLU ----
    e = jnp.maximum(emb_ref[0], 0.0)                        # (1, E)
    e_vec = jnp.sum(wemb_ref[...] * e, axis=1, keepdims=True) + bemb_ref[...]

    # ---- norm1 -> conv1 -> relu -> + embedding ----
    h = _group_norm(x, g1_ref[...], be1_ref[...], NUM_GROUPS)
    h = _conv3x3(h, w1_ref, H, W) + b1_ref[...]
    h = jnp.maximum(h, 0.0) + e_vec

    # ---- norm2 -> dropout -> conv2 ----
    h = _group_norm(h, g2_ref[...], be2_ref[...], NUM_GROUPS)
    # TODO(synk): nn.Dropout(p=0.1) is identity at inference (eval mode);
    # training-mode dropout would use pltpu.prng_seed / pltpu.prng_random_bits.
    h = _conv3x3(h, w2_ref, H, W) + b2_ref[...]

    # ---- shortcut (1x1 conv on the raw input) + final relu ----
    sc = jnp.dot(wsc_ref[...], x.astype(jnp.bfloat16),
                 preferred_element_type=jnp.float32) + bsc_ref[...]
    o_ref[0] = jnp.maximum(h + sc, 0.0)


# ------------------------------- wrapper -----------------------------------

def _whole_spec(arr):
    zeros = (0,) * arr.ndim
    return pl.BlockSpec(arr.shape, lambda b: zeros)


def resblock_forward(x, emb, params):
    B, Cin, H, W = x.shape
    T = H * W
    Cout = params["w1"].shape[0]
    E = params["wemb"].shape[1]

    x_flat = x.reshape(B, Cin, T)
    emb3 = emb.reshape(B, 1, E)

    # 3x3 conv weights -> (9, Cout, Cin) tap matrices, bf16 for the MXU.
    w1_taps = jnp.transpose(params["w1"], (2, 3, 0, 1)).reshape(
        9, Cout, Cin).astype(jnp.bfloat16)
    w2_taps = jnp.transpose(params["w2"], (2, 3, 0, 1)).reshape(
        9, Cout, Cout).astype(jnp.bfloat16)
    wsc = params["wsc"].astype(jnp.bfloat16)

    col = lambda a: a.reshape(-1, 1)
    operands = (x_flat, emb3,
                w1_taps, col(params["b1"]),
                w2_taps, col(params["b2"]),
                wsc, col(params["bsc"]),
                params["wemb"], col(params["bemb"]),
                col(params["g1"]), col(params["be1"]),
                col(params["g2"]), col(params["be2"]))

    in_specs = [pl.BlockSpec((1, Cin, T), lambda b: (b, 0, 0)),
                pl.BlockSpec((1, 1, E), lambda b: (b, 0, 0))]
    in_specs += [_whole_spec(a) for a in operands[2:]]

    kernel = functools.partial(_resblock_kernel, H=H, W=W)
    out = pl.pallas_call(
        kernel,
        out_shape=jax.ShapeDtypeStruct((B, Cout, T), jnp.float32),
        grid_spec=pltpu.PrefetchScalarGridSpec(
            num_scalar_prefetch=0,
            grid=(B,),
            in_specs=in_specs,
            out_specs=pl.BlockSpec((1, Cout, T), lambda b: (b, 0, 0)),
        ),
        compiler_params=pltpu.CompilerParams(
            dimension_semantics=("parallel",)),
    )(*operands)
    return out.reshape(B, Cout, H, W)


# ------------------------- params & pure-JAX reference ---------------------

def init_params(key, in_channels, num_channels, embedding_size):
    ks = jax.random.split(key, 12)
    f32 = jnp.float32
    return dict(
        w1=0.05 * jax.random.normal(ks[0], (num_channels, in_channels, 3, 3), f32),
        b1=0.05 * jax.random.normal(ks[1], (num_channels,), f32),
        w2=0.05 * jax.random.normal(ks[2], (num_channels, num_channels, 3, 3), f32),
        b2=0.05 * jax.random.normal(ks[3], (num_channels,), f32),
        wsc=0.05 * jax.random.normal(ks[4], (num_channels, in_channels), f32),
        bsc=0.05 * jax.random.normal(ks[5], (num_channels,), f32),
        wemb=0.05 * jax.random.normal(ks[6], (num_channels, embedding_size), f32),
        bemb=0.05 * jax.random.normal(ks[7], (num_channels,), f32),
        g1=1.0 + 0.1 * jax.random.normal(ks[8], (in_channels,), f32),
        be1=0.1 * jax.random.normal(ks[9], (in_channels,), f32),
        g2=1.0 + 0.1 * jax.random.normal(ks[10], (num_channels,), f32),
        be2=0.1 * jax.random.normal(ks[11], (num_channels,), f32),
    )


def resblock_reference(x, emb, params):
    def gn(v, gamma, beta):
        B, C, H, W = v.shape
        vg = v.reshape(B, NUM_GROUPS, -1)
        m = vg.mean(-1, keepdims=True)
        var = vg.var(-1, keepdims=True)
        vn = ((vg - m) / jnp.sqrt(var + EPS)).reshape(B, C, H, W)
        return vn * gamma[None, :, None, None] + beta[None, :, None, None]

    def conv3(v, w, b):
        out = jax.lax.conv_general_dilated(
            v, w, window_strides=(1, 1), padding=((1, 1), (1, 1)),
            dimension_numbers=("NCHW", "OIHW", "NCHW"))
        return out + b[None, :, None, None]

    e = jnp.maximum(emb, 0.0) @ params["wemb"].T + params["bemb"]
    h = gn(x, params["g1"], params["be1"])
    h = jnp.maximum(conv3(h, params["w1"], params["b1"]), 0.0)
    h = h + e[:, :, None, None]
    h = gn(h, params["g2"], params["be2"])
    # dropout: identity at inference
    h = conv3(h, params["w2"], params["b2"])
    sc = jnp.einsum("oi,bihw->bohw", params["wsc"], x) \
        + params["bsc"][None, :, None, None]
    return jnp.maximum(h + sc, 0.0)


if __name__ == "__main__":
    B, Cin, Cout, E, H, W = 2, 32, 64, 32, 16, 16   # channels % 32 == 0 (GroupNorm)

    key = jax.random.PRNGKey(0)
    kx, ke, kp = jax.random.split(key, 3)
    x = jax.random.normal(kx, (B, Cin, H, W), jnp.float32)
    emb = jax.random.normal(ke, (B, E), jnp.float32)
    params = init_params(kp, Cin, Cout, E)

    out = jax.block_until_ready(resblock_forward(x, emb, params))
    ref = jax.block_until_ready(resblock_reference(x, emb, params))
    np.testing.assert_allclose(np.asarray(out), np.asarray(ref),
                               atol=5e-2, rtol=5e-2)
    print("KERNEL_OK")
</pallas_src>

<mosaic_0001>
module attributes {stable_mosaic.version = 11 : i64} {
  func.func @_resblock_kernel(%arg0: i32, %arg1: memref<1x32x256xf32, #tpu.memory_space<vmem>>, %arg2: memref<1x1x32xf32, #tpu.memory_space<vmem>>, %arg3: memref<9x64x32xbf16, #tpu.memory_space<vmem>>, %arg4: memref<64x1xf32, #tpu.memory_space<vmem>>, %arg5: memref<9x64x64xbf16, #tpu.memory_space<vmem>>, %arg6: memref<64x1xf32, #tpu.memory_space<vmem>>, %arg7: memref<64x32xbf16, #tpu.memory_space<vmem>>, %arg8: memref<64x1xf32, #tpu.memory_space<vmem>>, %arg9: memref<64x32xf32, #tpu.memory_space<vmem>>, %arg10: memref<64x1xf32, #tpu.memory_space<vmem>>, %arg11: memref<32x1xf32, #tpu.memory_space<vmem>>, %arg12: memref<32x1xf32, #tpu.memory_space<vmem>>, %arg13: memref<64x1xf32, #tpu.memory_space<vmem>>, %arg14: memref<64x1xf32, #tpu.memory_space<vmem>>, %arg15: memref<1x64x256xf32, #tpu.memory_space<vmem>>) attributes {dimension_semantics = [#tpu.dimension_semantics<parallel>], iteration_bounds = array<i64: 2>, scalar_prefetch = 0 : i64, scratch_operands = 0 : i64, tpu.core_type = #tpu.core_type<tc>, window_params = [{transform_indices = @transform_0, window_bounds = array<i64: 1, 32, 256>}, {transform_indices = @transform_1, window_bounds = array<i64: 1, 1, 32>}, {pipeline_mode = #tpu.pipeline_mode<synchronous>, transform_indices = @transform_2, window_bounds = array<i64: 9, 64, 32>}, {pipeline_mode = #tpu.pipeline_mode<synchronous>, transform_indices = @transform_3, window_bounds = array<i64: 64, 1>}, {pipeline_mode = #tpu.pipeline_mode<synchronous>, transform_indices = @transform_4, window_bounds = array<i64: 9, 64, 64>}, {pipeline_mode = #tpu.pipeline_mode<synchronous>, transform_indices = @transform_5, window_bounds = array<i64: 64, 1>}, {pipeline_mode = #tpu.pipeline_mode<synchronous>, transform_indices = @transform_6, window_bounds = array<i64: 64, 32>}, {pipeline_mode = #tpu.pipeline_mode<synchronous>, transform_indices = @transform_7, window_bounds = array<i64: 64, 1>}, {pipeline_mode = #tpu.pipeline_mode<synchronous>, transform_indices = @transform_8, window_bounds = array<i64: 64, 32>}, {pipeline_mode = #tpu.pipeline_mode<synchronous>, transform_indices = @transform_9, window_bounds = array<i64: 64, 1>}, {pipeline_mode = #tpu.pipeline_mode<synchronous>, transform_indices = @transform_10, window_bounds = array<i64: 32, 1>}, {pipeline_mode = #tpu.pipeline_mode<synchronous>, transform_indices = @transform_11, window_bounds = array<i64: 32, 1>}, {pipeline_mode = #tpu.pipeline_mode<synchronous>, transform_indices = @transform_12, window_bounds = array<i64: 64, 1>}, {pipeline_mode = #tpu.pipeline_mode<synchronous>, transform_indices = @transform_13, window_bounds = array<i64: 64, 1>}, {transform_indices = @transform_14, window_bounds = array<i64: 1, 64, 256>}]} {
    %c0 = arith.constant 0 : index
    %c0_0 = arith.constant 0 : index
    %c0_1 = arith.constant 0 : index
    %0 = vector.load %arg1[%c0, %c0_0, %c0_1] : memref<1x32x256xf32, #tpu.memory_space<vmem>>, vector<1x32x256xf32>
    %1 = vector.shape_cast %0 : vector<1x32x256xf32> to vector<32x256xf32>
    %c0_2 = arith.constant 0 : index
    %c0_3 = arith.constant 0 : index
    %c0_4 = arith.constant 0 : index
    %2 = vector.load %arg2[%c0_2, %c0_3, %c0_4] : memref<1x1x32xf32, #tpu.memory_space<vmem>>, vector<1x1x32xf32>
    %3 = vector.shape_cast %2 : vector<1x1x32xf32> to vector<1x32xf32>
    %cst = arith.constant 0.000000e+00 : f32
    %4 = vector.broadcast %cst : f32 to vector<1x32xf32>
    %5 = arith.maximumf %3, %4 : vector<1x32xf32>
    %c0_5 = arith.constant 0 : index
    %c0_6 = arith.constant 0 : index
    %6 = vector.load %arg9[%c0_5, %c0_6] : memref<64x32xf32, #tpu.memory_space<vmem>>, vector<64x32xf32>
    %7 = vector.broadcast %5 : vector<1x32xf32> to vector<64x32xf32>
    %8 = arith.mulf %6, %7 : vector<64x32xf32>
    %cst_7 = arith.constant dense<0.000000e+00> : vector<64xf32>
    %9 = vector.multi_reduction <add>, %8, %cst_7 [1] : vector<64x32xf32> to vector<64xf32>
    %10 = vector.shape_cast %9 : vector<64xf32> to vector<64x1xf32>
    %c0_8 = arith.constant 0 : index
    %c0_9 = arith.constant 0 : index
    %11 = vector.load %arg10[%c0_8, %c0_9] : memref<64x1xf32, #tpu.memory_space<vmem>>, vector<64x1xf32>
    %12 = arith.addf %10, %11 : vector<64x1xf32>
    %c0_10 = arith.constant 0 : index
    %c0_11 = arith.constant 0 : index
    %13 = vector.load %arg11[%c0_10, %c0_11] : memref<32x1xf32, #tpu.memory_space<vmem>>, vector<32x1xf32>
    %c0_12 = arith.constant 0 : index
    %c0_13 = arith.constant 0 : index
    %14 = vector.load %arg12[%c0_12, %c0_13] : memref<32x1xf32, #tpu.memory_space<vmem>>, vector<32x1xf32>
    %cst_14 = arith.constant dense<0.000000e+00> : vector<32xf32>
    %15 = vector.multi_reduction <add>, %1, %cst_14 [1] : vector<32x256xf32> to vector<32xf32>
    %16 = vector.shape_cast %15 : vector<32xf32> to vector<32x1xf32>
    %17 = arith.mulf %1, %1 : vector<32x256xf32>
    %cst_15 = arith.constant dense<0.000000e+00> : vector<32xf32>
    %18 = vector.multi_reduction <add>, %17, %cst_15 [1] : vector<32x256xf32> to vector<32xf32>
    %19 = vector.shape_cast %18 : vector<32xf32> to vector<32x1xf32>
    %cst_16 = arith.constant 3.906250e-03 : f32
    %20 = vector.broadcast %cst_16 : f32 to vector<32x1xf32>
    %21 = arith.mulf %16, %20 : vector<32x1xf32>
    %cst_17 = arith.constant 3.906250e-03 : f32
    %22 = vector.broadcast %cst_17 : f32 to vector<32x1xf32>
    %23 = arith.mulf %19, %22 : vector<32x1xf32>
    %24 = arith.mulf %21, %21 : vector<32x1xf32>
    %25 = arith.subf %23, %24 : vector<32x1xf32>
    %cst_18 = arith.constant 9.99999974E-6 : f32
    %26 = vector.broadcast %cst_18 : f32 to vector<32x1xf32>
    %27 = arith.addf %25, %26 : vector<32x1xf32>
    %28 = math.rsqrt %27 : vector<32x1xf32>
    %29 = vector.broadcast %21 : vector<32x1xf32> to vector<32x256xf32>
    %30 = arith.subf %1, %29 : vector<32x256xf32>
    %31 = vector.broadcast %28 : vector<32x1xf32> to vector<32x256xf32>
    %32 = arith.mulf %30, %31 : vector<32x256xf32>
    %33 = vector.broadcast %13 : vector<32x1xf32> to vector<32x256xf32>
    %34 = arith.mulf %32, %33 : vector<32x256xf32>
    %35 = vector.broadcast %14 : vector<32x1xf32> to vector<32x256xf32>
    %36 = arith.addf %34, %35 : vector<32x256xf32>
    %cst_19 = arith.constant 0.000000e+00 : f32
    %37 = vector.broadcast %cst_19 : f32 to vector<64x256xf32>
    %cst_20 = arith.constant 0.000000e+00 : f32
    %38 = vector.broadcast %cst_20 : f32 to vector<32x17xf32>
    %39 = vector.extract_strided_slice %36 {offsets = [0, 0], sizes = [32, 239], strides = [1, 1]} : vector<32x256xf32> to vector<32x239xf32>
    %40 = tpu.concatenate %38, %39 in 1 : vector<32x17xf32>, vector<32x239xf32> -> vector<32x256xf32>
    %41 = tpu.iota {dimensions = array<i32: 1>} : vector<1x256xi32>
    %c16_i32 = arith.constant 16 : i32
    %c0_i32 = arith.constant 0 : i32
    %42 = arith.cmpi eq, %c16_i32, %c0_i32 : i32
    %c1_i32 = arith.constant 1 : i32
    %43 = arith.select %42, %c1_i32, %c16_i32 : i32
    %44 = vector.broadcast %43 : i32 to vector<1x256xi32>
    %45 = arith.remsi %41, %44 : vector<1x256xi32>
    %c0_i32_21 = arith.constant 0 : i32
    %46 = vector.broadcast %c0_i32_21 : i32 to vector<1x256xi32>
    %47 = arith.cmpi ne, %45, %46 : vector<1x256xi32>
    %c0_i32_22 = arith.constant 0 : i32
    %48 = vector.broadcast %c0_i32_22 : i32 to vector<1x256xi32>
    %49 = arith.cmpi slt, %45, %48 : vector<1x256xi32>
    %c0_i32_23 = arith.constant 0 : i32
    %50 = arith.cmpi slt, %43, %c0_i32_23 : i32
    %51 = vector.broadcast %50 : i1 to vector<1x256xi1>
    %52 = vector.broadcast %51 : vector<1x256xi1> to vector<1x256xi1>
    %53 = arith.xori %49, %52 : vector<1x256xi1>
    %54 = arith.andi %53, %47 : vector<1x256xi1>
    %55 = vector.broadcast %43 : i32 to vector<1x256xi32>
    %56 = arith.addi %45, %55 : vector<1x256xi32>
    %57 = arith.select %54, %56, %45 : vector<1x256xi1>, vector<1x256xi32>
    %c1_i32_24 = arith.constant 1 : i32
    %58 = vector.broadcast %c1_i32_24 : i32 to vector<1x256xi32>
    %59 = arith.cmpi sge, %57, %58 : vector<1x256xi32>
    %cst_25 = arith.constant 0.000000e+00 : f32
    %60 = vector.broadcast %cst_25 : f32 to vector<32x256xf32>
    %61 = vector.shape_cast %59 : vector<1x256xi1> to vector<1x256xi1>
    %62 = vector.broadcast %61 : vector<1x256xi1> to vector<32x256xi1>
    %63 = arith.select %62, %40, %60 : vector<32x256xi1>, vector<32x256xf32>
    %64 = arith.truncf %63 : vector<32x256xf32> to vector<32x256xbf16>
    %c0_26 = arith.constant 0 : index
    %c0_27 = arith.constant 0 : index
    %c0_28 = arith.constant 0 : index
    %65 = vector.load %arg3[%c0_26, %c0_27, %c0_28] : memref<9x64x32xbf16, #tpu.memory_space<vmem>>, vector<1x64x32xbf16>
    %66 = vector.shape_cast %65 : vector<1x64x32xbf16> to vector<64x32xbf16>
    %cst_29 = arith.constant dense<0.000000e+00> : vector<64x256xf32>
    %67 = tpu.matmul %66, %64, %cst_29 {dimension_numbers = #tpu.dot_dimension_numbers<[1], [0], [0], [1], [0, 0, 1, 1], [], []>} : vector<64x32xbf16>, vector<32x256xbf16>, vector<64x256xf32> -> vector<64x256xf32>
    %68 = arith.addf %37, %67 : vector<64x256xf32>
    %cst_30 = arith.constant 0.000000e+00 : f32
    %69 = vector.broadcast %cst_30 : f32 to vector<32x16xf32>
    %70 = vector.extract_strided_slice %36 {offsets = [0, 0], sizes = [32, 240], strides = [1, 1]} : vector<32x256xf32> to vector<32x240xf32>
    %71 = tpu.concatenate %69, %70 in 1 : vector<32x16xf32>, vector<32x240xf32> -> vector<32x256xf32>
    %72 = arith.truncf %71 : vector<32x256xf32> to vector<32x256xbf16>
    %c1 = arith.constant 1 : index
    %c0_31 = arith.constant 0 : index
    %c0_32 = arith.constant 0 : index
    %73 = vector.load %arg3[%c1, %c0_31, %c0_32] : memref<9x64x32xbf16, #tpu.memory_space<vmem>>, vector<1x64x32xbf16>
    %74 = vector.shape_cast %73 : vector<1x64x32xbf16> to vector<64x32xbf16>
    %cst_33 = arith.constant dense<0.000000e+00> : vector<64x256xf32>
    %75 = tpu.matmul %74, %72, %cst_33 {dimension_numbers = #tpu.dot_dimension_numbers<[1], [0], [0], [1], [0, 0, 1, 1], [], []>} : vector<64x32xbf16>, vector<32x256xbf16>, vector<64x256xf32> -> vector<64x256xf32>
    %76 = arith.addf %68, %75 : vector<64x256xf32>
    %cst_34 = arith.constant 0.000000e+00 : f32
    %77 = vector.broadcast %cst_34 : f32 to vector<32x15xf32>
    %78 = vector.extract_strided_slice %36 {offsets = [0, 0], sizes = [32, 241], strides = [1, 1]} : vector<32x256xf32> to vector<32x241xf32>
    %79 = tpu.concatenate %77, %78 in 1 : vector<32x15xf32>, vector<32x241xf32> -> vector<32x256xf32>
    %80 = tpu.iota {dimensions = array<i32: 1>} : vector<1x256xi32>
    %c16_i32_35 = arith.constant 16 : i32
    %c0_i32_36 = arith.constant 0 : i32
    %81 = arith.cmpi eq, %c16_i32_35, %c0_i32_36 : i32
    %c1_i32_37 = arith.constant 1 : i32
    %82 = arith.select %81, %c1_i32_37, %c16_i32_35 : i32
    %83 = vector.broadcast %82 : i32 to vector<1x256xi32>
    %84 = arith.remsi %80, %83 : vector<1x256xi32>
    %c0_i32_38 = arith.constant 0 : i32
    %85 = vector.broadcast %c0_i32_38 : i32 to vector<1x256xi32>
    %86 = arith.cmpi ne, %84, %85 : vector<1x256xi32>
    %c0_i32_39 = arith.constant 0 : i32
    %87 = vector.broadcast %c0_i32_39 : i32 to vector<1x256xi32>
    %88 = arith.cmpi slt, %84, %87 : vector<1x256xi32>
    %c0_i32_40 = arith.constant 0 : i32
    %89 = arith.cmpi slt, %82, %c0_i32_40 : i32
    %90 = vector.broadcast %89 : i1 to vector<1x256xi1>
    %91 = vector.broadcast %90 : vector<1x256xi1> to vector<1x256xi1>
    %92 = arith.xori %88, %91 : vector<1x256xi1>
    %93 = arith.andi %92, %86 : vector<1x256xi1>
    %94 = vector.broadcast %82 : i32 to vector<1x256xi32>
    %95 = arith.addi %84, %94 : vector<1x256xi32>
    %96 = arith.select %93, %95, %84 : vector<1x256xi1>, vector<1x256xi32>
    %c15_i32 = arith.constant 15 : i32
    %97 = vector.broadcast %c15_i32 : i32 to vector<1x256xi32>
    %98 = arith.cmpi slt, %96, %97 : vector<1x256xi32>
    %cst_41 = arith.constant 0.000000e+00 : f32
    %99 = vector.broadcast %cst_41 : f32 to vector<32x256xf32>
    %100 = vector.shape_cast %98 : vector<1x256xi1> to vector<1x256xi1>
    %101 = vector.broadcast %100 : vector<1x256xi1> to vector<32x256xi1>
    %102 = arith.select %101, %79, %99 : vector<32x256xi1>, vector<32x256xf32>
    %103 = arith.truncf %102 : vector<32x256xf32> to vector<32x256xbf16>
    %c2 = arith.constant 2 : index
    %c0_42 = arith.constant 0 : index
    %c0_43 = arith.constant 0 : index
    %104 = vector.load %arg3[%c2, %c0_42, %c0_43] : memref<9x64x32xbf16, #tpu.memory_space<vmem>>, vector<1x64x32xbf16>
    %105 = vector.shape_cast %104 : vector<1x64x32xbf16> to vector<64x32xbf16>
    %cst_44 = arith.constant dense<0.000000e+00> : vector<64x256xf32>
    %106 = tpu.matmul %105, %103, %cst_44 {dimension_numbers = #tpu.dot_dimension_numbers<[1], [0], [0], [1], [0, 0, 1, 1], [], []>} : vector<64x32xbf16>, vector<32x256xbf16>, vector<64x256xf32> -> vector<64x256xf32>
    %107 = arith.addf %76, %106 : vector<64x256xf32>
    %cst_45 = arith.constant 0.000000e+00 : f32
    %108 = vector.broadcast %cst_45 : f32 to vector<32x1xf32>
    %109 = vector.extract_strided_slice %36 {offsets = [0, 0], sizes = [32, 255], strides = [1, 1]} : vector<32x256xf32> to vector<32x255xf32>
    %110 = tpu.concatenate %108, %109 in 1 : vector<32x1xf32>, vector<32x255xf32> -> vector<32x256xf32>
    %111 = tpu.iota {dimensions = array<i32: 1>} : vector<1x256xi32>
    %c16_i32_46 = arith.constant 16 : i32
    %c0_i32_47 = arith.constant 0 : i32
    %112 = arith.cmpi eq, %c16_i32_46, %c0_i32_47 : i32
    %c1_i32_48 = arith.constant 1 : i32
    %113 = arith.select %112, %c1_i32_48, %c16_i32_46 : i32
    %114 = vector.broadcast %113 : i32 to vector<1x256xi32>
    %115 = arith.remsi %111, %114 : vector<1x256xi32>
    %c0_i32_49 = arith.constant 0 : i32
    %116 = vector.broadcast %c0_i32_49 : i32 to vector<1x256xi32>
    %117 = arith.cmpi ne, %115, %116 : vector<1x256xi32>
    %c0_i32_50 = arith.constant 0 : i32
    %118 = vector.broadcast %c0_i32_50 : i32 to vector<1x256xi32>
    %119 = arith.cmpi slt, %115, %118 : vector<1x256xi32>
    %c0_i32_51 = arith.constant 0 : i32
    %120 = arith.cmpi slt, %113, %c0_i32_51 : i32
    %121 = vector.broadcast %120 : i1 to vector<1x256xi1>
    %122 = vector.broadcast %121 : vector<1x256xi1> to vector<1x256xi1>
    %123 = arith.xori %119, %122 : vector<1x256xi1>
    %124 = arith.andi %123, %117 : vector<1x256xi1>
    %125 = vector.broadcast %113 : i32 to vector<1x256xi32>
    %126 = arith.addi %115, %125 : vector<1x256xi32>
    %127 = arith.select %124, %126, %115 : vector<1x256xi1>, vector<1x256xi32>
    %c1_i32_52 = arith.constant 1 : i32
    %128 = vector.broadcast %c1_i32_52 : i32 to vector<1x256xi32>
    %129 = arith.cmpi sge, %127, %128 : vector<1x256xi32>
    %cst_53 = arith.constant 0.000000e+00 : f32
    %130 = vector.broadcast %cst_53 : f32 to vector<32x256xf32>
    %131 = vector.shape_cast %129 : vector<1x256xi1> to vector<1x256xi1>
    %132 = vector.broadcast %131 : vector<1x256xi1> to vector<32x256xi1>
    %133 = arith.select %132, %110, %130 : vector<32x256xi1>, vector<32x256xf32>
    %134 = arith.truncf %133 : vector<32x256xf32> to vector<32x256xbf16>
    %c3 = arith.constant 3 : index
    %c0_54 = arith.constant 0 : index
    %c0_55 = arith.constant 0 : index
    %135 = vector.load %arg3[%c3, %c0_54, %c0_55] : memref<9x64x32xbf16, #tpu.memory_space<vmem>>, vector<1x64x32xbf16>
    %136 = vector.shape_cast %135 : vector<1x64x32xbf16> to vector<64x32xbf16>
    %cst_56 = arith.constant dense<0.000000e+00> : vector<64x256xf32>
    %137 = tpu.matmul %136, %134, %cst_56 {dimension_numbers = #tpu.dot_dimension_numbers<[1], [0], [0], [1], [0, 0, 1, 1], [], []>} : vector<64x32xbf16>, vector<32x256xbf16>, vector<64x256xf32> -> vector<64x256xf32>
    %138 = arith.addf %107, %137 : vector<64x256xf32>
    %139 = arith.truncf %36 : vector<32x256xf32> to vector<32x256xbf16>
    %c4 = arith.constant 4 : index
    %c0_57 = arith.constant 0 : index
    %c0_58 = arith.constant 0 : index
    %140 = vector.load %arg3[%c4, %c0_57, %c0_58] : memref<9x64x32xbf16, #tpu.memory_space<vmem>>, vector<1x64x32xbf16>
    %141 = vector.shape_cast %140 : vector<1x64x32xbf16> to vector<64x32xbf16>
    %cst_59 = arith.constant dense<0.000000e+00> : vector<64x256xf32>
    %142 = tpu.matmul %141, %139, %cst_59 {dimension_numbers = #tpu.dot_dimension_numbers<[1], [0], [0], [1], [0, 0, 1, 1], [], []>} : vector<64x32xbf16>, vector<32x256xbf16>, vector<64x256xf32> -> vector<64x256xf32>
    %143 = arith.addf %138, %142 : vector<64x256xf32>
    %144 = vector.extract_strided_slice %36 {offsets = [0, 1], sizes = [32, 255], strides = [1, 1]} : vector<32x256xf32> to vector<32x255xf32>
    %cst_60 = arith.constant 0.000000e+00 : f32
    %145 = vector.broadcast %cst_60 : f32 to vector<32x1xf32>
    %146 = tpu.concatenate %144, %145 in 1 : vector<32x255xf32>, vector<32x1xf32> -> vector<32x256xf32>
    %147 = tpu.iota {dimensions = array<i32: 1>} : vector<1x256xi32>
    %c16_i32_61 = arith.constant 16 : i32
    %c0_i32_62 = arith.constant 0 : i32
    %148 = arith.cmpi eq, %c16_i32_61, %c0_i32_62 : i32
    %c1_i32_63 = arith.constant 1 : i32
    %149 = arith.select %148, %c1_i32_63, %c16_i32_61 : i32
    %150 = vector.broadcast %149 : i32 to vector<1x256xi32>
    %151 = arith.remsi %147, %150 : vector<1x256xi32>
    %c0_i32_64 = arith.constant 0 : i32
    %152 = vector.broadcast %c0_i32_64 : i32 to vector<1x256xi32>
    %153 = arith.cmpi ne, %151, %152 : vector<1x256xi32>
    %c0_i32_65 = arith.constant 0 : i32
    %154 = vector.broadcast %c0_i32_65 : i32 to vector<1x256xi32>
    %155 = arith.cmpi slt, %151, %154 : vector<1x256xi32>
    %c0_i32_66 = arith.constant 0 : i32
    %156 = arith.cmpi slt, %149, %c0_i32_66 : i32
    %157 = vector.broadcast %156 : i1 to vector<1x256xi1>
    %158 = vector.broadcast %157 : vector<1x256xi1> to vector<1x256xi1>
    %159 = arith.xori %155, %158 : vector<1x256xi1>
    %160 = arith.andi %159, %153 : vector<1x256xi1>
    %161 = vector.broadcast %149 : i32 to vector<1x256xi32>
    %162 = arith.addi %151, %161 : vector<1x256xi32>
    %163 = arith.select %160, %162, %151 : vector<1x256xi1>, vector<1x256xi32>
    %c15_i32_67 = arith.constant 15 : i32
    %164 = vector.broadcast %c15_i32_67 : i32 to vector<1x256xi32>
    %165 = arith.cmpi slt, %163, %164 : vector<1x256xi32>
    %cst_68 = arith.constant 0.000000e+00 : f32
    %166 = vector.broadcast %cst_68 : f32 to vector<32x256xf32>
    %167 = vector.shape_cast %165 : vector<1x256xi1> to vector<1x256xi1>
    %168 = vector.broadcast %167 : vector<1x256xi1> to vector<32x256xi1>
    %169 = arith.select %168, %146, %166 : vector<32x256xi1>, vector<32x256xf32>
    %170 = arith.truncf %169 : vector<32x256xf32> to vector<32x256xbf16>
    %c5 = arith.constant 5 : index
    %c0_69 = arith.constant 0 : index
    %c0_70 = arith.constant 0 : index
    %171 = vector.load %arg3[%c5, %c0_69, %c0_70] : memref<9x64x32xbf16, #tpu.memory_space<vmem>>, vector<1x64x32xbf16>
    %172 = vector.shape_cast %171 : vector<1x64x32xbf16> to vector<64x32xbf16>
    %cst_71 = arith.constant dense<0.000000e+00> : vector<64x256xf32>
    %173 = tpu.matmul %172, %170, %cst_71 {dimension_numbers = #tpu.dot_dimension_numbers<[1], [0], [0], [1], [0, 0, 1, 1], [], []>} : vector<64x32xbf16>, vector<32x256xbf16>, vector<64x256xf32> -> vector<64x256xf32>
    %174 = arith.addf %143, %173 : vector<64x256xf32>
    %175 = vector.extract_strided_slice %36 {offsets = [0, 15], sizes = [32, 241], strides = [1, 1]} : vector<32x256xf32> to vector<32x241xf32>
    %cst_72 = arith.constant 0.000000e+00 : f32
    %176 = vector.broadcast %cst_72 : f32 to vector<32x15xf32>
    %177 = tpu.concatenate %175, %176 in 1 : vector<32x241xf32>, vector<32x15xf32> -> vector<32x256xf32>
    %178 = tpu.iota {dimensions = array<i32: 1>} : vector<1x256xi32>
    %c16_i32_73 = arith.constant 16 : i32
    %c0_i32_74 = arith.constant 0 : i32
    %179 = arith.cmpi eq, %c16_i32_73, %c0_i32_74 : i32
    %c1_i32_75 = arith.constant 1 : i32
    %180 = arith.select %179, %c1_i32_75, %c16_i32_73 : i32
    %181 = vector.broadcast %180 : i32 to vector<1x256xi32>
    %182 = arith.remsi %178, %181 : vector<1x256xi32>
    %c0_i32_76 = arith.constant 0 : i32
    %183 = vector.broadcast %c0_i32_76 : i32 to vector<1x256xi32>
    %184 = arith.cmpi ne, %182, %183 : vector<1x256xi32>
    %c0_i32_77 = arith.constant 0 : i32
    %185 = vector.broadcast %c0_i32_77 : i32 to vector<1x256xi32>
    %186 = arith.cmpi slt, %182, %185 : vector<1x256xi32>
    %c0_i32_78 = arith.constant 0 : i32
    %187 = arith.cmpi slt, %180, %c0_i32_78 : i32
    %188 = vector.broadcast %187 : i1 to vector<1x256xi1>
    %189 = vector.broadcast %188 : vector<1x256xi1> to vector<1x256xi1>
    %190 = arith.xori %186, %189 : vector<1x256xi1>
    %191 = arith.andi %190, %184 : vector<1x256xi1>
    %192 = vector.broadcast %180 : i32 to vector<1x256xi32>
    %193 = arith.addi %182, %192 : vector<1x256xi32>
    %194 = arith.select %191, %193, %182 : vector<1x256xi1>, vector<1x256xi32>
    %c1_i32_79 = arith.constant 1 : i32
    %195 = vector.broadcast %c1_i32_79 : i32 to vector<1x256xi32>
    %196 = arith.cmpi sge, %194, %195 : vector<1x256xi32>
    %cst_80 = arith.constant 0.000000e+00 : f32
    %197 = vector.broadcast %cst_80 : f32 to vector<32x256xf32>
    %198 = vector.shape_cast %196 : vector<1x256xi1> to vector<1x256xi1>
    %199 = vector.broadcast %198 : vector<1x256xi1> to vector<32x256xi1>
    %200 = arith.select %199, %177, %197 : vector<32x256xi1>, vector<32x256xf32>
    %201 = arith.truncf %200 : vector<32x256xf32> to vector<32x256xbf16>
    %c6 = arith.constant 6 : index
    %c0_81 = arith.constant 0 : index
    %c0_82 = arith.constant 0 : index
    %202 = vector.load %arg3[%c6, %c0_81, %c0_82] : memref<9x64x32xbf16, #tpu.memory_space<vmem>>, vector<1x64x32xbf16>
    %203 = vector.shape_cast %202 : vector<1x64x32xbf16> to vector<64x32xbf16>
    %cst_83 = arith.constant dense<0.000000e+00> : vector<64x256xf32>
    %204 = tpu.matmul %203, %201, %cst_83 {dimension_numbers = #tpu.dot_dimension_numbers<[1], [0], [0], [1], [0, 0, 1, 1], [], []>} : vector<64x32xbf16>, vector<32x256xbf16>, vector<64x256xf32> -> vector<64x256xf32>
    %205 = arith.addf %174, %204 : vector<64x256xf32>
    %206 = vector.extract_strided_slice %36 {offsets = [0, 16], sizes = [32, 240], strides = [1, 1]} : vector<32x256xf32> to vector<32x240xf32>
    %cst_84 = arith.constant 0.000000e+00 : f32
    %207 = vector.broadcast %cst_84 : f32 to vector<32x16xf32>
    %208 = tpu.concatenate %206, %207 in 1 : vector<32x240xf32>, vector<32x16xf32> -> vector<32x256xf32>
    %209 = arith.truncf %208 : vector<32x256xf32> to vector<32x256xbf16>
    %c7 = arith.constant 7 : index
    %c0_85 = arith.constant 0 : index
    %c0_86 = arith.constant 0 : index
    %210 = vector.load %arg3[%c7, %c0_85, %c0_86] : memref<9x64x32xbf16, #tpu.memory_space<vmem>>, vector<1x64x32xbf16>
    %211 = vector.shape_cast %210 : vector<1x64x32xbf16> to vector<64x32xbf16>
    %cst_87 = arith.constant dense<0.000000e+00> : vector<64x256xf32>
    %212 = tpu.matmul %211, %209, %cst_87 {dimension_numbers = #tpu.dot_dimension_numbers<[1], [0], [0], [1], [0, 0, 1, 1], [], []>} : vector<64x32xbf16>, vector<32x256xbf16>, vector<64x256xf32> -> vector<64x256xf32>
    %213 = arith.addf %205, %212 : vector<64x256xf32>
    %214 = vector.extract_strided_slice %36 {offsets = [0, 17], sizes = [32, 239], strides = [1, 1]} : vector<32x256xf32> to vector<32x239xf32>
    %cst_88 = arith.constant 0.000000e+00 : f32
    %215 = vector.broadcast %cst_88 : f32 to vector<32x17xf32>
    %216 = tpu.concatenate %214, %215 in 1 : vector<32x239xf32>, vector<32x17xf32> -> vector<32x256xf32>
    %217 = tpu.iota {dimensions = array<i32: 1>} : vector<1x256xi32>
    %c16_i32_89 = arith.constant 16 : i32
    %c0_i32_90 = arith.constant 0 : i32
    %218 = arith.cmpi eq, %c16_i32_89, %c0_i32_90 : i32
    %c1_i32_91 = arith.constant 1 : i32
    %219 = arith.select %218, %c1_i32_91, %c16_i32_89 : i32
    %220 = vector.broadcast %219 : i32 to vector<1x256xi32>
    %221 = arith.remsi %217, %220 : vector<1x256xi32>
    %c0_i32_92 = arith.constant 0 : i32
    %222 = vector.broadcast %c0_i32_92 : i32 to vector<1x256xi32>
    %223 = arith.cmpi ne, %221, %222 : vector<1x256xi32>
    %c0_i32_93 = arith.constant 0 : i32
    %224 = vector.broadcast %c0_i32_93 : i32 to vector<1x256xi32>
    %225 = arith.cmpi slt, %221, %224 : vector<1x256xi32>
    %c0_i32_94 = arith.constant 0 : i32
    %226 = arith.cmpi slt, %219, %c0_i32_94 : i32
    %227 = vector.broadcast %226 : i1 to vector<1x256xi1>
    %228 = vector.broadcast %227 : vector<1x256xi1> to vector<1x256xi1>
    %229 = arith.xori %225, %228 : vector<1x256xi1>
    %230 = arith.andi %229, %223 : vector<1x256xi1>
    %231 = vector.broadcast %219 : i32 to vector<1x256xi32>
    %232 = arith.addi %221, %231 : vector<1x256xi32>
    %233 = arith.select %230, %232, %221 : vector<1x256xi1>, vector<1x256xi32>
    %c15_i32_95 = arith.constant 15 : i32
    %234 = vector.broadcast %c15_i32_95 : i32 to vector<1x256xi32>
    %235 = arith.cmpi slt, %233, %234 : vector<1x256xi32>
    %cst_96 = arith.constant 0.000000e+00 : f32
    %236 = vector.broadcast %cst_96 : f32 to vector<32x256xf32>
    %237 = vector.shape_cast %235 : vector<1x256xi1> to vector<1x256xi1>
    %238 = vector.broadcast %237 : vector<1x256xi1> to vector<32x256xi1>
    %239 = arith.select %238, %216, %236 : vector<32x256xi1>, vector<32x256xf32>
    %240 = arith.truncf %239 : vector<32x256xf32> to vector<32x256xbf16>
    %c8 = arith.constant 8 : index
    %c0_97 = arith.constant 0 : index
    %c0_98 = arith.constant 0 : index
    %241 = vector.load %arg3[%c8, %c0_97, %c0_98] : memref<9x64x32xbf16, #tpu.memory_space<vmem>>, vector<1x64x32xbf16>
    %242 = vector.shape_cast %241 : vector<1x64x32xbf16> to vector<64x32xbf16>
    %cst_99 = arith.constant dense<0.000000e+00> : vector<64x256xf32>
    %243 = tpu.matmul %242, %240, %cst_99 {dimension_numbers = #tpu.dot_dimension_numbers<[1], [0], [0], [1], [0, 0, 1, 1], [], []>} : vector<64x32xbf16>, vector<32x256xbf16>, vector<64x256xf32> -> vector<64x256xf32>
    %244 = arith.addf %213, %243 : vector<64x256xf32>
    %c0_100 = arith.constant 0 : index
    %c0_101 = arith.constant 0 : index
    %245 = vector.load %arg4[%c0_100, %c0_101] : memref<64x1xf32, #tpu.memory_space<vmem>>, vector<64x1xf32>
    %246 = vector.broadcast %245 : vector<64x1xf32> to vector<64x256xf32>
    %247 = arith.addf %244, %246 : vector<64x256xf32>
    %cst_102 = arith.constant 0.000000e+00 : f32
    %248 = vector.broadcast %cst_102 : f32 to vector<64x256xf32>
    %249 = arith.maximumf %247, %248 : vector<64x256xf32>
    %250 = vector.broadcast %12 : vector<64x1xf32> to vector<64x256xf32>
    %251 = arith.addf %249, %250 : vector<64x256xf32>
    %c0_103 = arith.constant 0 : index
    %c0_104 = arith.constant 0 : index
    %252 = vector.load %arg13[%c0_103, %c0_104] : memref<64x1xf32, #tpu.memory_space<vmem>>, vector<64x1xf32>
    %c0_105 = arith.constant 0 : index
    %c0_106 = arith.constant 0 : index
    %253 = vector.load %arg14[%c0_105, %c0_106] : memref<64x1xf32, #tpu.memory_space<vmem>>, vector<64x1xf32>
    %cst_107 = arith.constant dense<0.000000e+00> : vector<64xf32>
    %254 = vector.multi_reduction <add>, %251, %cst_107 [1] : vector<64x256xf32> to vector<64xf32>
    %255 = vector.shape_cast %254 : vector<64xf32> to vector<64x1xf32>
    %256 = arith.mulf %251, %251 : vector<64x256xf32>
    %cst_108 = arith.constant dense<0.000000e+00> : vector<64xf32>
    %257 = vector.multi_reduction <add>, %256, %cst_108 [1] : vector<64x256xf32> to vector<64xf32>
    %258 = vector.shape_cast %257 : vector<64xf32> to vector<64x1xf32>
    %259 = vector.extract_strided_slice %255 {offsets = [0, 0], sizes = [2, 1], strides = [1, 1]} : vector<64x1xf32> to vector<2x1xf32>
    %cst_109 = arith.constant dense<0.000000e+00> : vector<1xf32>
    %260 = vector.multi_reduction <add>, %259, %cst_109 [0] : vector<2x1xf32> to vector<1xf32>
    %261 = vector.shape_cast %260 : vector<1xf32> to vector<1x1xf32>
    %262 = vector.extract_strided_slice %258 {offsets = [0, 0], sizes = [2, 1], strides = [1, 1]} : vector<64x1xf32> to vector<2x1xf32>
    %cst_110 = arith.constant dense<0.000000e+00> : vector<1xf32>
    %263 = vector.multi_reduction <add>, %262, %cst_110 [0] : vector<2x1xf32> to vector<1xf32>
    %264 = vector.shape_cast %263 : vector<1xf32> to vector<1x1xf32>
    %cst_111 = arith.constant 0.001953125 : f32
    %265 = vector.broadcast %cst_111 : f32 to vector<1x1xf32>
    %266 = arith.mulf %261, %265 : vector<1x1xf32>
    %cst_112 = arith.constant 0.001953125 : f32
    %267 = vector.broadcast %cst_112 : f32 to vector<1x1xf32>
    %268 = arith.mulf %264, %267 : vector<1x1xf32>
    %269 = arith.mulf %266, %266 : vector<1x1xf32>
    %270 = arith.subf %268, %269 : vector<1x1xf32>
    %cst_113 = arith.constant 9.99999974E-6 : f32
    %271 = vector.broadcast %cst_113 : f32 to vector<1x1xf32>
    %272 = arith.addf %270, %271 : vector<1x1xf32>
    %273 = math.rsqrt %272 : vector<1x1xf32>
    %274 = vector.shape_cast %266 : vector<1x1xf32> to vector<1x1xf32>
    %275 = vector.broadcast %274 : vector<1x1xf32> to vector<2x1xf32>
    %276 = vector.shape_cast %273 : vector<1x1xf32> to vector<1x1xf32>
    %277 = vector.broadcast %276 : vector<1x1xf32> to vector<2x1xf32>
    %278 = vector.extract_strided_slice %255 {offsets = [2, 0], sizes = [2, 1], strides = [1, 1]} : vector<64x1xf32> to vector<2x1xf32>
    %cst_114 = arith.constant dense<0.000000e+00> : vector<1xf32>
    %279 = vector.multi_reduction <add>, %278, %cst_114 [0] : vector<2x1xf32> to vector<1xf32>
    %280 = vector.shape_cast %279 : vector<1xf32> to vector<1x1xf32>
    %281 = vector.extract_strided_slice %258 {offsets = [2, 0], sizes = [2, 1], strides = [1, 1]} : vector<64x1xf32> to vector<2x1xf32>
    %cst_115 = arith.constant dense<0.000000e+00> : vector<1xf32>
    %282 = vector.multi_reduction <add>, %281, %cst_115 [0] : vector<2x1xf32> to vector<1xf32>
    %283 = vector.shape_cast %282 : vector<1xf32> to vector<1x1xf32>
    %cst_116 = arith.constant 0.001953125 : f32
    %284 = vector.broadcast %cst_116 : f32 to vector<1x1xf32>
    %285 = arith.mulf %280, %284 : vector<1x1xf32>
    %cst_117 = arith.constant 0.001953125 : f32
    %286 = vector.broadcast %cst_117 : f32 to vector<1x1xf32>
    %287 = arith.mulf %283, %286 : vector<1x1xf32>
    %288 = arith.mulf %285, %285 : vector<1x1xf32>
    %289 = arith.subf %287, %288 : vector<1x1xf32>
    %cst_118 = arith.constant 9.99999974E-6 : f32
    %290 = vector.broadcast %cst_118 : f32 to vector<1x1xf32>
    %291 = arith.addf %289, %290 : vector<1x1xf32>
    %292 = math.rsqrt %291 : vector<1x1xf32>
    %293 = vector.shape_cast %285 : vector<1x1xf32> to vector<1x1xf32>
    %294 = vector.broadcast %293 : vector<1x1xf32> to vector<2x1xf32>
    %295 = vector.shape_cast %292 : vector<1x1xf32> to vector<1x1xf32>
    %296 = vector.broadcast %295 : vector<1x1xf32> to vector<2x1xf32>
    %297 = vector.extract_strided_slice %255 {offsets = [4, 0], sizes = [2, 1], strides = [1, 1]} : vector<64x1xf32> to vector<2x1xf32>
    %cst_119 = arith.constant dense<0.000000e+00> : vector<1xf32>
    %298 = vector.multi_reduction <add>, %297, %cst_119 [0] : vector<2x1xf32> to vector<1xf32>
    %299 = vector.shape_cast %298 : vector<1xf32> to vector<1x1xf32>
    %300 = vector.extract_strided_slice %258 {offsets = [4, 0], sizes = [2, 1], strides = [1, 1]} : vector<64x1xf32> to vector<2x1xf32>
    %cst_120 = arith.constant dense<0.000000e+00> : vector<1xf32>
    %301 = vector.multi_reduction <add>, %300, %cst_120 [0] : vector<2x1xf32> to vector<1xf32>
    %302 = vector.shape_cast %301 : vector<1xf32> to vector<1x1xf32>
    %cst_121 = arith.constant 0.001953125 : f32
    %303 = vector.broadcast %cst_121 : f32 to vector<1x1xf32>
    %304 = arith.mulf %299, %303 : vector<1x1xf32>
    %cst_122 = arith.constant 0.001953125 : f32
    %305 = vector.broadcast %cst_122 : f32 to vector<1x1xf32>
    %306 = arith.mulf %302, %305 : vector<1x1xf32>
    %307 = arith.mulf %304, %304 : vector<1x1xf32>
    %308 = arith.subf %306, %307 : vector<1x1xf32>
    %cst_123 = arith.constant 9.99999974E-6 : f32
    %309 = vector.broadcast %cst_123 : f32 to vector<1x1xf32>
    %310 = arith.addf %308, %309 : vector<1x1xf32>
    %311 = math.rsqrt %310 : vector<1x1xf32>
    %312 = vector.shape_cast %304 : vector<1x1xf32> to vector<1x1xf32>
    %313 = vector.broadcast %312 : vector<1x1xf32> to vector<2x1xf32>
    %314 = vector.shape_cast %311 : vector<1x1xf32> to vector<1x1xf32>
    %315 = vector.broadcast %314 : vector<1x1xf32> to vector<2x1xf32>
    %316 = vector.extract_strided_slice %255 {offsets = [6, 0], sizes = [2, 1], strides = [1, 1]} : vector<64x1xf32> to vector<2x1xf32>
    %cst_124 = arith.constant dense<0.000000e+00> : vector<1xf32>
    %317 = vector.multi_reduction <add>, %316, %cst_124 [0] : vector<2x1xf32> to vector<1xf32>
    %318 = vector.shape_cast %317 : vector<1xf32> to vector<1x1xf32>
    %319 = vector.extract_strided_slice %258 {offsets = [6, 0], sizes = [2, 1], strides = [1, 1]} : vector<64x1xf32> to vector<2x1xf32>
    %cst_125 = arith.constant dense<0.000000e+00> : vector<1xf32>
    %320 = vector.multi_reduction <add>, %319, %cst_125 [0] : vector<2x1xf32> to vector<1xf32>
    %321 = vector.shape_cast %320 : vector<1xf32> to vector<1x1xf32>
    %cst_126 = arith.constant 0.001953125 : f32
    %322 = vector.broadcast %cst_126 : f32 to vector<1x1xf32>
    %323 = arith.mulf %318, %322 : vector<1x1xf32>
    %cst_127 = arith.constant 0.001953125 : f32
    %324 = vector.broadcast %cst_127 : f32 to vector<1x1xf32>
    %325 = arith.mulf %321, %324 : vector<1x1xf32>
    %326 = arith.mulf %323, %323 : vector<1x1xf32>
    %327 = arith.subf %325, %326 : vector<1x1xf32>
    %cst_128 = arith.constant 9.99999974E-6 : f32
    %328 = vector.broadcast %cst_128 : f32 to vector<1x1xf32>
    %329 = arith.addf %327, %328 : vector<1x1xf32>
    %330 = math.rsqrt %329 : vector<1x1xf32>
    %331 = vector.shape_cast %323 : vector<1x1xf32> to vector<1x1xf32>
    %332 = vector.broadcast %331 : vector<1x1xf32> to vector<2x1xf32>
    %333 = vector.shape_cast %330 : vector<1x1xf32> to vector<1x1xf32>
    %334 = vector.broadcast %333 : vector<1x1xf32> to vector<2x1xf32>
    %335 = vector.extract_strided_slice %255 {offsets = [8, 0], sizes = [2, 1], strides = [1, 1]} : vector<64x1xf32> to vector<2x1xf32>
    %cst_129 = arith.constant dense<0.000000e+00> : vector<1xf32>
    %336 = vector.multi_reduction <add>, %335, %cst_129 [0] : vector<2x1xf32> to vector<1xf32>
    %337 = vector.shape_cast %336 : vector<1xf32> to vector<1x1xf32>
    %338 = vector.extract_strided_slice %258 {offsets = [8, 0], sizes = [2, 1], strides = [1, 1]} : vector<64x1xf32> to vector<2x1xf32>
    %cst_130 = arith.constant dense<0.000000e+00> : vector<1xf32>
    %339 = vector.multi_reduction <add>, %338, %cst_130 [0] : vector<2x1xf32> to vector<1xf32>
    %340 = vector.shape_cast %339 : vector<1xf32> to vector<1x1xf32>
    %cst_131 = arith.constant 0.001953125 : f32
    %341 = vector.broadcast %cst_131 : f32 to vector<1x1xf32>
    %342 = arith.mulf %337, %341 : vector<1x1xf32>
    %cst_132 = arith.constant 0.001953125 : f32
    %343 = vector.broadcast %cst_132 : f32 to vector<1x1xf32>
    %344 = arith.mulf %340, %343 : vector<1x1xf32>
    %345 = arith.mulf %342, %342 : vector<1x1xf32>
    %346 = arith.subf %344, %345 : vector<1x1xf32>
    %cst_133 = arith.constant 9.99999974E-6 : f32
    %347 = vector.broadcast %cst_133 : f32 to vector<1x1xf32>
    %348 = arith.addf %346, %347 : vector<1x1xf32>
    %349 = math.rsqrt %348 : vector<1x1xf32>
    %350 = vector.shape_cast %342 : vector<1x1xf32> to vector<1x1xf32>
    %351 = vector.broadcast %350 : vector<1x1xf32> to vector<2x1xf32>
    %352 = vector.shape_cast %349 : vector<1x1xf32> to vector<1x1xf32>
    %353 = vector.broadcast %352 : vector<1x1xf32> to vector<2x1xf32>
    %354 = vector.extract_strided_slice %255 {offsets = [10, 0], sizes = [2, 1], strides = [1, 1]} : vector<64x1xf32> to vector<2x1xf32>
    %cst_134 = arith.constant dense<0.000000e+00> : vector<1xf32>
    %355 = vector.multi_reduction <add>, %354, %cst_134 [0] : vector<2x1xf32> to vector<1xf32>
    %356 = vector.shape_cast %355 : vector<1xf32> to vector<1x1xf32>
    %357 = vector.extract_strided_slice %258 {offsets = [10, 0], sizes = [2, 1], strides = [1, 1]} : vector<64x1xf32> to vector<2x1xf32>
    %cst_135 = arith.constant dense<0.000000e+00> : vector<1xf32>
    %358 = vector.multi_reduction <add>, %357, %cst_135 [0] : vector<2x1xf32> to vector<1xf32>
    %359 = vector.shape_cast %358 : vector<1xf32> to vector<1x1xf32>
    %cst_136 = arith.constant 0.001953125 : f32
    %360 = vector.broadcast %cst_136 : f32 to vector<1x1xf32>
    %361 = arith.mulf %356, %360 : vector<1x1xf32>
    %cst_137 = arith.constant 0.001953125 : f32
    %362 = vector.broadcast %cst_137 : f32 to vector<1x1xf32>
    %363 = arith.mulf %359, %362 : vector<1x1xf32>
    %364 = arith.mulf %361, %361 : vector<1x1xf32>
    %365 = arith.subf %363, %364 : vector<1x1xf32>
    %cst_138 = arith.constant 9.99999974E-6 : f32
    %366 = vector.broadcast %cst_138 : f32 to vector<1x1xf32>
    %367 = arith.addf %365, %366 : vector<1x1xf32>
    %368 = math.rsqrt %367 : vector<1x1xf32>
    %369 = vector.shape_cast %361 : vector<1x1xf32> to vector<1x1xf32>
    %370 = vector.broadcast %369 : vector<1x1xf32> to vector<2x1xf32>
    %371 = vector.shape_cast %368 : vector<1x1xf32> to vector<1x1xf32>
    %372 = vector.broadcast %371 : vector<1x1xf32> to vector<2x1xf32>
    %373 = vector.extract_strided_slice %255 {offsets = [12, 0], sizes = [2, 1], strides = [1, 1]} : vector<64x1xf32> to vector<2x1xf32>
    %cst_139 = arith.constant dense<0.000000e+00> : vector<1xf32>
    %374 = vector.multi_reduction <add>, %373, %cst_139 [0] : vector<2x1xf32> to vector<1xf32>
    %375 = vector.shape_cast %374 : vector<1xf32> to vector<1x1xf32>
    %376 = vector.extract_strided_slice %258 {offsets = [12, 0], sizes = [2, 1], strides = [1, 1]} : vector<64x1xf32> to vector<2x1xf32>
    %cst_140 = arith.constant dense<0.000000e+00> : vector<1xf32>
    %377 = vector.multi_reduction <add>, %376, %cst_140 [0] : vector<2x1xf32> to vector<1xf32>
    %378 = vector.shape_cast %377 : vector<1xf32> to vector<1x1xf32>
    %cst_141 = arith.constant 0.001953125 : f32
    %379 = vector.broadcast %cst_141 : f32 to vector<1x1xf32>
    %380 = arith.mulf %375, %379 : vector<1x1xf32>
    %cst_142 = arith.constant 0.001953125 : f32
    %381 = vector.broadcast %cst_142 : f32 to vector<1x1xf32>
    %382 = arith.mulf %378, %381 : vector<1x1xf32>
    %383 = arith.mulf %380, %380 : vector<1x1xf32>
    %384 = arith.subf %382, %383 : vector<1x1xf32>
    %cst_143 = arith.constant 9.99999974E-6 : f32
    %385 = vector.broadcast %cst_143 : f32 to vector<1x1xf32>
    %386 = arith.addf %384, %385 : vector<1x1xf32>
    %387 = math.rsqrt %386 : vector<1x1xf32>
    %388 = vector.shape_cast %380 : vector<1x1xf32> to vector<1x1xf32>
    %389 = vector.broadcast %388 : vector<1x1xf32> to vector<2x1xf32>
    %390 = vector.shape_cast %387 : vector<1x1xf32> to vector<1x1xf32>
    %391 = vector.broadcast %390 : vector<1x1xf32> to vector<2x1xf32>
    %392 = vector.extract_strided_slice %255 {offsets = [14, 0], sizes = [2, 1], strides = [1, 1]} : vector<64x1xf32> to vector<2x1xf32>
    %cst_144 = arith.constant dense<0.000000e+00> : vector<1xf32>
    %393 = vector.multi_reduction <add>, %392, %cst_144 [0] : vector<2x1xf32> to vector<1xf32>
    %394 = vector.shape_cast %393 : vector<1xf32> to vector<1x1xf32>
    %395 = vector.extract_strided_slice %258 {offsets = [14, 0], sizes = [2, 1], strides = [1, 1]} : vector<64x1xf32> to vector<2x1xf32>
    %cst_145 = arith.constant dense<0.000000e+00> : vector<1xf32>
    %396 = vector.multi_reduction <add>, %395, %cst_145 [0] : vector<2x1xf32> to vector<1xf32>
    %397 = vector.shape_cast %396 : vector<1xf32> to vector<1x1xf32>
    %cst_146 = arith.constant 0.001953125 : f32
    %398 = vector.broadcast %cst_146 : f32 to vector<1x1xf32>
    %399 = arith.mulf %394, %398 : vector<1x1xf32>
    %cst_147 = arith.constant 0.001953125 : f32
    %400 = vector.broadcast %cst_147 : f32 to vector<1x1xf32>
    %401 = arith.mulf %397, %400 : vector<1x1xf32>
    %402 = arith.mulf %399, %399 : vector<1x1xf32>
    %403 = arith.subf %401, %402 : vector<1x1xf32>
    %cst_148 = arith.constant 9.99999974E-6 : f32
    %404 = vector.broadcast %cst_148 : f32 to vector<1x1xf32>
    %405 = arith.addf %403, %404 : vector<1x1xf32>
    %406 = math.rsqrt %405 : vector<1x1xf32>
    %407 = vector.shape_cast %399 : vector<1x1xf32> to vector<1x1xf32>
    %408 = vector.broadcast %407 : vector<1x1xf32> to vector<2x1xf32>
    %409 = vector.shape_cast %406 : vector<1x1xf32> to vector<1x1xf32>
    %410 = vector.broadcast %409 : vector<1x1xf32> to vector<2x1xf32>
    %411 = vector.extract_strided_slice %255 {offsets = [16, 0], sizes = [2, 1], strides = [1, 1]} : vector<64x1xf32> to vector<2x1xf32>
    %cst_149 = arith.constant dense<0.000000e+00> : vector<1xf32>
    %412 = vector.multi_reduction <add>, %411, %cst_149 [0] : vector<2x1xf32> to vector<1xf32>
    %413 = vector.shape_cast %412 : vector<1xf32> to vector<1x1xf32>
    %414 = vector.extract_strided_slice %258 {offsets = [16, 0], sizes = [2, 1], strides = [1, 1]} : vector<64x1xf32> to vector<2x1xf32>
    %cst_150 = arith.constant dense<0.000000e+00> : vector<1xf32>
    %415 = vector.multi_reduction <add>, %414, %cst_150 [0] : vector<2x1xf32> to vector<1xf32>
    %416 = vector.shape_cast %415 : vector<1xf32> to vector<1x1xf32>
    %cst_151 = arith.constant 0.001953125 : f32
    %417 = vector.broadcast %cst_151 : f32 to vector<1x1xf32>
    %418 = arith.mulf %413, %417 : vector<1x1xf32>
    %cst_152 = arith.constant 0.001953125 : f32
    %419 = vector.broadcast %cst_152 : f32 to vector<1x1xf32>
    %420 = arith.mulf %416, %419 : vector<1x1xf32>
    %421 = arith.mulf %418, %418 : vector<1x1xf32>
    %422 = arith.subf %420, %421 : vector<1x1xf32>
    %cst_153 = arith.constant 9.99999974E-6 : f32
    %423 = vector.broadcast %cst_153 : f32 to vector<1x1xf32>
    %424 = arith.addf %422, %423 : vector<1x1xf32>
    %425 = math.rsqrt %424 : vector<1x1xf32>
    %426 = vector.shape_cast %418 : vector<1x1xf32> to vector<1x1xf32>
    %427 = vector.broadcast %426 : vector<1x1xf32> to vector<2x1xf32>
    %428 = vector.shape_cast %425 : vector<1x1xf32> to vector<1x1xf32>
    %429 = vector.broadcast %428 : vector<1x1xf32> to vector<2x1xf32>
    %430 = vector.extract_strided_slice %255 {offsets = [18, 0], sizes = [2, 1], strides = [1, 1]} : vector<64x1xf32> to vector<2x1xf32>
    %cst_154 = arith.constant dense<0.000000e+00> : vector<1xf32>
    %431 = vector.multi_reduction <add>, %430, %cst_154 [0] : vector<2x1xf32> to vector<1xf32>
    %432 = vector.shape_cast %431 : vector<1xf32> to vector<1x1xf32>
    %433 = vector.extract_strided_slice %258 {offsets = [18, 0], sizes = [2, 1], strides = [1, 1]} : vector<64x1xf32> to vector<2x1xf32>
    %cst_155 = arith.constant dense<0.000000e+00> : vector<1xf32>
    %434 = vector.multi_reduction <add>, %433, %cst_155 [0] : vector<2x1xf32> to vector<1xf32>
    %435 = vector.shape_cast %434 : vector<1xf32> to vector<1x1xf32>
    %cst_156 = arith.constant 0.001953125 : f32
    %436 = vector.broadcast %cst_156 : f32 to vector<1x1xf32>
    %437 = arith.mulf %432, %436 : vector<1x1xf32>
    %cst_157 = arith.constant 0.001953125 : f32
    %438 = vector.broadcast %cst_157 : f32 to vector<1x1xf32>
    %439 = arith.mulf %435, %438 : vector<1x1xf32>
    %440 = arith.mulf %437, %437 : vector<1x1xf32>
    %441 = arith.subf %439, %440 : vector<1x1xf32>
    %cst_158 = arith.constant 9.99999974E-6 : f32
    %442 = vector.broadcast %cst_158 : f32 to vector<1x1xf32>
    %443 = arith.addf %441, %442 : vector<1x1xf32>
    %444 = math.rsqrt %443 : vector<1x1xf32>
    %445 = vector.shape_cast %437 : vector<1x1xf32> to vector<1x1xf32>
    %446 = vector.broadcast %445 : vector<1x1xf32> to vector<2x1xf32>
    %447 = vector.shape_cast %444 : vector<1x1xf32> to vector<1x1xf32>
    %448 = vector.broadcast %447 : vector<1x1xf32> to vector<2x1xf32>
    %449 = vector.extract_strided_slice %255 {offsets = [20, 0], sizes = [2, 1], strides = [1, 1]} : vector<64x1xf32> to vector<2x1xf32>
    %cst_159 = arith.constant dense<0.000000e+00> : vector<1xf32>
    %450 = vector.multi_reduction <add>, %449, %cst_159 [0] : vector<2x1xf32> to vector<1xf32>
    %451 = vector.shape_cast %450 : vector<1xf32> to vector<1x1xf32>
    %452 = vector.extract_strided_slice %258 {offsets = [20, 0], sizes = [2, 1], strides = [1, 1]} : vector<64x1xf32> to vector<2x1xf32>
    %cst_160 = arith.constant dense<0.000000e+00> : vector<1xf32>
    %453 = vector.multi_reduction <add>, %452, %cst_160 [0] : vector<2x1xf32> to vector<1xf32>
    %454 = vector.shape_cast %453 : vector<1xf32> to vector<1x1xf32>
    %cst_161 = arith.constant 0.001953125 : f32
    %455 = vector.broadcast %cst_161 : f32 to vector<1x1xf32>
    %456 = arith.mulf %451, %455 : vector<1x1xf32>
    %cst_162 = arith.constant 0.001953125 : f32
    %457 = vector.broadcast %cst_162 : f32 to vector<1x1xf32>
    %458 = arith.mulf %454, %457 : vector<1x1xf32>
    %459 = arith.mulf %456, %456 : vector<1x1xf32>
    %460 = arith.subf %458, %459 : vector<1x1xf32>
    %cst_163 = arith.constant 9.99999974E-6 : f32
    %461 = vector.broadcast %cst_163 : f32 to vector<1x1xf32>
    %462 = arith.addf %460, %461 : vector<1x1xf32>
    %463 = math.rsqrt %462 : vector<1x1xf32>
    %464 = vector.shape_cast %456 : vector<1x1xf32> to vector<1x1xf32>
    %465 = vector.broadcast %464 : vector<1x1xf32> to vector<2x1xf32>
    %466 = vector.shape_cast %463 : vector<1x1xf32> to vector<1x1xf32>
    %467 = vector.broadcast %466 : vector<1x1xf32> to vector<2x1xf32>
    %468 = vector.extract_strided_slice %255 {offsets = [22, 0], sizes = [2, 1], strides = [1, 1]} : vector<64x1xf32> to vector<2x1xf32>
    %cst_164 = arith.constant dense<0.000000e+00> : vector<1xf32>
    %469 = vector.multi_reduction <add>, %468, %cst_164 [0] : vector<2x1xf32> to vector<1xf32>
    %470 = vector.shape_cast %469 : vector<1xf32> to vector<1x1xf32>
    %471 = vector.extract_strided_slice %258 {offsets = [22, 0], sizes = [2, 1], strides = [1, 1]} : vector<64x1xf32> to vector<2x1xf32>
    %cst_165 = arith.constant dense<0.000000e+00> : vector<1xf32>
    %472 = vector.multi_reduction <add>, %471, %cst_165 [0] : vector<2x1xf32> to vector<1xf32>
    %473 = vector.shape_cast %472 : vector<1xf32> to vector<1x1xf32>
    %cst_166 = arith.constant 0.001953125 : f32
    %474 = vector.broadcast %cst_166 : f32 to vector<1x1xf32>
    %475 = arith.mulf %470, %474 : vector<1x1xf32>
    %cst_167 = arith.constant 0.001953125 : f32
    %476 = vector.broadcast %cst_167 : f32 to vector<1x1xf32>
    %477 = arith.mulf %473, %476 : vector<1x1xf32>
    %478 = arith.mulf %475, %475 : vector<1x1xf32>
    %479 = arith.subf %477, %478 : vector<1x1xf32>
    %cst_168 = arith.constant 9.99999974E-6 : f32
    %480 = vector.broadcast %cst_168 : f32 to vector<1x1xf32>
    %481 = arith.addf %479, %480 : vector<1x1xf32>
    %482 = math.rsqrt %481 : vector<1x1xf32>
    %483 = vector.shape_cast %475 : vector<1x1xf32> to vector<1x1xf32>
    %484 = vector.broadcast %483 : vector<1x1xf32> to vector<2x1xf32>
    %485 = vector.shape_cast %482 : vector<1x1xf32> to vector<1x1xf32>
    %486 = vector.broadcast %485 : vector<1x1xf32> to vector<2x1xf32>
    %487 = vector.extract_strided_slice %255 {offsets = [24, 0], sizes = [2, 1], strides = [1, 1]} : vector<64x1xf32> to vector<2x1xf32>
    %cst_169 = arith.constant dense<0.000000e+00> : vector<1xf32>
    %488 = vector.multi_reduction <add>, %487, %cst_169 [0] : vector<2x1xf32> to vector<1xf32>
    %489 = vector.shape_cast %488 : vector<1xf32> to vector<1x1xf32>
    %490 = vector.extract_strided_slice %258 {offsets = [24, 0], sizes = [2, 1], strides = [1, 1]} : vector<64x1xf32> to vector<2x1xf32>
    %cst_170 = arith.constant dense<0.000000e+00> : vector<1xf32>
    %491 = vector.multi_reduction <add>, %490, %cst_170 [0] : vector<2x1xf32> to vector<1xf32>
    %492 = vector.shape_cast %491 : vector<1xf32> to vector<1x1xf32>
    %cst_171 = arith.constant 0.001953125 : f32
    %493 = vector.broadcast %cst_171 : f32 to vector<1x1xf32>
    %494 = arith.mulf %489, %493 : vector<1x1xf32>
    %cst_172 = arith.constant 0.001953125 : f32
    %495 = vector.broadcast %cst_172 : f32 to vector<1x1xf32>
    %496 = arith.mulf %492, %495 : vector<1x1xf32>
    %497 = arith.mulf %494, %494 : vector<1x1xf32>
    %498 = arith.subf %496, %497 : vector<1x1xf32>
    %cst_173 = arith.constant 9.99999974E-6 : f32
    %499 = vector.broadcast %cst_173 : f32 to vector<1x1xf32>
    %500 = arith.addf %498, %499 : vector<1x1xf32>
    %501 = math.rsqrt %500 : vector<1x1xf32>
    %502 = vector.shape_cast %494 : vector<1x1xf32> to vector<1x1xf32>
    %503 = vector.broadcast %502 : vector<1x1xf32> to vector<2x1xf32>
    %504 = vector.shape_cast %501 : vector<1x1xf32> to vector<1x1xf32>
    %505 = vector.broadcast %504 : vector<1x1xf32> to vector<2x1xf32>
    %506 = vector.extract_strided_slice %255 {offsets = [26, 0], sizes = [2, 1], strides = [1, 1]} : vector<64x1xf32> to vector<2x1xf32>
    %cst_174 = arith.constant dense<0.000000e+00> : vector<1xf32>
    %507 = vector.multi_reduction <add>, %506, %cst_174 [0] : vector<2x1xf32> to vector<1xf32>
    %508 = vector.shape_cast %507 : vector<1xf32> to vector<1x1xf32>
    %509 = vector.extract_strided_slice %258 {offsets = [26, 0], sizes = [2, 1], strides = [1, 1]} : vector<64x1xf32> to vector<2x1xf32>
    %cst_175 = arith.constant dense<0.000000e+00> : vector<1xf32>
    %510 = vector.multi_reduction <add>, %509, %cst_175 [0] : vector<2x1xf32> to vector<1xf32>
    %511 = vector.shape_cast %510 : vector<1xf32> to vector<1x1xf32>
    %cst_176 = arith.constant 0.001953125 : f32
    %512 = vector.broadcast %cst_176 : f32 to vector<1x1xf32>
    %513 = arith.mulf %508, %512 : vector<1x1xf32>
    %cst_177 = arith.constant 0.001953125 : f32
    %514 = vector.broadcast %cst_177 : f32 to vector<1x1xf32>
    %515 = arith.mulf %511, %514 : vector<1x1xf32>
    %516 = arith.mulf %513, %513 : vector<1x1xf32>
    %517 = arith.subf %515, %516 : vector<1x1xf32>
    %cst_178 = arith.constant 9.99999974E-6 : f32
    %518 = vector.broadcast %cst_178 : f32 to vector<1x1xf32>
    %519 = arith.addf %517, %518 : vector<1x1xf32>
    %520 = math.rsqrt %519 : vector<1x1xf32>
    %521 = vector.shape_cast %513 : vector<1x1xf32> to vector<1x1xf32>
    %522 = vector.broadcast %521 : vector<1x1xf32> to vector<2x1xf32>
    %523 = vector.shape_cast %520 : vector<1x1xf32> to vector<1x1xf32>
    %524 = vector.broadcast %523 : vector<1x1xf32> to vector<2x1xf32>
    %525 = vector.extract_strided_slice %255 {offsets = [28, 0], sizes = [2, 1], strides = [1, 1]} : vector<64x1xf32> to vector<2x1xf32>
    %cst_179 = arith.constant dense<0.000000e+00> : vector<1xf32>
    %526 = vector.multi_reduction <add>, %525, %cst_179 [0] : vector<2x1xf32> to vector<1xf32>
    %527 = vector.shape_cast %526 : vector<1xf32> to vector<1x1xf32>
    %528 = vector.extract_strided_slice %258 {offsets = [28, 0], sizes = [2, 1], strides = [1, 1]} : vector<64x1xf32> to vector<2x1xf32>
    %cst_180 = arith.constant dense<0.000000e+00> : vector<1xf32>
    %529 = vector.multi_reduction <add>, %528, %cst_180 [0] : vector<2x1xf32> to vector<1xf32>
    %530 = vector.shape_cast %529 : vector<1xf32> to vector<1x1xf32>
    %cst_181 = arith.constant 0.001953125 : f32
    %531 = vector.broadcast %cst_181 : f32 to vector<1x1xf32>
    %532 = arith.mulf %527, %531 : vector<1x1xf32>
    %cst_182 = arith.constant 0.001953125 : f32
    %533 = vector.broadcast %cst_182 : f32 to vector<1x1xf32>
    %534 = arith.mulf %530, %533 : vector<1x1xf32>
    %535 = arith.mulf %532, %532 : vector<1x1xf32>
    %536 = arith.subf %534, %535 : vector<1x1xf32>
    %cst_183 = arith.constant 9.99999974E-6 : f32
    %537 = vector.broadcast %cst_183 : f32 to vector<1x1xf32>
    %538 = arith.addf %536, %537 : vector<1x1xf32>
    %539 = math.rsqrt %538 : vector<1x1xf32>
    %540 = vector.shape_cast %532 : vector<1x1xf32> to vector<1x1xf32>
    %541 = vector.broadcast %540 : vector<1x1xf32> to vector<2x1xf32>
    %542 = vector.shape_cast %539 : vector<1x1xf32> to vector<1x1xf32>
    %543 = vector.broadcast %542 : vector<1x1xf32> to vector<2x1xf32>
    %544 = vector.extract_strided_slice %255 {offsets = [30, 0], sizes = [2, 1], strides = [1, 1]} : vector<64x1xf32> to vector<2x1xf32>
    %cst_184 = arith.constant dense<0.000000e+00> : vector<1xf32>
    %545 = vector.multi_reduction <add>, %544, %cst_184 [0] : vector<2x1xf32> to vector<1xf32>
    %546 = vector.shape_cast %545 : vector<1xf32> to vector<1x1xf32>
    %547 = vector.extract_strided_slice %258 {offsets = [30, 0], sizes = [2, 1], strides = [1, 1]} : vector<64x1xf32> to vector<2x1xf32>
    %cst_185 = arith.constant dense<0.000000e+00> : vector<1xf32>
    %548 = vector.multi_reduction <add>, %547, %cst_185 [0] : vector<2x1xf32> to vector<1xf32>
    %549 = vector.shape_cast %548 : vector<1xf32> to vector<1x1xf32>
    %cst_186 = arith.constant 0.001953125 : f32
    %550 = vector.broadcast %cst_186 : f32 to vector<1x1xf32>
    %551 = arith.mulf %546, %550 : vector<1x1xf32>
    %cst_187 = arith.constant 0.001953125 : f32
    %552 = vector.broadcast %cst_187 : f32 to vector<1x1xf32>
    %553 = arith.mulf %549, %552 : vector<1x1xf32>
    %554 = arith.mulf %551, %551 : vector<1x1xf32>
    %555 = arith.subf %553, %554 : vector<1x1xf32>
    %cst_188 = arith.constant 9.99999974E-6 : f32
    %556 = vector.broadcast %cst_188 : f32 to vector<1x1xf32>
    %557 = arith.addf %555, %556 : vector<1x1xf32>
    %558 = math.rsqrt %557 : vector<1x1xf32>
    %559 = vector.shape_cast %551 : vector<1x1xf32> to vector<1x1xf32>
    %560 = vector.broadcast %559 : vector<1x1xf32> to vector<2x1xf32>
    %561 = vector.shape_cast %558 : vector<1x1xf32> to vector<1x1xf32>
    %562 = vector.broadcast %561 : vector<1x1xf32> to vector<2x1xf32>
    %563 = vector.extract_strided_slice %255 {offsets = [32, 0], sizes = [2, 1], strides = [1, 1]} : vector<64x1xf32> to vector<2x1xf32>
    %cst_189 = arith.constant dense<0.000000e+00> : vector<1xf32>
    %564 = vector.multi_reduction <add>, %563, %cst_189 [0] : vector<2x1xf32> to vector<1xf32>
    %565 = vector.shape_cast %564 : vector<1xf32> to vector<1x1xf32>
    %566 = vector.extract_strided_slice %258 {offsets = [32, 0], sizes = [2, 1], strides = [1, 1]} : vector<64x1xf32> to vector<2x1xf32>
    %cst_190 = arith.constant dense<0.000000e+00> : vector<1xf32>
    %567 = vector.multi_reduction <add>, %566, %cst_190 [0] : vector<2x1xf32> to vector<1xf32>
    %568 = vector.shape_cast %567 : vector<1xf32> to vector<1x1xf32>
    %cst_191 = arith.constant 0.001953125 : f32
    %569 = vector.broadcast %cst_191 : f32 to vector<1x1xf32>
    %570 = arith.mulf %565, %569 : vector<1x1xf32>
    %cst_192 = arith.constant 0.001953125 : f32
    %571 = vector.broadcast %cst_192 : f32 to vector<1x1xf32>
    %572 = arith.mulf %568, %571 : vector<1x1xf32>
    %573 = arith.mulf %570, %570 : vector<1x1xf32>
    %574 = arith.subf %572, %573 : vector<1x1xf32>
    %cst_193 = arith.constant 9.99999974E-6 : f32
    %575 = vector.broadcast %cst_193 : f32 to vector<1x1xf32>
    %576 = arith.addf %574, %575 : vector<1x1xf32>
    %577 = math.rsqrt %576 : vector<1x1xf32>
    %578 = vector.shape_cast %570 : vector<1x1xf32> to vector<1x1xf32>
    %579 = vector.broadcast %578 : vector<1x1xf32> to vector<2x1xf32>
    %580 = vector.shape_cast %577 : vector<1x1xf32> to vector<1x1xf32>
    %581 = vector.broadcast %580 : vector<1x1xf32> to vector<2x1xf32>
    %582 = vector.extract_strided_slice %255 {offsets = [34, 0], sizes = [2, 1], strides = [1, 1]} : vector<64x1xf32> to vector<2x1xf32>
    %cst_194 = arith.constant dense<0.000000e+00> : vector<1xf32>
    %583 = vector.multi_reduction <add>, %582, %cst_194 [0] : vector<2x1xf32> to vector<1xf32>
    %584 = vector.shape_cast %583 : vector<1xf32> to vector<1x1xf32>
    %585 = vector.extract_strided_slice %258 {offsets = [34, 0], sizes = [2, 1], strides = [1, 1]} : vector<64x1xf32> to vector<2x1xf32>
    %cst_195 = arith.constant dense<0.000000e+00> : vector<1xf32>
    %586 = vector.multi_reduction <add>, %585, %cst_195 [0] : vector<2x1xf32> to vector<1xf32>
    %587 = vector.shape_cast %586 : vector<1xf32> to vector<1x1xf32>
    %cst_196 = arith.constant 0.001953125 : f32
    %588 = vector.broadcast %cst_196 : f32 to vector<1x1xf32>
    %589 = arith.mulf %584, %588 : vector<1x1xf32>
    %cst_197 = arith.constant 0.001953125 : f32
    %590 = vector.broadcast %cst_197 : f32 to vector<1x1xf32>
    %591 = arith.mulf %587, %590 : vector<1x1xf32>
    %592 = arith.mulf %589, %589 : vector<1x1xf32>
    %593 = arith.subf %591, %592 : vector<1x1xf32>
    %cst_198 = arith.constant 9.99999974E-6 : f32
    %594 = vector.broadcast %cst_198 : f32 to vector<1x1xf32>
    %595 = arith.addf %593, %594 : vector<1x1xf32>
    %596 = math.rsqrt %595 : vector<1x1xf32>
    %597 = vector.shape_cast %589 : vector<1x1xf32> to vector<1x1xf32>
    %598 = vector.broadcast %597 : vector<1x1xf32> to vector<2x1xf32>
    %599 = vector.shape_cast %596 : vector<1x1xf32> to vector<1x1xf32>
    %600 = vector.broadcast %599 : vector<1x1xf32> to vector<2x1xf32>
    %601 = vector.extract_strided_slice %255 {offsets = [36, 0], sizes = [2, 1], strides = [1, 1]} : vector<64x1xf32> to vector<2x1xf32>
    %cst_199 = arith.constant dense<0.000000e+00> : vector<1xf32>
    %602 = vector.multi_reduction <add>, %601, %cst_199 [0] : vector<2x1xf32> to vector<1xf32>
    %603 = vector.shape_cast %602 : vector<1xf32> to vector<1x1xf32>
    %604 = vector.extract_strided_slice %258 {offsets = [36, 0], sizes = [2, 1], strides = [1, 1]} : vector<64x1xf32> to vector<2x1xf32>
    %cst_200 = arith.constant dense<0.000000e+00> : vector<1xf32>
    %605 = vector.multi_reduction <add>, %604, %cst_200 [0] : vector<2x1xf32> to vector<1xf32>
    %606 = vector.shape_cast %605 : vector<1xf32> to vector<1x1xf32>
    %cst_201 = arith.constant 0.001953125 : f32
    %607 = vector.broadcast %cst_201 : f32 to vector<1x1xf32>
    %608 = arith.mulf %603, %607 : vector<1x1xf32>
    %cst_202 = arith.constant 0.001953125 : f32
    %609 = vector.broadcast %cst_202 : f32 to vector<1x1xf32>
    %610 = arith.mulf %606, %609 : vector<1x1xf32>
    %611 = arith.mulf %608, %608 : vector<1x1xf32>
    %612 = arith.subf %610, %611 : vector<1x1xf32>
    %cst_203 = arith.constant 9.99999974E-6 : f32
    %613 = vector.broadcast %cst_203 : f32 to vector<1x1xf32>
    %614 = arith.addf %612, %613 : vector<1x1xf32>
    %615 = math.rsqrt %614 : vector<1x1xf32>
    %616 = vector.shape_cast %608 : vector<1x1xf32> to vector<1x1xf32>
    %617 = vector.broadcast %616 : vector<1x1xf32> to vector<2x1xf32>
    %618 = vector.shape_cast %615 : vector<1x1xf32> to vector<1x1xf32>
    %619 = vector.broadcast %618 : vector<1x1xf32> to vector<2x1xf32>
    %620 = vector.extract_strided_slice %255 {offsets = [38, 0], sizes = [2, 1], strides = [1, 1]} : vector<64x1xf32> to vector<2x1xf32>
    %cst_204 = arith.constant dense<0.000000e+00> : vector<1xf32>
    %621 = vector.multi_reduction <add>, %620, %cst_204 [0] : vector<2x1xf32> to vector<1xf32>
    %622 = vector.shape_cast %621 : vector<1xf32> to vector<1x1xf32>
    %623 = vector.extract_strided_slice %258 {offsets = [38, 0], sizes = [2, 1], strides = [1, 1]} : vector<64x1xf32> to vector<2x1xf32>
    %cst_205 = arith.constant dense<0.000000e+00> : vector<1xf32>
    %624 = vector.multi_reduction <add>, %623, %cst_205 [0] : vector<2x1xf32> to vector<1xf32>
    %625 = vector.shape_cast %624 : vector<1xf32> to vector<1x1xf32>
    %cst_206 = arith.constant 0.001953125 : f32
    %626 = vector.broadcast %cst_206 : f32 to vector<1x1xf32>
    %627 = arith.mulf %622, %626 : vector<1x1xf32>
    %cst_207 = arith.constant 0.001953125 : f32
    %628 = vector.broadcast %cst_207 : f32 to vector<1x1xf32>
    %629 = arith.mulf %625, %628 : vector<1x1xf32>
    %630 = arith.mulf %627, %627 : vector<1x1xf32>
    %631 = arith.subf %629, %630 : vector<1x1xf32>
    %cst_208 = arith.constant 9.99999974E-6 : f32
    %632 = vector.broadcast %cst_208 : f32 to vector<1x1xf32>
    %633 = arith.addf %631, %632 : vector<1x1xf32>
    %634 = math.rsqrt %633 : vector<1x1xf32>
    %635 = vector.shape_cast %627 : vector<1x1xf32> to vector<1x1xf32>
    %636 = vector.broadcast %635 : vector<1x1xf32> to vector<2x1xf32>
    %637 = vector.shape_cast %634 : vector<1x1xf32> to vector<1x1xf32>
    %638 = vector.broadcast %637 : vector<1x1xf32> to vector<2x1xf32>
    %639 = vector.extract_strided_slice %255 {offsets = [40, 0], sizes = [2, 1], strides = [1, 1]} : vector<64x1xf32> to vector<2x1xf32>
    %cst_209 = arith.constant dense<0.000000e+00> : vector<1xf32>
    %640 = vector.multi_reduction <add>, %639, %cst_209 [0] : vector<2x1xf32> to vector<1xf32>
    %641 = vector.shape_cast %640 : vector<1xf32> to vector<1x1xf32>
    %642 = vector.extract_strided_slice %258 {offsets = [40, 0], sizes = [2, 1], strides = [1, 1]} : vector<64x1xf32> to vector<2x1xf32>
    %cst_210 = arith.constant dense<0.000000e+00> : vector<1xf32>
    %643 = vector.multi_reduction <add>, %642, %cst_210 [0] : vector<2x1xf32> to vector<1xf32>
    %644 = vector.shape_cast %643 : vector<1xf32> to vector<1x1xf32>
    %cst_211 = arith.constant 0.001953125 : f32
    %645 = vector.broadcast %cst_211 : f32 to vector<1x1xf32>
    %646 = arith.mulf %641, %645 : vector<1x1xf32>
    %cst_212 = arith.constant 0.001953125 : f32
    %647 = vector.broadcast %cst_212 : f32 to vector<1x1xf32>
    %648 = arith.mulf %644, %647 : vector<1x1xf32>
    %649 = arith.mulf %646, %646 : vector<1x1xf32>
    %650 = arith.subf %648, %649 : vector<1x1xf32>
    %cst_213 = arith.constant 9.99999974E-6 : f32
    %651 = vector.broadcast %cst_213 : f32 to vector<1x1xf32>
    %652 = arith.addf %650, %651 : vector<1x1xf32>
    %653 = math.rsqrt %652 : vector<1x1xf32>
    %654 = vector.shape_cast %646 : vector<1x1xf32> to vector<1x1xf32>
    %655 = vector.broadcast %654 : vector<1x1xf32> to vector<2x1xf32>
    %656 = vector.shape_cast %653 : vector<1x1xf32> to vector<1x1xf32>
    %657 = vector.broadcast %656 : vector<1x1xf32> to vector<2x1xf32>
    %658 = vector.extract_strided_slice %255 {offsets = [42, 0], sizes = [2, 1], strides = [1, 1]} : vector<64x1xf32> to vector<2x1xf32>
    %cst_214 = arith.constant dense<0.000000e+00> : vector<1xf32>
    %659 = vector.multi_reduction <add>, %658, %cst_214 [0] : vector<2x1xf32> to vector<1xf32>
    %660 = vector.shape_cast %659 : vector<1xf32> to vector<1x1xf32>
    %661 = vector.extract_strided_slice %258 {offsets = [42, 0], sizes = [2, 1], strides = [1, 1]} : vector<64x1xf32> to vector<2x1xf32>
    %cst_215 = arith.constant dense<0.000000e+00> : vector<1xf32>
    %662 = vector.multi_reduction <add>, %661, %cst_215 [0] : vector<2x1xf32> to vector<1xf32>
    %663 = vector.shape_cast %662 : vector<1xf32> to vector<1x1xf32>
    %cst_216 = arith.constant 0.001953125 : f32
    %664 = vector.broadcast %cst_216 : f32 to vector<1x1xf32>
    %665 = arith.mulf %660, %664 : vector<1x1xf32>
    %cst_217 = arith.constant 0.001953125 : f32
    %666 = vector.broadcast %cst_217 : f32 to vector<1x1xf32>
    %667 = arith.mulf %663, %666 : vector<1x1xf32>
    %668 = arith.mulf %665, %665 : vector<1x1xf32>
    %669 = arith.subf %667, %668 : vector<1x1xf32>
    %cst_218 = arith.constant 9.99999974E-6 : f32
    %670 = vector.broadcast %cst_218 : f32 to vector<1x1xf32>
    %671 = arith.addf %669, %670 : vector<1x1xf32>
    %672 = math.rsqrt %671 : vector<1x1xf32>
    %673 = vector.shape_cast %665 : vector<1x1xf32> to vector<1x1xf32>
    %674 = vector.broadcast %673 : vector<1x1xf32> to vector<2x1xf32>
    %675 = vector.shape_cast %672 : vector<1x1xf32> to vector<1x1xf32>
    %676 = vector.broadcast %675 : vector<1x1xf32> to vector<2x1xf32>
    %677 = vector.extract_strided_slice %255 {offsets = [44, 0], sizes = [2, 1], strides = [1, 1]} : vector<64x1xf32> to vector<2x1xf32>
    %cst_219 = arith.constant dense<0.000000e+00> : vector<1xf32>
    %678 = vector.multi_reduction <add>, %677, %cst_219 [0] : vector<2x1xf32> to vector<1xf32>
    %679 = vector.shape_cast %678 : vector<1xf32> to vector<1x1xf32>
    %680 = vector.extract_strided_slice %258 {offsets = [44, 0], sizes = [2, 1], strides = [1, 1]} : vector<64x1xf32> to vector<2x1xf32>
    %cst_220 = arith.constant dense<0.000000e+00> : vector<1xf32>
    %681 = vector.multi_reduction <add>, %680, %cst_220 [0] : vector<2x1xf32> to vector<1xf32>
    %682 = vector.shape_cast %681 : vector<1xf32> to vector<1x1xf32>
    %cst_221 = arith.constant 0.001953125 : f32
    %683 = vector.broadcast %cst_221 : f32 to vector<1x1xf32>
    %684 = arith.mulf %679, %683 : vector<1x1xf32>
    %cst_222 = arith.constant 0.001953125 : f32
    %685 = vector.broadcast %cst_222 : f32 to vector<1x1xf32>
    %686 = arith.mulf %682, %685 : vector<1x1xf32>
    %687 = arith.mulf %684, %684 : vector<1x1xf32>
    %688 = arith.subf %686, %687 : vector<1x1xf32>
    %cst_223 = arith.constant 9.99999974E-6 : f32
    %689 = vector.broadcast %cst_223 : f32 to vector<1x1xf32>
    %690 = arith.addf %688, %689 : vector<1x1xf32>
    %691 = math.rsqrt %690 : vector<1x1xf32>
    %692 = vector.shape_cast %684 : vector<1x1xf32> to vector<1x1xf32>
    %693 = vector.broadcast %692 : vector<1x1xf32> to vector<2x1xf32>
    %694 = vector.shape_cast %691 : vector<1x1xf32> to vector<1x1xf32>
    %695 = vector.broadcast %694 : vector<1x1xf32> to vector<2x1xf32>
    %696 = vector.extract_strided_slice %255 {offsets = [46, 0], sizes = [2, 1], strides = [1, 1]} : vector<64x1xf32> to vector<2x1xf32>
    %cst_224 = arith.constant dense<0.000000e+00> : vector<1xf32>
    %697 = vector.multi_reduction <add>, %696, %cst_224 [0] : vector<2x1xf32> to vector<1xf32>
    %698 = vector.shape_cast %697 : vector<1xf32> to vector<1x1xf32>
    %699 = vector.extract_strided_slice %258 {offsets = [46, 0], sizes = [2, 1], strides = [1, 1]} : vector<64x1xf32> to vector<2x1xf32>
    %cst_225 = arith.constant dense<0.000000e+00> : vector<1xf32>
    %700 = vector.multi_reduction <add>, %699, %cst_225 [0] : vector<2x1xf32> to vector<1xf32>
    %701 = vector.shape_cast %700 : vector<1xf32> to vector<1x1xf32>
    %cst_226 = arith.constant 0.001953125 : f32
    %702 = vector.broadcast %cst_226 : f32 to vector<1x1xf32>
    %703 = arith.mulf %698, %702 : vector<1x1xf32>
    %cst_227 = arith.constant 0.001953125 : f32
    %704 = vector.broadcast %cst_227 : f32 to vector<1x1xf32>
    %705 = arith.mulf %701, %704 : vector<1x1xf32>
    %706 = arith.mulf %703, %703 : vector<1x1xf32>
    %707 = arith.subf %705, %706 : vector<1x1xf32>
    %cst_228 = arith.constant 9.99999974E-6 : f32
    %708 = vector.broadcast %cst_228 : f32 to vector<1x1xf32>
    %709 = arith.addf %707, %708 : vector<1x1xf32>
    %710 = math.rsqrt %709 : vector<1x1xf32>
    %711 = vector.shape_cast %703 : vector<1x1xf32> to vector<1x1xf32>
    %712 = vector.broadcast %711 : vector<1x1xf32> to vector<2x1xf32>
    %713 = vector.shape_cast %710 : vector<1x1xf32> to vector<1x1xf32>
    %714 = vector.broadcast %713 : vector<1x1xf32> to vector<2x1xf32>
    %715 = vector.extract_strided_slice %255 {offsets = [48, 0], sizes = [2, 1], strides = [1, 1]} : vector<64x1xf32> to vector<2x1xf32>
    %cst_229 = arith.constant dense<0.000000e+00> : vector<1xf32>
    %716 = vector.multi_reduction <add>, %715, %cst_229 [0] : vector<2x1xf32> to vector<1xf32>
    %717 = vector.shape_cast %716 : vector<1xf32> to vector<1x1xf32>
    %718 = vector.extract_strided_slice %258 {offsets = [48, 0], sizes = [2, 1], strides = [1, 1]} : vector<64x1xf32> to vector<2x1xf32>
    %cst_230 = arith.constant dense<0.000000e+00> : vector<1xf32>
    %719 = vector.multi_reduction <add>, %718, %cst_230 [0] : vector<2x1xf32> to vector<1xf32>
    %720 = vector.shape_cast %719 : vector<1xf32> to vector<1x1xf32>
    %cst_231 = arith.constant 0.001953125 : f32
    %721 = vector.broadcast %cst_231 : f32 to vector<1x1xf32>
    %722 = arith.mulf %717, %721 : vector<1x1xf32>
    %cst_232 = arith.constant 0.001953125 : f32
    %723 = vector.broadcast %cst_232 : f32 to vector<1x1xf32>
    %724 = arith.mulf %720, %723 : vector<1x1xf32>
    %725 = arith.mulf %722, %722 : vector<1x1xf32>
    %726 = arith.subf %724, %725 : vector<1x1xf32>
    %cst_233 = arith.constant 9.99999974E-6 : f32
    %727 = vector.broadcast %cst_233 : f32 to vector<1x1xf32>
    %728 = arith.addf %726, %727 : vector<1x1xf32>
    %729 = math.rsqrt %728 : vector<1x1xf32>
    %730 = vector.shape_cast %722 : vector<1x1xf32> to vector<1x1xf32>
    %731 = vector.broadcast %730 : vector<1x1xf32> to vector<2x1xf32>
    %732 = vector.shape_cast %729 : vector<1x1xf32> to vector<1x1xf32>
    %733 = vector.broadcast %732 : vector<1x1xf32> to vector<2x1xf32>
    %734 = vector.extract_strided_slice %255 {offsets = [50, 0], sizes = [2, 1], strides = [1, 1]} : vector<64x1xf32> to vector<2x1xf32>
    %cst_234 = arith.constant dense<0.000000e+00> : vector<1xf32>
    %735 = vector.multi_reduction <add>, %734, %cst_234 [0] : vector<2x1xf32> to vector<1xf32>
    %736 = vector.shape_cast %735 : vector<1xf32> to vector<1x1xf32>
    %737 = vector.extract_strided_slice %258 {offsets = [50, 0], sizes = [2, 1], strides = [1, 1]} : vector<64x1xf32> to vector<2x1xf32>
    %cst_235 = arith.constant dense<0.000000e+00> : vector<1xf32>
    %738 = vector.multi_reduction <add>, %737, %cst_235 [0] : vector<2x1xf32> to vector<1xf32>
    %739 = vector.shape_cast %738 : vector<1xf32> to vector<1x1xf32>
    %cst_236 = arith.constant 0.001953125 : f32
    %740 = vector.broadcast %cst_236 : f32 to vector<1x1xf32>
    %741 = arith.mulf %736, %740 : vector<1x1xf32>
    %cst_237 = arith.constant 0.001953125 : f32
    %742 = vector.broadcast %cst_237 : f32 to vector<1x1xf32>
    %743 = arith.mulf %739, %742 : vector<1x1xf32>
    %744 = arith.mulf %741, %741 : vector<1x1xf32>
    %745 = arith.subf %743, %744 : vector<1x1xf32>
    %cst_238 = arith.constant 9.99999974E-6 : f32
    %746 = vector.broadcast %cst_238 : f32 to vector<1x1xf32>
    %747 = arith.addf %745, %746 : vector<1x1xf32>
    %748 = math.rsqrt %747 : vector<1x1xf32>
    %749 = vector.shape_cast %741 : vector<1x1xf32> to vector<1x1xf32>
    %750 = vector.broadcast %749 : vector<1x1xf32> to vector<2x1xf32>
    %751 = vector.shape_cast %748 : vector<1x1xf32> to vector<1x1xf32>
    %752 = vector.broadcast %751 : vector<1x1xf32> to vector<2x1xf32>
    %753 = vector.extract_strided_slice %255 {offsets = [52, 0], sizes = [2, 1], strides = [1, 1]} : vector<64x1xf32> to vector<2x1xf32>
    %cst_239 = arith.constant dense<0.000000e+00> : vector<1xf32>
    %754 = vector.multi_reduction <add>, %753, %cst_239 [0] : vector<2x1xf32> to vector<1xf32>
    %755 = vector.shape_cast %754 : vector<1xf32> to vector<1x1xf32>
    %756 = vector.extract_strided_slice %258 {offsets = [52, 0], sizes = [2, 1], strides = [1, 1]} : vector<64x1xf32> to vector<2x1xf32>
    %cst_240 = arith.constant dense<0.000000e+00> : vector<1xf32>
    %757 = vector.multi_reduction <add>, %756, %cst_240 [0] : vector<2x1xf32> to vector<1xf32>
    %758 = vector.shape_cast %757 : vector<1xf32> to vector<1x1xf32>
    %cst_241 = arith.constant 0.001953125 : f32
    %759 = vector.broadcast %cst_241 : f32 to vector<1x1xf32>
    %760 = arith.mulf %755, %759 : vector<1x1xf32>
    %cst_242 = arith.constant 0.001953125 : f32
    %761 = vector.broadcast %cst_242 : f32 to vector<1x1xf32>
    %762 = arith.mulf %758, %761 : vector<1x1xf32>
    %763 = arith.mulf %760, %760 : vector<1x1xf32>
    %764 = arith.subf %762, %763 : vector<1x1xf32>
    %cst_243 = arith.constant 9.99999974E-6 : f32
    %765 = vector.broadcast %cst_243 : f32 to vector<1x1xf32>
    %766 = arith.addf %764, %765 : vector<1x1xf32>
    %767 = math.rsqrt %766 : vector<1x1xf32>
    %768 = vector.shape_cast %760 : vector<1x1xf32> to vector<1x1xf32>
    %769 = vector.broadcast %768 : vector<1x1xf32> to vector<2x1xf32>
    %770 = vector.shape_cast %767 : vector<1x1xf32> to vector<1x1xf32>
    %771 = vector.broadcast %770 : vector<1x1xf32> to vector<2x1xf32>
    %772 = vector.extract_strided_slice %255 {offsets = [54, 0], sizes = [2, 1], strides = [1, 1]} : vector<64x1xf32> to vector<2x1xf32>
    %cst_244 = arith.constant dense<0.000000e+00> : vector<1xf32>
    %773 = vector.multi_reduction <add>, %772, %cst_244 [0] : vector<2x1xf32> to vector<1xf32>
    %774 = vector.shape_cast %773 : vector<1xf32> to vector<1x1xf32>
    %775 = vector.extract_strided_slice %258 {offsets = [54, 0], sizes = [2, 1], strides = [1, 1]} : vector<64x1xf32> to vector<2x1xf32>
    %cst_245 = arith.constant dense<0.000000e+00> : vector<1xf32>
    %776 = vector.multi_reduction <add>, %775, %cst_245 [0] : vector<2x1xf32> to vector<1xf32>
    %777 = vector.shape_cast %776 : vector<1xf32> to vector<1x1xf32>
    %cst_246 = arith.constant 0.001953125 : f32
    %778 = vector.broadcast %cst_246 : f32 to vector<1x1xf32>
    %779 = arith.mulf %774, %778 : vector<1x1xf32>
    %cst_247 = arith.constant 0.001953125 : f32
    %780 = vector.broadcast %cst_247 : f32 to vector<1x1xf32>
    %781 = arith.mulf %777, %780 : vector<1x1xf32>
    %782 = arith.mulf %779, %779 : vector<1x1xf32>
    %783 = arith.subf %781, %782 : vector<1x1xf32>
    %cst_248 = arith.constant 9.99999974E-6 : f32
    %784 = vector.broadcast %cst_248 : f32 to vector<1x1xf32>
    %785 = arith.addf %783, %784 : vector<1x1xf32>
    %786 = math.rsqrt %785 : vector<1x1xf32>
    %787 = vector.shape_cast %779 : vector<1x1xf32> to vector<1x1xf32>
    %788 = vector.broadcast %787 : vector<1x1xf32> to vector<2x1xf32>
    %789 = vector.shape_cast %786 : vector<1x1xf32> to vector<1x1xf32>
    %790 = vector.broadcast %789 : vector<1x1xf32> to vector<2x1xf32>
    %791 = vector.extract_strided_slice %255 {offsets = [56, 0], sizes = [2, 1], strides = [1, 1]} : vector<64x1xf32> to vector<2x1xf32>
    %cst_249 = arith.constant dense<0.000000e+00> : vector<1xf32>
    %792 = vector.multi_reduction <add>, %791, %cst_249 [0] : vector<2x1xf32> to vector<1xf32>
    %793 = vector.shape_cast %792 : vector<1xf32> to vector<1x1xf32>
    %794 = vector.extract_strided_slice %258 {offsets = [56, 0], sizes = [2, 1], strides = [1, 1]} : vector<64x1xf32> to vector<2x1xf32>
    %cst_250 = arith.constant dense<0.000000e+00> : vector<1xf32>
    %795 = vector.multi_reduction <add>, %794, %cst_250 [0] : vector<2x1xf32> to vector<1xf32>
    %796 = vector.shape_cast %795 : vector<1xf32> to vector<1x1xf32>
    %cst_251 = arith.constant 0.001953125 : f32
    %797 = vector.broadcast %cst_251 : f32 to vector<1x1xf32>
    %798 = arith.mulf %793, %797 : vector<1x1xf32>
    %cst_252 = arith.constant 0.001953125 : f32
    %799 = vector.broadcast %cst_252 : f32 to vector<1x1xf32>
    %800 = arith.mulf %796, %799 : vector<1x1xf32>
    %801 = arith.mulf %798, %798 : vector<1x1xf32>
    %802 = arith.subf %800, %801 : vector<1x1xf32>
    %cst_253 = arith.constant 9.99999974E-6 : f32
    %803 = vector.broadcast %cst_253 : f32 to vector<1x1xf32>
    %804 = arith.addf %802, %803 : vector<1x1xf32>
    %805 = math.rsqrt %804 : vector<1x1xf32>
    %806 = vector.shape_cast %798 : vector<1x1xf32> to vector<1x1xf32>
    %807 = vector.broadcast %806 : vector<1x1xf32> to vector<2x1xf32>
    %808 = vector.shape_cast %805 : vector<1x1xf32> to vector<1x1xf32>
    %809 = vector.broadcast %808 : vector<1x1xf32> to vector<2x1xf32>
    %810 = vector.extract_strided_slice %255 {offsets = [58, 0], sizes = [2, 1], strides = [1, 1]} : vector<64x1xf32> to vector<2x1xf32>
    %cst_254 = arith.constant dense<0.000000e+00> : vector<1xf32>
    %811 = vector.multi_reduction <add>, %810, %cst_254 [0] : vector<2x1xf32> to vector<1xf32>
    %812 = vector.shape_cast %811 : vector<1xf32> to vector<1x1xf32>
    %813 = vector.extract_strided_slice %258 {offsets = [58, 0], sizes = [2, 1], strides = [1, 1]} : vector<64x1xf32> to vector<2x1xf32>
    %cst_255 = arith.constant dense<0.000000e+00> : vector<1xf32>
    %814 = vector.multi_reduction <add>, %813, %cst_255 [0] : vector<2x1xf32> to vector<1xf32>
    %815 = vector.shape_cast %814 : vector<1xf32> to vector<1x1xf32>
    %cst_256 = arith.constant 0.001953125 : f32
    %816 = vector.broadcast %cst_256 : f32 to vector<1x1xf32>
    %817 = arith.mulf %812, %816 : vector<1x1xf32>
    %cst_257 = arith.constant 0.001953125 : f32
    %818 = vector.broadcast %cst_257 : f32 to vector<1x1xf32>
    %819 = arith.mulf %815, %818 : vector<1x1xf32>
    %820 = arith.mulf %817, %817 : vector<1x1xf32>
    %821 = arith.subf %819, %820 : vector<1x1xf32>
    %cst_258 = arith.constant 9.99999974E-6 : f32
    %822 = vector.broadcast %cst_258 : f32 to vector<1x1xf32>
    %823 = arith.addf %821, %822 : vector<1x1xf32>
    %824 = math.rsqrt %823 : vector<1x1xf32>
    %825 = vector.shape_cast %817 : vector<1x1xf32> to vector<1x1xf32>
    %826 = vector.broadcast %825 : vector<1x1xf32> to vector<2x1xf32>
    %827 = vector.shape_cast %824 : vector<1x1xf32> to vector<1x1xf32>
    %828 = vector.broadcast %827 : vector<1x1xf32> to vector<2x1xf32>
    %829 = vector.extract_strided_slice %255 {offsets = [60, 0], sizes = [2, 1], strides = [1, 1]} : vector<64x1xf32> to vector<2x1xf32>
    %cst_259 = arith.constant dense<0.000000e+00> : vector<1xf32>
    %830 = vector.multi_reduction <add>, %829, %cst_259 [0] : vector<2x1xf32> to vector<1xf32>
    %831 = vector.shape_cast %830 : vector<1xf32> to vector<1x1xf32>
    %832 = vector.extract_strided_slice %258 {offsets = [60, 0], sizes = [2, 1], strides = [1, 1]} : vector<64x1xf32> to vector<2x1xf32>
    %cst_260 = arith.constant dense<0.000000e+00> : vector<1xf32>
    %833 = vector.multi_reduction <add>, %832, %cst_260 [0] : vector<2x1xf32> to vector<1xf32>
    %834 = vector.shape_cast %833 : vector<1xf32> to vector<1x1xf32>
    %cst_261 = arith.constant 0.001953125 : f32
    %835 = vector.broadcast %cst_261 : f32 to vector<1x1xf32>
    %836 = arith.mulf %831, %835 : vector<1x1xf32>
    %cst_262 = arith.constant 0.001953125 : f32
    %837 = vector.broadcast %cst_262 : f32 to vector<1x1xf32>
    %838 = arith.mulf %834, %837 : vector<1x1xf32>
    %839 = arith.mulf %836, %836 : vector<1x1xf32>
    %840 = arith.subf %838, %839 : vector<1x1xf32>
    %cst_263 = arith.constant 9.99999974E-6 : f32
    %841 = vector.broadcast %cst_263 : f32 to vector<1x1xf32>
    %842 = arith.addf %840, %841 : vector<1x1xf32>
    %843 = math.rsqrt %842 : vector<1x1xf32>
    %844 = vector.shape_cast %836 : vector<1x1xf32> to vector<1x1xf32>
    %845 = vector.broadcast %844 : vector<1x1xf32> to vector<2x1xf32>
    %846 = vector.shape_cast %843 : vector<1x1xf32> to vector<1x1xf32>
    %847 = vector.broadcast %846 : vector<1x1xf32> to vector<2x1xf32>
    %848 = vector.extract_strided_slice %255 {offsets = [62, 0], sizes = [2, 1], strides = [1, 1]} : vector<64x1xf32> to vector<2x1xf32>
    %cst_264 = arith.constant dense<0.000000e+00> : vector<1xf32>
    %849 = vector.multi_reduction <add>, %848, %cst_264 [0] : vector<2x1xf32> to vector<1xf32>
    %850 = vector.shape_cast %849 : vector<1xf32> to vector<1x1xf32>
    %851 = vector.extract_strided_slice %258 {offsets = [62, 0], sizes = [2, 1], strides = [1, 1]} : vector<64x1xf32> to vector<2x1xf32>
    %cst_265 = arith.constant dense<0.000000e+00> : vector<1xf32>
    %852 = vector.multi_reduction <add>, %851, %cst_265 [0] : vector<2x1xf32> to vector<1xf32>
    %853 = vector.shape_cast %852 : vector<1xf32> to vector<1x1xf32>
    %cst_266 = arith.constant 0.001953125 : f32
    %854 = vector.broadcast %cst_266 : f32 to vector<1x1xf32>
    %855 = arith.mulf %850, %854 : vector<1x1xf32>
    %cst_267 = arith.constant 0.001953125 : f32
    %856 = vector.broadcast %cst_267 : f32 to vector<1x1xf32>
    %857 = arith.mulf %853, %856 : vector<1x1xf32>
    %858 = arith.mulf %855, %855 : vector<1x1xf32>
    %859 = arith.subf %857, %858 : vector<1x1xf32>
    %cst_268 = arith.constant 9.99999974E-6 : f32
    %860 = vector.broadcast %cst_268 : f32 to vector<1x1xf32>
    %861 = arith.addf %859, %860 : vector<1x1xf32>
    %862 = math.rsqrt %861 : vector<1x1xf32>
    %863 = vector.shape_cast %855 : vector<1x1xf32> to vector<1x1xf32>
    %864 = vector.broadcast %863 : vector<1x1xf32> to vector<2x1xf32>
    %865 = vector.shape_cast %862 : vector<1x1xf32> to vector<1x1xf32>
    %866 = vector.broadcast %865 : vector<1x1xf32> to vector<2x1xf32>
    %867 = tpu.concatenate %275, %294, %313, %332, %351, %370, %389, %408, %427, %446, %465, %484, %503, %522, %541, %560 in 0 : vector<2x1xf32>, vector<2x1xf32>, vector<2x1xf32>, vector<2x1xf32>, vector<2x1xf32>, vector<2x1xf32>, vector<2x1xf32>, vector<2x1xf32>, vector<2x1xf32>, vector<2x1xf32>, vector<2x1xf32>, vector<2x1xf32>, vector<2x1xf32>, vector<2x1xf32>, vector<2x1xf32>, vector<2x1xf32> -> vector<32x1xf32>
    %868 = tpu.concatenate %579, %598, %617, %636, %655, %674, %693, %712, %731, %750, %769, %788, %807, %826, %845, %864 in 0 : vector<2x1xf32>, vector<2x1xf32>, vector<2x1xf32>, vector<2x1xf32>, vector<2x1xf32>, vector<2x1xf32>, vector<2x1xf32>, vector<2x1xf32>, vector<2x1xf32>, vector<2x1xf32>, vector<2x1xf32>, vector<2x1xf32>, vector<2x1xf32>, vector<2x1xf32>, vector<2x1xf32>, vector<2x1xf32> -> vector<32x1xf32>
    %869 = tpu.concatenate %867, %868 in 0 : vector<32x1xf32>, vector<32x1xf32> -> vector<64x1xf32>
    %870 = tpu.concatenate %277, %296, %315, %334, %353, %372, %391, %410, %429, %448, %467, %486, %505, %524, %543, %562 in 0 : vector<2x1xf32>, vector<2x1xf32>, vector<2x1xf32>, vector<2x1xf32>, vector<2x1xf32>, vector<2x1xf32>, vector<2x1xf32>, vector<2x1xf32>, vector<2x1xf32>, vector<2x1xf32>, vector<2x1xf32>, vector<2x1xf32>, vector<2x1xf32>, vector<2x1xf32>, vector<2x1xf32>, vector<2x1xf32> -> vector<32x1xf32>
    %871 = tpu.concatenate %581, %600, %619, %638, %657, %676, %695, %714, %733, %752, %771, %790, %809, %828, %847, %866 in 0 : vector<2x1xf32>, vector<2x1xf32>, vector<2x1xf32>, vector<2x1xf32>, vector<2x1xf32>, vector<2x1xf32>, vector<2x1xf32>, vector<2x1xf32>, vector<2x1xf32>, vector<2x1xf32>, vector<2x1xf32>, vector<2x1xf32>, vector<2x1xf32>, vector<2x1xf32>, vector<2x1xf32>, vector<2x1xf32> -> vector<32x1xf32>
    %872 = tpu.concatenate %870, %871 in 0 : vector<32x1xf32>, vector<32x1xf32> -> vector<64x1xf32>
    %873 = vector.broadcast %869 : vector<64x1xf32> to vector<64x256xf32>
    %874 = arith.subf %251, %873 : vector<64x256xf32>
    %875 = vector.broadcast %872 : vector<64x1xf32> to vector<64x256xf32>
    %876 = arith.mulf %874, %875 : vector<64x256xf32>
    %877 = vector.broadcast %252 : vector<64x1xf32> to vector<64x256xf32>
    %878 = arith.mulf %876, %877 : vector<64x256xf32>
    %879 = vector.broadcast %253 : vector<64x1xf32> to vector<64x256xf32>
    %880 = arith.addf %878, %879 : vector<64x256xf32>
    %cst_269 = arith.constant 0.000000e+00 : f32
    %881 = vector.broadcast %cst_269 : f32 to vector<64x256xf32>
    %cst_270 = arith.constant 0.000000e+00 : f32
    %882 = vector.broadcast %cst_270 : f32 to vector<64x17xf32>
    %883 = vector.extract_strided_slice %880 {offsets = [0, 0], sizes = [64, 239], strides = [1, 1]} : vector<64x256xf32> to vector<64x239xf32>
    %884 = tpu.concatenate %882, %883 in 1 : vector<64x17xf32>, vector<64x239xf32> -> vector<64x256xf32>
    %885 = tpu.iota {dimensions = array<i32: 1>} : vector<1x256xi32>
    %c16_i32_271 = arith.constant 16 : i32
    %c0_i32_272 = arith.constant 0 : i32
    %886 = arith.cmpi eq, %c16_i32_271, %c0_i32_272 : i32
    %c1_i32_273 = arith.constant 1 : i32
    %887 = arith.select %886, %c1_i32_273, %c16_i32_271 : i32
    %888 = vector.broadcast %887 : i32 to vector<1x256xi32>
    %889 = arith.remsi %885, %888 : vector<1x256xi32>
    %c0_i32_274 = arith.constant 0 : i32
    %890 = vector.broadcast %c0_i32_274 : i32 to vector<1x256xi32>
    %891 = arith.cmpi ne, %889, %890 : vector<1x256xi32>
    %c0_i32_275 = arith.constant 0 : i32
    %892 = vector.broadcast %c0_i32_275 : i32 to vector<1x256xi32>
    %893 = arith.cmpi slt, %889, %892 : vector<1x256xi32>
    %c0_i32_276 = arith.constant 0 : i32
    %894 = arith.cmpi slt, %887, %c0_i32_276 : i32
    %895 = vector.broadcast %894 : i1 to vector<1x256xi1>
    %896 = vector.broadcast %895 : vector<1x256xi1> to vector<1x256xi1>
    %897 = arith.xori %893, %896 : vector<1x256xi1>
    %898 = arith.andi %897, %891 : vector<1x256xi1>
    %899 = vector.broadcast %887 : i32 to vector<1x256xi32>
    %900 = arith.addi %889, %899 : vector<1x256xi32>
    %901 = arith.select %898, %900, %889 : vector<1x256xi1>, vector<1x256xi32>
    %c1_i32_277 = arith.constant 1 : i32
    %902 = vector.broadcast %c1_i32_277 : i32 to vector<1x256xi32>
    %903 = arith.cmpi sge, %901, %902 : vector<1x256xi32>
    %cst_278 = arith.constant 0.000000e+00 : f32
    %904 = vector.broadcast %cst_278 : f32 to vector<64x256xf32>
    %905 = vector.shape_cast %903 : vector<1x256xi1> to vector<1x256xi1>
    %906 = vector.broadcast %905 : vector<1x256xi1> to vector<64x256xi1>
    %907 = arith.select %906, %884, %904 : vector<64x256xi1>, vector<64x256xf32>
    %908 = arith.truncf %907 : vector<64x256xf32> to vector<64x256xbf16>
    %c0_279 = arith.constant 0 : index
    %c0_280 = arith.constant 0 : index
    %c0_281 = arith.constant 0 : index
    %909 = vector.load %arg5[%c0_279, %c0_280, %c0_281] : memref<9x64x64xbf16, #tpu.memory_space<vmem>>, vector<1x64x64xbf16>
    %910 = vector.shape_cast %909 : vector<1x64x64xbf16> to vector<64x64xbf16>
    %cst_282 = arith.constant dense<0.000000e+00> : vector<64x256xf32>
    %911 = tpu.matmul %910, %908, %cst_282 {dimension_numbers = #tpu.dot_dimension_numbers<[1], [0], [0], [1], [0, 0, 1, 1], [], []>} : vector<64x64xbf16>, vector<64x256xbf16>, vector<64x256xf32> -> vector<64x256xf32>
    %912 = arith.addf %881, %911 : vector<64x256xf32>
    %cst_283 = arith.constant 0.000000e+00 : f32
    %913 = vector.broadcast %cst_283 : f32 to vector<64x16xf32>
    %914 = vector.extract_strided_slice %880 {offsets = [0, 0], sizes = [64, 240], strides = [1, 1]} : vector<64x256xf32> to vector<64x240xf32>
    %915 = tpu.concatenate %913, %914 in 1 : vector<64x16xf32>, vector<64x240xf32> -> vector<64x256xf32>
    %916 = arith.truncf %915 : vector<64x256xf32> to vector<64x256xbf16>
    %c1_284 = arith.constant 1 : index
    %c0_285 = arith.constant 0 : index
    %c0_286 = arith.constant 0 : index
    %917 = vector.load %arg5[%c1_284, %c0_285, %c0_286] : memref<9x64x64xbf16, #tpu.memory_space<vmem>>, vector<1x64x64xbf16>
    %918 = vector.shape_cast %917 : vector<1x64x64xbf16> to vector<64x64xbf16>
    %cst_287 = arith.constant dense<0.000000e+00> : vector<64x256xf32>
    %919 = tpu.matmul %918, %916, %cst_287 {dimension_numbers = #tpu.dot_dimension_numbers<[1], [0], [0], [1], [0, 0, 1, 1], [], []>} : vector<64x64xbf16>, vector<64x256xbf16>, vector<64x256xf32> -> vector<64x256xf32>
    %920 = arith.addf %912, %919 : vector<64x256xf32>
    %cst_288 = arith.constant 0.000000e+00 : f32
    %921 = vector.broadcast %cst_288 : f32 to vector<64x15xf32>
    %922 = vector.extract_strided_slice %880 {offsets = [0, 0], sizes = [64, 241], strides = [1, 1]} : vector<64x256xf32> to vector<64x241xf32>
    %923 = tpu.concatenate %921, %922 in 1 : vector<64x15xf32>, vector<64x241xf32> -> vector<64x256xf32>
    %924 = tpu.iota {dimensions = array<i32: 1>} : vector<1x256xi32>
    %c16_i32_289 = arith.constant 16 : i32
    %c0_i32_290 = arith.constant 0 : i32
    %925 = arith.cmpi eq, %c16_i32_289, %c0_i32_290 : i32
    %c1_i32_291 = arith.constant 1 : i32
    %926 = arith.select %925, %c1_i32_291, %c16_i32_289 : i32
    %927 = vector.broadcast %926 : i32 to vector<1x256xi32>
    %928 = arith.remsi %924, %927 : vector<1x256xi32>
    %c0_i32_292 = arith.constant 0 : i32
    %929 = vector.broadcast %c0_i32_292 : i32 to vector<1x256xi32>
    %930 = arith.cmpi ne, %928, %929 : vector<1x256xi32>
    %c0_i32_293 = arith.constant 0 : i32
    %931 = vector.broadcast %c0_i32_293 : i32 to vector<1x256xi32>
    %932 = arith.cmpi slt, %928, %931 : vector<1x256xi32>
    %c0_i32_294 = arith.constant 0 : i32
    %933 = arith.cmpi slt, %926, %c0_i32_294 : i32
    %934 = vector.broadcast %933 : i1 to vector<1x256xi1>
    %935 = vector.broadcast %934 : vector<1x256xi1> to vector<1x256xi1>
    %936 = arith.xori %932, %935 : vector<1x256xi1>
    %937 = arith.andi %936, %930 : vector<1x256xi1>
    %938 = vector.broadcast %926 : i32 to vector<1x256xi32>
    %939 = arith.addi %928, %938 : vector<1x256xi32>
    %940 = arith.select %937, %939, %928 : vector<1x256xi1>, vector<1x256xi32>
    %c15_i32_295 = arith.constant 15 : i32
    %941 = vector.broadcast %c15_i32_295 : i32 to vector<1x256xi32>
    %942 = arith.cmpi slt, %940, %941 : vector<1x256xi32>
    %cst_296 = arith.constant 0.000000e+00 : f32
    %943 = vector.broadcast %cst_296 : f32 to vector<64x256xf32>
    %944 = vector.shape_cast %942 : vector<1x256xi1> to vector<1x256xi1>
    %945 = vector.broadcast %944 : vector<1x256xi1> to vector<64x256xi1>
    %946 = arith.select %945, %923, %943 : vector<64x256xi1>, vector<64x256xf32>
    %947 = arith.truncf %946 : vector<64x256xf32> to vector<64x256xbf16>
    %c2_297 = arith.constant 2 : index
    %c0_298 = arith.constant 0 : index
    %c0_299 = arith.constant 0 : index
    %948 = vector.load %arg5[%c2_297, %c0_298, %c0_299] : memref<9x64x64xbf16, #tpu.memory_space<vmem>>, vector<1x64x64xbf16>
    %949 = vector.shape_cast %948 : vector<1x64x64xbf16> to vector<64x64xbf16>
    %cst_300 = arith.constant dense<0.000000e+00> : vector<64x256xf32>
    %950 = tpu.matmul %949, %947, %cst_300 {dimension_numbers = #tpu.dot_dimension_numbers<[1], [0], [0], [1], [0, 0, 1, 1], [], []>} : vector<64x64xbf16>, vector<64x256xbf16>, vector<64x256xf32> -> vector<64x256xf32>
    %951 = arith.addf %920, %950 : vector<64x256xf32>
    %cst_301 = arith.constant 0.000000e+00 : f32
    %952 = vector.broadcast %cst_301 : f32 to vector<64x1xf32>
    %953 = vector.extract_strided_slice %880 {offsets = [0, 0], sizes = [64, 255], strides = [1, 1]} : vector<64x256xf32> to vector<64x255xf32>
    %954 = tpu.concatenate %952, %953 in 1 : vector<64x1xf32>, vector<64x255xf32> -> vector<64x256xf32>
    %955 = tpu.iota {dimensions = array<i32: 1>} : vector<1x256xi32>
    %c16_i32_302 = arith.constant 16 : i32
    %c0_i32_303 = arith.constant 0 : i32
    %956 = arith.cmpi eq, %c16_i32_302, %c0_i32_303 : i32
    %c1_i32_304 = arith.constant 1 : i32
    %957 = arith.select %956, %c1_i32_304, %c16_i32_302 : i32
    %958 = vector.broadcast %957 : i32 to vector<1x256xi32>
    %959 = arith.remsi %955, %958 : vector<1x256xi32>
    %c0_i32_305 = arith.constant 0 : i32
    %960 = vector.broadcast %c0_i32_305 : i32 to vector<1x256xi32>
    %961 = arith.cmpi ne, %959, %960 : vector<1x256xi32>
    %c0_i32_306 = arith.constant 0 : i32
    %962 = vector.broadcast %c0_i32_306 : i32 to vector<1x256xi32>
    %963 = arith.cmpi slt, %959, %962 : vector<1x256xi32>
    %c0_i32_307 = arith.constant 0 : i32
    %964 = arith.cmpi slt, %957, %c0_i32_307 : i32
    %965 = vector.broadcast %964 : i1 to vector<1x256xi1>
    %966 = vector.broadcast %965 : vector<1x256xi1> to vector<1x256xi1>
    %967 = arith.xori %963, %966 : vector<1x256xi1>
    %968 = arith.andi %967, %961 : vector<1x256xi1>
    %969 = vector.broadcast %957 : i32 to vector<1x256xi32>
    %970 = arith.addi %959, %969 : vector<1x256xi32>
    %971 = arith.select %968, %970, %959 : vector<1x256xi1>, vector<1x256xi32>
    %c1_i32_308 = arith.constant 1 : i32
    %972 = vector.broadcast %c1_i32_308 : i32 to vector<1x256xi32>
    %973 = arith.cmpi sge, %971, %972 : vector<1x256xi32>
    %cst_309 = arith.constant 0.000000e+00 : f32
    %974 = vector.broadcast %cst_309 : f32 to vector<64x256xf32>
    %975 = vector.shape_cast %973 : vector<1x256xi1> to vector<1x256xi1>
    %976 = vector.broadcast %975 : vector<1x256xi1> to vector<64x256xi1>
    %977 = arith.select %976, %954, %974 : vector<64x256xi1>, vector<64x256xf32>
    %978 = arith.truncf %977 : vector<64x256xf32> to vector<64x256xbf16>
    %c3_310 = arith.constant 3 : index
    %c0_311 = arith.constant 0 : index
    %c0_312 = arith.constant 0 : index
    %979 = vector.load %arg5[%c3_310, %c0_311, %c0_312] : memref<9x64x64xbf16, #tpu.memory_space<vmem>>, vector<1x64x64xbf16>
    %980 = vector.shape_cast %979 : vector<1x64x64xbf16> to vector<64x64xbf16>
    %cst_313 = arith.constant dense<0.000000e+00> : vector<64x256xf32>
    %981 = tpu.matmul %980, %978, %cst_313 {dimension_numbers = #tpu.dot_dimension_numbers<[1], [0], [0], [1], [0, 0, 1, 1], [], []>} : vector<64x64xbf16>, vector<64x256xbf16>, vector<64x256xf32> -> vector<64x256xf32>
    %982 = arith.addf %951, %981 : vector<64x256xf32>
    %983 = arith.truncf %880 : vector<64x256xf32> to vector<64x256xbf16>
    %c4_314 = arith.constant 4 : index
    %c0_315 = arith.constant 0 : index
    %c0_316 = arith.constant 0 : index
    %984 = vector.load %arg5[%c4_314, %c0_315, %c0_316] : memref<9x64x64xbf16, #tpu.memory_space<vmem>>, vector<1x64x64xbf16>
    %985 = vector.shape_cast %984 : vector<1x64x64xbf16> to vector<64x64xbf16>
    %cst_317 = arith.constant dense<0.000000e+00> : vector<64x256xf32>
    %986 = tpu.matmul %985, %983, %cst_317 {dimension_numbers = #tpu.dot_dimension_numbers<[1], [0], [0], [1], [0, 0, 1, 1], [], []>} : vector<64x64xbf16>, vector<64x256xbf16>, vector<64x256xf32> -> vector<64x256xf32>
    %987 = arith.addf %982, %986 : vector<64x256xf32>
    %988 = vector.extract_strided_slice %880 {offsets = [0, 1], sizes = [64, 255], strides = [1, 1]} : vector<64x256xf32> to vector<64x255xf32>
    %cst_318 = arith.constant 0.000000e+00 : f32
    %989 = vector.broadcast %cst_318 : f32 to vector<64x1xf32>
    %990 = tpu.concatenate %988, %989 in 1 : vector<64x255xf32>, vector<64x1xf32> -> vector<64x256xf32>
    %991 = tpu.iota {dimensions = array<i32: 1>} : vector<1x256xi32>
    %c16_i32_319 = arith.constant 16 : i32
    %c0_i32_320 = arith.constant 0 : i32
    %992 = arith.cmpi eq, %c16_i32_319, %c0_i32_320 : i32
    %c1_i32_321 = arith.constant 1 : i32
    %993 = arith.select %992, %c1_i32_321, %c16_i32_319 : i32
    %994 = vector.broadcast %993 : i32 to vector<1x256xi32>
    %995 = arith.remsi %991, %994 : vector<1x256xi32>
    %c0_i32_322 = arith.constant 0 : i32
    %996 = vector.broadcast %c0_i32_322 : i32 to vector<1x256xi32>
    %997 = arith.cmpi ne, %995, %996 : vector<1x256xi32>
    %c0_i32_323 = arith.constant 0 : i32
    %998 = vector.broadcast %c0_i32_323 : i32 to vector<1x256xi32>
    %999 = arith.cmpi slt, %995, %998 : vector<1x256xi32>
    %c0_i32_324 = arith.constant 0 : i32
    %1000 = arith.cmpi slt, %993, %c0_i32_324 : i32
    %1001 = vector.broadcast %1000 : i1 to vector<1x256xi1>
    %1002 = vector.broadcast %1001 : vector<1x256xi1> to vector<1x256xi1>
    %1003 = arith.xori %999, %1002 : vector<1x256xi1>
    %1004 = arith.andi %1003, %997 : vector<1x256xi1>
    %1005 = vector.broadcast %993 : i32 to vector<1x256xi32>
    %1006 = arith.addi %995, %1005 : vector<1x256xi32>
    %1007 = arith.select %1004, %1006, %995 : vector<1x256xi1>, vector<1x256xi32>
    %c15_i32_325 = arith.constant 15 : i32
    %1008 = vector.broadcast %c15_i32_325 : i32 to vector<1x256xi32>
    %1009 = arith.cmpi slt, %1007, %1008 : vector<1x256xi32>
    %cst_326 = arith.constant 0.000000e+00 : f32
    %1010 = vector.broadcast %cst_326 : f32 to vector<64x256xf32>
    %1011 = vector.shape_cast %1009 : vector<1x256xi1> to vector<1x256xi1>
    %1012 = vector.broadcast %1011 : vector<1x256xi1> to vector<64x256xi1>
    %1013 = arith.select %1012, %990, %1010 : vector<64x256xi1>, vector<64x256xf32>
    %1014 = arith.truncf %1013 : vector<64x256xf32> to vector<64x256xbf16>
    %c5_327 = arith.constant 5 : index
    %c0_328 = arith.constant 0 : index
    %c0_329 = arith.constant 0 : index
    %1015 = vector.load %arg5[%c5_327, %c0_328, %c0_329] : memref<9x64x64xbf16, #tpu.memory_space<vmem>>, vector<1x64x64xbf16>
    %1016 = vector.shape_cast %1015 : vector<1x64x64xbf16> to vector<64x64xbf16>
    %cst_330 = arith.constant dense<0.000000e+00> : vector<64x256xf32>
    %1017 = tpu.matmul %1016, %1014, %cst_330 {dimension_numbers = #tpu.dot_dimension_numbers<[1], [0], [0], [1], [0, 0, 1, 1], [], []>} : vector<64x64xbf16>, vector<64x256xbf16>, vector<64x256xf32> -> vector<64x256xf32>
    %1018 = arith.addf %987, %1017 : vector<64x256xf32>
    %1019 = vector.extract_strided_slice %880 {offsets = [0, 15], sizes = [64, 241], strides = [1, 1]} : vector<64x256xf32> to vector<64x241xf32>
    %cst_331 = arith.constant 0.000000e+00 : f32
    %1020 = vector.broadcast %cst_331 : f32 to vector<64x15xf32>
    %1021 = tpu.concatenate %1019, %1020 in 1 : vector<64x241xf32>, vector<64x15xf32> -> vector<64x256xf32>
    %1022 = tpu.iota {dimensions = array<i32: 1>} : vector<1x256xi32>
    %c16_i32_332 = arith.constant 16 : i32
    %c0_i32_333 = arith.constant 0 : i32
    %1023 = arith.cmpi eq, %c16_i32_332, %c0_i32_333 : i32
    %c1_i32_334 = arith.constant 1 : i32
    %1024 = arith.select %1023, %c1_i32_334, %c16_i32_332 : i32
    %1025 = vector.broadcast %1024 : i32 to vector<1x256xi32>
    %1026 = arith.remsi %1022, %1025 : vector<1x256xi32>
    %c0_i32_335 = arith.constant 0 : i32
    %1027 = vector.broadcast %c0_i32_335 : i32 to vector<1x256xi32>
    %1028 = arith.cmpi ne, %1026, %1027 : vector<1x256xi32>
    %c0_i32_336 = arith.constant 0 : i32
    %1029 = vector.broadcast %c0_i32_336 : i32 to vector<1x256xi32>
    %1030 = arith.cmpi slt, %1026, %1029 : vector<1x256xi32>
    %c0_i32_337 = arith.constant 0 : i32
    %1031 = arith.cmpi slt, %1024, %c0_i32_337 : i32
    %1032 = vector.broadcast %1031 : i1 to vector<1x256xi1>
    %1033 = vector.broadcast %1032 : vector<1x256xi1> to vector<1x256xi1>
    %1034 = arith.xori %1030, %1033 : vector<1x256xi1>
    %1035 = arith.andi %1034, %1028 : vector<1x256xi1>
    %1036 = vector.broadcast %1024 : i32 to vector<1x256xi32>
    %1037 = arith.addi %1026, %1036 : vector<1x256xi32>
    %1038 = arith.select %1035, %1037, %1026 : vector<1x256xi1>, vector<1x256xi32>
    %c1_i32_338 = arith.constant 1 : i32
    %1039 = vector.broadcast %c1_i32_338 : i32 to vector<1x256xi32>
    %1040 = arith.cmpi sge, %1038, %1039 : vector<1x256xi32>
    %cst_339 = arith.constant 0.000000e+00 : f32
    %1041 = vector.broadcast %cst_339 : f32 to vector<64x256xf32>
    %1042 = vector.shape_cast %1040 : vector<1x256xi1> to vector<1x256xi1>
    %1043 = vector.broadcast %1042 : vector<1x256xi1> to vector<64x256xi1>
    %1044 = arith.select %1043, %1021, %1041 : vector<64x256xi1>, vector<64x256xf32>
    %1045 = arith.truncf %1044 : vector<64x256xf32> to vector<64x256xbf16>
    %c6_340 = arith.constant 6 : index
    %c0_341 = arith.constant 0 : index
    %c0_342 = arith.constant 0 : index
    %1046 = vector.load %arg5[%c6_340, %c0_341, %c0_342] : memref<9x64x64xbf16, #tpu.memory_space<vmem>>, vector<1x64x64xbf16>
    %1047 = vector.shape_cast %1046 : vector<1x64x64xbf16> to vector<64x64xbf16>
    %cst_343 = arith.constant dense<0.000000e+00> : vector<64x256xf32>
    %1048 = tpu.matmul %1047, %1045, %cst_343 {dimension_numbers = #tpu.dot_dimension_numbers<[1], [0], [0], [1], [0, 0, 1, 1], [], []>} : vector<64x64xbf16>, vector<64x256xbf16>, vector<64x256xf32> -> vector<64x256xf32>
    %1049 = arith.addf %1018, %1048 : vector<64x256xf32>
    %1050 = vector.extract_strided_slice %880 {offsets = [0, 16], sizes = [64, 240], strides = [1, 1]} : vector<64x256xf32> to vector<64x240xf32>
    %cst_344 = arith.constant 0.000000e+00 : f32
    %1051 = vector.broadcast %cst_344 : f32 to vector<64x16xf32>
    %1052 = tpu.concatenate %1050, %1051 in 1 : vector<64x240xf32>, vector<64x16xf32> -> vector<64x256xf32>
    %1053 = arith.truncf %1052 : vector<64x256xf32> to vector<64x256xbf16>
    %c7_345 = arith.constant 7 : index
    %c0_346 = arith.constant 0 : index
    %c0_347 = arith.constant 0 : index
    %1054 = vector.load %arg5[%c7_345, %c0_346, %c0_347] : memref<9x64x64xbf16, #tpu.memory_space<vmem>>, vector<1x64x64xbf16>
    %1055 = vector.shape_cast %1054 : vector<1x64x64xbf16> to vector<64x64xbf16>
    %cst_348 = arith.constant dense<0.000000e+00> : vector<64x256xf32>
    %1056 = tpu.matmul %1055, %1053, %cst_348 {dimension_numbers = #tpu.dot_dimension_numbers<[1], [0], [0], [1], [0, 0, 1, 1], [], []>} : vector<64x64xbf16>, vector<64x256xbf16>, vector<64x256xf32> -> vector<64x256xf32>
    %1057 = arith.addf %1049, %1056 : vector<64x256xf32>
    %1058 = vector.extract_strided_slice %880 {offsets = [0, 17], sizes = [64, 239], strides = [1, 1]} : vector<64x256xf32> to vector<64x239xf32>
    %cst_349 = arith.constant 0.000000e+00 : f32
    %1059 = vector.broadcast %cst_349 : f32 to vector<64x17xf32>
    %1060 = tpu.concatenate %1058, %1059 in 1 : vector<64x239xf32>, vector<64x17xf32> -> vector<64x256xf32>
    %1061 = tpu.iota {dimensions = array<i32: 1>} : vector<1x256xi32>
    %c16_i32_350 = arith.constant 16 : i32
    %c0_i32_351 = arith.constant 0 : i32
    %1062 = arith.cmpi eq, %c16_i32_350, %c0_i32_351 : i32
    %c1_i32_352 = arith.constant 1 : i32
    %1063 = arith.select %1062, %c1_i32_352, %c16_i32_350 : i32
    %1064 = vector.broadcast %1063 : i32 to vector<1x256xi32>
    %1065 = arith.remsi %1061, %1064 : vector<1x256xi32>
    %c0_i32_353 = arith.constant 0 : i32
    %1066 = vector.broadcast %c0_i32_353 : i32 to vector<1x256xi32>
    %1067 = arith.cmpi ne, %1065, %1066 : vector<1x256xi32>
    %c0_i32_354 = arith.constant 0 : i32
    %1068 = vector.broadcast %c0_i32_354 : i32 to vector<1x256xi32>
    %1069 = arith.cmpi slt, %1065, %1068 : vector<1x256xi32>
    %c0_i32_355 = arith.constant 0 : i32
    %1070 = arith.cmpi slt, %1063, %c0_i32_355 : i32
    %1071 = vector.broadcast %1070 : i1 to vector<1x256xi1>
    %1072 = vector.broadcast %1071 : vector<1x256xi1> to vector<1x256xi1>
    %1073 = arith.xori %1069, %1072 : vector<1x256xi1>
    %1074 = arith.andi %1073, %1067 : vector<1x256xi1>
    %1075 = vector.broadcast %1063 : i32 to vector<1x256xi32>
    %1076 = arith.addi %1065, %1075 : vector<1x256xi32>
    %1077 = arith.select %1074, %1076, %1065 : vector<1x256xi1>, vector<1x256xi32>
    %c15_i32_356 = arith.constant 15 : i32
    %1078 = vector.broadcast %c15_i32_356 : i32 to vector<1x256xi32>
    %1079 = arith.cmpi slt, %1077, %1078 : vector<1x256xi32>
    %cst_357 = arith.constant 0.000000e+00 : f32
    %1080 = vector.broadcast %cst_357 : f32 to vector<64x256xf32>
    %1081 = vector.shape_cast %1079 : vector<1x256xi1> to vector<1x256xi1>
    %1082 = vector.broadcast %1081 : vector<1x256xi1> to vector<64x256xi1>
    %1083 = arith.select %1082, %1060, %1080 : vector<64x256xi1>, vector<64x256xf32>
    %1084 = arith.truncf %1083 : vector<64x256xf32> to vector<64x256xbf16>
    %c8_358 = arith.constant 8 : index
    %c0_359 = arith.constant 0 : index
    %c0_360 = arith.constant 0 : index
    %1085 = vector.load %arg5[%c8_358, %c0_359, %c0_360] : memref<9x64x64xbf16, #tpu.memory_space<vmem>>, vector<1x64x64xbf16>
    %1086 = vector.shape_cast %1085 : vector<1x64x64xbf16> to vector<64x64xbf16>
    %cst_361 = arith.constant dense<0.000000e+00> : vector<64x256xf32>
    %1087 = tpu.matmul %1086, %1084, %cst_361 {dimension_numbers = #tpu.dot_dimension_numbers<[1], [0], [0], [1], [0, 0, 1, 1], [], []>} : vector<64x64xbf16>, vector<64x256xbf16>, vector<64x256xf32> -> vector<64x256xf32>
    %1088 = arith.addf %1057, %1087 : vector<64x256xf32>
    %c0_362 = arith.constant 0 : index
    %c0_363 = arith.constant 0 : index
    %1089 = vector.load %arg6[%c0_362, %c0_363] : memref<64x1xf32, #tpu.memory_space<vmem>>, vector<64x1xf32>
    %1090 = vector.broadcast %1089 : vector<64x1xf32> to vector<64x256xf32>
    %1091 = arith.addf %1088, %1090 : vector<64x256xf32>
    %c0_364 = arith.constant 0 : index
    %c0_365 = arith.constant 0 : index
    %1092 = vector.load %arg7[%c0_364, %c0_365] : memref<64x32xbf16, #tpu.memory_space<vmem>>, vector<64x32xbf16>
    %1093 = arith.truncf %1 : vector<32x256xf32> to vector<32x256xbf16>
    %cst_366 = arith.constant dense<0.000000e+00> : vector<64x256xf32>
    %1094 = tpu.matmul %1092, %1093, %cst_366 {dimension_numbers = #tpu.dot_dimension_numbers<[1], [0], [0], [1], [0, 0, 1, 1], [], []>} : vector<64x32xbf16>, vector<32x256xbf16>, vector<64x256xf32> -> vector<64x256xf32>
    %c0_367 = arith.constant 0 : index
    %c0_368 = arith.constant 0 : index
    %1095 = vector.load %arg8[%c0_367, %c0_368] : memref<64x1xf32, #tpu.memory_space<vmem>>, vector<64x1xf32>
    %1096 = vector.broadcast %1095 : vector<64x1xf32> to vector<64x256xf32>
    %1097 = arith.addf %1094, %1096 : vector<64x256xf32>
    %1098 = arith.addf %1091, %1097 : vector<64x256xf32>
    %cst_369 = arith.constant 0.000000e+00 : f32
    %1099 = vector.broadcast %cst_369 : f32 to vector<64x256xf32>
    %1100 = arith.maximumf %1098, %1099 : vector<64x256xf32>
    %c0_370 = arith.constant 0 : index
    %c0_371 = arith.constant 0 : index
    %c0_372 = arith.constant 0 : index
    %1101 = vector.load %arg15[%c0_370, %c0_371, %c0_372] : memref<1x64x256xf32, #tpu.memory_space<vmem>>, vector<1x64x256xf32>
    %1102 = vector.shape_cast %1101 : vector<1x64x256xf32> to vector<64x256xf32>
    %1103 = vector.shape_cast %1100 : vector<64x256xf32> to vector<1x64x256xf32>
    tpu.vector_store %arg15[%c0_370, %c0_371, %c0_372], %1103 {strides = array<i32>} : memref<1x64x256xf32, #tpu.memory_space<vmem>>, vector<1x64x256xf32>,
    return
  }
  func.func @transform_0(%arg0: i32) -> (i32, i32, i32) {
    %c0_i32 = arith.constant 0 : i32
    %c0_i32_0 = arith.constant 0 : i32
    %c0_i32_1 = arith.constant 0 : i32
    return %arg0, %c0_i32, %c0_i32_0 : i32, i32, i32
  }
  func.func @transform_1(%arg0: i32) -> (i32, i32, i32) {
    %c0_i32 = arith.constant 0 : i32
    %c0_i32_0 = arith.constant 0 : i32
    %c0_i32_1 = arith.constant 0 : i32
    return %arg0, %c0_i32, %c0_i32_0 : i32, i32, i32
  }
  func.func @transform_2(%arg0: i32) -> (i32, i32, i32) {
    %c0_i32 = arith.constant 0 : i32
    %c0_i32_0 = arith.constant 0 : i32
    %c0_i32_1 = arith.constant 0 : i32
    %c0_i32_2 = arith.constant 0 : i32
    return %c0_i32, %c0_i32_0, %c0_i32_1 : i32, i32, i32
  }
  func.func @transform_3(%arg0: i32) -> (i32, i32) {
    %c0_i32 = arith.constant 0 : i32
    %c0_i32_0 = arith.constant 0 : i32
    %c0_i32_1 = arith.constant 0 : i32
    return %c0_i32, %c0_i32_0 : i32, i32
  }
  func.func @transform_4(%arg0: i32) -> (i32, i32, i32) {
    %c0_i32 = arith.constant 0 : i32
    %c0_i32_0 = arith.constant 0 : i32
    %c0_i32_1 = arith.constant 0 : i32
    %c0_i32_2 = arith.constant 0 : i32
    return %c0_i32, %c0_i32_0, %c0_i32_1 : i32, i32, i32
  }
  func.func @transform_5(%arg0: i32) -> (i32, i32) {
    %c0_i32 = arith.constant 0 : i32
    %c0_i32_0 = arith.constant 0 : i32
    %c0_i32_1 = arith.constant 0 : i32
    return %c0_i32, %c0_i32_0 : i32, i32
  }
  func.func @transform_6(%arg0: i32) -> (i32, i32) {
    %c0_i32 = arith.constant 0 : i32
    %c0_i32_0 = arith.constant 0 : i32
    %c0_i32_1 = arith.constant 0 : i32
    return %c0_i32, %c0_i32_0 : i32, i32
  }
  func.func @transform_7(%arg0: i32) -> (i32, i32) {
    %c0_i32 = arith.constant 0 : i32
    %c0_i32_0 = arith.constant 0 : i32
    %c0_i32_1 = arith.constant 0 : i32
    return %c0_i32, %c0_i32_0 : i32, i32
  }
  func.func @transform_8(%arg0: i32) -> (i32, i32) {
    %c0_i32 = arith.constant 0 : i32
    %c0_i32_0 = arith.constant 0 : i32
    %c0_i32_1 = arith.constant 0 : i32
    return %c0_i32, %c0_i32_0 : i32, i32
  }
  func.func @transform_9(%arg0: i32) -> (i32, i32) {
    %c0_i32 = arith.constant 0 : i32
    %c0_i32_0 = arith.constant 0 : i32
    %c0_i32_1 = arith.constant 0 : i32
    return %c0_i32, %c0_i32_0 : i32, i32
  }
  func.func @transform_10(%arg0: i32) -> (i32, i32) {
    %c0_i32 = arith.constant 0 : i32
    %c0_i32_0 = arith.constant 0 : i32
    %c0_i32_1 = arith.constant 0 : i32
    return %c0_i32, %c0_i32_0 : i32, i32
  }
  func.func @transform_11(%arg0: i32) -> (i32, i32) {
    %c0_i32 = arith.constant 0 : i32
    %c0_i32_0 = arith.constant 0 : i32
    %c0_i32_1 = arith.constant 0 : i32
    return %c0_i32, %c0_i32_0 : i32, i32
  }
  func.func @transform_12(%arg0: i32) -> (i32, i32) {
    %c0_i32 = arith.constant 0 : i32
    %c0_i32_0 = arith.constant 0 : i32
    %c0_i32_1 = arith.constant 0 : i32
    return %c0_i32, %c0_i32_0 : i32, i32
  }
  func.func @transform_13(%arg0: i32) -> (i32, i32) {
    %c0_i32 = arith.constant 0 : i32
    %c0_i32_0 = arith.constant 0 : i32
    %c0_i32_1 = arith.constant 0 : i32
    return %c0_i32, %c0_i32_0 : i32, i32
  }
  func.func @transform_14(%arg0: i32) -> (i32, i32, i32) {
    %c0_i32 = arith.constant 0 : i32
    %c0_i32_0 = arith.constant 0 : i32
    %c0_i32_1 = arith.constant 0 : i32
    return %arg0, %c0_i32, %c0_i32_0 : i32, i32, i32
  }
}

</mosaic_0001>

<llo_original>
// kernel: tpu_custom_call.1
$region0: #{tpu_custom_call.1}
  #allocation0 [shape = 'u32[]', space=smem, size = 0x4, offset = 0x4, fixed_abs, tag = 'smem constant byte address 0x4 - core index']
  #allocation1 [shape = 'u32[144,128]{1,0:T(1,128)}', space=vmem, size = 0x12000, scoped, tag = 'internal scratch']
  %s0 = inlined_call_operand.vmem [shape: f32[2,32,256], index: 0, kind: input, shape index: {}]
  %s1 = inlined_call_operand.vmem [shape: f32[2,1,32], index: 1, kind: input, shape index: {}]
  %s2 = inlined_call_operand.vmem [shape: bf16[9,64,32], index: 2, kind: input, shape index: {}]
  %s3 = inlined_call_operand.vmem [shape: f32[64,1], index: 3, kind: input, shape index: {}]
  %s4 = inlined_call_operand.vmem [shape: bf16[9,64,64], index: 4, kind: input, shape index: {}]
  %s5 = inlined_call_operand.vmem [shape: f32[64,1], index: 5, kind: input, shape index: {}]
  %s6 = inlined_call_operand.vmem [shape: bf16[64,32], index: 6, kind: input, shape index: {}]
  %s7 = inlined_call_operand.vmem [shape: f32[64,1], index: 7, kind: input, shape index: {}]
  %s8 = inlined_call_operand.vmem [shape: f32[64,32], index: 8, kind: input, shape index: {}]
  %s9 = inlined_call_operand.vmem [shape: f32[64,1], index: 9, kind: input, shape index: {}]
  %s10 = inlined_call_operand.vmem [shape: f32[32,1], index: 10, kind: input, shape index: {}]
  %s11 = inlined_call_operand.vmem [shape: f32[32,1], index: 11, kind: input, shape index: {}]
  %s12 = inlined_call_operand.vmem [shape: f32[64,1], index: 12, kind: input, shape index: {}]
  %s13 = inlined_call_operand.vmem [shape: f32[64,1], index: 13, kind: input, shape index: {}]
  %s14 = inlined_call_operand.hbm [shape: f32[2,64,256], index: 14, kind: output, shape index: {}]
  %s15 = sld [smem:[#allocation0]]
  $region89: #{tpu_custom_call.1} parent=0
    _
  %s17 = ssub.s32 1, %s15
  %s18 = scalar_select 0, %s17, %s15
  $region1: #{tpu_custom_call.1} parent=0
    #allocation2 [shape = 'u8[131072]{0}', space=vmem, size = 0x20000, scoped, tag = 'output window, operand 0']
    #allocation3 [shape = 's32[2]{0}', space=sflag, size = 0x8, scoped, tag = 'scoped memory for tpu_custom_call.1']
    %19 = vsyncpa [#allocation3], 0
    %s20 = scalar_lea.sflag [#allocation3], 1
    %21 = vsyncpa %s20, 0
    loop: start=0, step=1, limit=4
    $region2: #{tpu_custom_call.1} parent=1 // loop_pre_header
      _
    $region3: #{tpu_custom_call.1} parent=1 // loop_header
      %s23 = sphi 0, %s27
      %p24 = scmp.ge.s32.totalorder %s23, 4
      %s33 = sphi 0, %s35
      %s36 = sphi 0, %s33
      %s37 = sphi 0, %s36
      %s53 = sphi 0, %s37
      %s59 = sphi 0, %s61
      %s62 = sphi 0, %s59
      %s63 = sphi 0, %s62
      %s79 = sphi 0, %s63
      %s83 = sphi 0, %s83
      %s85 = sphi 0, %s83
      %s86 = sphi 0, %s85
      %s100 = sphi 0, %s86
      %s104 = sphi 0, %s104
      %s106 = sphi 0, %s104
      %s107 = sphi 0, %s106
      %s121 = sphi 0, %s107
      %s125 = sphi 0, %s125
      %s127 = sphi 0, %s125
      %s128 = sphi 0, %s127
      %s142 = sphi 0, %s128
      %s146 = sphi 0, %s146
      %s148 = sphi 0, %s146
      %s149 = sphi 0, %s148
      %s163 = sphi 0, %s149
      %s167 = sphi 0, %s167
      %s169 = sphi 0, %s167
      %s170 = sphi 0, %s169
      %s184 = sphi 0, %s170
      %s188 = sphi 0, %s188
      %s190 = sphi 0, %s188
      %s191 = sphi 0, %s190
      %s205 = sphi 0, %s191
      %s209 = sphi 0, %s209
      %s211 = sphi 0, %s209
      %s212 = sphi 0, %s211
      %s226 = sphi 0, %s212
      %s230 = sphi 0, %s230
      %s232 = sphi 0, %s230
      %s233 = sphi 0, %s232
      %s247 = sphi 0, %s233
      %s251 = sphi 0, %s251
      %s253 = sphi 0, %s251
      %s254 = sphi 0, %s253
      %s268 = sphi 0, %s254
      %s272 = sphi 0, %s272
      %s274 = sphi 0, %s272
      %s275 = sphi 0, %s274
      %s289 = sphi 0, %s275
      %s293 = sphi 0, %s293
      %s295 = sphi 0, %s293
      %s296 = sphi 0, %s295
      %s310 = sphi 0, %s296
      %s314 = sphi 0, %s314
      %s316 = sphi 0, %s314
      %s317 = sphi 0, %s316
      %s331 = sphi 0, %s317
      %s337 = sphi 0, %s339
      %s340 = sphi 0, %s337
      %s341 = sphi 0, %s340
      %s357 = sphi 0, %s341
    $region4: #{tpu_custom_call.1} parent=1 // loop_header_branch
      %26 = sbr.rel (%p24) target = $region8
    $region5: #{tpu_custom_call.1} parent=1 // loop_body
      %s28 = ssub.s32 %s23, 1
      %s29 = ssub.s32 %s23, 2
      %s30 = sadd.s32 %s23, 1
      %s31 = ssub.s32 %s23, %s30
      %p32 = scmp.eq.s32.totalorder %s31, 0
      %s34 = sadd.s32 %s33, 1
      %s35 = scalar_select %p32, %s33, %s34
      %p38 = pneg %p32
      %p39 = scmp.eq.s32.totalorder %s23, 1
      %p40 = por %p38, %p39
      %p41 = scmp.ne.s32.totalorder %s33, %s36
      %p42 = scmp.eq.s32.totalorder %s23, 0
      %p43 = por %p41, %p42
      %p44 = scmp.ne.s32.totalorder %s33, %s36
      %p45 = scmp.eq.s32.totalorder %s28, 1
      %p46 = por %p44, %p45
      %p47 = scmp.ne.s32.totalorder %s36, %s37
      %p48 = scmp.eq.s32.totalorder %s28, 0
      %p49 = por %p47, %p48
      %p50 = scmp.ne.s32.totalorder %s36, %s37
      %p51 = scmp.eq.s32.totalorder %s29, 1
      %p52 = por %p50, %p51
      %p54 = scmp.ne.s32.totalorder %s37, %s53
      %p55 = scmp.eq.s32.totalorder %s29, 0
      %p56 = por %p54, %p55
      %s57 = ssub.s32 %s23, %s30
      %p58 = scmp.eq.s32.totalorder %s57, 0
      %s60 = sadd.s32 %s59, 1
      %s61 = scalar_select %p58, %s59, %s60
      %p64 = pneg %p58
      %p65 = scmp.eq.s32.totalorder %s23, 1
      %p66 = por %p64, %p65
      %p67 = scmp.ne.s32.totalorder %s59, %s62
      %p68 = scmp.eq.s32.totalorder %s23, 0
      %p69 = por %p67, %p68
      %p70 = scmp.ne.s32.totalorder %s59, %s62
      %p71 = scmp.eq.s32.totalorder %s28, 1
      %p72 = por %p70, %p71
      %p73 = scmp.ne.s32.totalorder %s62, %s63
      %p74 = scmp.eq.s32.totalorder %s28, 0
      %p75 = por %p73, %p74
      %p76 = scmp.ne.s32.totalorder %s62, %s63
      %p77 = scmp.eq.s32.totalorder %s29, 1
      %p78 = por %p76, %p77
      %p80 = scmp.ne.s32.totalorder %s63, %s79
      %p81 = scmp.eq.s32.totalorder %s29, 0
      %p82 = por %p80, %p81
      %s84 = sadd.s32 %s83, 1
      %p87 = scmp.eq.s32.totalorder %s23, 1
      %p88 = scmp.ne.s32.totalorder %s83, %s85
      %p89 = scmp.eq.s32.totalorder %s23, 0
      %p90 = por %p88, %p89
      %p91 = scmp.ne.s32.totalorder %s83, %s85
      %p92 = scmp.eq.s32.totalorder %s28, 1
      %p93 = por %p91, %p92
      %p94 = scmp.ne.s32.totalorder %s85, %s86
      %p95 = scmp.eq.s32.totalorder %s28, 0
      %p96 = por %p94, %p95
      %p97 = scmp.ne.s32.totalorder %s85, %s86
      %p98 = scmp.eq.s32.totalorder %s29, 1
      %p99 = por %p97, %p98
      %p101 = scmp.ne.s32.totalorder %s86, %s100
      %p102 = scmp.eq.s32.totalorder %s29, 0
      %p103 = por %p101, %p102
      %s105 = sadd.s32 %s104, 1
      %p108 = scmp.eq.s32.totalorder %s23, 1
      %p109 = scmp.ne.s32.totalorder %s104, %s106
      %p110 = scmp.eq.s32.totalorder %s23, 0
      %p111 = por %p109, %p110
      %p112 = scmp.ne.s32.totalorder %s104, %s106
      %p113 = scmp.eq.s32.totalorder %s28, 1
      %p114 = por %p112, %p113
      %p115 = scmp.ne.s32.totalorder %s106, %s107
      %p116 = scmp.eq.s32.totalorder %s28, 0
      %p117 = por %p115, %p116
      %p118 = scmp.ne.s32.totalorder %s106, %s107
      %p119 = scmp.eq.s32.totalorder %s29, 1
      %p120 = por %p118, %p119
      %p122 = scmp.ne.s32.totalorder %s107, %s121
      %p123 = scmp.eq.s32.totalorder %s29, 0
      %p124 = por %p122, %p123
      %s126 = sadd.s32 %s125, 1
      %p129 = scmp.eq.s32.totalorder %s23, 1
      %p130 = scmp.ne.s32.totalorder %s125, %s127
      %p131 = scmp.eq.s32.totalorder %s23, 0
      %p132 = por %p130, %p131
      %p133 = scmp.ne.s32.totalorder %s125, %s127
      %p134 = scmp.eq.s32.totalorder %s28, 1
      %p135 = por %p133, %p134
      %p136 = scmp.ne.s32.totalorder %s127, %s128
      %p137 = scmp.eq.s32.totalorder %s28, 0
      %p138 = por %p136, %p137
      %p139 = scmp.ne.s32.totalorder %s127, %s128
      %p140 = scmp.eq.s32.totalorder %s29, 1
      %p141 = por %p139, %p140
      %p143 = scmp.ne.s32.totalorder %s128, %s142
      %p144 = scmp.eq.s32.totalorder %s29, 0
      %p145 = por %p143, %p144
      %s147 = sadd.s32 %s146, 1
      %p150 = scmp.eq.s32.totalorder %s23, 1
      %p151 = scmp.ne.s32.totalorder %s146, %s148
      %p152 = scmp.eq.s32.totalorder %s23, 0
      %p153 = por %p151, %p152
      %p154 = scmp.ne.s32.totalorder %s146, %s148
      %p155 = scmp.eq.s32.totalorder %s28, 1
      %p156 = por %p154, %p155
      %p157 = scmp.ne.s32.totalorder %s148, %s149
      %p158 = scmp.eq.s32.totalorder %s28, 0
      %p159 = por %p157, %p158
      %p160 = scmp.ne.s32.totalorder %s148, %s149
      %p161 = scmp.eq.s32.totalorder %s29, 1
      %p162 = por %p160, %p161
      %p164 = scmp.ne.s32.totalorder %s149, %s163
      %p165 = scmp.eq.s32.totalorder %s29, 0
      %p166 = por %p164, %p165
      %s168 = sadd.s32 %s167, 1
      %p171 = scmp.eq.s32.totalorder %s23, 1
      %p172 = scmp.ne.s32.totalorder %s167, %s169
      %p173 = scmp.eq.s32.totalorder %s23, 0
      %p174 = por %p172, %p173
      %p175 = scmp.ne.s32.totalorder %s167, %s169
      %p176 = scmp.eq.s32.totalorder %s28, 1
      %p177 = por %p175, %p176
      %p178 = scmp.ne.s32.totalorder %s169, %s170
      %p179 = scmp.eq.s32.totalorder %s28, 0
      %p180 = por %p178, %p179
      %p181 = scmp.ne.s32.totalorder %s169, %s170
      %p182 = scmp.eq.s32.totalorder %s29, 1
      %p183 = por %p181, %p182
      %p185 = scmp.ne.s32.totalorder %s170, %s184
      %p186 = scmp.eq.s32.totalorder %s29, 0
      %p187 = por %p185, %p186
      %s189 = sadd.s32 %s188, 1
      %p192 = scmp.eq.s32.totalorder %s23, 1
      %p193 = scmp.ne.s32.totalorder %s188, %s190
      %p194 = scmp.eq.s32.totalorder %s23, 0
      %p195 = por %p193, %p194
      %p196 = scmp.ne.s32.totalorder %s188, %s190
      %p197 = scmp.eq.s32.totalorder %s28, 1
      %p198 = por %p196, %p197
      %p199 = scmp.ne.s32.totalorder %s190, %s191
      %p200 = scmp.eq.s32.totalorder %s28, 0
      %p201 = por %p199, %p200
      %p202 = scmp.ne.s32.totalorder %s190, %s191
      %p203 = scmp.eq.s32.totalorder %s29, 1
      %p204 = por %p202, %p203
      %p206 = scmp.ne.s32.totalorder %s191, %s205
      %p207 = scmp.eq.s32.totalorder %s29, 0
      %p208 = por %p206, %p207
      %s210 = sadd.s32 %s209, 1
      %p213 = scmp.eq.s32.totalorder %s23, 1
      %p214 = scmp.ne.s32.totalorder %s209, %s211
      %p215 = scmp.eq.s32.totalorder %s23, 0
      %p216 = por %p214, %p215
      %p217 = scmp.ne.s32.totalorder %s209, %s211
      %p218 = scmp.eq.s32.totalorder %s28, 1
      %p219 = por %p217, %p218
      %p220 = scmp.ne.s32.totalorder %s211, %s212
      %p221 = scmp.eq.s32.totalorder %s28, 0
      %p222 = por %p220, %p221
      %p223 = scmp.ne.s32.totalorder %s211, %s212
      %p224 = scmp.eq.s32.totalorder %s29, 1
      %p225 = por %p223, %p224
      %p227 = scmp.ne.s32.totalorder %s212, %s226
      %p228 = scmp.eq.s32.totalorder %s29, 0
      %p229 = por %p227, %p228
      %s231 = sadd.s32 %s230, 1
      %p234 = scmp.eq.s32.totalorder %s23, 1
      %p235 = scmp.ne.s32.totalorder %s230, %s232
      %p236 = scmp.eq.s32.totalorder %s23, 0
      %p237 = por %p235, %p236
      %p238 = scmp.ne.s32.totalorder %s230, %s232
      %p239 = scmp.eq.s32.totalorder %s28, 1
      %p240 = por %p238, %p239
      %p241 = scmp.ne.s32.totalorder %s232, %s233
      %p242 = scmp.eq.s32.totalorder %s28, 0
      %p243 = por %p241, %p242
      %p244 = scmp.ne.s32.totalorder %s232, %s233
      %p245 = scmp.eq.s32.totalorder %s29, 1
      %p246 = por %p244, %p245
      %p248 = scmp.ne.s32.totalorder %s233, %s247
      %p249 = scmp.eq.s32.totalorder %s29, 0
      %p250 = por %p248, %p249
      %s252 = sadd.s32 %s251, 1
      %p255 = scmp.eq.s32.totalorder %s23, 1
      %p256 = scmp.ne.s32.totalorder %s251, %s253
      %p257 = scmp.eq.s32.totalorder %s23, 0
      %p258 = por %p256, %p257
      %p259 = scmp.ne.s32.totalorder %s251, %s253
      %p260 = scmp.eq.s32.totalorder %s28, 1
      %p261 = por %p259, %p260
      %p262 = scmp.ne.s32.totalorder %s253, %s254
      %p263 = scmp.eq.s32.totalorder %s28, 0
      %p264 = por %p262, %p263
      %p265 = scmp.ne.s32.totalorder %s253, %s254
      %p266 = scmp.eq.s32.totalorder %s29, 1
      %p267 = por %p265, %p266
      %p269 = scmp.ne.s32.totalorder %s254, %s268
      %p270 = scmp.eq.s32.totalorder %s29, 0
      %p271 = por %p269, %p270
      %s273 = sadd.s32 %s272, 1
      %p276 = scmp.eq.s32.totalorder %s23, 1
      %p277 = scmp.ne.s32.totalorder %s272, %s274
      %p278 = scmp.eq.s32.totalorder %s23, 0
      %p279 = por %p277, %p278
      %p280 = scmp.ne.s32.totalorder %s272, %s274
      %p281 = scmp.eq.s32.totalorder %s28, 1
      %p282 = por %p280, %p281
      %p283 = scmp.ne.s32.totalorder %s274, %s275
      %p284 = scmp.eq.s32.totalorder %s28, 0
      %p285 = por %p283, %p284
      %p286 = scmp.ne.s32.totalorder %s274, %s275
      %p287 = scmp.eq.s32.totalorder %s29, 1
      %p288 = por %p286, %p287
      %p290 = scmp.ne.s32.totalorder %s275, %s289
      %p291 = scmp.eq.s32.totalorder %s29, 0
      %p292 = por %p290, %p291
      %s294 = sadd.s32 %s293, 1
      %p297 = scmp.eq.s32.totalorder %s23, 1
      %p298 = scmp.ne.s32.totalorder %s293, %s295
      %p299 = scmp.eq.s32.totalorder %s23, 0
      %p300 = por %p298, %p299
      %p301 = scmp.ne.s32.totalorder %s293, %s295
      %p302 = scmp.eq.s32.totalorder %s28, 1
      %p303 = por %p301, %p302
      %p304 = scmp.ne.s32.totalorder %s295, %s296
      %p305 = scmp.eq.s32.totalorder %s28, 0
      %p306 = por %p304, %p305
      %p307 = scmp.ne.s32.totalorder %s295, %s296
      %p308 = scmp.eq.s32.totalorder %s29, 1
      %p309 = por %p307, %p308
      %p311 = scmp.ne.s32.totalorder %s296, %s310
      %p312 = scmp.eq.s32.totalorder %s29, 0
      %p313 = por %p311, %p312
      %s315 = sadd.s32 %s314, 1
      %p318 = scmp.eq.s32.totalorder %s23, 1
      %p319 = scmp.ne.s32.totalorder %s314, %s316
      %p320 = scmp.eq.s32.totalorder %s23, 0
      %p321 = por %p319, %p320
      %p322 = scmp.ne.s32.totalorder %s314, %s316
      %p323 = scmp.eq.s32.totalorder %s28, 1
      %p324 = por %p322, %p323
      %p325 = scmp.ne.s32.totalorder %s316, %s317
      %p326 = scmp.eq.s32.totalorder %s28, 0
      %p327 = por %p325, %p326
      %p328 = scmp.ne.s32.totalorder %s316, %s317
      %p329 = scmp.eq.s32.totalorder %s29, 1
      %p330 = por %p328, %p329
      %p332 = scmp.ne.s32.totalorder %s317, %s331
      %p333 = scmp.eq.s32.totalorder %s29, 0
      %p334 = por %p332, %p333
      %s335 = ssub.s32 %s23, %s30
      %p336 = scmp.eq.s32.totalorder %s335, 0
      %s338 = sadd.s32 %s337, 1
      %s339 = scalar_select %p336, %s337, %s338
      %p342 = pneg %p336
      %p343 = scmp.eq.s32.totalorder %s23, 1
      %p344 = por %p342, %p343
      %p345 = scmp.ne.s32.totalorder %s337, %s340
      %p346 = scmp.eq.s32.totalorder %s23, 0
      %p347 = por %p345, %p346
      %p348 = scmp.ne.s32.totalorder %s337, %s340
      %p349 = scmp.eq.s32.totalorder %s28, 1
      %p350 = por %p348, %p349
      %p351 = scmp.ne.s32.totalorder %s340, %s341
      %p352 = scmp.eq.s32.totalorder %s28, 0
      %p353 = por %p351, %p352
      %p354 = scmp.ne.s32.totalorder %s340, %s341
      %p355 = scmp.eq.s32.totalorder %s29, 1
      %p356 = por %p354, %p355
      %p358 = scmp.ne.s32.totalorder %s341, %s357
      %p359 = scmp.eq.s32.totalorder %s29, 0
      %p360 = por %p358, %p359
      %p361 = scmp.le.s32.totalorder 1, %s23
      %p362 = scmp.lt.s32.totalorder %s23, 3
      %p363 = pnand %p361, %p362
      %p364 = pneg %p363
      // Predicated region
      $region9: #{tpu_custom_call.1} parent=5 // pred_check
        _
      $region10: #{tpu_custom_call.1} parent=5 // pred_check_branch
        %366 = sbr.rel (%p363) target = $region12
      $region11: #{tpu_custom_call.1} parent=5 // pred_region
        %s367 = ssub.s32 %s23, 1
        // Predicated region
        $region13: #{tpu_custom_call.1} parent=11 // pred_check
          %p368 = pneg %p96
        $region14: #{tpu_custom_call.1} parent=11 // pred_check_branch
          %370 = sbr.rel (%p368) target = $region16
        $region15: #{tpu_custom_call.1} parent=11 // pred_region
          _
        $region16: #{tpu_custom_call.1} parent=11 // pred_fallthru
          _
        // Predicated region
        $region17: #{tpu_custom_call.1} parent=11 // pred_check
          %p371 = pneg %p117
        $region18: #{tpu_custom_call.1} parent=11 // pred_check_branch
          %373 = sbr.rel (%p371) target = $region20
        $region19: #{tpu_custom_call.1} parent=11 // pred_region
          _
        $region20: #{tpu_custom_call.1} parent=11 // pred_fallthru
          _
        // Predicated region
        $region21: #{tpu_custom_call.1} parent=11 // pred_check
          %p374 = pneg %p138
        $region22: #{tpu_custom_call.1} parent=11 // pred_check_branch
          %376 = sbr.rel (%p374) target = $region24
        $region23: #{tpu_custom_call.1} parent=11 // pred_region
          _
        $region24: #{tpu_custom_call.1} parent=11 // pred_fallthru
          _
        // Predicated region
        $region25: #{tpu_custom_call.1} parent=11 // pred_check
          %p377 = pneg %p159
        $region26: #{tpu_custom_call.1} parent=11 // pred_check_branch
          %379 = sbr.rel (%p377) target = $region28
        $region27: #{tpu_custom_call.1} parent=11 // pred_region
          _
        $region28: #{tpu_custom_call.1} parent=11 // pred_fallthru
          _
        // Predicated region
        $region29: #{tpu_custom_call.1} parent=11 // pred_check
          %p380 = pneg %p180
        $region30: #{tpu_custom_call.1} parent=11 // pred_check_branch
          %382 = sbr.rel (%p380) target = $region32
        $region31: #{tpu_custom_call.1} parent=11 // pred_region
          _
        $region32: #{tpu_custom_call.1} parent=11 // pred_fallthru
          _
        // Predicated region
        $region33: #{tpu_custom_call.1} parent=11 // pred_check
          %p383 = pneg %p201
        $region34: #{tpu_custom_call.1} parent=11 // pred_check_branch
          %385 = sbr.rel (%p383) target = $region36
        $region35: #{tpu_custom_call.1} parent=11 // pred_region
          _
        $region36: #{tpu_custom_call.1} parent=11 // pred_fallthru
          _
        // Predicated region
        $region37: #{tpu_custom_call.1} parent=11 // pred_check
          %p386 = pneg %p222
        $region38: #{tpu_custom_call.1} parent=11 // pred_check_branch
          %388 = sbr.rel (%p386) target = $region40
        $region39: #{tpu_custom_call.1} parent=11 // pred_region
          _
        $region40: #{tpu_custom_call.1} parent=11 // pred_fallthru
          _
        // Predicated region
        $region41: #{tpu_custom_call.1} parent=11 // pred_check
          %p389 = pneg %p243
        $region42: #{tpu_custom_call.1} parent=11 // pred_check_branch
          %391 = sbr.rel (%p389) target = $region44
        $region43: #{tpu_custom_call.1} parent=11 // pred_region
          _
        $region44: #{tpu_custom_call.1} parent=11 // pred_fallthru
          _
        // Predicated region
        $region45: #{tpu_custom_call.1} parent=11 // pred_check
          %p392 = pneg %p264
        $region46: #{tpu_custom_call.1} parent=11 // pred_check_branch
          %394 = sbr.rel (%p392) target = $region48
        $region47: #{tpu_custom_call.1} parent=11 // pred_region
          _
        $region48: #{tpu_custom_call.1} parent=11 // pred_fallthru
          _
        // Predicated region
        $region49: #{tpu_custom_call.1} parent=11 // pred_check
          %p395 = pneg %p285
        $region50: #{tpu_custom_call.1} parent=11 // pred_check_branch
          %397 = sbr.rel (%p395) target = $region52
        $region51: #{tpu_custom_call.1} parent=11 // pred_region
          _
        $region52: #{tpu_custom_call.1} parent=11 // pred_fallthru
          _
        // Predicated region
        $region53: #{tpu_custom_call.1} parent=11 // pred_check
          %p398 = pneg %p306
        $region54: #{tpu_custom_call.1} parent=11 // pred_check_branch
          %400 = sbr.rel (%p398) target = $region56
        $region55: #{tpu_custom_call.1} parent=11 // pred_region
          _
        $region56: #{tpu_custom_call.1} parent=11 // pred_fallthru
          _
        // Predicated region
        $region57: #{tpu_custom_call.1} parent=11 // pred_check
          %p401 = pneg %p327
        $region58: #{tpu_custom_call.1} parent=11 // pred_check_branch
          %403 = sbr.rel (%p401) target = $region60
        $region59: #{tpu_custom_call.1} parent=11 // pred_region
          _
        $region60: #{tpu_custom_call.1} parent=11 // pred_fallthru
          _
      $region12: #{tpu_custom_call.1} parent=5 // pred_fallthru
        _
      %p404 = scmp.lt.s32.totalorder %s23, 2
      // Predicated region
      $region61: #{tpu_custom_call.1} parent=5 // pred_check
        %p405 = pneg %p404
      $region62: #{tpu_custom_call.1} parent=5 // pred_check_branch
        %407 = sbr.rel (%p405) target = $region64
      $region63: #{tpu_custom_call.1} parent=5 // pred_region
        // Predicated region
        $region65: #{tpu_custom_call.1} parent=63 // pred_check
          %p408 = pneg %p43
        $region66: #{tpu_custom_call.1} parent=63 // pred_check_branch
          %410 = sbr.rel (%p408) target = $region68
        $region67: #{tpu_custom_call.1} parent=63 // pred_region
          %p411 = scmp.lt.s32.totalorder %s23, 1
          %s412 = scalar_select %p411, %s23, 1
          %s413 = smul.addr %s412, 8
          %s414 = smul.addr %s413, 8
          %s415 = scalar_lea.vmem %s0, %s414
        $region68: #{tpu_custom_call.1} parent=63 // pred_fallthru
          _
        // Predicated region
        $region69: #{tpu_custom_call.1} parent=63 // pred_check
          %p416 = pneg %p69
        $region70: #{tpu_custom_call.1} parent=63 // pred_check_branch
          %418 = sbr.rel (%p416) target = $region72
        $region71: #{tpu_custom_call.1} parent=63 // pred_region
          %p419 = scmp.lt.s32.totalorder %s23, 1
          %s420 = scalar_select %p419, %s23, 1
          %s421 = scalar_lea.vmem %s1, %s420
        $region72: #{tpu_custom_call.1} parent=63 // pred_fallthru
          _
      $region64: #{tpu_custom_call.1} parent=5 // pred_fallthru
        _
      %p422 = scmp.le.s32.totalorder 1, %s23
      %p423 = scmp.lt.s32.totalorder %s23, 3
      %p424 = pnand %p422, %p423
      %p425 = pneg %p424
      // Predicated region
      $region73: #{tpu_custom_call.1} parent=5 // pred_check
        _
      $region74: #{tpu_custom_call.1} parent=5 // pred_check_branch
        %427 = sbr.rel (%p424) target = $region76
      $region75: #{tpu_custom_call.1} parent=5 // pred_region
        %s428 = ssub.s32 %s23, 1
        %p429 = scmp.lt.s32.totalorder %s28, 1
        %s430 = scalar_select %p429, %s28, 1
        %s431 = smul.addr %s430, 8
        %s432 = smul.addr %s431, 8
        %s433 = scalar_lea.vmem %s0, %s432
        %p434 = pneg %p49
        %p435 = pneg %p46
        %p436 = scmp.lt.s32.totalorder %s28, 1
        %s437 = scalar_select %p436, %s28, 1
        %s438 = scalar_lea.vmem %s1, %s437
        %p439 = pneg %p75
        %p440 = pneg %p72
        %p441 = pneg %p96
        %p442 = pneg %p93
        %p443 = pneg %p117
        %p444 = pneg %p114
        %p445 = pneg %p138
        %p446 = pneg %p135
        %p447 = pneg %p159
        %p448 = pneg %p156
        %p449 = pneg %p180
        %p450 = pneg %p177
        %p451 = pneg %p201
        %p452 = pneg %p198
        %p453 = pneg %p222
        %p454 = pneg %p219
        %p455 = pneg %p243
        %p456 = pneg %p240
        %p457 = pneg %p264
        %p458 = pneg %p261
        %p459 = pneg %p285
        %p460 = pneg %p282
        %p461 = pneg %p306
        %p462 = pneg %p303
        %p463 = pneg %p327
        %p464 = pneg %p324
        %p465 = pneg %p353
        %p466 = pneg %p350
        %s467 = sand.u32 %s340, 1
        %s468 = scalar_lea.sflag [#allocation3], %s467
        %s469 = sand.u32 %s340, 1
        %s470 = smul.addr %s469, 128
        %s471 = scalar_lea.vmem [#allocation2], %s470
        %p472 = scmp.lt.s32.totalorder %s28, 1
        %s473 = scalar_select %p472, %s28, 1
        %s474 = smul.addr %s473, 8
        %s475 = smul.addr %s474, 8
        %s476 = scalar_lea.vmem %s0, %s475
        %p477 = scmp.lt.s32.totalorder %s28, 1
        %s478 = scalar_select %p477, %s28, 1
        %s479 = scalar_lea.vmem %s1, %s478
        %v481 = vld [vmem:[%s476] sm:$0xff]
        %v482 = vld [vmem:[%s476 + $0x8] sm:$0xff]
        %v483 = vld [vmem:[%s476 + $0x10] sm:$0xff]
        %v484 = vld [vmem:[%s476 + $0x18] sm:$0xff]
        %v485 = vld [vmem:[%s476 + $0x20] sm:$0xff]
        %v486 = vld [vmem:[%s476 + $0x28] sm:$0xff]
        %v487 = vld [vmem:[%s476 + $0x30] sm:$0xff]
        %v488 = vld [vmem:[%s476 + $0x38] sm:$0xff]
        %v489 = vld [vmem:[%s479] sm:$0x1]
        %v490 = vmax.f32 %v489, 0.0
        %v491 = vld [vmem:[%s8] sm:$0xff]
        %v492 = vld [vmem:[%s8 + $0x8] sm:$0xff]
        %v493 = vld [vmem:[%s8 + $0x10] sm:$0xff]
        %v494 = vld [vmem:[%s8 + $0x18] sm:$0xff]
        %v495 = vld [vmem:[%s8 + $0x20] sm:$0xff]
        %v496 = vld [vmem:[%s8 + $0x28] sm:$0xff]
        %v497 = vld [vmem:[%s8 + $0x30] sm:$0xff]
        %v498 = vld [vmem:[%s8 + $0x38] sm:$0xff]
        %v500 = vlaneseq
        %v501 = vshrl.u32 %v500, 7
        %v502 = vsub.s32 0, %v501
        %v503 = vrot.slane %v490, %v502
        %v505 = vmul.f32 %v491, %v503
        %v506 = vmul.f32 %v492, %v503
        %v507 = vmul.f32 %v493, %v503
        %v508 = vmul.f32 %v494, %v503
        %v509 = vmul.f32 %v495, %v503
        %v510 = vmul.f32 %v496, %v503
        %v511 = vmul.f32 %v497, %v503
        %v512 = vmul.f32 %v498, %v503
        %vm513 = vcmask 261120
        %v514 = vsel %vm513, %v505, 0.0
        %515 = vadd.xlane.f32.xlu0 %v514
        %v516 = vpop.xlane.xlu0 %515
        %v517 = vsel %vm513, %v506, 0.0
        %518 = vadd.xlane.f32.xlu0 %v517
        %v519 = vpop.xlane.xlu0 %518
        %v520 = vsel %vm513, %v507, 0.0
        %521 = vadd.xlane.f32.xlu0 %v520
        %v522 = vpop.xlane.xlu0 %521
        %v523 = vsel %vm513, %v508, 0.0
        %524 = vadd.xlane.f32.xlu0 %v523
        %v525 = vpop.xlane.xlu0 %524
        %v526 = vsel %vm513, %v509, 0.0
        %527 = vadd.xlane.f32.xlu0 %v526
        %v528 = vpop.xlane.xlu0 %527
        %v529 = vsel %vm513, %v510, 0.0
        %530 = vadd.xlane.f32.xlu0 %v529
        %v531 = vpop.xlane.xlu0 %530
        %v532 = vsel %vm513, %v511, 0.0
        %533 = vadd.xlane.f32.xlu0 %v532
        %v534 = vpop.xlane.xlu0 %533
        %v535 = vsel %vm513, %v512, 0.0
        %536 = vadd.xlane.f32.xlu0 %v535
        %v537 = vpop.xlane.xlu0 %536
        %v538 = vld [vmem:[%s9] sm:$0xff]
        %v539 = vld [vmem:[%s9 + $0x8] sm:$0xff]
        %v540 = vld [vmem:[%s9 + $0x10] sm:$0xff]
        %v541 = vld [vmem:[%s9 + $0x18] sm:$0xff]
        %v542 = vld [vmem:[%s9 + $0x20] sm:$0xff]
        %v543 = vld [vmem:[%s9 + $0x28] sm:$0xff]
        %v544 = vld [vmem:[%s9 + $0x30] sm:$0xff]
        %v545 = vld [vmem:[%s9 + $0x38] sm:$0xff]
        %v546 = vadd.f32 %v516, %v538
        %v547 = vadd.f32 %v519, %v539
        %v548 = vadd.f32 %v522, %v540
        %v549 = vadd.f32 %v525, %v541
        %v550 = vadd.f32 %v528, %v542
        %v551 = vadd.f32 %v531, %v543
        %v552 = vadd.f32 %v534, %v544
        %v553 = vadd.f32 %v537, %v545
        %v554 = vld [vmem:[%s10] sm:$0xff]
        %v555 = vld [vmem:[%s10 + $0x8] sm:$0xff]
        %v556 = vld [vmem:[%s10 + $0x10] sm:$0xff]
        %v557 = vld [vmem:[%s10 + $0x18] sm:$0xff]
        %v558 = vld [vmem:[%s11] sm:$0xff]
        %v559 = vld [vmem:[%s11 + $0x8] sm:$0xff]
        %v560 = vld [vmem:[%s11 + $0x10] sm:$0xff]
        %v561 = vld [vmem:[%s11 + $0x18] sm:$0xff]
        %v562 = vadd.f32 %v481, %v482
        %563 = vadd.xlane.f32.xlu0 %v562
        %v564 = vpop.xlane.xlu0 %563
        %v565 = vadd.f32 %v483, %v484
        %566 = vadd.xlane.f32.xlu0 %v565
        %v567 = vpop.xlane.xlu0 %566
        %v568 = vadd.f32 %v485, %v486
        %569 = vadd.xlane.f32.xlu0 %v568
        %v570 = vpop.xlane.xlu0 %569
        %v571 = vadd.f32 %v487, %v488
        %572 = vadd.xlane.f32.xlu0 %v571
        %v573 = vpop.xlane.xlu0 %572
        %v574 = vmul.f32 %v481, %v481
        %v575 = vmul.f32 %v482, %v482
        %v576 = vmul.f32 %v483, %v483
        %v577 = vmul.f32 %v484, %v484
        %v578 = vmul.f32 %v485, %v485
        %v579 = vmul.f32 %v486, %v486
        %v580 = vmul.f32 %v487, %v487
        %v581 = vmul.f32 %v488, %v488
        %v582 = vadd.f32 %v574, %v575
        %583 = vadd.xlane.f32.xlu0 %v582
        %v584 = vpop.xlane.xlu0 %583
        %v585 = vadd.f32 %v576, %v577
        %586 = vadd.xlane.f32.xlu0 %v585
        %v587 = vpop.xlane.xlu0 %586
        %v588 = vadd.f32 %v578, %v579
        %589 = vadd.xlane.f32.xlu0 %v588
        %v590 = vpop.xlane.xlu0 %589
        %v591 = vadd.f32 %v580, %v581
        %592 = vadd.xlane.f32.xlu0 %v591
        %v593 = vpop.xlane.xlu0 %592
        %v594 = vmul.f32 %v564, 0.00390625
        %v595 = vmul.f32 %v567, 0.00390625
        %v596 = vmul.f32 %v570, 0.00390625
        %v597 = vmul.f32 %v573, 0.00390625
        %v598 = vmul.f32 %v584, 0.00390625
        %v599 = vmul.f32 %v587, 0.00390625
        %v600 = vmul.f32 %v590, 0.00390625
        %v601 = vmul.f32 %v593, 0.00390625
        %v602 = vmul.f32 %v594, %v594
        %v603 = vmul.f32 %v595, %v595
        %v604 = vmul.f32 %v596, %v596
        %v605 = vmul.f32 %v597, %v597
        %v606 = vsub.f32 %v598, %v602
        %v607 = vsub.f32 %v599, %v603
        %v608 = vsub.f32 %v600, %v604
        %v609 = vsub.f32 %v601, %v605
        %v610 = vadd.f32 %v606, 1e-05
        %v611 = vadd.f32 %v607, 1e-05
        %v612 = vadd.f32 %v608, 1e-05
        %v613 = vadd.f32 %v609, 1e-05
        %v614 = vrsqrt.pop %v610
        %v615 = vrsqrt.pop %v611
        %v616 = vrsqrt.pop %v612
        %v617 = vrsqrt.pop %v613
        %v618 = vsub.f32 %v481, %v594
        %v619 = vsub.f32 %v482, %v594
        %v620 = vsub.f32 %v483, %v595
        %v621 = vsub.f32 %v484, %v595
        %v622 = vsub.f32 %v485, %v596
        %v623 = vsub.f32 %v486, %v596
        %v624 = vsub.f32 %v487, %v597
        %v625 = vsub.f32 %v488, %v597
        %v626 = vmul.f32 %v618, %v614
        %v627 = vmul.f32 %v619, %v614
        %v628 = vmul.f32 %v620, %v615
        %v629 = vmul.f32 %v621, %v615
        %v630 = vmul.f32 %v622, %v616
        %v631 = vmul.f32 %v623, %v616
        %v632 = vmul.f32 %v624, %v617
        %v633 = vmul.f32 %v625, %v617
        %635 = vset.pattern.permute.xlu0 0
        %636 = vperm.xlu0 %635, %v554
        %v637 = vpop.permute.xlu0 %636
        %640 = vset.pattern.permute.xlu0 0
        %641 = vperm.xlu0 %640, %v555
        %v642 = vpop.permute.xlu0 %641
        %645 = vset.pattern.permute.xlu0 0
        %646 = vperm.xlu0 %645, %v556
        %v647 = vpop.permute.xlu0 %646
        %650 = vset.pattern.permute.xlu0 0
        %651 = vperm.xlu0 %650, %v557
        %v652 = vpop.permute.xlu0 %651
        %v654 = vmul.f32 %v626, %v637
        %v655 = vmul.f32 %v627, %v637
        %v656 = vmul.f32 %v628, %v642
        %v657 = vmul.f32 %v629, %v642
        %v658 = vmul.f32 %v630, %v647
        %v659 = vmul.f32 %v631, %v647
        %v660 = vmul.f32 %v632, %v652
        %v661 = vmul.f32 %v633, %v652
        %663 = vset.pattern.permute.xlu0 0
        %664 = vperm.xlu0 %663, %v558
        %v665 = vpop.permute.xlu0 %664
        %668 = vset.pattern.permute.xlu0 0
        %669 = vperm.xlu0 %668, %v559
        %v670 = vpop.permute.xlu0 %669
        %673 = vset.pattern.permute.xlu0 0
        %674 = vperm.xlu0 %673, %v560
        %v675 = vpop.permute.xlu0 %674
        %678 = vset.pattern.permute.xlu0 0
        %679 = vperm.xlu0 %678, %v561
        %v680 = vpop.permute.xlu0 %679
        %v682 = vadd.f32 %v654, %v665
        %v683 = vadd.f32 %v655, %v665
        %v684 = vadd.f32 %v656, %v670
        %v685 = vadd.f32 %v657, %v670
        %v686 = vadd.f32 %v658, %v675
        %v687 = vadd.f32 %v659, %v675
        %v688 = vadd.f32 %v660, %v680
        %v689 = vadd.f32 %v661, %v680
        %698 = vrot.lane.b32.xlu0 %v682, 17
        %v699 = vpop.permute.xlu0 %698
        %700 = vrot.lane.b32.xlu0 %v683, 17
        %v701 = vpop.permute.xlu0 %700
        %702 = vrot.lane.b32.xlu0 %v684, 17
        %v703 = vpop.permute.xlu0 %702
        %704 = vrot.lane.b32.xlu0 %v685, 17
        %v705 = vpop.permute.xlu0 %704
        %706 = vrot.lane.b32.xlu0 %v686, 17
        %v707 = vpop.permute.xlu0 %706
        %708 = vrot.lane.b32.xlu0 %v687, 17
        %v709 = vpop.permute.xlu0 %708
        %710 = vrot.lane.b32.xlu0 %v688, 17
        %v711 = vpop.permute.xlu0 %710
        %712 = vrot.lane.b32.xlu0 %v689, 17
        %v713 = vpop.permute.xlu0 %712
        %vm714 = vcmask 138240
        %v715 = vsel %vm714, %v699, %v701
        %v716 = vsel %vm714, %v703, %v705
        %v717 = vsel %vm714, %v707, %v709
        %v718 = vsel %vm714, %v711, %v713
        %v727 = vsel %vm714, 0.0, %v699
        %v728 = vsel %vm714, 0.0, %v703
        %v729 = vsel %vm714, 0.0, %v707
        %v730 = vsel %vm714, 0.0, %v711
        %v731 = vlaneseq
        %v732 = vand.u32 %v731, 127
        %v733 = vadd.s32 %v732, 128
        %vm734 = vcmp.lt.s32.totalorder %v732, 0
        %v735 = vsub.s32 0, %v732
        %v736 = vsel %vm734, %v735, %v732
        %v737 = vshrl.u32 %v736, 4
        %v738 = vand.u32 %v736, 15
        %v739 = vsub.s32 0, %v738
        %v740 = vsel %vm734, %v739, %v738
        %vm741 = vcmp.lt.s32.totalorder %v733, 0
        %v742 = vsub.s32 0, %v733
        %v743 = vsel %vm741, %v742, %v733
        %v744 = vshrl.u32 %v743, 4
        %v745 = vand.u32 %v743, 15
        %v746 = vsub.s32 0, %v745
        %v747 = vsel %vm741, %v746, %v745
        %vm748 = vcmp.ne.s32.totalorder %v740, 0
        %vm749 = vcmp.ne.s32.totalorder %v747, 0
        %vm750 = vcmp.lt.s32.totalorder %v740, 0
        %vm751 = vcmp.lt.s32.totalorder %v747, 0
        %vm752 = vmand %vm750, %vm748
        %vm753 = vmand %vm751, %vm749
        %v754 = vadd.s32 %v740, 16
        %v755 = vadd.s32 %v747, 16
        %v756 = vsel %vm752, %v754, %v740
        %v757 = vsel %vm753, %v755, %v747
        %vm758 = vcmp.ge.s32.totalorder %v756, 1
        %vm759 = vcmp.ge.s32.totalorder %v757, 1
        %v760 = vsel %vm758, 1, 0
        %v761 = vsel %vm759, 1, 0
        %vm762 = vcmp.eq.s32.totalorder %v760, 1
        %vm763 = vcmp.eq.s32.totalorder %v761, 1
        %v764 = vsel %vm762, %v727, 0.0
        %v765 = vsel %vm763, %v715, 0.0
        %v766 = vsel %vm762, %v728, 0.0
        %v767 = vsel %vm763, %v716, 0.0
        %v768 = vsel %vm762, %v729, 0.0
        %v769 = vsel %vm763, %v717, 0.0
        %v770 = vsel %vm762, %v730, 0.0
        %v771 = vsel %vm763, %v718, 0.0
        %v772 = vpack.c.bf16 %v766, %v764
        %v773 = vpack.c.bf16 %v767, %v765
        %v774 = vpack.c.bf16 %v770, %v768
        %v775 = vpack.c.bf16 %v771, %v769
        %v776 = vld [vmem:[%s2] sm:$0xf]
        %v777 = vld [vmem:[%s2 + $0x4] sm:$0xf]
        %v778 = vld [vmem:[%s2 + $0x8] sm:$0xf]
        %v779 = vld [vmem:[%s2 + $0xc] sm:$0xf]
        %v780 = vld [vmem:[%s2 + $0x10] sm:$0xf]
        %v781 = vld [vmem:[%s2 + $0x14] sm:$0xf]
        %v782 = vld [vmem:[%s2 + $0x18] sm:$0xf]
        %v783 = vld [vmem:[%s2 + $0x1c] sm:$0xf]
        %784 = vrot.lane.b32.xlu0 %v682, 16
        %v785 = vpop.permute.xlu0 %784
        %786 = vrot.lane.b32.xlu0 %v683, 16
        %v787 = vpop.permute.xlu0 %786
        %788 = vrot.lane.b32.xlu0 %v684, 16
        %v789 = vpop.permute.xlu0 %788
        %790 = vrot.lane.b32.xlu0 %v685, 16
        %v791 = vpop.permute.xlu0 %790
        %792 = vrot.lane.b32.xlu0 %v686, 16
        %v793 = vpop.permute.xlu0 %792
        %794 = vrot.lane.b32.xlu0 %v687, 16
        %v795 = vpop.permute.xlu0 %794
        %796 = vrot.lane.b32.xlu0 %v688, 16
        %v797 = vpop.permute.xlu0 %796
        %798 = vrot.lane.b32.xlu0 %v689, 16
        %v799 = vpop.permute.xlu0 %798
        %vm800 = vcmask 130048
        %v801 = vsel %vm800, %v785, %v787
        %v802 = vsel %vm800, %v789, %v791
        %v803 = vsel %vm800, %v793, %v795
        %v804 = vsel %vm800, %v797, %v799
        %v813 = vsel %vm800, 0.0, %v785
        %v814 = vsel %vm800, 0.0, %v789
        %v815 = vsel %vm800, 0.0, %v793
        %v816 = vsel %vm800, 0.0, %v797
        %v817 = vpack.c.bf16 %v814, %v813
        %v818 = vpack.c.bf16 %v802, %v801
        %v819 = vpack.c.bf16 %v816, %v815
        %v820 = vpack.c.bf16 %v804, %v803
        %s821 = scalar_lea.vmem %s2, 32
        %v822 = vld [vmem:[%s821] sm:$0xf]
        %v823 = vld [vmem:[%s821 + $0x4] sm:$0xf]
        %v824 = vld [vmem:[%s821 + $0x8] sm:$0xf]
        %v825 = vld [vmem:[%s821 + $0xc] sm:$0xf]
        %v826 = vld [vmem:[%s821 + $0x10] sm:$0xf]
        %v827 = vld [vmem:[%s821 + $0x14] sm:$0xf]
        %v828 = vld [vmem:[%s821 + $0x18] sm:$0xf]
        %v829 = vld [vmem:[%s821 + $0x1c] sm:$0xf]
        %v838 = vunpack.c.l.b16 %v822
        %v839 = vunpack.c.l.b16 %v823
        %v840 = vunpack.c.l.b16 %v824
        %v841 = vunpack.c.l.b16 %v825
        %v842 = vunpack.c.l.b16 %v826
        %v843 = vunpack.c.l.b16 %v827
        %v844 = vunpack.c.l.b16 %v828
        %v845 = vunpack.c.l.b16 %v829
        %v846 = vpack.c.b16 %v839, %v838
        %v847 = vpack.c.b16 %v841, %v840
        %v848 = vpack.c.b16 %v843, %v842
        %v849 = vpack.c.b16 %v845, %v844
        %v851 = vsel %vm513, %v846, 0
        %v854 = vsel %vm513, %v847, 0
        %v857 = vsel %vm513, %v848, 0
        %v860 = vsel %vm513, %v849, 0
        %862 = vmatprep.subr.bf16.mxu0 0
        %863 = vmatpush1.bf16.msra.mxu0 0
        %864 = vmatprep.subr.bf16.mxu0 0
        %865 = vmatpush1.bf16.msra.mxu0 0
        %866 = vmatprep.subr.bf16.mxu0 0
        %867 = vmatpush1.bf16.msra.mxu0 0
        %868 = vmatprep.subr.bf16.mxu0 0
        %869 = vmatpush1.bf16.msra.mxu0 0
        %870 = vmatprep.subr.bf16.mxu0 0
        %871 = vmatpush1.bf16.msra.mxu0 0
        %872 = vmatprep.subr.bf16.mxu0 0
        %873 = vmatpush1.bf16.msra.mxu0 0
        %874 = vmatprep.subr.bf16.mxu0 %v820
        %875 = vmatpush1.bf16.msra.mxu0 %v819
        %876 = vmatprep.subr.bf16.mxu0 %v818
        %877 = vmatpush1.bf16.msra.mxu0 %v817
        %878 = vmatprep.subr.bf16.mxu0 0
        %879 = vmatpush2.bf16.msra.mxu0 0
        %880 = vmatprep.subr.bf16.mxu0 0
        %881 = vmatpush2.bf16.msra.mxu0 0
        %882 = vmatprep.subr.bf16.mxu0 0
        %883 = vmatpush2.bf16.msra.mxu0 0
        %884 = vmatprep.subr.bf16.mxu0 0
        %885 = vmatpush2.bf16.msra.mxu0 0
        %886 = vmatprep.subr.bf16.mxu0 0
        %887 = vmatpush2.bf16.msra.mxu0 0
        %888 = vmatprep.subr.bf16.mxu0 0
        %889 = vmatpush2.bf16.msra.mxu0 0
        %890 = vmatprep.subr.bf16.mxu0 0
        %891 = vmatpush2.bf16.msra.mxu0 0
        %892 = vmatprep.subr.bf16.mxu0 0
        %893 = vmatpush2.bf16.msra.mxu0 0
        %894 = vmatprep.mubr.bf16.mxu0 0
        %895 = vmatmul.mubr.bf16.gmra.mxu0 %v851
        %v896 = vpop.f32.mrf.mxu0
        %v897 = vadd.f32 0.0, %v896
        %v898 = vpop.f32.mrf.mxu0
        %v899 = vadd.f32 0.0, %v898
        %v900 = vpop.f32.mrf.mxu0
        %v901 = vadd.f32 0.0, %v900
        %v902 = vpop.f32.mrf.mxu0
        %v903 = vadd.f32 0.0, %v902
        %904 = vmatprep.mubr.bf16.mxu0 0
        %905 = vmatmul.mubr.bf16.gmra.mxu0 %v854
        %v906 = vpop.f32.mrf.mxu0
        %v907 = vadd.f32 0.0, %v906
        %v908 = vpop.f32.mrf.mxu0
        %v909 = vadd.f32 0.0, %v908
        %v910 = vpop.f32.mrf.mxu0
        %v911 = vadd.f32 0.0, %v910
        %v912 = vpop.f32.mrf.mxu0
        %v913 = vadd.f32 0.0, %v912
        %914 = vmatprep.mubr.bf16.mxu0 0
        %915 = vmatmul.mubr.bf16.gmra.mxu0 %v857
        %v916 = vpop.f32.mrf.mxu0
        %v917 = vadd.f32 0.0, %v916
        %v918 = vpop.f32.mrf.mxu0
        %v919 = vadd.f32 0.0, %v918
        %v920 = vpop.f32.mrf.mxu0
        %v921 = vadd.f32 0.0, %v920
        %v922 = vpop.f32.mrf.mxu0
        %v923 = vadd.f32 0.0, %v922
        %924 = vmatprep.mubr.bf16.mxu0 0
        %925 = vmatmul.mubr.bf16.gmra.mxu0 %v860
        %v926 = vpop.f32.mrf.mxu0
        %v927 = vadd.f32 0.0, %v926
        %v928 = vpop.f32.mrf.mxu0
        %v929 = vadd.f32 0.0, %v928
        %v930 = vpop.f32.mrf.mxu0
        %v931 = vadd.f32 0.0, %v930
        %v932 = vpop.f32.mrf.mxu0
        %v933 = vadd.f32 0.0, %v932
        %934 = vdwg.mxu0
        %v943 = vunpack.c.l.b16 %v776
        %v944 = vunpack.c.l.b16 %v777
        %v945 = vunpack.c.l.b16 %v778
        %v946 = vunpack.c.l.b16 %v779
        %v947 = vunpack.c.l.b16 %v780
        %v948 = vunpack.c.l.b16 %v781
        %v949 = vunpack.c.l.b16 %v782
        %v950 = vunpack.c.l.b16 %v783
        %v951 = vpack.c.b16 %v944, %v943
        %v952 = vpack.c.b16 %v946, %v945
        %v953 = vpack.c.b16 %v948, %v947
        %v954 = vpack.c.b16 %v950, %v949
        %v956 = vsel %vm513, %v951, 0
        %v959 = vsel %vm513, %v952, 0
        %v962 = vsel %vm513, %v953, 0
        %v965 = vsel %vm513, %v954, 0
        %967 = vmatprep.subr.bf16.mxu0 0
        %968 = vmatpush1.bf16.msra.mxu0 0
        %969 = vmatprep.subr.bf16.mxu0 0
        %970 = vmatpush1.bf16.msra.mxu0 0
        %971 = vmatprep.subr.bf16.mxu0 0
        %972 = vmatpush1.bf16.msra.mxu0 0
        %973 = vmatprep.subr.bf16.mxu0 0
        %974 = vmatpush1.bf16.msra.mxu0 0
        %975 = vmatprep.subr.bf16.mxu0 0
        %976 = vmatpush1.bf16.msra.mxu0 0
        %977 = vmatprep.subr.bf16.mxu0 0
        %978 = vmatpush1.bf16.msra.mxu0 0
        %979 = vmatprep.subr.bf16.mxu0 %v775
        %980 = vmatpush1.bf16.msra.mxu0 %v774
        %981 = vmatprep.subr.bf16.mxu0 %v773
        %982 = vmatpush1.bf16.msra.mxu0 %v772
        %983 = vmatprep.subr.bf16.mxu0 0
        %984 = vmatpush2.bf16.msra.mxu0 0
        %985 = vmatprep.subr.bf16.mxu0 0
        %986 = vmatpush2.bf16.msra.mxu0 0
        %987 = vmatprep.subr.bf16.mxu0 0
        %988 = vmatpush2.bf16.msra.mxu0 0
        %989 = vmatprep.subr.bf16.mxu0 0
        %990 = vmatpush2.bf16.msra.mxu0 0
        %991 = vmatprep.subr.bf16.mxu0 0
        %992 = vmatpush2.bf16.msra.mxu0 0
        %993 = vmatprep.subr.bf16.mxu0 0
        %994 = vmatpush2.bf16.msra.mxu0 0
        %995 = vmatprep.subr.bf16.mxu0 0
        %996 = vmatpush2.bf16.msra.mxu0 0
        %997 = vmatprep.subr.bf16.mxu0 0
        %998 = vmatpush2.bf16.msra.mxu0 0
        %999 = vmatprep.mubr.bf16.mxu0 0
        %1000 = vmatmul.mubr.bf16.gmra.mxu0 %v956
        %v1001 = vpop.f32.mrf.mxu0
        %v1002 = vadd.f32 %v897, %v1001
        %v1003 = vpop.f32.mrf.mxu0
        %v1004 = vadd.f32 %v899, %v1003
        %v1005 = vpop.f32.mrf.mxu0
        %v1006 = vadd.f32 %v901, %v1005
        %v1007 = vpop.f32.mrf.mxu0
        %v1008 = vadd.f32 %v903, %v1007
        %1009 = vmatprep.mubr.bf16.mxu0 0
        %1010 = vmatmul.mubr.bf16.gmra.mxu0 %v959
        %v1011 = vpop.f32.mrf.mxu0
        %v1012 = vadd.f32 %v907, %v1011
        %v1013 = vpop.f32.mrf.mxu0
        %v1014 = vadd.f32 %v909, %v1013
        %v1015 = vpop.f32.mrf.mxu0
        %v1016 = vadd.f32 %v911, %v1015
        %v1017 = vpop.f32.mrf.mxu0
        %v1018 = vadd.f32 %v913, %v1017
        %1019 = vmatprep.mubr.bf16.mxu0 0
        %1020 = vmatmul.mubr.bf16.gmra.mxu0 %v962
        %v1021 = vpop.f32.mrf.mxu0
        %v1022 = vadd.f32 %v917, %v1021
        %v1023 = vpop.f32.mrf.mxu0
        %v1024 = vadd.f32 %v919, %v1023
        %v1025 = vpop.f32.mrf.mxu0
        %v1026 = vadd.f32 %v921, %v1025
        %v1027 = vpop.f32.mrf.mxu0
        %v1028 = vadd.f32 %v923, %v1027
        %1029 = vmatprep.mubr.bf16.mxu0 0
        %1030 = vmatmul.mubr.bf16.gmra.mxu0 %v965
        %v1031 = vpop.f32.mrf.mxu0
        %v1032 = vadd.f32 %v927, %v1031
        %v1033 = vpop.f32.mrf.mxu0
        %v1034 = vadd.f32 %v929, %v1033
        %v1035 = vpop.f32.mrf.mxu0
        %v1036 = vadd.f32 %v931, %v1035
        %v1037 = vpop.f32.mrf.mxu0
        %v1038 = vadd.f32 %v933, %v1037
        %1039 = vdwg.mxu0
        %1040 = vrot.lane.b32.xlu0 %v682, 15
        %v1041 = vpop.permute.xlu0 %1040
        %1042 = vrot.lane.b32.xlu0 %v683, 15
        %v1043 = vpop.permute.xlu0 %1042
        %1044 = vrot.lane.b32.xlu0 %v684, 15
        %v1045 = vpop.permute.xlu0 %1044
        %1046 = vrot.lane.b32.xlu0 %v685, 15
        %v1047 = vpop.permute.xlu0 %1046
        %1048 = vrot.lane.b32.xlu0 %v686, 15
        %v1049 = vpop.permute.xlu0 %1048
        %1050 = vrot.lane.b32.xlu0 %v687, 15
        %v1051 = vpop.permute.xlu0 %1050
        %1052 = vrot.lane.b32.xlu0 %v688, 15
        %v1053 = vpop.permute.xlu0 %1052
        %1054 = vrot.lane.b32.xlu0 %v689, 15
        %v1055 = vpop.permute.xlu0 %1054
        %vm1056 = vcmask 121856
        %v1057 = vsel %vm1056, %v1041, %v1043
        %v1058 = vsel %vm1056, %v1045, %v1047
        %v1059 = vsel %vm1056, %v1049, %v1051
        %v1060 = vsel %vm1056, %v1053, %v1055
        %v1069 = vsel %vm1056, 0.0, %v1041
        %v1070 = vsel %vm1056, 0.0, %v1045
        %v1071 = vsel %vm1056, 0.0, %v1049
        %v1072 = vsel %vm1056, 0.0, %v1053
        %vm1073 = vcmp.lt.s32.totalorder %v756, 15
        %vm1074 = vcmp.lt.s32.totalorder %v757, 15
        %v1075 = vsel %vm1073, 1, 0
        %v1076 = vsel %vm1074, 1, 0
        %vm1077 = vcmp.eq.s32.totalorder %v1075, 1
        %vm1078 = vcmp.eq.s32.totalorder %v1076, 1
        %v1079 = vsel %vm1077, %v1069, 0.0
        %v1080 = vsel %vm1078, %v1057, 0.0
        %v1081 = vsel %vm1077, %v1070, 0.0
        %v1082 = vsel %vm1078, %v1058, 0.0
        %v1083 = vsel %vm1077, %v1071, 0.0
        %v1084 = vsel %vm1078, %v1059, 0.0
        %v1085 = vsel %vm1077, %v1072, 0.0
        %v1086 = vsel %vm1078, %v1060, 0.0
        %v1087 = vpack.c.bf16 %v1081, %v1079
        %v1088 = vpack.c.bf16 %v1082, %v1080
        %v1089 = vpack.c.bf16 %v1085, %v1083
        %v1090 = vpack.c.bf16 %v1086, %v1084
        %s1091 = scalar_lea.vmem %s2, 64
        %v1092 = vld [vmem:[%s1091] sm:$0xf]
        %v1093 = vld [vmem:[%s1091 + $0x4] sm:$0xf]
        %v1094 = vld [vmem:[%s1091 + $0x8] sm:$0xf]
        %v1095 = vld [vmem:[%s1091 + $0xc] sm:$0xf]
        %v1096 = vld [vmem:[%s1091 + $0x10] sm:$0xf]
        %v1097 = vld [vmem:[%s1091 + $0x14] sm:$0xf]
        %v1098 = vld [vmem:[%s1091 + $0x18] sm:$0xf]
        %v1099 = vld [vmem:[%s1091 + $0x1c] sm:$0xf]
        %v1108 = vunpack.c.l.b16 %v1092
        %v1109 = vunpack.c.l.b16 %v1093
        %v1110 = vunpack.c.l.b16 %v1094
        %v1111 = vunpack.c.l.b16 %v1095
        %v1112 = vunpack.c.l.b16 %v1096
        %v1113 = vunpack.c.l.b16 %v1097
        %v1114 = vunpack.c.l.b16 %v1098
        %v1115 = vunpack.c.l.b16 %v1099
        %v1116 = vpack.c.b16 %v1109, %v1108
        %v1117 = vpack.c.b16 %v1111, %v1110
        %v1118 = vpack.c.b16 %v1113, %v1112
        %v1119 = vpack.c.b16 %v1115, %v1114
        %v1121 = vsel %vm513, %v1116, 0
        %v1124 = vsel %vm513, %v1117, 0
        %v1127 = vsel %vm513, %v1118, 0
        %v1130 = vsel %vm513, %v1119, 0
        %1132 = vmatprep.subr.bf16.mxu0 0
        %1133 = vmatpush1.bf16.msra.mxu0 0
        %1134 = vmatprep.subr.bf16.mxu0 0
        %1135 = vmatpush1.bf16.msra.mxu0 0
        %1136 = vmatprep.subr.bf16.mxu0 0
        %1137 = vmatpush1.bf16.msra.mxu0 0
        %1138 = vmatprep.subr.bf16.mxu0 0
        %1139 = vmatpush1.bf16.msra.mxu0 0
        %1140 = vmatprep.subr.bf16.mxu0 0
        %1141 = vmatpush1.bf16.msra.mxu0 0
        %1142 = vmatprep.subr.bf16.mxu0 0
        %1143 = vmatpush1.bf16.msra.mxu0 0
        %1144 = vmatprep.subr.bf16.mxu0 %v1090
        %1145 = vmatpush1.bf16.msra.mxu0 %v1089
        %1146 = vmatprep.subr.bf16.mxu0 %v1088
        %1147 = vmatpush1.bf16.msra.mxu0 %v1087
        %1148 = vmatprep.subr.bf16.mxu0 0
        %1149 = vmatpush2.bf16.msra.mxu0 0
        %1150 = vmatprep.subr.bf16.mxu0 0
        %1151 = vmatpush2.bf16.msra.mxu0 0
        %1152 = vmatprep.subr.bf16.mxu0 0
        %1153 = vmatpush2.bf16.msra.mxu0 0
        %1154 = vmatprep.subr.bf16.mxu0 0
        %1155 = vmatpush2.bf16.msra.mxu0 0
        %1156 = vmatprep.subr.bf16.mxu0 0
        %1157 = vmatpush2.bf16.msra.mxu0 0
        %1158 = vmatprep.subr.bf16.mxu0 0
        %1159 = vmatpush2.bf16.msra.mxu0 0
        %1160 = vmatprep.subr.bf16.mxu0 0
        %1161 = vmatpush2.bf16.msra.mxu0 0
        %1162 = vmatprep.subr.bf16.mxu0 0
        %1163 = vmatpush2.bf16.msra.mxu0 0
        %1164 = vmatprep.mubr.bf16.mxu0 0
        %1165 = vmatmul.mubr.bf16.gmra.mxu0 %v1121
        %v1166 = vpop.f32.mrf.mxu0
        %v1167 = vadd.f32 0.0, %v1166
        %v1168 = vpop.f32.mrf.mxu0
        %v1169 = vadd.f32 0.0, %v1168
        %v1170 = vpop.f32.mrf.mxu0
        %v1171 = vadd.f32 0.0, %v1170
        %v1172 = vpop.f32.mrf.mxu0
        %v1173 = vadd.f32 0.0, %v1172
        %1174 = vmatprep.mubr.bf16.mxu0 0
        %1175 = vmatmul.mubr.bf16.gmra.mxu0 %v1124
        %v1176 = vpop.f32.mrf.mxu0
        %v1177 = vadd.f32 0.0, %v1176
        %v1178 = vpop.f32.mrf.mxu0
        %v1179 = vadd.f32 0.0, %v1178
        %v1180 = vpop.f32.mrf.mxu0
        %v1181 = vadd.f32 0.0, %v1180
        %v1182 = vpop.f32.mrf.mxu0
        %v1183 = vadd.f32 0.0, %v1182
        %1184 = vmatprep.mubr.bf16.mxu0 0
        %1185 = vmatmul.mubr.bf16.gmra.mxu0 %v1127
        %v1186 = vpop.f32.mrf.mxu0
        %v1187 = vadd.f32 0.0, %v1186
        %v1188 = vpop.f32.mrf.mxu0
        %v1189 = vadd.f32 0.0, %v1188
        %v1190 = vpop.f32.mrf.mxu0
        %v1191 = vadd.f32 0.0, %v1190
        %v1192 = vpop.f32.mrf.mxu0
        %v1193 = vadd.f32 0.0, %v1192
        %1194 = vmatprep.mubr.bf16.mxu0 0
        %1195 = vmatmul.mubr.bf16.gmra.mxu0 %v1130
        %v1196 = vpop.f32.mrf.mxu0
        %v1197 = vadd.f32 0.0, %v1196
        %v1198 = vpop.f32.mrf.mxu0
        %v1199 = vadd.f32 0.0, %v1198
        %v1200 = vpop.f32.mrf.mxu0
        %v1201 = vadd.f32 0.0, %v1200
        %v1202 = vpop.f32.mrf.mxu0
        %v1203 = vadd.f32 0.0, %v1202
        %1204 = vdwg.mxu0
        %v1205 = vadd.f32 %v1002, %v1167
        %v1206 = vadd.f32 %v1004, %v1169
        %v1207 = vadd.f32 %v1006, %v1171
        %v1208 = vadd.f32 %v1008, %v1173
        %v1209 = vadd.f32 %v1012, %v1177
        %v1210 = vadd.f32 %v1014, %v1179
        %v1211 = vadd.f32 %v1016, %v1181
        %v1212 = vadd.f32 %v1018, %v1183
        %v1213 = vadd.f32 %v1022, %v1187
        %v1214 = vadd.f32 %v1024, %v1189
        %v1215 = vadd.f32 %v1026, %v1191
        %v1216 = vadd.f32 %v1028, %v1193
        %v1217 = vadd.f32 %v1032, %v1197
        %v1218 = vadd.f32 %v1034, %v1199
        %v1219 = vadd.f32 %v1036, %v1201
        %v1220 = vadd.f32 %v1038, %v1203
        %1221 = vrot.lane.b32.xlu0 %v682, 1
        %v1222 = vpop.permute.xlu0 %1221
        %1223 = vrot.lane.b32.xlu0 %v683, 1
        %v1224 = vpop.permute.xlu0 %1223
        %1225 = vrot.lane.b32.xlu0 %v684, 1
        %v1226 = vpop.permute.xlu0 %1225
        %1227 = vrot.lane.b32.xlu0 %v685, 1
        %v1228 = vpop.permute.xlu0 %1227
        %1229 = vrot.lane.b32.xlu0 %v686, 1
        %v1230 = vpop.permute.xlu0 %1229
        %1231 = vrot.lane.b32.xlu0 %v687, 1
        %v1232 = vpop.permute.xlu0 %1231
        %1233 = vrot.lane.b32.xlu0 %v688, 1
        %v1234 = vpop.permute.xlu0 %1233
        %1235 = vrot.lane.b32.xlu0 %v689, 1
        %v1236 = vpop.permute.xlu0 %1235
        %vm1237 = vcmask 7168
        %v1238 = vsel %vm1237, %v1222, %v1224
        %v1239 = vsel %vm1237, %v1226, %v1228
        %v1240 = vsel %vm1237, %v1230, %v1232
        %v1241 = vsel %vm1237, %v1234, %v1236
        %v1250 = vsel %vm1237, 0.0, %v1222
        %v1251 = vsel %vm1237, 0.0, %v1226
        %v1252 = vsel %vm1237, 0.0, %v1230
        %v1253 = vsel %vm1237, 0.0, %v1234
        %v1254 = vsel %vm762, %v1250, 0.0
        %v1255 = vsel %vm763, %v1238, 0.0
        %v1256 = vsel %vm762, %v1251, 0.0
        %v1257 = vsel %vm763, %v1239, 0.0
        %v1258 = vsel %vm762, %v1252, 0.0
        %v1259 = vsel %vm763, %v1240, 0.0
        %v1260 = vsel %vm762, %v1253, 0.0
        %v1261 = vsel %vm763, %v1241, 0.0
        %v1262 = vpack.c.bf16 %v1256, %v1254
        %v1263 = vpack.c.bf16 %v1257, %v1255
        %v1264 = vpack.c.bf16 %v1260, %v1258
        %v1265 = vpack.c.bf16 %v1261, %v1259
        %s1266 = scalar_lea.vmem %s2, 96
        %v1267 = vld [vmem:[%s1266] sm:$0xf]
        %v1268 = vld [vmem:[%s1266 + $0x4] sm:$0xf]
        %v1269 = vld [vmem:[%s1266 + $0x8] sm:$0xf]
        %v1270 = vld [vmem:[%s1266 + $0xc] sm:$0xf]
        %v1271 = vld [vmem:[%s1266 + $0x10] sm:$0xf]
        %v1272 = vld [vmem:[%s1266 + $0x14] sm:$0xf]
        %v1273 = vld [vmem:[%s1266 + $0x18] sm:$0xf]
        %v1274 = vld [vmem:[%s1266 + $0x1c] sm:$0xf]
        %v1283 = vunpack.c.l.b16 %v1267
        %v1284 = vunpack.c.l.b16 %v1268
        %v1285 = vunpack.c.l.b16 %v1269
        %v1286 = vunpack.c.l.b16 %v1270
        %v1287 = vunpack.c.l.b16 %v1271
        %v1288 = vunpack.c.l.b16 %v1272
        %v1289 = vunpack.c.l.b16 %v1273
        %v1290 = vunpack.c.l.b16 %v1274
        %v1291 = vpack.c.b16 %v1284, %v1283
        %v1292 = vpack.c.b16 %v1286, %v1285
        %v1293 = vpack.c.b16 %v1288, %v1287
        %v1294 = vpack.c.b16 %v1290, %v1289
        %v1296 = vsel %vm513, %v1291, 0
        %v1299 = vsel %vm513, %v1292, 0
        %v1302 = vsel %vm513, %v1293, 0
        %v1305 = vsel %vm513, %v1294, 0
        %1307 = vmatprep.subr.bf16.mxu0 0
        %1308 = vmatpush1.bf16.msra.mxu0 0
        %1309 = vmatprep.subr.bf16.mxu0 0
        %1310 = vmatpush1.bf16.msra.mxu0 0
        %1311 = vmatprep.subr.bf16.mxu0 0
        %1312 = vmatpush1.bf16.msra.mxu0 0
        %1313 = vmatprep.subr.bf16.mxu0 0
        %1314 = vmatpush1.bf16.msra.mxu0 0
        %1315 = vmatprep.subr.bf16.mxu0 0
        %1316 = vmatpush1.bf16.msra.mxu0 0
        %1317 = vmatprep.subr.bf16.mxu0 0
        %1318 = vmatpush1.bf16.msra.mxu0 0
        %1319 = vmatprep.subr.bf16.mxu0 %v1265
        %1320 = vmatpush1.bf16.msra.mxu0 %v1264
        %1321 = vmatprep.subr.bf16.mxu0 %v1263
        %1322 = vmatpush1.bf16.msra.mxu0 %v1262
        %1323 = vmatprep.subr.bf16.mxu0 0
        %1324 = vmatpush2.bf16.msra.mxu0 0
        %1325 = vmatprep.subr.bf16.mxu0 0
        %1326 = vmatpush2.bf16.msra.mxu0 0
        %1327 = vmatprep.subr.bf16.mxu0 0
        %1328 = vmatpush2.bf16.msra.mxu0 0
        %1329 = vmatprep.subr.bf16.mxu0 0
        %1330 = vmatpush2.bf16.msra.mxu0 0
        %1331 = vmatprep.subr.bf16.mxu0 0
        %1332 = vmatpush2.bf16.msra.mxu0 0
        %1333 = vmatprep.subr.bf16.mxu0 0
        %1334 = vmatpush2.bf16.msra.mxu0 0
        %1335 = vmatprep.subr.bf16.mxu0 0
        %1336 = vmatpush2.bf16.msra.mxu0 0
        %1337 = vmatprep.subr.bf16.mxu0 0
        %1338 = vmatpush2.bf16.msra.mxu0 0
        %1339 = vmatprep.mubr.bf16.mxu0 0
        %1340 = vmatmul.mubr.bf16.gmra.mxu0 %v1296
        %v1341 = vpop.f32.mrf.mxu0
        %v1342 = vadd.f32 0.0, %v1341
        %v1343 = vpop.f32.mrf.mxu0
        %v1344 = vadd.f32 0.0, %v1343
        %v1345 = vpop.f32.mrf.mxu0
        %v1346 = vadd.f32 0.0, %v1345
        %v1347 = vpop.f32.mrf.mxu0
        %v1348 = vadd.f32 0.0, %v1347
        %1349 = vmatprep.mubr.bf16.mxu0 0
        %1350 = vmatmul.mubr.bf16.gmra.mxu0 %v1299
        %v1351 = vpop.f32.mrf.mxu0
        %v1352 = vadd.f32 0.0, %v1351
        %v1353 = vpop.f32.mrf.mxu0
        %v1354 = vadd.f32 0.0, %v1353
        %v1355 = vpop.f32.mrf.mxu0
        %v1356 = vadd.f32 0.0, %v1355
        %v1357 = vpop.f32.mrf.mxu0
        %v1358 = vadd.f32 0.0, %v1357
        %1359 = vmatprep.mubr.bf16.mxu0 0
        %1360 = vmatmul.mubr.bf16.gmra.mxu0 %v1302
        %v1361 = vpop.f32.mrf.mxu0
        %v1362 = vadd.f32 0.0, %v1361
        %v1363 = vpop.f32.mrf.mxu0
        %v1364 = vadd.f32 0.0, %v1363
        %v1365 = vpop.f32.mrf.mxu0
        %v1366 = vadd.f32 0.0, %v1365
        %v1367 = vpop.f32.mrf.mxu0
        %v1368 = vadd.f32 0.0, %v1367
        %1369 = vmatprep.mubr.bf16.mxu0 0
        %1370 = vmatmul.mubr.bf16.gmra.mxu0 %v1305
        %v1371 = vpop.f32.mrf.mxu0
        %v1372 = vadd.f32 0.0, %v1371
        %v1373 = vpop.f32.mrf.mxu0
        %v1374 = vadd.f32 0.0, %v1373
        %v1375 = vpop.f32.mrf.mxu0
        %v1376 = vadd.f32 0.0, %v1375
        %v1377 = vpop.f32.mrf.mxu0
        %v1378 = vadd.f32 0.0, %v1377
        %1379 = vdwg.mxu0
        %v1380 = vadd.f32 %v1205, %v1342
        %v1381 = vadd.f32 %v1206, %v1344
        %v1382 = vadd.f32 %v1207, %v1346
        %v1383 = vadd.f32 %v1208, %v1348
        %v1384 = vadd.f32 %v1209, %v1352
        %v1385 = vadd.f32 %v1210, %v1354
        %v1386 = vadd.f32 %v1211, %v1356
        %v1387 = vadd.f32 %v1212, %v1358
        %v1388 = vadd.f32 %v1213, %v1362
        %v1389 = vadd.f32 %v1214, %v1364
        %v1390 = vadd.f32 %v1215, %v1366
        %v1391 = vadd.f32 %v1216, %v1368
        %v1392 = vadd.f32 %v1217, %v1372
        %v1393 = vadd.f32 %v1218, %v1374
        %v1394 = vadd.f32 %v1219, %v1376
        %v1395 = vadd.f32 %v1220, %v1378
        %v1396 = vpack.c.bf16 %v684, %v682
        %v1397 = vpack.c.bf16 %v685, %v683
        %v1398 = vpack.c.bf16 %v688, %v686
        %v1399 = vpack.c.bf16 %v689, %v687
        %s1400 = scalar_lea.vmem %s2, 128
        %v1401 = vld [vmem:[%s1400] sm:$0xf]
        %v1402 = vld [vmem:[%s1400 + $0x4] sm:$0xf]
        %v1403 = vld [vmem:[%s1400 + $0x8] sm:$0xf]
        %v1404 = vld [vmem:[%s1400 + $0xc] sm:$0xf]
        %v1405 = vld [vmem:[%s1400 + $0x10] sm:$0xf]
        %v1406 = vld [vmem:[%s1400 + $0x14] sm:$0xf]
        %v1407 = vld [vmem:[%s1400 + $0x18] sm:$0xf]
        %v1408 = vld [vmem:[%s1400 + $0x1c] sm:$0xf]
        %v1417 = vunpack.c.l.b16 %v1401
        %v1418 = vunpack.c.l.b16 %v1402
        %v1419 = vunpack.c.l.b16 %v1403
        %v1420 = vunpack.c.l.b16 %v1404
        %v1421 = vunpack.c.l.b16 %v1405
        %v1422 = vunpack.c.l.b16 %v1406
        %v1423 = vunpack.c.l.b16 %v1407
        %v1424 = vunpack.c.l.b16 %v1408
        %v1425 = vpack.c.b16 %v1418, %v1417
        %v1426 = vpack.c.b16 %v1420, %v1419
        %v1427 = vpack.c.b16 %v1422, %v1421
        %v1428 = vpack.c.b16 %v1424, %v1423
        %v1430 = vsel %vm513, %v1425, 0
        %v1433 = vsel %vm513, %v1426, 0
        %v1436 = vsel %vm513, %v1427, 0
        %v1439 = vsel %vm513, %v1428, 0
        %1441 = vmatprep.subr.bf16.mxu0 0
        %1442 = vmatpush1.bf16.msra.mxu0 0
        %1443 = vmatprep.subr.bf16.mxu0 0
        %1444 = vmatpush1.bf16.msra.mxu0 0
        %1445 = vmatprep.subr.bf16.mxu0 0
        %1446 = vmatpush1.bf16.msra.mxu0 0
        %1447 = vmatprep.subr.bf16.mxu0 0
        %1448 = vmatpush1.bf16.msra.mxu0 0
        %1449 = vmatprep.subr.bf16.mxu0 0
        %1450 = vmatpush1.bf16.msra.mxu0 0
        %1451 = vmatprep.subr.bf16.mxu0 0
        %1452 = vmatpush1.bf16.msra.mxu0 0
        %1453 = vmatprep.subr.bf16.mxu0 %v1399
        %1454 = vmatpush1.bf16.msra.mxu0 %v1398
        %1455 = vmatprep.subr.bf16.mxu0 %v1397
        %1456 = vmatpush1.bf16.msra.mxu0 %v1396
        %1457 = vmatprep.subr.bf16.mxu0 0
        %1458 = vmatpush2.bf16.msra.mxu0 0
        %1459 = vmatprep.subr.bf16.mxu0 0
        %1460 = vmatpush2.bf16.msra.mxu0 0
        %1461 = vmatprep.subr.bf16.mxu0 0
        %1462 = vmatpush2.bf16.msra.mxu0 0
        %1463 = vmatprep.subr.bf16.mxu0 0
        %1464 = vmatpush2.bf16.msra.mxu0 0
        %1465 = vmatprep.subr.bf16.mxu0 0
        %1466 = vmatpush2.bf16.msra.mxu0 0
        %1467 = vmatprep.subr.bf16.mxu0 0
        %1468 = vmatpush2.bf16.msra.mxu0 0
        %1469 = vmatprep.subr.bf16.mxu0 0
        %1470 = vmatpush2.bf16.msra.mxu0 0
        %1471 = vmatprep.subr.bf16.mxu0 0
        %1472 = vmatpush2.bf16.msra.mxu0 0
        %1473 = vmatprep.mubr.bf16.mxu0 0
        %1474 = vmatmul.mubr.bf16.gmra.mxu0 %v1430
        %v1475 = vpop.f32.mrf.mxu0
        %v1476 = vadd.f32 0.0, %v1475
        %v1477 = vpop.f32.mrf.mxu0
        %v1478 = vadd.f32 0.0, %v1477
        %v1479 = vpop.f32.mrf.mxu0
        %v1480 = vadd.f32 0.0, %v1479
        %v1481 = vpop.f32.mrf.mxu0
        %v1482 = vadd.f32 0.0, %v1481
        %1483 = vmatprep.mubr.bf16.mxu0 0
        %1484 = vmatmul.mubr.bf16.gmra.mxu0 %v1433
        %v1485 = vpop.f32.mrf.mxu0
        %v1486 = vadd.f32 0.0, %v1485
        %v1487 = vpop.f32.mrf.mxu0
        %v1488 = vadd.f32 0.0, %v1487
        %v1489 = vpop.f32.mrf.mxu0
        %v1490 = vadd.f32 0.0, %v1489
        %v1491 = vpop.f32.mrf.mxu0
        %v1492 = vadd.f32 0.0, %v1491
        %1493 = vmatprep.mubr.bf16.mxu0 0
        %1494 = vmatmul.mubr.bf16.gmra.mxu0 %v1436
        %v1495 = vpop.f32.mrf.mxu0
        %v1496 = vadd.f32 0.0, %v1495
        %v1497 = vpop.f32.mrf.mxu0
        %v1498 = vadd.f32 0.0, %v1497
        %v1499 = vpop.f32.mrf.mxu0
        %v1500 = vadd.f32 0.0, %v1499
        %v1501 = vpop.f32.mrf.mxu0
        %v1502 = vadd.f32 0.0, %v1501
        %1503 = vmatprep.mubr.bf16.mxu0 0
        %1504 = vmatmul.mubr.bf16.gmra.mxu0 %v1439
        %v1505 = vpop.f32.mrf.mxu0
        %v1506 = vadd.f32 0.0, %v1505
        %v1507 = vpop.f32.mrf.mxu0
        %v1508 = vadd.f32 0.0, %v1507
        %v1509 = vpop.f32.mrf.mxu0
        %v1510 = vadd.f32 0.0, %v1509
        %v1511 = vpop.f32.mrf.mxu0
        %v1512 = vadd.f32 0.0, %v1511
        %1513 = vdwg.mxu0
        %v1514 = vadd.f32 %v1380, %v1476
        %v1515 = vadd.f32 %v1381, %v1478
        %v1516 = vadd.f32 %v1382, %v1480
        %v1517 = vadd.f32 %v1383, %v1482
        %v1518 = vadd.f32 %v1384, %v1486
        %v1519 = vadd.f32 %v1385, %v1488
        %v1520 = vadd.f32 %v1386, %v1490
        %v1521 = vadd.f32 %v1387, %v1492
        %v1522 = vadd.f32 %v1388, %v1496
        %v1523 = vadd.f32 %v1389, %v1498
        %v1524 = vadd.f32 %v1390, %v1500
        %v1525 = vadd.f32 %v1391, %v1502
        %v1526 = vadd.f32 %v1392, %v1506
        %v1527 = vadd.f32 %v1393, %v1508
        %v1528 = vadd.f32 %v1394, %v1510
        %v1529 = vadd.f32 %v1395, %v1512
        %1530 = vrot.lane.b32.xlu0 %v682, 127
        %v1531 = vpop.permute.xlu0 %1530
        %1532 = vrot.lane.b32.xlu0 %v683, 127
        %v1533 = vpop.permute.xlu0 %1532
        %1534 = vrot.lane.b32.xlu0 %v684, 127
        %v1535 = vpop.permute.xlu0 %1534
        %1536 = vrot.lane.b32.xlu0 %v685, 127
        %v1537 = vpop.permute.xlu0 %1536
        %1538 = vrot.lane.b32.xlu0 %v686, 127
        %v1539 = vpop.permute.xlu0 %1538
        %1540 = vrot.lane.b32.xlu0 %v687, 127
        %v1541 = vpop.permute.xlu0 %1540
        %1542 = vrot.lane.b32.xlu0 %v688, 127
        %v1543 = vpop.permute.xlu0 %1542
        %1544 = vrot.lane.b32.xlu0 %v689, 127
        %v1545 = vpop.permute.xlu0 %1544
        %vm1546 = vcmask 1039360
        %v1547 = vsel %vm1546, %v1531, %v1533
        %v1548 = vsel %vm1546, %v1535, %v1537
        %v1549 = vsel %vm1546, %v1539, %v1541
        %v1550 = vsel %vm1546, %v1543, %v1545
        %v1559 = vsel %vm1546, %v1533, 0.0
        %v1560 = vsel %vm1546, %v1537, 0.0
        %v1561 = vsel %vm1546, %v1541, 0.0
        %v1562 = vsel %vm1546, %v1545, 0.0
        %v1563 = vsel %vm1077, %v1547, 0.0
        %v1564 = vsel %vm1078, %v1559, 0.0
        %v1565 = vsel %vm1077, %v1548, 0.0
        %v1566 = vsel %vm1078, %v1560, 0.0
        %v1567 = vsel %vm1077, %v1549, 0.0
        %v1568 = vsel %vm1078, %v1561, 0.0
        %v1569 = vsel %vm1077, %v1550, 0.0
        %v1570 = vsel %vm1078, %v1562, 0.0
        %v1571 = vpack.c.bf16 %v1565, %v1563
        %v1572 = vpack.c.bf16 %v1566, %v1564
        %v1573 = vpack.c.bf16 %v1569, %v1567
        %v1574 = vpack.c.bf16 %v1570, %v1568
        %s1575 = scalar_lea.vmem %s2, 160
        %v1576 = vld [vmem:[%s1575] sm:$0xf]
        %v1577 = vld [vmem:[%s1575 + $0x4] sm:$0xf]
        %v1578 = vld [vmem:[%s1575 + $0x8] sm:$0xf]
        %v1579 = vld [vmem:[%s1575 + $0xc] sm:$0xf]
        %v1580 = vld [vmem:[%s1575 + $0x10] sm:$0xf]
        %v1581 = vld [vmem:[%s1575 + $0x14] sm:$0xf]
        %v1582 = vld [vmem:[%s1575 + $0x18] sm:$0xf]
        %v1583 = vld [vmem:[%s1575 + $0x1c] sm:$0xf]
        %v1592 = vunpack.c.l.b16 %v1576
        %v1593 = vunpack.c.l.b16 %v1577
        %v1594 = vunpack.c.l.b16 %v1578
        %v1595 = vunpack.c.l.b16 %v1579
        %v1596 = vunpack.c.l.b16 %v1580
        %v1597 = vunpack.c.l.b16 %v1581
        %v1598 = vunpack.c.l.b16 %v1582
        %v1599 = vunpack.c.l.b16 %v1583
        %v1600 = vpack.c.b16 %v1593, %v1592
        %v1601 = vpack.c.b16 %v1595, %v1594
        %v1602 = vpack.c.b16 %v1597, %v1596
        %v1603 = vpack.c.b16 %v1599, %v1598
        %v1605 = vsel %vm513, %v1600, 0
        %v1608 = vsel %vm513, %v1601, 0
        %v1611 = vsel %vm513, %v1602, 0
        %v1614 = vsel %vm513, %v1603, 0
        %1616 = vmatprep.subr.bf16.mxu0 0
        %1617 = vmatpush1.bf16.msra.mxu0 0
        %1618 = vmatprep.subr.bf16.mxu0 0
        %1619 = vmatpush1.bf16.msra.mxu0 0
        %1620 = vmatprep.subr.bf16.mxu0 0
        %1621 = vmatpush1.bf16.msra.mxu0 0
        %1622 = vmatprep.subr.bf16.mxu0 0
        %1623 = vmatpush1.bf16.msra.mxu0 0
        %1624 = vmatprep.subr.bf16.mxu0 0
        %1625 = vmatpush1.bf16.msra.mxu0 0
        %1626 = vmatprep.subr.bf16.mxu0 0
        %1627 = vmatpush1.bf16.msra.mxu0 0
        %1628 = vmatprep.subr.bf16.mxu0 %v1574
        %1629 = vmatpush1.bf16.msra.mxu0 %v1573
        %1630 = vmatprep.subr.bf16.mxu0 %v1572
        %1631 = vmatpush1.bf16.msra.mxu0 %v1571
        %1632 = vmatprep.subr.bf16.mxu0 0
        %1633 = vmatpush2.bf16.msra.mxu0 0
        %1634 = vmatprep.subr.bf16.mxu0 0
        %1635 = vmatpush2.bf16.msra.mxu0 0
        %1636 = vmatprep.subr.bf16.mxu0 0
        %1637 = vmatpush2.bf16.msra.mxu0 0
        %1638 = vmatprep.subr.bf16.mxu0 0
        %1639 = vmatpush2.bf16.msra.mxu0 0
        %1640 = vmatprep.subr.bf16.mxu0 0
        %1641 = vmatpush2.bf16.msra.mxu0 0
        %1642 = vmatprep.subr.bf16.mxu0 0
        %1643 = vmatpush2.bf16.msra.mxu0 0
        %1644 = vmatprep.subr.bf16.mxu0 0
        %1645 = vmatpush2.bf16.msra.mxu0 0
        %1646 = vmatprep.subr.bf16.mxu0 0
        %1647 = vmatpush2.bf16.msra.mxu0 0
        %1648 = vmatprep.mubr.bf16.mxu0 0
        %1649 = vmatmul.mubr.bf16.gmra.mxu0 %v1605
        %v1650 = vpop.f32.mrf.mxu0
        %v1651 = vadd.f32 0.0, %v1650
        %v1652 = vpop.f32.mrf.mxu0
        %v1653 = vadd.f32 0.0, %v1652
        %v1654 = vpop.f32.mrf.mxu0
        %v1655 = vadd.f32 0.0, %v1654
        %v1656 = vpop.f32.mrf.mxu0
        %v1657 = vadd.f32 0.0, %v1656
        %1658 = vmatprep.mubr.bf16.mxu0 0
        %1659 = vmatmul.mubr.bf16.gmra.mxu0 %v1608
        %v1660 = vpop.f32.mrf.mxu0
        %v1661 = vadd.f32 0.0, %v1660
        %v1662 = vpop.f32.mrf.mxu0
        %v1663 = vadd.f32 0.0, %v1662
        %v1664 = vpop.f32.mrf.mxu0
        %v1665 = vadd.f32 0.0, %v1664
        %v1666 = vpop.f32.mrf.mxu0
        %v1667 = vadd.f32 0.0, %v1666
        %1668 = vmatprep.mubr.bf16.mxu0 0
        %1669 = vmatmul.mubr.bf16.gmra.mxu0 %v1611
        %v1670 = vpop.f32.mrf.mxu0
        %v1671 = vadd.f32 0.0, %v1670
        %v1672 = vpop.f32.mrf.mxu0
        %v1673 = vadd.f32 0.0, %v1672
        %v1674 = vpop.f32.mrf.mxu0
        %v1675 = vadd.f32 0.0, %v1674
        %v1676 = vpop.f32.mrf.mxu0
        %v1677 = vadd.f32 0.0, %v1676
        %1678 = vmatprep.mubr.bf16.mxu0 0
        %1679 = vmatmul.mubr.bf16.gmra.mxu0 %v1614
        %v1680 = vpop.f32.mrf.mxu0
        %v1681 = vadd.f32 0.0, %v1680
        %v1682 = vpop.f32.mrf.mxu0
        %v1683 = vadd.f32 0.0, %v1682
        %v1684 = vpop.f32.mrf.mxu0
        %v1685 = vadd.f32 0.0, %v1684
        %v1686 = vpop.f32.mrf.mxu0
        %v1687 = vadd.f32 0.0, %v1686
        %1688 = vdwg.mxu0
        %v1689 = vadd.f32 %v1514, %v1651
        %v1690 = vadd.f32 %v1515, %v1653
        %v1691 = vadd.f32 %v1516, %v1655
        %v1692 = vadd.f32 %v1517, %v1657
        %v1693 = vadd.f32 %v1518, %v1661
        %v1694 = vadd.f32 %v1519, %v1663
        %v1695 = vadd.f32 %v1520, %v1665
        %v1696 = vadd.f32 %v1521, %v1667
        %v1697 = vadd.f32 %v1522, %v1671
        %v1698 = vadd.f32 %v1523, %v1673
        %v1699 = vadd.f32 %v1524, %v1675
        %v1700 = vadd.f32 %v1525, %v1677
        %v1701 = vadd.f32 %v1526, %v1681
        %v1702 = vadd.f32 %v1527, %v1683
        %v1703 = vadd.f32 %v1528, %v1685
        %v1704 = vadd.f32 %v1529, %v1687
        %1705 = vrot.lane.b32.xlu0 %v682, 113
        %v1706 = vpop.permute.xlu0 %1705
        %1707 = vrot.lane.b32.xlu0 %v683, 113
        %v1708 = vpop.permute.xlu0 %1707
        %1709 = vrot.lane.b32.xlu0 %v684, 113
        %v1710 = vpop.permute.xlu0 %1709
        %1711 = vrot.lane.b32.xlu0 %v685, 113
        %v1712 = vpop.permute.xlu0 %1711
        %1713 = vrot.lane.b32.xlu0 %v686, 113
        %v1714 = vpop.permute.xlu0 %1713
        %1715 = vrot.lane.b32.xlu0 %v687, 113
        %v1716 = vpop.permute.xlu0 %1715
        %1717 = vrot.lane.b32.xlu0 %v688, 113
        %v1718 = vpop.permute.xlu0 %1717
        %1719 = vrot.lane.b32.xlu0 %v689, 113
        %v1720 = vpop.permute.xlu0 %1719
        %vm1721 = vcmask 924672
        %v1722 = vsel %vm1721, %v1706, %v1708
        %v1723 = vsel %vm1721, %v1710, %v1712
        %v1724 = vsel %vm1721, %v1714, %v1716
        %v1725 = vsel %vm1721, %v1718, %v1720
        %v1734 = vsel %vm1721, %v1708, 0.0
        %v1735 = vsel %vm1721, %v1712, 0.0
        %v1736 = vsel %vm1721, %v1716, 0.0
        %v1737 = vsel %vm1721, %v1720, 0.0
        %v1738 = vsel %vm762, %v1722, 0.0
        %v1739 = vsel %vm763, %v1734, 0.0
        %v1740 = vsel %vm762, %v1723, 0.0
        %v1741 = vsel %vm763, %v1735, 0.0
        %v1742 = vsel %vm762, %v1724, 0.0
        %v1743 = vsel %vm763, %v1736, 0.0
        %v1744 = vsel %vm762, %v1725, 0.0
        %v1745 = vsel %vm763, %v1737, 0.0
        %v1746 = vpack.c.bf16 %v1740, %v1738
        %v1747 = vpack.c.bf16 %v1741, %v1739
        %v1748 = vpack.c.bf16 %v1744, %v1742
        %v1749 = vpack.c.bf16 %v1745, %v1743
        %s1750 = scalar_lea.vmem %s2, 192
        %v1751 = vld [vmem:[%s1750] sm:$0xf]
        %v1752 = vld [vmem:[%s1750 + $0x4] sm:$0xf]
        %v1753 = vld [vmem:[%s1750 + $0x8] sm:$0xf]
        %v1754 = vld [vmem:[%s1750 + $0xc] sm:$0xf]
        %v1755 = vld [vmem:[%s1750 + $0x10] sm:$0xf]
        %v1756 = vld [vmem:[%s1750 + $0x14] sm:$0xf]
        %v1757 = vld [vmem:[%s1750 + $0x18] sm:$0xf]
        %v1758 = vld [vmem:[%s1750 + $0x1c] sm:$0xf]
        %v1767 = vunpack.c.l.b16 %v1751
        %v1768 = vunpack.c.l.b16 %v1752
        %v1769 = vunpack.c.l.b16 %v1753
        %v1770 = vunpack.c.l.b16 %v1754
        %v1771 = vunpack.c.l.b16 %v1755
        %v1772 = vunpack.c.l.b16 %v1756
        %v1773 = vunpack.c.l.b16 %v1757
        %v1774 = vunpack.c.l.b16 %v1758
        %v1775 = vpack.c.b16 %v1768, %v1767
        %v1776 = vpack.c.b16 %v1770, %v1769
        %v1777 = vpack.c.b16 %v1772, %v1771
        %v1778 = vpack.c.b16 %v1774, %v1773
        %v1780 = vsel %vm513, %v1775, 0
        %v1783 = vsel %vm513, %v1776, 0
        %v1786 = vsel %vm513, %v1777, 0
        %v1789 = vsel %vm513, %v1778, 0
        %1791 = vmatprep.subr.bf16.mxu0 0
        %1792 = vmatpush1.bf16.msra.mxu0 0
        %1793 = vmatprep.subr.bf16.mxu0 0
        %1794 = vmatpush1.bf16.msra.mxu0 0
        %1795 = vmatprep.subr.bf16.mxu0 0
        %1796 = vmatpush1.bf16.msra.mxu0 0
        %1797 = vmatprep.subr.bf16.mxu0 0
        %1798 = vmatpush1.bf16.msra.mxu0 0
        %1799 = vmatprep.subr.bf16.mxu0 0
        %1800 = vmatpush1.bf16.msra.mxu0 0
        %1801 = vmatprep.subr.bf16.mxu0 0
        %1802 = vmatpush1.bf16.msra.mxu0 0
        %1803 = vmatprep.subr.bf16.mxu0 %v1749
        %1804 = vmatpush1.bf16.msra.mxu0 %v1748
        %1805 = vmatprep.subr.bf16.mxu0 %v1747
        %1806 = vmatpush1.bf16.msra.mxu0 %v1746
        %1807 = vmatprep.subr.bf16.mxu0 0
        %1808 = vmatpush2.bf16.msra.mxu0 0
        %1809 = vmatprep.subr.bf16.mxu0 0
        %1810 = vmatpush2.bf16.msra.mxu0 0
        %1811 = vmatprep.subr.bf16.mxu0 0
        %1812 = vmatpush2.bf16.msra.mxu0 0
        %1813 = vmatprep.subr.bf16.mxu0 0
        %1814 = vmatpush2.bf16.msra.mxu0 0
        %1815 = vmatprep.subr.bf16.mxu0 0
        %1816 = vmatpush2.bf16.msra.mxu0 0
        %1817 = vmatprep.subr.bf16.mxu0 0
        %1818 = vmatpush2.bf16.msra.mxu0 0
        %1819 = vmatprep.subr.bf16.mxu0 0
        %1820 = vmatpush2.bf16.msra.mxu0 0
        %1821 = vmatprep.subr.bf16.mxu0 0
        %1822 = vmatpush2.bf16.msra.mxu0 0
        %1823 = vmatprep.mubr.bf16.mxu0 0
        %1824 = vmatmul.mubr.bf16.gmra.mxu0 %v1780
        %v1825 = vpop.f32.mrf.mxu0
        %v1826 = vadd.f32 0.0, %v1825
        %v1827 = vpop.f32.mrf.mxu0
        %v1828 = vadd.f32 0.0, %v1827
        %v1829 = vpop.f32.mrf.mxu0
        %v1830 = vadd.f32 0.0, %v1829
        %v1831 = vpop.f32.mrf.mxu0
        %v1832 = vadd.f32 0.0, %v1831
        %1833 = vmatprep.mubr.bf16.mxu0 0
        %1834 = vmatmul.mubr.bf16.gmra.mxu0 %v1783
        %v1835 = vpop.f32.mrf.mxu0
        %v1836 = vadd.f32 0.0, %v1835
        %v1837 = vpop.f32.mrf.mxu0
        %v1838 = vadd.f32 0.0, %v1837
        %v1839 = vpop.f32.mrf.mxu0
        %v1840 = vadd.f32 0.0, %v1839
        %v1841 = vpop.f32.mrf.mxu0
        %v1842 = vadd.f32 0.0, %v1841
        %1843 = vmatprep.mubr.bf16.mxu0 0
        %1844 = vmatmul.mubr.bf16.gmra.mxu0 %v1786
        %v1845 = vpop.f32.mrf.mxu0
        %v1846 = vadd.f32 0.0, %v1845
        %v1847 = vpop.f32.mrf.mxu0
        %v1848 = vadd.f32 0.0, %v1847
        %v1849 = vpop.f32.mrf.mxu0
        %v1850 = vadd.f32 0.0, %v1849
        %v1851 = vpop.f32.mrf.mxu0
        %v1852 = vadd.f32 0.0, %v1851
        %1853 = vmatprep.mubr.bf16.mxu0 0
        %1854 = vmatmul.mubr.bf16.gmra.mxu0 %v1789
        %v1855 = vpop.f32.mrf.mxu0
        %v1856 = vadd.f32 0.0, %v1855
        %v1857 = vpop.f32.mrf.mxu0
        %v1858 = vadd.f32 0.0, %v1857
        %v1859 = vpop.f32.mrf.mxu0
        %v1860 = vadd.f32 0.0, %v1859
        %v1861 = vpop.f32.mrf.mxu0
        %v1862 = vadd.f32 0.0, %v1861
        %1863 = vdwg.mxu0
        %v1864 = vadd.f32 %v1689, %v1826
        %v1865 = vadd.f32 %v1690, %v1828
        %v1866 = vadd.f32 %v1691, %v1830
        %v1867 = vadd.f32 %v1692, %v1832
        %v1868 = vadd.f32 %v1693, %v1836
        %v1869 = vadd.f32 %v1694, %v1838
        %v1870 = vadd.f32 %v1695, %v1840
        %v1871 = vadd.f32 %v1696, %v1842
        %v1872 = vadd.f32 %v1697, %v1846
        %v1873 = vadd.f32 %v1698, %v1848
        %v1874 = vadd.f32 %v1699, %v1850
        %v1875 = vadd.f32 %v1700, %v1852
        %v1876 = vadd.f32 %v1701, %v1856
        %v1877 = vadd.f32 %v1702, %v1858
        %v1878 = vadd.f32 %v1703, %v1860
        %v1879 = vadd.f32 %v1704, %v1862
        %1880 = vrot.lane.b32.xlu0 %v682, 112
        %v1881 = vpop.permute.xlu0 %1880
        %1882 = vrot.lane.b32.xlu0 %v683, 112
        %v1883 = vpop.permute.xlu0 %1882
        %1884 = vrot.lane.b32.xlu0 %v684, 112
        %v1885 = vpop.permute.xlu0 %1884
        %1886 = vrot.lane.b32.xlu0 %v685, 112
        %v1887 = vpop.permute.xlu0 %1886
        %1888 = vrot.lane.b32.xlu0 %v686, 112
        %v1889 = vpop.permute.xlu0 %1888
        %1890 = vrot.lane.b32.xlu0 %v687, 112
        %v1891 = vpop.permute.xlu0 %1890
        %1892 = vrot.lane.b32.xlu0 %v688, 112
        %v1893 = vpop.permute.xlu0 %1892
        %1894 = vrot.lane.b32.xlu0 %v689, 112
        %v1895 = vpop.permute.xlu0 %1894
        %vm1896 = vcmask 916480
        %v1897 = vsel %vm1896, %v1881, %v1883
        %v1898 = vsel %vm1896, %v1885, %v1887
        %v1899 = vsel %vm1896, %v1889, %v1891
        %v1900 = vsel %vm1896, %v1893, %v1895
        %v1909 = vsel %vm1896, %v1883, 0.0
        %v1910 = vsel %vm1896, %v1887, 0.0
        %v1911 = vsel %vm1896, %v1891, 0.0
        %v1912 = vsel %vm1896, %v1895, 0.0
        %v1913 = vpack.c.bf16 %v1898, %v1897
        %v1914 = vpack.c.bf16 %v1910, %v1909
        %v1915 = vpack.c.bf16 %v1900, %v1899
        %v1916 = vpack.c.bf16 %v1912, %v1911
        %s1917 = scalar_lea.vmem %s2, 224
        %v1918 = vld [vmem:[%s1917] sm:$0xf]
        %v1919 = vld [vmem:[%s1917 + $0x4] sm:$0xf]
        %v1920 = vld [vmem:[%s1917 + $0x8] sm:$0xf]
        %v1921 = vld [vmem:[%s1917 + $0xc] sm:$0xf]
        %v1922 = vld [vmem:[%s1917 + $0x10] sm:$0xf]
        %v1923 = vld [vmem:[%s1917 + $0x14] sm:$0xf]
        %v1924 = vld [vmem:[%s1917 + $0x18] sm:$0xf]
        %v1925 = vld [vmem:[%s1917 + $0x1c] sm:$0xf]
        %v1934 = vunpack.c.l.b16 %v1918
        %v1935 = vunpack.c.l.b16 %v1919
        %v1936 = vunpack.c.l.b16 %v1920
        %v1937 = vunpack.c.l.b16 %v1921
        %v1938 = vunpack.c.l.b16 %v1922
        %v1939 = vunpack.c.l.b16 %v1923
        %v1940 = vunpack.c.l.b16 %v1924
        %v1941 = vunpack.c.l.b16 %v1925
        %v1942 = vpack.c.b16 %v1935, %v1934
        %v1943 = vpack.c.b16 %v1937, %v1936
        %v1944 = vpack.c.b16 %v1939, %v1938
        %v1945 = vpack.c.b16 %v1941, %v1940
        %v1947 = vsel %vm513, %v1942, 0
        %v1950 = vsel %vm513, %v1943, 0
        %v1953 = vsel %vm513, %v1944, 0
        %v1956 = vsel %vm513, %v1945, 0
        %1958 = vmatprep.subr.bf16.mxu0 0
        %1959 = vmatpush1.bf16.msra.mxu0 0
        %1960 = vmatprep.subr.bf16.mxu0 0
        %1961 = vmatpush1.bf16.msra.mxu0 0
        %1962 = vmatprep.subr.bf16.mxu0 0
        %1963 = vmatpush1.bf16.msra.mxu0 0
        %1964 = vmatprep.subr.bf16.mxu0 0
        %1965 = vmatpush1.bf16.msra.mxu0 0
        %1966 = vmatprep.subr.bf16.mxu0 0
        %1967 = vmatpush1.bf16.msra.mxu0 0
        %1968 = vmatprep.subr.bf16.mxu0 0
        %1969 = vmatpush1.bf16.msra.mxu0 0
        %1970 = vmatprep.subr.bf16.mxu0 %v1916
        %1971 = vmatpush1.bf16.msra.mxu0 %v1915
        %1972 = vmatprep.subr.bf16.mxu0 %v1914
        %1973 = vmatpush1.bf16.msra.mxu0 %v1913
        %1974 = vmatprep.subr.bf16.mxu0 0
        %1975 = vmatpush2.bf16.msra.mxu0 0
        %1976 = vmatprep.subr.bf16.mxu0 0
        %1977 = vmatpush2.bf16.msra.mxu0 0
        %1978 = vmatprep.subr.bf16.mxu0 0
        %1979 = vmatpush2.bf16.msra.mxu0 0
        %1980 = vmatprep.subr.bf16.mxu0 0
        %1981 = vmatpush2.bf16.msra.mxu0 0
        %1982 = vmatprep.subr.bf16.mxu0 0
        %1983 = vmatpush2.bf16.msra.mxu0 0
        %1984 = vmatprep.subr.bf16.mxu0 0
        %1985 = vmatpush2.bf16.msra.mxu0 0
        %1986 = vmatprep.subr.bf16.mxu0 0
        %1987 = vmatpush2.bf16.msra.mxu0 0
        %1988 = vmatprep.subr.bf16.mxu0 0
        %1989 = vmatpush2.bf16.msra.mxu0 0
        %1990 = vmatprep.mubr.bf16.mxu0 0
        %1991 = vmatmul.mubr.bf16.gmra.mxu0 %v1947
        %v1992 = vpop.f32.mrf.mxu0
        %v1993 = vadd.f32 0.0, %v1992
        %v1994 = vpop.f32.mrf.mxu0
        %v1995 = vadd.f32 0.0, %v1994
        %v1996 = vpop.f32.mrf.mxu0
        %v1997 = vadd.f32 0.0, %v1996
        %v1998 = vpop.f32.mrf.mxu0
        %v1999 = vadd.f32 0.0, %v1998
        %2000 = vmatprep.mubr.bf16.mxu0 0
        %2001 = vmatmul.mubr.bf16.gmra.mxu0 %v1950
        %v2002 = vpop.f32.mrf.mxu0
        %v2003 = vadd.f32 0.0, %v2002
        %v2004 = vpop.f32.mrf.mxu0
        %v2005 = vadd.f32 0.0, %v2004
        %v2006 = vpop.f32.mrf.mxu0
        %v2007 = vadd.f32 0.0, %v2006
        %v2008 = vpop.f32.mrf.mxu0
        %v2009 = vadd.f32 0.0, %v2008
        %2010 = vmatprep.mubr.bf16.mxu0 0
        %2011 = vmatmul.mubr.bf16.gmra.mxu0 %v1953
        %v2012 = vpop.f32.mrf.mxu0
        %v2013 = vadd.f32 0.0, %v2012
        %v2014 = vpop.f32.mrf.mxu0
        %v2015 = vadd.f32 0.0, %v2014
        %v2016 = vpop.f32.mrf.mxu0
        %v2017 = vadd.f32 0.0, %v2016
        %v2018 = vpop.f32.mrf.mxu0
        %v2019 = vadd.f32 0.0, %v2018
        %2020 = vmatprep.mubr.bf16.mxu0 0
        %2021 = vmatmul.mubr.bf16.gmra.mxu0 %v1956
        %v2022 = vpop.f32.mrf.mxu0
        %v2023 = vadd.f32 0.0, %v2022
        %v2024 = vpop.f32.mrf.mxu0
        %v2025 = vadd.f32 0.0, %v2024
        %v2026 = vpop.f32.mrf.mxu0
        %v2027 = vadd.f32 0.0, %v2026
        %v2028 = vpop.f32.mrf.mxu0
        %v2029 = vadd.f32 0.0, %v2028
        %2030 = vdwg.mxu0
        %v2031 = vadd.f32 %v1864, %v1993
        %v2032 = vadd.f32 %v1865, %v1995
        %v2033 = vadd.f32 %v1866, %v1997
        %v2034 = vadd.f32 %v1867, %v1999
        %v2035 = vadd.f32 %v1868, %v2003
        %v2036 = vadd.f32 %v1869, %v2005
        %v2037 = vadd.f32 %v1870, %v2007
        %v2038 = vadd.f32 %v1871, %v2009
        %v2039 = vadd.f32 %v1872, %v2013
        %v2040 = vadd.f32 %v1873, %v2015
        %v2041 = vadd.f32 %v1874, %v2017
        %v2042 = vadd.f32 %v1875, %v2019
        %v2043 = vadd.f32 %v1876, %v2023
        %v2044 = vadd.f32 %v1877, %v2025
        %v2045 = vadd.f32 %v1878, %v2027
        %v2046 = vadd.f32 %v1879, %v2029
        %2047 = vrot.lane.b32.xlu0 %v682, 111
        %v2048 = vpop.permute.xlu0 %2047
        %2049 = vrot.lane.b32.xlu0 %v683, 111
        %v2050 = vpop.permute.xlu0 %2049
        %2051 = vrot.lane.b32.xlu0 %v684, 111
        %v2052 = vpop.permute.xlu0 %2051
        %2053 = vrot.lane.b32.xlu0 %v685, 111
        %v2054 = vpop.permute.xlu0 %2053
        %2055 = vrot.lane.b32.xlu0 %v686, 111
        %v2056 = vpop.permute.xlu0 %2055
        %2057 = vrot.lane.b32.xlu0 %v687, 111
        %v2058 = vpop.permute.xlu0 %2057
        %2059 = vrot.lane.b32.xlu0 %v688, 111
        %v2060 = vpop.permute.xlu0 %2059
        %2061 = vrot.lane.b32.xlu0 %v689, 111
        %v2062 = vpop.permute.xlu0 %2061
        %vm2063 = vcmask 908288
        %v2064 = vsel %vm2063, %v2048, %v2050
        %v2065 = vsel %vm2063, %v2052, %v2054
        %v2066 = vsel %vm2063, %v2056, %v2058
        %v2067 = vsel %vm2063, %v2060, %v2062
        %v2076 = vsel %vm2063, %v2050, 0.0
        %v2077 = vsel %vm2063, %v2054, 0.0
        %v2078 = vsel %vm2063, %v2058, 0.0
        %v2079 = vsel %vm2063, %v2062, 0.0
        %v2080 = vsel %vm1077, %v2064, 0.0
        %v2081 = vsel %vm1078, %v2076, 0.0
        %v2082 = vsel %vm1077, %v2065, 0.0
        %v2083 = vsel %vm1078, %v2077, 0.0
        %v2084 = vsel %vm1077, %v2066, 0.0
        %v2085 = vsel %vm1078, %v2078, 0.0
        %v2086 = vsel %vm1077, %v2067, 0.0
        %v2087 = vsel %vm1078, %v2079, 0.0
        %v2088 = vpack.c.bf16 %v2082, %v2080
        %v2089 = vpack.c.bf16 %v2083, %v2081
        %v2090 = vpack.c.bf16 %v2086, %v2084
        %v2091 = vpack.c.bf16 %v2087, %v2085
        %s2092 = scalar_lea.vmem %s2, 256
        %v2093 = vld [vmem:[%s2092] sm:$0xf]
        %v2094 = vld [vmem:[%s2092 + $0x4] sm:$0xf]
        %v2095 = vld [vmem:[%s2092 + $0x8] sm:$0xf]
        %v2096 = vld [vmem:[%s2092 + $0xc] sm:$0xf]
        %v2097 = vld [vmem:[%s2092 + $0x10] sm:$0xf]
        %v2098 = vld [vmem:[%s2092 + $0x14] sm:$0xf]
        %v2099 = vld [vmem:[%s2092 + $0x18] sm:$0xf]
        %v2100 = vld [vmem:[%s2092 + $0x1c] sm:$0xf]
        %v2109 = vunpack.c.l.b16 %v2093
        %v2110 = vunpack.c.l.b16 %v2094
        %v2111 = vunpack.c.l.b16 %v2095
        %v2112 = vunpack.c.l.b16 %v2096
        %v2113 = vunpack.c.l.b16 %v2097
        %v2114 = vunpack.c.l.b16 %v2098
        %v2115 = vunpack.c.l.b16 %v2099
        %v2116 = vunpack.c.l.b16 %v2100
        %v2117 = vpack.c.b16 %v2110, %v2109
        %v2118 = vpack.c.b16 %v2112, %v2111
        %v2119 = vpack.c.b16 %v2114, %v2113
        %v2120 = vpack.c.b16 %v2116, %v2115
        %v2122 = vsel %vm513, %v2117, 0
        %v2125 = vsel %vm513, %v2118, 0
        %v2128 = vsel %vm513, %v2119, 0
        %v2131 = vsel %vm513, %v2120, 0
        %2133 = vmatprep.subr.bf16.mxu0 0
        %2134 = vmatpush1.bf16.msra.mxu0 0
        %2135 = vmatprep.subr.bf16.mxu0 0
        %2136 = vmatpush1.bf16.msra.mxu0 0
        %2137 = vmatprep.subr.bf16.mxu0 0
        %2138 = vmatpush1.bf16.msra.mxu0 0
        %2139 = vmatprep.subr.bf16.mxu0 0
        %2140 = vmatpush1.bf16.msra.mxu0 0
        %2141 = vmatprep.subr.bf16.mxu0 0
        %2142 = vmatpush1.bf16.msra.mxu0 0
        %2143 = vmatprep.subr.bf16.mxu0 0
        %2144 = vmatpush1.bf16.msra.mxu0 0
        %2145 = vmatprep.subr.bf16.mxu0 %v2091
        %2146 = vmatpush1.bf16.msra.mxu0 %v2090
        %2147 = vmatprep.subr.bf16.mxu0 %v2089
        %2148 = vmatpush1.bf16.msra.mxu0 %v2088
        %2149 = vmatprep.subr.bf16.mxu0 0
        %2150 = vmatpush2.bf16.msra.mxu0 0
        %2151 = vmatprep.subr.bf16.mxu0 0
        %2152 = vmatpush2.bf16.msra.mxu0 0
        %2153 = vmatprep.subr.bf16.mxu0 0
        %2154 = vmatpush2.bf16.msra.mxu0 0
        %2155 = vmatprep.subr.bf16.mxu0 0
        %2156 = vmatpush2.bf16.msra.mxu0 0
        %2157 = vmatprep.subr.bf16.mxu0 0
        %2158 = vmatpush2.bf16.msra.mxu0 0
        %2159 = vmatprep.subr.bf16.mxu0 0
        %2160 = vmatpush2.bf16.msra.mxu0 0
        %2161 = vmatprep.subr.bf16.mxu0 0
        %2162 = vmatpush2.bf16.msra.mxu0 0
        %2163 = vmatprep.subr.bf16.mxu0 0
        %2164 = vmatpush2.bf16.msra.mxu0 0
        %2165 = vmatprep.mubr.bf16.mxu0 0
        %2166 = vmatmul.mubr.bf16.gmra.mxu0 %v2122
        %v2167 = vpop.f32.mrf.mxu0
        %v2168 = vadd.f32 0.0, %v2167
        %v2169 = vpop.f32.mrf.mxu0
        %v2170 = vadd.f32 0.0, %v2169
        %v2171 = vpop.f32.mrf.mxu0
        %v2172 = vadd.f32 0.0, %v2171
        %v2173 = vpop.f32.mrf.mxu0
        %v2174 = vadd.f32 0.0, %v2173
        %2175 = vmatprep.mubr.bf16.mxu0 0
        %2176 = vmatmul.mubr.bf16.gmra.mxu0 %v2125
        %v2177 = vpop.f32.mrf.mxu0
        %v2178 = vadd.f32 0.0, %v2177
        %v2179 = vpop.f32.mrf.mxu0
        %v2180 = vadd.f32 0.0, %v2179
        %v2181 = vpop.f32.mrf.mxu0
        %v2182 = vadd.f32 0.0, %v2181
        %v2183 = vpop.f32.mrf.mxu0
        %v2184 = vadd.f32 0.0, %v2183
        %2185 = vmatprep.mubr.bf16.mxu0 0
        %2186 = vmatmul.mubr.bf16.gmra.mxu0 %v2128
        %v2187 = vpop.f32.mrf.mxu0
        %v2188 = vadd.f32 0.0, %v2187
        %v2189 = vpop.f32.mrf.mxu0
        %v2190 = vadd.f32 0.0, %v2189
        %v2191 = vpop.f32.mrf.mxu0
        %v2192 = vadd.f32 0.0, %v2191
        %v2193 = vpop.f32.mrf.mxu0
        %v2194 = vadd.f32 0.0, %v2193
        %2195 = vmatprep.mubr.bf16.mxu0 0
        %2196 = vmatmul.mubr.bf16.gmra.mxu0 %v2131
        %v2197 = vpop.f32.mrf.mxu0
        %v2198 = vadd.f32 0.0, %v2197
        %v2199 = vpop.f32.mrf.mxu0
        %v2200 = vadd.f32 0.0, %v2199
        %v2201 = vpop.f32.mrf.mxu0
        %v2202 = vadd.f32 0.0, %v2201
        %v2203 = vpop.f32.mrf.mxu0
        %v2204 = vadd.f32 0.0, %v2203
        %2205 = vdwg.mxu0
        %v2206 = vadd.f32 %v2031, %v2168
        %v2207 = vadd.f32 %v2032, %v2170
        %v2208 = vadd.f32 %v2033, %v2172
        %v2209 = vadd.f32 %v2034, %v2174
        %v2210 = vadd.f32 %v2035, %v2178
        %v2211 = vadd.f32 %v2036, %v2180
        %v2212 = vadd.f32 %v2037, %v2182
        %v2213 = vadd.f32 %v2038, %v2184
        %v2214 = vadd.f32 %v2039, %v2188
        %v2215 = vadd.f32 %v2040, %v2190
        %v2216 = vadd.f32 %v2041, %v2192
        %v2217 = vadd.f32 %v2042, %v2194
        %v2218 = vadd.f32 %v2043, %v2198
        %v2219 = vadd.f32 %v2044, %v2200
        %v2220 = vadd.f32 %v2045, %v2202
        %v2221 = vadd.f32 %v2046, %v2204
        %v2222 = vld [vmem:[%s3] sm:$0xff]
        %v2223 = vld [vmem:[%s3 + $0x8] sm:$0xff]
        %v2224 = vld [vmem:[%s3 + $0x10] sm:$0xff]
        %v2225 = vld [vmem:[%s3 + $0x18] sm:$0xff]
        %v2226 = vld [vmem:[%s3 + $0x20] sm:$0xff]
        %v2227 = vld [vmem:[%s3 + $0x28] sm:$0xff]
        %v2228 = vld [vmem:[%s3 + $0x30] sm:$0xff]
        %v2229 = vld [vmem:[%s3 + $0x38] sm:$0xff]
        %2231 = vset.pattern.permute.xlu0 0
        %2232 = vperm.xlu0 %2231, %v2222
        %v2233 = vpop.permute.xlu0 %2232
        %2236 = vset.pattern.permute.xlu0 0
        %2237 = vperm.xlu0 %2236, %v2223
        %v2238 = vpop.permute.xlu0 %2237
        %2241 = vset.pattern.permute.xlu0 0
        %2242 = vperm.xlu0 %2241, %v2224
        %v2243 = vpop.permute.xlu0 %2242
        %2246 = vset.pattern.permute.xlu0 0
        %2247 = vperm.xlu0 %2246, %v2225
        %v2248 = vpop.permute.xlu0 %2247
        %2251 = vset.pattern.permute.xlu0 0
        %2252 = vperm.xlu0 %2251, %v2226
        %v2253 = vpop.permute.xlu0 %2252
        %2256 = vset.pattern.permute.xlu0 0
        %2257 = vperm.xlu0 %2256, %v2227
        %v2258 = vpop.permute.xlu0 %2257
        %2261 = vset.pattern.permute.xlu0 0
        %2262 = vperm.xlu0 %2261, %v2228
        %v2263 = vpop.permute.xlu0 %2262
        %2266 = vset.pattern.permute.xlu0 0
        %2267 = vperm.xlu0 %2266, %v2229
        %v2268 = vpop.permute.xlu0 %2267
        %v2270 = vadd.f32 %v2206, %v2233
        %v2271 = vadd.f32 %v2207, %v2233
        %v2272 = vadd.f32 %v2208, %v2238
        %v2273 = vadd.f32 %v2209, %v2238
        %v2274 = vadd.f32 %v2210, %v2243
        %v2275 = vadd.f32 %v2211, %v2243
        %v2276 = vadd.f32 %v2212, %v2248
        %v2277 = vadd.f32 %v2213, %v2248
        %v2278 = vadd.f32 %v2214, %v2253
        %v2279 = vadd.f32 %v2215, %v2253
        %v2280 = vadd.f32 %v2216, %v2258
        %v2281 = vadd.f32 %v2217, %v2258
        %v2282 = vadd.f32 %v2218, %v2263
        %v2283 = vadd.f32 %v2219, %v2263
        %v2284 = vadd.f32 %v2220, %v2268
        %v2285 = vadd.f32 %v2221, %v2268
        %v2286 = vmax.f32 %v2270, 0.0
        %v2287 = vmax.f32 %v2271, 0.0
        %v2288 = vmax.f32 %v2272, 0.0
        %v2289 = vmax.f32 %v2273, 0.0
        %v2290 = vmax.f32 %v2274, 0.0
        %v2291 = vmax.f32 %v2275, 0.0
        %v2292 = vmax.f32 %v2276, 0.0
        %v2293 = vmax.f32 %v2277, 0.0
        %v2294 = vmax.f32 %v2278, 0.0
        %v2295 = vmax.f32 %v2279, 0.0
        %v2296 = vmax.f32 %v2280, 0.0
        %v2297 = vmax.f32 %v2281, 0.0
        %v2298 = vmax.f32 %v2282, 0.0
        %v2299 = vmax.f32 %v2283, 0.0
        %v2300 = vmax.f32 %v2284, 0.0
        %v2301 = vmax.f32 %v2285, 0.0
        %2303 = vset.pattern.permute.xlu0 0
        %2304 = vperm.xlu0 %2303, %v546
        %v2305 = vpop.permute.xlu0 %2304
        %2308 = vset.pattern.permute.xlu0 0
        %2309 = vperm.xlu0 %2308, %v547
        %v2310 = vpop.permute.xlu0 %2309
        %2313 = vset.pattern.permute.xlu0 0
        %2314 = vperm.xlu0 %2313, %v548
        %v2315 = vpop.permute.xlu0 %2314
        %2318 = vset.pattern.permute.xlu0 0
        %2319 = vperm.xlu0 %2318, %v549
        %v2320 = vpop.permute.xlu0 %2319
        %2323 = vset.pattern.permute.xlu0 0
        %2324 = vperm.xlu0 %2323, %v550
        %v2325 = vpop.permute.xlu0 %2324
        %2328 = vset.pattern.permute.xlu0 0
        %2329 = vperm.xlu0 %2328, %v551
        %v2330 = vpop.permute.xlu0 %2329
        %2333 = vset.pattern.permute.xlu0 0
        %2334 = vperm.xlu0 %2333, %v552
        %v2335 = vpop.permute.xlu0 %2334
        %2338 = vset.pattern.permute.xlu0 0
        %2339 = vperm.xlu0 %2338, %v553
        %v2340 = vpop.permute.xlu0 %2339
        %v2342 = vadd.f32 %v2286, %v2305
        %v2343 = vadd.f32 %v2287, %v2305
        %v2344 = vadd.f32 %v2288, %v2310
        %v2345 = vadd.f32 %v2289, %v2310
        %v2346 = vadd.f32 %v2290, %v2315
        %v2347 = vadd.f32 %v2291, %v2315
        %v2348 = vadd.f32 %v2292, %v2320
        %v2349 = vadd.f32 %v2293, %v2320
        %v2350 = vadd.f32 %v2294, %v2325
        %v2351 = vadd.f32 %v2295, %v2325
        %v2352 = vadd.f32 %v2296, %v2330
        %v2353 = vadd.f32 %v2297, %v2330
        %v2354 = vadd.f32 %v2298, %v2335
        %v2355 = vadd.f32 %v2299, %v2335
        %v2356 = vadd.f32 %v2300, %v2340
        %v2357 = vadd.f32 %v2301, %v2340
        %v2358 = vld [vmem:[%s12] sm:$0xff]
        %v2359 = vld [vmem:[%s12 + $0x8] sm:$0xff]
        %v2360 = vld [vmem:[%s12 + $0x10] sm:$0xff]
        %v2361 = vld [vmem:[%s12 + $0x18] sm:$0xff]
        %v2362 = vld [vmem:[%s12 + $0x20] sm:$0xff]
        %v2363 = vld [vmem:[%s12 + $0x28] sm:$0xff]
        %v2364 = vld [vmem:[%s12 + $0x30] sm:$0xff]
        %v2365 = vld [vmem:[%s12 + $0x38] sm:$0xff]
        %v2366 = vld [vmem:[%s13] sm:$0xff]
        %v2367 = vld [vmem:[%s13 + $0x8] sm:$0xff]
        %v2368 = vld [vmem:[%s13 + $0x10] sm:$0xff]
        %v2369 = vld [vmem:[%s13 + $0x18] sm:$0xff]
        %v2370 = vld [vmem:[%s13 + $0x20] sm:$0xff]
        %v2371 = vld [vmem:[%s13 + $0x28] sm:$0xff]
        %v2372 = vld [vmem:[%s13 + $0x30] sm:$0xff]
        %v2373 = vld [vmem:[%s13 + $0x38] sm:$0xff]
        %v2374 = vadd.f32 %v2342, %v2343
        %2375 = vadd.xlane.f32.xlu0 %v2374
        %v2376 = vpop.xlane.xlu0 %2375
        %v2377 = vadd.f32 %v2344, %v2345
        %2378 = vadd.xlane.f32.xlu0 %v2377
        %v2379 = vpop.xlane.xlu0 %2378
        %v2380 = vadd.f32 %v2346, %v2347
        %2381 = vadd.xlane.f32.xlu0 %v2380
        %v2382 = vpop.xlane.xlu0 %2381
        %v2383 = vadd.f32 %v2348, %v2349
        %2384 = vadd.xlane.f32.xlu0 %v2383
        %v2385 = vpop.xlane.xlu0 %2384
        %v2386 = vadd.f32 %v2350, %v2351
        %2387 = vadd.xlane.f32.xlu0 %v2386
        %v2388 = vpop.xlane.xlu0 %2387
        %v2389 = vadd.f32 %v2352, %v2353
        %2390 = vadd.xlane.f32.xlu0 %v2389
        %v2391 = vpop.xlane.xlu0 %2390
        %v2392 = vadd.f32 %v2354, %v2355
        %2393 = vadd.xlane.f32.xlu0 %v2392
        %v2394 = vpop.xlane.xlu0 %2393
        %v2395 = vadd.f32 %v2356, %v2357
        %2396 = vadd.xlane.f32.xlu0 %v2395
        %v2397 = vpop.xlane.xlu0 %2396
        %v2398 = vmul.f32 %v2342, %v2342
        %v2399 = vmul.f32 %v2343, %v2343
        %v2400 = vmul.f32 %v2344, %v2344
        %v2401 = vmul.f32 %v2345, %v2345
        %v2402 = vmul.f32 %v2346, %v2346
        %v2403 = vmul.f32 %v2347, %v2347
        %v2404 = vmul.f32 %v2348, %v2348
        %v2405 = vmul.f32 %v2349, %v2349
        %v2406 = vmul.f32 %v2350, %v2350
        %v2407 = vmul.f32 %v2351, %v2351
        %v2408 = vmul.f32 %v2352, %v2352
        %v2409 = vmul.f32 %v2353, %v2353
        %v2410 = vmul.f32 %v2354, %v2354
        %v2411 = vmul.f32 %v2355, %v2355
        %v2412 = vmul.f32 %v2356, %v2356
        %v2413 = vmul.f32 %v2357, %v2357
        %v2414 = vadd.f32 %v2398, %v2399
        %2415 = vadd.xlane.f32.xlu0 %v2414
        %v2416 = vpop.xlane.xlu0 %2415
        %v2417 = vadd.f32 %v2400, %v2401
        %2418 = vadd.xlane.f32.xlu0 %v2417
        %v2419 = vpop.xlane.xlu0 %2418
        %v2420 = vadd.f32 %v2402, %v2403
        %2421 = vadd.xlane.f32.xlu0 %v2420
        %v2422 = vpop.xlane.xlu0 %2421
        %v2423 = vadd.f32 %v2404, %v2405
        %2424 = vadd.xlane.f32.xlu0 %v2423
        %v2425 = vpop.xlane.xlu0 %2424
        %v2426 = vadd.f32 %v2406, %v2407
        %2427 = vadd.xlane.f32.xlu0 %v2426
        %v2428 = vpop.xlane.xlu0 %2427
        %v2429 = vadd.f32 %v2408, %v2409
        %2430 = vadd.xlane.f32.xlu0 %v2429
        %v2431 = vpop.xlane.xlu0 %2430
        %v2432 = vadd.f32 %v2410, %v2411
        %2433 = vadd.xlane.f32.xlu0 %v2432
        %v2434 = vpop.xlane.xlu0 %2433
        %v2435 = vadd.f32 %v2412, %v2413
        %2436 = vadd.xlane.f32.xlu0 %v2435
        %v2437 = vpop.xlane.xlu0 %2436
        %vm2438 = vcmask 1041408
        %v2439 = vsel %vm2438, %v2376, 0.0
        %v2440 = vrot.slane %v2439, 4
        %v2441 = vadd.f32 %v2439, %v2440
        %v2442 = vrot.slane %v2441, 2
        %v2443 = vadd.f32 %v2441, %v2442
        %v2444 = vrot.slane %v2443, 1
        %v2445 = vadd.f32 %v2443, %v2444
        %v2446 = vsel %vm2438, %v2416, 0.0
        %v2447 = vrot.slane %v2446, 4
        %v2448 = vadd.f32 %v2446, %v2447
        %v2449 = vrot.slane %v2448, 2
        %v2450 = vadd.f32 %v2448, %v2449
        %v2451 = vrot.slane %v2450, 1
        %v2452 = vadd.f32 %v2450, %v2451
        %v2453 = vmul.f32 %v2445, 0.001953125
        %v2454 = vmul.f32 %v2452, 0.001953125
        %v2455 = vmul.f32 %v2453, %v2453
        %v2456 = vsub.f32 %v2454, %v2455
        %v2457 = vadd.f32 %v2456, 1e-05
        %v2458 = vrsqrt.pop %v2457
        %v2460 = vrot.slane %v2376, 2
        %v2462 = vsel %vm2438, %v2460, 0.0
        %v2463 = vrot.slane %v2462, 4
        %v2464 = vadd.f32 %v2462, %v2463
        %v2465 = vrot.slane %v2464, 2
        %v2466 = vadd.f32 %v2464, %v2465
        %v2467 = vrot.slane %v2466, 1
        %v2468 = vadd.f32 %v2466, %v2467
        %v2470 = vrot.slane %v2416, 2
        %v2472 = vsel %vm2438, %v2470, 0.0
        %v2473 = vrot.slane %v2472, 4
        %v2474 = vadd.f32 %v2472, %v2473
        %v2475 = vrot.slane %v2474, 2
        %v2476 = vadd.f32 %v2474, %v2475
        %v2477 = vrot.slane %v2476, 1
        %v2478 = vadd.f32 %v2476, %v2477
        %v2479 = vmul.f32 %v2468, 0.001953125
        %v2480 = vmul.f32 %v2478, 0.001953125
        %v2481 = vmul.f32 %v2479, %v2479
        %v2482 = vsub.f32 %v2480, %v2481
        %v2483 = vadd.f32 %v2482, 1e-05
        %v2484 = vrsqrt.pop %v2483
        %v2485 = vrot.slane %v2376, 4
        %v2487 = vsel %vm2438, %v2485, 0.0
        %v2488 = vrot.slane %v2487, 4
        %v2489 = vadd.f32 %v2487, %v2488
        %v2490 = vrot.slane %v2489, 2
        %v2491 = vadd.f32 %v2489, %v2490
        %v2492 = vrot.slane %v2491, 1
        %v2493 = vadd.f32 %v2491, %v2492
        %v2494 = vrot.slane %v2416, 4
        %v2496 = vsel %vm2438, %v2494, 0.0
        %v2497 = vrot.slane %v2496, 4
        %v2498 = vadd.f32 %v2496, %v2497
        %v2499 = vrot.slane %v2498, 2
        %v2500 = vadd.f32 %v2498, %v2499
        %v2501 = vrot.slane %v2500, 1
        %v2502 = vadd.f32 %v2500, %v2501
        %v2503 = vmul.f32 %v2493, 0.001953125
        %v2504 = vmul.f32 %v2502, 0.001953125
        %v2505 = vmul.f32 %v2503, %v2503
        %v2506 = vsub.f32 %v2504, %v2505
        %v2507 = vadd.f32 %v2506, 1e-05
        %v2508 = vrsqrt.pop %v2507
        %v2509 = vrot.slane %v2376, 6
        %v2511 = vsel %vm2438, %v2509, 0.0
        %v2512 = vrot.slane %v2511, 4
        %v2513 = vadd.f32 %v2511, %v2512
        %v2514 = vrot.slane %v2513, 2
        %v2515 = vadd.f32 %v2513, %v2514
        %v2516 = vrot.slane %v2515, 1
        %v2517 = vadd.f32 %v2515, %v2516
        %v2518 = vrot.slane %v2416, 6
        %v2520 = vsel %vm2438, %v2518, 0.0
        %v2521 = vrot.slane %v2520, 4
        %v2522 = vadd.f32 %v2520, %v2521
        %v2523 = vrot.slane %v2522, 2
        %v2524 = vadd.f32 %v2522, %v2523
        %v2525 = vrot.slane %v2524, 1
        %v2526 = vadd.f32 %v2524, %v2525
        %v2527 = vmul.f32 %v2517, 0.001953125
        %v2528 = vmul.f32 %v2526, 0.001953125
        %v2529 = vmul.f32 %v2527, %v2527
        %v2530 = vsub.f32 %v2528, %v2529
        %v2531 = vadd.f32 %v2530, 1e-05
        %v2532 = vrsqrt.pop %v2531
        %v2533 = vsel %vm2438, %v2379, 0.0
        %v2534 = vrot.slane %v2533, 4
        %v2535 = vadd.f32 %v2533, %v2534
        %v2536 = vrot.slane %v2535, 2
        %v2537 = vadd.f32 %v2535, %v2536
        %v2538 = vrot.slane %v2537, 1
        %v2539 = vadd.f32 %v2537, %v2538
        %v2540 = vsel %vm2438, %v2419, 0.0
        %v2541 = vrot.slane %v2540, 4
        %v2542 = vadd.f32 %v2540, %v2541
        %v2543 = vrot.slane %v2542, 2
        %v2544 = vadd.f32 %v2542, %v2543
        %v2545 = vrot.slane %v2544, 1
        %v2546 = vadd.f32 %v2544, %v2545
        %v2547 = vmul.f32 %v2539, 0.001953125
        %v2548 = vmul.f32 %v2546, 0.001953125
        %v2549 = vmul.f32 %v2547, %v2547
        %v2550 = vsub.f32 %v2548, %v2549
        %v2551 = vadd.f32 %v2550, 1e-05
        %v2552 = vrsqrt.pop %v2551
        %v2554 = vrot.slane %v2379, 2
        %v2556 = vsel %vm2438, %v2554, 0.0
        %v2557 = vrot.slane %v2556, 4
        %v2558 = vadd.f32 %v2556, %v2557
        %v2559 = vrot.slane %v2558, 2
        %v2560 = vadd.f32 %v2558, %v2559
        %v2561 = vrot.slane %v2560, 1
        %v2562 = vadd.f32 %v2560, %v2561
        %v2564 = vrot.slane %v2419, 2
        %v2566 = vsel %vm2438, %v2564, 0.0
        %v2567 = vrot.slane %v2566, 4
        %v2568 = vadd.f32 %v2566, %v2567
        %v2569 = vrot.slane %v2568, 2
        %v2570 = vadd.f32 %v2568, %v2569
        %v2571 = vrot.slane %v2570, 1
        %v2572 = vadd.f32 %v2570, %v2571
        %v2573 = vmul.f32 %v2562, 0.001953125
        %v2574 = vmul.f32 %v2572, 0.001953125
        %v2575 = vmul.f32 %v2573, %v2573
        %v2576 = vsub.f32 %v2574, %v2575
        %v2577 = vadd.f32 %v2576, 1e-05
        %v2578 = vrsqrt.pop %v2577
        %v2579 = vrot.slane %v2379, 4
        %v2581 = vsel %vm2438, %v2579, 0.0
        %v2582 = vrot.slane %v2581, 4
        %v2583 = vadd.f32 %v2581, %v2582
        %v2584 = vrot.slane %v2583, 2
        %v2585 = vadd.f32 %v2583, %v2584
        %v2586 = vrot.slane %v2585, 1
        %v2587 = vadd.f32 %v2585, %v2586
        %v2588 = vrot.slane %v2419, 4
        %v2590 = vsel %vm2438, %v2588, 0.0
        %v2591 = vrot.slane %v2590, 4
        %v2592 = vadd.f32 %v2590, %v2591
        %v2593 = vrot.slane %v2592, 2
        %v2594 = vadd.f32 %v2592, %v2593
        %v2595 = vrot.slane %v2594, 1
        %v2596 = vadd.f32 %v2594, %v2595
        %v2597 = vmul.f32 %v2587, 0.001953125
        %v2598 = vmul.f32 %v2596, 0.001953125
        %v2599 = vmul.f32 %v2597, %v2597
        %v2600 = vsub.f32 %v2598, %v2599
        %v2601 = vadd.f32 %v2600, 1e-05
        %v2602 = vrsqrt.pop %v2601
        %v2603 = vrot.slane %v2379, 6
        %v2605 = vsel %vm2438, %v2603, 0.0
        %v2606 = vrot.slane %v2605, 4
        %v2607 = vadd.f32 %v2605, %v2606
        %v2608 = vrot.slane %v2607, 2
        %v2609 = vadd.f32 %v2607, %v2608
        %v2610 = vrot.slane %v2609, 1
        %v2611 = vadd.f32 %v2609, %v2610
        %v2612 = vrot.slane %v2419, 6
        %v2614 = vsel %vm2438, %v2612, 0.0
        %v2615 = vrot.slane %v2614, 4
        %v2616 = vadd.f32 %v2614, %v2615
        %v2617 = vrot.slane %v2616, 2
        %v2618 = vadd.f32 %v2616, %v2617
        %v2619 = vrot.slane %v2618, 1
        %v2620 = vadd.f32 %v2618, %v2619
        %v2621 = vmul.f32 %v2611, 0.001953125
        %v2622 = vmul.f32 %v2620, 0.001953125
        %v2623 = vmul.f32 %v2621, %v2621
        %v2624 = vsub.f32 %v2622, %v2623
        %v2625 = vadd.f32 %v2624, 1e-05
        %v2626 = vrsqrt.pop %v2625
        %v2627 = vsel %vm2438, %v2382, 0.0
        %v2628 = vrot.slane %v2627, 4
        %v2629 = vadd.f32 %v2627, %v2628
        %v2630 = vrot.slane %v2629, 2
        %v2631 = vadd.f32 %v2629, %v2630
        %v2632 = vrot.slane %v2631, 1
        %v2633 = vadd.f32 %v2631, %v2632
        %v2634 = vsel %vm2438, %v2422, 0.0
        %v2635 = vrot.slane %v2634, 4
        %v2636 = vadd.f32 %v2634, %v2635
        %v2637 = vrot.slane %v2636, 2
        %v2638 = vadd.f32 %v2636, %v2637
        %v2639 = vrot.slane %v2638, 1
        %v2640 = vadd.f32 %v2638, %v2639
        %v2641 = vmul.f32 %v2633, 0.001953125
        %v2642 = vmul.f32 %v2640, 0.001953125
        %v2643 = vmul.f32 %v2641, %v2641
        %v2644 = vsub.f32 %v2642, %v2643
        %v2645 = vadd.f32 %v2644, 1e-05
        %v2646 = vrsqrt.pop %v2645
        %v2648 = vrot.slane %v2382, 2
        %v2650 = vsel %vm2438, %v2648, 0.0
        %v2651 = vrot.slane %v2650, 4
        %v2652 = vadd.f32 %v2650, %v2651
        %v2653 = vrot.slane %v2652, 2
        %v2654 = vadd.f32 %v2652, %v2653
        %v2655 = vrot.slane %v2654, 1
        %v2656 = vadd.f32 %v2654, %v2655
        %v2658 = vrot.slane %v2422, 2
        %v2660 = vsel %vm2438, %v2658, 0.0
        %v2661 = vrot.slane %v2660, 4
        %v2662 = vadd.f32 %v2660, %v2661
        %v2663 = vrot.slane %v2662, 2
        %v2664 = vadd.f32 %v2662, %v2663
        %v2665 = vrot.slane %v2664, 1
        %v2666 = vadd.f32 %v2664, %v2665
        %v2667 = vmul.f32 %v2656, 0.001953125
        %v2668 = vmul.f32 %v2666, 0.001953125
        %v2669 = vmul.f32 %v2667, %v2667
        %v2670 = vsub.f32 %v2668, %v2669
        %v2671 = vadd.f32 %v2670, 1e-05
        %v2672 = vrsqrt.pop %v2671
        %v2673 = vrot.slane %v2382, 4
        %v2675 = vsel %vm2438, %v2673, 0.0
        %v2676 = vrot.slane %v2675, 4
        %v2677 = vadd.f32 %v2675, %v2676
        %v2678 = vrot.slane %v2677, 2
        %v2679 = vadd.f32 %v2677, %v2678
        %v2680 = vrot.slane %v2679, 1
        %v2681 = vadd.f32 %v2679, %v2680
        %v2682 = vrot.slane %v2422, 4
        %v2684 = vsel %vm2438, %v2682, 0.0
        %v2685 = vrot.slane %v2684, 4
        %v2686 = vadd.f32 %v2684, %v2685
        %v2687 = vrot.slane %v2686, 2
        %v2688 = vadd.f32 %v2686, %v2687
        %v2689 = vrot.slane %v2688, 1
        %v2690 = vadd.f32 %v2688, %v2689
        %v2691 = vmul.f32 %v2681, 0.001953125
        %v2692 = vmul.f32 %v2690, 0.001953125
        %v2693 = vmul.f32 %v2691, %v2691
        %v2694 = vsub.f32 %v2692, %v2693
        %v2695 = vadd.f32 %v2694, 1e-05
        %v2696 = vrsqrt.pop %v2695
        %v2697 = vrot.slane %v2382, 6
        %v2699 = vsel %vm2438, %v2697, 0.0
        %v2700 = vrot.slane %v2699, 4
        %v2701 = vadd.f32 %v2699, %v2700
        %v2702 = vrot.slane %v2701, 2
        %v2703 = vadd.f32 %v2701, %v2702
        %v2704 = vrot.slane %v2703, 1
        %v2705 = vadd.f32 %v2703, %v2704
        %v2706 = vrot.slane %v2422, 6
        %v2708 = vsel %vm2438, %v2706, 0.0
        %v2709 = vrot.slane %v2708, 4
        %v2710 = vadd.f32 %v2708, %v2709
        %v2711 = vrot.slane %v2710, 2
        %v2712 = vadd.f32 %v2710, %v2711
        %v2713 = vrot.slane %v2712, 1
        %v2714 = vadd.f32 %v2712, %v2713
        %v2715 = vmul.f32 %v2705, 0.001953125
        %v2716 = vmul.f32 %v2714, 0.001953125
        %v2717 = vmul.f32 %v2715, %v2715
        %v2718 = vsub.f32 %v2716, %v2717
        %v2719 = vadd.f32 %v2718, 1e-05
        %v2720 = vrsqrt.pop %v2719
        %v2721 = vsel %vm2438, %v2385, 0.0
        %v2722 = vrot.slane %v2721, 4
        %v2723 = vadd.f32 %v2721, %v2722
        %v2724 = vrot.slane %v2723, 2
        %v2725 = vadd.f32 %v2723, %v2724
        %v2726 = vrot.slane %v2725, 1
        %v2727 = vadd.f32 %v2725, %v2726
        %v2728 = vsel %vm2438, %v2425, 0.0
        %v2729 = vrot.slane %v2728, 4
        %v2730 = vadd.f32 %v2728, %v2729
        %v2731 = vrot.slane %v2730, 2
        %v2732 = vadd.f32 %v2730, %v2731
        %v2733 = vrot.slane %v2732, 1
        %v2734 = vadd.f32 %v2732, %v2733
        %v2735 = vmul.f32 %v2727, 0.001953125
        %v2736 = vmul.f32 %v2734, 0.001953125
        %v2737 = vmul.f32 %v2735, %v2735
        %v2738 = vsub.f32 %v2736, %v2737
        %v2739 = vadd.f32 %v2738, 1e-05
        %v2740 = vrsqrt.pop %v2739
        %v2742 = vrot.slane %v2385, 2
        %v2744 = vsel %vm2438, %v2742, 0.0
        %v2745 = vrot.slane %v2744, 4
        %v2746 = vadd.f32 %v2744, %v2745
        %v2747 = vrot.slane %v2746, 2
        %v2748 = vadd.f32 %v2746, %v2747
        %v2749 = vrot.slane %v2748, 1
        %v2750 = vadd.f32 %v2748, %v2749
        %v2752 = vrot.slane %v2425, 2
        %v2754 = vsel %vm2438, %v2752, 0.0
        %v2755 = vrot.slane %v2754, 4
        %v2756 = vadd.f32 %v2754, %v2755
        %v2757 = vrot.slane %v2756, 2
        %v2758 = vadd.f32 %v2756, %v2757
        %v2759 = vrot.slane %v2758, 1
        %v2760 = vadd.f32 %v2758, %v2759
        %v2761 = vmul.f32 %v2750, 0.001953125
        %v2762 = vmul.f32 %v2760, 0.001953125
        %v2763 = vmul.f32 %v2761, %v2761
        %v2764 = vsub.f32 %v2762, %v2763
        %v2765 = vadd.f32 %v2764, 1e-05
        %v2766 = vrsqrt.pop %v2765
        %v2767 = vrot.slane %v2385, 4
        %v2769 = vsel %vm2438, %v2767, 0.0
        %v2770 = vrot.slane %v2769, 4
        %v2771 = vadd.f32 %v2769, %v2770
        %v2772 = vrot.slane %v2771, 2
        %v2773 = vadd.f32 %v2771, %v2772
        %v2774 = vrot.slane %v2773, 1
        %v2775 = vadd.f32 %v2773, %v2774
        %v2776 = vrot.slane %v2425, 4
        %v2778 = vsel %vm2438, %v2776, 0.0
        %v2779 = vrot.slane %v2778, 4
        %v2780 = vadd.f32 %v2778, %v2779
        %v2781 = vrot.slane %v2780, 2
        %v2782 = vadd.f32 %v2780, %v2781
        %v2783 = vrot.slane %v2782, 1
        %v2784 = vadd.f32 %v2782, %v2783
        %v2785 = vmul.f32 %v2775, 0.001953125
        %v2786 = vmul.f32 %v2784, 0.001953125
        %v2787 = vmul.f32 %v2785, %v2785
        %v2788 = vsub.f32 %v2786, %v2787
        %v2789 = vadd.f32 %v2788, 1e-05
        %v2790 = vrsqrt.pop %v2789
        %v2791 = vrot.slane %v2385, 6
        %v2793 = vsel %vm2438, %v2791, 0.0
        %v2794 = vrot.slane %v2793, 4
        %v2795 = vadd.f32 %v2793, %v2794
        %v2796 = vrot.slane %v2795, 2
        %v2797 = vadd.f32 %v2795, %v2796
        %v2798 = vrot.slane %v2797, 1
        %v2799 = vadd.f32 %v2797, %v2798
        %v2800 = vrot.slane %v2425, 6
        %v2802 = vsel %vm2438, %v2800, 0.0
        %v2803 = vrot.slane %v2802, 4
        %v2804 = vadd.f32 %v2802, %v2803
        %v2805 = vrot.slane %v2804, 2
        %v2806 = vadd.f32 %v2804, %v2805
        %v2807 = vrot.slane %v2806, 1
        %v2808 = vadd.f32 %v2806, %v2807
        %v2809 = vmul.f32 %v2799, 0.001953125
        %v2810 = vmul.f32 %v2808, 0.001953125
        %v2811 = vmul.f32 %v2809, %v2809
        %v2812 = vsub.f32 %v2810, %v2811
        %v2813 = vadd.f32 %v2812, 1e-05
        %v2814 = vrsqrt.pop %v2813
        %v2815 = vsel %vm2438, %v2388, 0.0
        %v2816 = vrot.slane %v2815, 4
        %v2817 = vadd.f32 %v2815, %v2816
        %v2818 = vrot.slane %v2817, 2
        %v2819 = vadd.f32 %v2817, %v2818
        %v2820 = vrot.slane %v2819, 1
        %v2821 = vadd.f32 %v2819, %v2820
        %v2822 = vsel %vm2438, %v2428, 0.0
        %v2823 = vrot.slane %v2822, 4
        %v2824 = vadd.f32 %v2822, %v2823
        %v2825 = vrot.slane %v2824, 2
        %v2826 = vadd.f32 %v2824, %v2825
        %v2827 = vrot.slane %v2826, 1
        %v2828 = vadd.f32 %v2826, %v2827
        %v2829 = vmul.f32 %v2821, 0.001953125
        %v2830 = vmul.f32 %v2828, 0.001953125
        %v2831 = vmul.f32 %v2829, %v2829
        %v2832 = vsub.f32 %v2830, %v2831
        %v2833 = vadd.f32 %v2832, 1e-05
        %v2834 = vrsqrt.pop %v2833
        %v2836 = vrot.slane %v2388, 2
        %v2838 = vsel %vm2438, %v2836, 0.0
        %v2839 = vrot.slane %v2838, 4
        %v2840 = vadd.f32 %v2838, %v2839
        %v2841 = vrot.slane %v2840, 2
        %v2842 = vadd.f32 %v2840, %v2841
        %v2843 = vrot.slane %v2842, 1
        %v2844 = vadd.f32 %v2842, %v2843
        %v2846 = vrot.slane %v2428, 2
        %v2848 = vsel %vm2438, %v2846, 0.0
        %v2849 = vrot.slane %v2848, 4
        %v2850 = vadd.f32 %v2848, %v2849
        %v2851 = vrot.slane %v2850, 2
        %v2852 = vadd.f32 %v2850, %v2851
        %v2853 = vrot.slane %v2852, 1
        %v2854 = vadd.f32 %v2852, %v2853
        %v2855 = vmul.f32 %v2844, 0.001953125
        %v2856 = vmul.f32 %v2854, 0.001953125
        %v2857 = vmul.f32 %v2855, %v2855
        %v2858 = vsub.f32 %v2856, %v2857
        %v2859 = vadd.f32 %v2858, 1e-05
        %v2860 = vrsqrt.pop %v2859
        %v2861 = vrot.slane %v2388, 4
        %v2863 = vsel %vm2438, %v2861, 0.0
        %v2864 = vrot.slane %v2863, 4
        %v2865 = vadd.f32 %v2863, %v2864
        %v2866 = vrot.slane %v2865, 2
        %v2867 = vadd.f32 %v2865, %v2866
        %v2868 = vrot.slane %v2867, 1
        %v2869 = vadd.f32 %v2867, %v2868
        %v2870 = vrot.slane %v2428, 4
        %v2872 = vsel %vm2438, %v2870, 0.0
        %v2873 = vrot.slane %v2872, 4
        %v2874 = vadd.f32 %v2872, %v2873
        %v2875 = vrot.slane %v2874, 2
        %v2876 = vadd.f32 %v2874, %v2875
        %v2877 = vrot.slane %v2876, 1
        %v2878 = vadd.f32 %v2876, %v2877
        %v2879 = vmul.f32 %v2869, 0.001953125
        %v2880 = vmul.f32 %v2878, 0.001953125
        %v2881 = vmul.f32 %v2879, %v2879
        %v2882 = vsub.f32 %v2880, %v2881
        %v2883 = vadd.f32 %v2882, 1e-05
        %v2884 = vrsqrt.pop %v2883
        %v2885 = vrot.slane %v2388, 6
        %v2887 = vsel %vm2438, %v2885, 0.0
        %v2888 = vrot.slane %v2887, 4
        %v2889 = vadd.f32 %v2887, %v2888
        %v2890 = vrot.slane %v2889, 2
        %v2891 = vadd.f32 %v2889, %v2890
        %v2892 = vrot.slane %v2891, 1
        %v2893 = vadd.f32 %v2891, %v2892
        %v2894 = vrot.slane %v2428, 6
        %v2896 = vsel %vm2438, %v2894, 0.0
        %v2897 = vrot.slane %v2896, 4
        %v2898 = vadd.f32 %v2896, %v2897
        %v2899 = vrot.slane %v2898, 2
        %v2900 = vadd.f32 %v2898, %v2899
        %v2901 = vrot.slane %v2900, 1
        %v2902 = vadd.f32 %v2900, %v2901
        %v2903 = vmul.f32 %v2893, 0.001953125
        %v2904 = vmul.f32 %v2902, 0.001953125
        %v2905 = vmul.f32 %v2903, %v2903
        %v2906 = vsub.f32 %v2904, %v2905
        %v2907 = vadd.f32 %v2906, 1e-05
        %v2908 = vrsqrt.pop %v2907
        %v2909 = vsel %vm2438, %v2391, 0.0
        %v2910 = vrot.slane %v2909, 4
        %v2911 = vadd.f32 %v2909, %v2910
        %v2912 = vrot.slane %v2911, 2
        %v2913 = vadd.f32 %v2911, %v2912
        %v2914 = vrot.slane %v2913, 1
        %v2915 = vadd.f32 %v2913, %v2914
        %v2916 = vsel %vm2438, %v2431, 0.0
        %v2917 = vrot.slane %v2916, 4
        %v2918 = vadd.f32 %v2916, %v2917
        %v2919 = vrot.slane %v2918, 2
        %v2920 = vadd.f32 %v2918, %v2919
        %v2921 = vrot.slane %v2920, 1
        %v2922 = vadd.f32 %v2920, %v2921
        %v2923 = vmul.f32 %v2915, 0.001953125
        %v2924 = vmul.f32 %v2922, 0.001953125
        %v2925 = vmul.f32 %v2923, %v2923
        %v2926 = vsub.f32 %v2924, %v2925
        %v2927 = vadd.f32 %v2926, 1e-05
        %v2928 = vrsqrt.pop %v2927
        %v2930 = vrot.slane %v2391, 2
        %v2932 = vsel %vm2438, %v2930, 0.0
        %v2933 = vrot.slane %v2932, 4
        %v2934 = vadd.f32 %v2932, %v2933
        %v2935 = vrot.slane %v2934, 2
        %v2936 = vadd.f32 %v2934, %v2935
        %v2937 = vrot.slane %v2936, 1
        %v2938 = vadd.f32 %v2936, %v2937
        %v2940 = vrot.slane %v2431, 2
        %v2942 = vsel %vm2438, %v2940, 0.0
        %v2943 = vrot.slane %v2942, 4
        %v2944 = vadd.f32 %v2942, %v2943
        %v2945 = vrot.slane %v2944, 2
        %v2946 = vadd.f32 %v2944, %v2945
        %v2947 = vrot.slane %v2946, 1
        %v2948 = vadd.f32 %v2946, %v2947
        %v2949 = vmul.f32 %v2938, 0.001953125
        %v2950 = vmul.f32 %v2948, 0.001953125
        %v2951 = vmul.f32 %v2949, %v2949
        %v2952 = vsub.f32 %v2950, %v2951
        %v2953 = vadd.f32 %v2952, 1e-05
        %v2954 = vrsqrt.pop %v2953
        %v2955 = vrot.slane %v2391, 4
        %v2957 = vsel %vm2438, %v2955, 0.0
        %v2958 = vrot.slane %v2957, 4
        %v2959 = vadd.f32 %v2957, %v2958
        %v2960 = vrot.slane %v2959, 2
        %v2961 = vadd.f32 %v2959, %v2960
        %v2962 = vrot.slane %v2961, 1
        %v2963 = vadd.f32 %v2961, %v2962
        %v2964 = vrot.slane %v2431, 4
        %v2966 = vsel %vm2438, %v2964, 0.0
        %v2967 = vrot.slane %v2966, 4
        %v2968 = vadd.f32 %v2966, %v2967
        %v2969 = vrot.slane %v2968, 2
        %v2970 = vadd.f32 %v2968, %v2969
        %v2971 = vrot.slane %v2970, 1
        %v2972 = vadd.f32 %v2970, %v2971
        %v2973 = vmul.f32 %v2963, 0.001953125
        %v2974 = vmul.f32 %v2972, 0.001953125
        %v2975 = vmul.f32 %v2973, %v2973
        %v2976 = vsub.f32 %v2974, %v2975
        %v2977 = vadd.f32 %v2976, 1e-05
        %v2978 = vrsqrt.pop %v2977
        %v2979 = vrot.slane %v2391, 6
        %v2981 = vsel %vm2438, %v2979, 0.0
        %v2982 = vrot.slane %v2981, 4
        %v2983 = vadd.f32 %v2981, %v2982
        %v2984 = vrot.slane %v2983, 2
        %v2985 = vadd.f32 %v2983, %v2984
        %v2986 = vrot.slane %v2985, 1
        %v2987 = vadd.f32 %v2985, %v2986
        %v2988 = vrot.slane %v2431, 6
        %v2990 = vsel %vm2438, %v2988, 0.0
        %v2991 = vrot.slane %v2990, 4
        %v2992 = vadd.f32 %v2990, %v2991
        %v2993 = vrot.slane %v2992, 2
        %v2994 = vadd.f32 %v2992, %v2993
        %v2995 = vrot.slane %v2994, 1
        %v2996 = vadd.f32 %v2994, %v2995
        %v2997 = vmul.f32 %v2987, 0.001953125
        %v2998 = vmul.f32 %v2996, 0.001953125
        %v2999 = vmul.f32 %v2997, %v2997
        %v3000 = vsub.f32 %v2998, %v2999
        %v3001 = vadd.f32 %v3000, 1e-05
        %v3002 = vrsqrt.pop %v3001
        %v3003 = vsel %vm2438, %v2394, 0.0
        %v3004 = vrot.slane %v3003, 4
        %v3005 = vadd.f32 %v3003, %v3004
        %v3006 = vrot.slane %v3005, 2
        %v3007 = vadd.f32 %v3005, %v3006
        %v3008 = vrot.slane %v3007, 1
        %v3009 = vadd.f32 %v3007, %v3008
        %v3010 = vsel %vm2438, %v2434, 0.0
        %v3011 = vrot.slane %v3010, 4
        %v3012 = vadd.f32 %v3010, %v3011
        %v3013 = vrot.slane %v3012, 2
        %v3014 = vadd.f32 %v3012, %v3013
        %v3015 = vrot.slane %v3014, 1
        %v3016 = vadd.f32 %v3014, %v3015
        %v3017 = vmul.f32 %v3009, 0.001953125
        %v3018 = vmul.f32 %v3016, 0.001953125
        %v3019 = vmul.f32 %v3017, %v3017
        %v3020 = vsub.f32 %v3018, %v3019
        %v3021 = vadd.f32 %v3020, 1e-05
        %v3022 = vrsqrt.pop %v3021
        %v3024 = vrot.slane %v2394, 2
        %v3026 = vsel %vm2438, %v3024, 0.0
        %v3027 = vrot.slane %v3026, 4
        %v3028 = vadd.f32 %v3026, %v3027
        %v3029 = vrot.slane %v3028, 2
        %v3030 = vadd.f32 %v3028, %v3029
        %v3031 = vrot.slane %v3030, 1
        %v3032 = vadd.f32 %v3030, %v3031
        %v3034 = vrot.slane %v2434, 2
        %v3036 = vsel %vm2438, %v3034, 0.0
        %v3037 = vrot.slane %v3036, 4
        %v3038 = vadd.f32 %v3036, %v3037
        %v3039 = vrot.slane %v3038, 2
        %v3040 = vadd.f32 %v3038, %v3039
        %v3041 = vrot.slane %v3040, 1
        %v3042 = vadd.f32 %v3040, %v3041
        %v3043 = vmul.f32 %v3032, 0.001953125
        %v3044 = vmul.f32 %v3042, 0.001953125
        %v3045 = vmul.f32 %v3043, %v3043
        %v3046 = vsub.f32 %v3044, %v3045
        %v3047 = vadd.f32 %v3046, 1e-05
        %v3048 = vrsqrt.pop %v3047
        %v3049 = vrot.slane %v2394, 4
        %v3051 = vsel %vm2438, %v3049, 0.0
        %v3052 = vrot.slane %v3051, 4
        %v3053 = vadd.f32 %v3051, %v3052
        %v3054 = vrot.slane %v3053, 2
        %v3055 = vadd.f32 %v3053, %v3054
        %v3056 = vrot.slane %v3055, 1
        %v3057 = vadd.f32 %v3055, %v3056
        %v3058 = vrot.slane %v2434, 4
        %v3060 = vsel %vm2438, %v3058, 0.0
        %v3061 = vrot.slane %v3060, 4
        %v3062 = vadd.f32 %v3060, %v3061
        %v3063 = vrot.slane %v3062, 2
        %v3064 = vadd.f32 %v3062, %v3063
        %v3065 = vrot.slane %v3064, 1
        %v3066 = vadd.f32 %v3064, %v3065
        %v3067 = vmul.f32 %v3057, 0.001953125
        %v3068 = vmul.f32 %v3066, 0.001953125
        %v3069 = vmul.f32 %v3067, %v3067
        %v3070 = vsub.f32 %v3068, %v3069
        %v3071 = vadd.f32 %v3070, 1e-05
        %v3072 = vrsqrt.pop %v3071
        %v3073 = vrot.slane %v2394, 6
        %v3075 = vsel %vm2438, %v3073, 0.0
        %v3076 = vrot.slane %v3075, 4
        %v3077 = vadd.f32 %v3075, %v3076
        %v3078 = vrot.slane %v3077, 2
        %v3079 = vadd.f32 %v3077, %v3078
        %v3080 = vrot.slane %v3079, 1
        %v3081 = vadd.f32 %v3079, %v3080
        %v3082 = vrot.slane %v2434, 6
        %v3084 = vsel %vm2438, %v3082, 0.0
        %v3085 = vrot.slane %v3084, 4
        %v3086 = vadd.f32 %v3084, %v3085
        %v3087 = vrot.slane %v3086, 2
        %v3088 = vadd.f32 %v3086, %v3087
        %v3089 = vrot.slane %v3088, 1
        %v3090 = vadd.f32 %v3088, %v3089
        %v3091 = vmul.f32 %v3081, 0.001953125
        %v3092 = vmul.f32 %v3090, 0.001953125
        %v3093 = vmul.f32 %v3091, %v3091
        %v3094 = vsub.f32 %v3092, %v3093
        %v3095 = vadd.f32 %v3094, 1e-05
        %v3096 = vrsqrt.pop %v3095
        %v3097 = vsel %vm2438, %v2397, 0.0
        %v3098 = vrot.slane %v3097, 4
        %v3099 = vadd.f32 %v3097, %v3098
        %v3100 = vrot.slane %v3099, 2
        %v3101 = vadd.f32 %v3099, %v3100
        %v3102 = vrot.slane %v3101, 1
        %v3103 = vadd.f32 %v3101, %v3102
        %v3104 = vsel %vm2438, %v2437, 0.0
        %v3105 = vrot.slane %v3104, 4
        %v3106 = vadd.f32 %v3104, %v3105
        %v3107 = vrot.slane %v3106, 2
        %v3108 = vadd.f32 %v3106, %v3107
        %v3109 = vrot.slane %v3108, 1
        %v3110 = vadd.f32 %v3108, %v3109
        %v3111 = vmul.f32 %v3103, 0.001953125
        %v3112 = vmul.f32 %v3110, 0.001953125
        %v3113 = vmul.f32 %v3111, %v3111
        %v3114 = vsub.f32 %v3112, %v3113
        %v3115 = vadd.f32 %v3114, 1e-05
        %v3116 = vrsqrt.pop %v3115
        %v3118 = vrot.slane %v2397, 2
        %v3120 = vsel %vm2438, %v3118, 0.0
        %v3121 = vrot.slane %v3120, 4
        %v3122 = vadd.f32 %v3120, %v3121
        %v3123 = vrot.slane %v3122, 2
        %v3124 = vadd.f32 %v3122, %v3123
        %v3125 = vrot.slane %v3124, 1
        %v3126 = vadd.f32 %v3124, %v3125
        %v3128 = vrot.slane %v2437, 2
        %v3130 = vsel %vm2438, %v3128, 0.0
        %v3131 = vrot.slane %v3130, 4
        %v3132 = vadd.f32 %v3130, %v3131
        %v3133 = vrot.slane %v3132, 2
        %v3134 = vadd.f32 %v3132, %v3133
        %v3135 = vrot.slane %v3134, 1
        %v3136 = vadd.f32 %v3134, %v3135
        %v3137 = vmul.f32 %v3126, 0.001953125
        %v3138 = vmul.f32 %v3136, 0.001953125
        %v3139 = vmul.f32 %v3137, %v3137
        %v3140 = vsub.f32 %v3138, %v3139
        %v3141 = vadd.f32 %v3140, 1e-05
        %v3142 = vrsqrt.pop %v3141
        %v3143 = vrot.slane %v2397, 4
        %v3145 = vsel %vm2438, %v3143, 0.0
        %v3146 = vrot.slane %v3145, 4
        %v3147 = vadd.f32 %v3145, %v3146
        %v3148 = vrot.slane %v3147, 2
        %v3149 = vadd.f32 %v3147, %v3148
        %v3150 = vrot.slane %v3149, 1
        %v3151 = vadd.f32 %v3149, %v3150
        %v3152 = vrot.slane %v2437, 4
        %v3154 = vsel %vm2438, %v3152, 0.0
        %v3155 = vrot.slane %v3154, 4
        %v3156 = vadd.f32 %v3154, %v3155
        %v3157 = vrot.slane %v3156, 2
        %v3158 = vadd.f32 %v3156, %v3157
        %v3159 = vrot.slane %v3158, 1
        %v3160 = vadd.f32 %v3158, %v3159
        %v3161 = vmul.f32 %v3151, 0.001953125
        %v3162 = vmul.f32 %v3160, 0.001953125
        %v3163 = vmul.f32 %v3161, %v3161
        %v3164 = vsub.f32 %v3162, %v3163
        %v3165 = vadd.f32 %v3164, 1e-05
        %v3166 = vrsqrt.pop %v3165
        %v3167 = vrot.slane %v2397, 6
        %v3169 = vsel %vm2438, %v3167, 0.0
        %v3170 = vrot.slane %v3169, 4
        %v3171 = vadd.f32 %v3169, %v3170
        %v3172 = vrot.slane %v3171, 2
        %v3173 = vadd.f32 %v3171, %v3172
        %v3174 = vrot.slane %v3173, 1
        %v3175 = vadd.f32 %v3173, %v3174
        %v3176 = vrot.slane %v2437, 6
        %v3178 = vsel %vm2438, %v3176, 0.0
        %v3179 = vrot.slane %v3178, 4
        %v3180 = vadd.f32 %v3178, %v3179
        %v3181 = vrot.slane %v3180, 2
        %v3182 = vadd.f32 %v3180, %v3181
        %v3183 = vrot.slane %v3182, 1
        %v3184 = vadd.f32 %v3182, %v3183
        %v3185 = vmul.f32 %v3175, 0.001953125
        %v3186 = vmul.f32 %v3184, 0.001953125
        %v3187 = vmul.f32 %v3185, %v3185
        %v3188 = vsub.f32 %v3186, %v3187
        %v3189 = vadd.f32 %v3188, 1e-05
        %v3190 = vrsqrt.pop %v3189
        %v3191 = vsel %vm2438, %v2453, %v2479
        %vm3192 = vcmask 1043456
        %v3193 = vsel %vm3192, %v3191, %v2503
        %vm3194 = vcmask 1045504
        %v3195 = vsel %vm3194, %v3193, %v2527
        %v3196 = vsel %vm2438, %v2547, %v2573
        %v3197 = vsel %vm3192, %v3196, %v2597
        %v3198 = vsel %vm3194, %v3197, %v2621
        %v3199 = vsel %vm2438, %v2641, %v2667
        %v3200 = vsel %vm3192, %v3199, %v2691
        %v3201 = vsel %vm3194, %v3200, %v2715
        %v3202 = vsel %vm2438, %v2735, %v2761
        %v3203 = vsel %vm3192, %v3202, %v2785
        %v3204 = vsel %vm3194, %v3203, %v2809
        %v3205 = vsel %vm2438, %v2829, %v2855
        %v3206 = vsel %vm3192, %v3205, %v2879
        %v3207 = vsel %vm3194, %v3206, %v2903
        %v3208 = vsel %vm2438, %v2923, %v2949
        %v3209 = vsel %vm3192, %v3208, %v2973
        %v3210 = vsel %vm3194, %v3209, %v2997
        %v3211 = vsel %vm2438, %v3017, %v3043
        %v3212 = vsel %vm3192, %v3211, %v3067
        %v3213 = vsel %vm3194, %v3212, %v3091
        %v3214 = vsel %vm2438, %v3111, %v3137
        %v3215 = vsel %vm3192, %v3214, %v3161
        %v3216 = vsel %vm3194, %v3215, %v3185
        %v3217 = vsel %vm2438, %v2458, %v2484
        %v3218 = vsel %vm3192, %v3217, %v2508
        %v3219 = vsel %vm3194, %v3218, %v2532
        %v3220 = vsel %vm2438, %v2552, %v2578
        %v3221 = vsel %vm3192, %v3220, %v2602
        %v3222 = vsel %vm3194, %v3221, %v2626
        %v3223 = vsel %vm2438, %v2646, %v2672
        %v3224 = vsel %vm3192, %v3223, %v2696
        %v3225 = vsel %vm3194, %v3224, %v2720
        %v3226 = vsel %vm2438, %v2740, %v2766
        %v3227 = vsel %vm3192, %v3226, %v2790
        %v3228 = vsel %vm3194, %v3227, %v2814
        %v3229 = vsel %vm2438, %v2834, %v2860
        %v3230 = vsel %vm3192, %v3229, %v2884
        %v3231 = vsel %vm3194, %v3230, %v2908
        %v3232 = vsel %vm2438, %v2928, %v2954
        %v3233 = vsel %vm3192, %v3232, %v2978
        %v3234 = vsel %vm3194, %v3233, %v3002
        %v3235 = vsel %vm2438, %v3022, %v3048
        %v3236 = vsel %vm3192, %v3235, %v3072
        %v3237 = vsel %vm3194, %v3236, %v3096
        %v3238 = vsel %vm2438, %v3116, %v3142
        %v3239 = vsel %vm3192, %v3238, %v3166
        %v3240 = vsel %vm3194, %v3239, %v3190
        %3242 = vset.pattern.permute.xlu0 0
        %3243 = vperm.xlu0 %3242, %v3195
        %v3244 = vpop.permute.xlu0 %3243
        %3247 = vset.pattern.permute.xlu0 0
        %3248 = vperm.xlu0 %3247, %v3198
        %v3249 = vpop.permute.xlu0 %3248
        %3252 = vset.pattern.permute.xlu0 0
        %3253 = vperm.xlu0 %3252, %v3201
        %v3254 = vpop.permute.xlu0 %3253
        %3257 = vset.pattern.permute.xlu0 0
        %3258 = vperm.xlu0 %3257, %v3204
        %v3259 = vpop.permute.xlu0 %3258
        %3262 = vset.pattern.permute.xlu0 0
        %3263 = vperm.xlu0 %3262, %v3207
        %v3264 = vpop.permute.xlu0 %3263
        %3267 = vset.pattern.permute.xlu0 0
        %3268 = vperm.xlu0 %3267, %v3210
        %v3269 = vpop.permute.xlu0 %3268
        %3272 = vset.pattern.permute.xlu0 0
        %3273 = vperm.xlu0 %3272, %v3213
        %v3274 = vpop.permute.xlu0 %3273
        %3277 = vset.pattern.permute.xlu0 0
        %3278 = vperm.xlu0 %3277, %v3216
        %v3279 = vpop.permute.xlu0 %3278
        %v3281 = vsub.f32 %v2342, %v3244
        %v3282 = vsub.f32 %v2343, %v3244
        %v3283 = vsub.f32 %v2344, %v3249
        %v3284 = vsub.f32 %v2345, %v3249
        %v3285 = vsub.f32 %v2346, %v3254
        %v3286 = vsub.f32 %v2347, %v3254
        %v3287 = vsub.f32 %v2348, %v3259
        %v3288 = vsub.f32 %v2349, %v3259
        %v3289 = vsub.f32 %v2350, %v3264
        %v3290 = vsub.f32 %v2351, %v3264
        %v3291 = vsub.f32 %v2352, %v3269
        %v3292 = vsub.f32 %v2353, %v3269
        %v3293 = vsub.f32 %v2354, %v3274
        %v3294 = vsub.f32 %v2355, %v3274
        %v3295 = vsub.f32 %v2356, %v3279
        %v3296 = vsub.f32 %v2357, %v3279
        %3298 = vset.pattern.permute.xlu0 0
        %3299 = vperm.xlu0 %3298, %v3219
        %v3300 = vpop.permute.xlu0 %3299
        %3303 = vset.pattern.permute.xlu0 0
        %3304 = vperm.xlu0 %3303, %v3222
        %v3305 = vpop.permute.xlu0 %3304
        %3308 = vset.pattern.permute.xlu0 0
        %3309 = vperm.xlu0 %3308, %v3225
        %v3310 = vpop.permute.xlu0 %3309
        %3313 = vset.pattern.permute.xlu0 0
        %3314 = vperm.xlu0 %3313, %v3228
        %v3315 = vpop.permute.xlu0 %3314
        %3318 = vset.pattern.permute.xlu0 0
        %3319 = vperm.xlu0 %3318, %v3231
        %v3320 = vpop.permute.xlu0 %3319
        %3323 = vset.pattern.permute.xlu0 0
        %3324 = vperm.xlu0 %3323, %v3234
        %v3325 = vpop.permute.xlu0 %3324
        %3328 = vset.pattern.permute.xlu0 0
        %3329 = vperm.xlu0 %3328, %v3237
        %v3330 = vpop.permute.xlu0 %3329
        %3333 = vset.pattern.permute.xlu0 0
        %3334 = vperm.xlu0 %3333, %v3240
        %v3335 = vpop.permute.xlu0 %3334
        %v3337 = vmul.f32 %v3281, %v3300
        %v3338 = vmul.f32 %v3282, %v3300
        %v3339 = vmul.f32 %v3283, %v3305
        %v3340 = vmul.f32 %v3284, %v3305
        %v3341 = vmul.f32 %v3285, %v3310
        %v3342 = vmul.f32 %v3286, %v3310
        %v3343 = vmul.f32 %v3287, %v3315
        %v3344 = vmul.f32 %v3288, %v3315
        %v3345 = vmul.f32 %v3289, %v3320
        %v3346 = vmul.f32 %v3290, %v3320
        %v3347 = vmul.f32 %v3291, %v3325
        %v3348 = vmul.f32 %v3292, %v3325
        %v3349 = vmul.f32 %v3293, %v3330
        %v3350 = vmul.f32 %v3294, %v3330
        %v3351 = vmul.f32 %v3295, %v3335
        %v3352 = vmul.f32 %v3296, %v3335
        %3354 = vset.pattern.permute.xlu0 0
        %3355 = vperm.xlu0 %3354, %v2358
        %v3356 = vpop.permute.xlu0 %3355
        %3359 = vset.pattern.permute.xlu0 0
        %3360 = vperm.xlu0 %3359, %v2359
        %v3361 = vpop.permute.xlu0 %3360
        %3364 = vset.pattern.permute.xlu0 0
        %3365 = vperm.xlu0 %3364, %v2360
        %v3366 = vpop.permute.xlu0 %3365
        %3369 = vset.pattern.permute.xlu0 0
        %3370 = vperm.xlu0 %3369, %v2361
        %v3371 = vpop.permute.xlu0 %3370
        %3374 = vset.pattern.permute.xlu0 0
        %3375 = vperm.xlu0 %3374, %v2362
        %v3376 = vpop.permute.xlu0 %3375
        %3379 = vset.pattern.permute.xlu0 0
        %3380 = vperm.xlu0 %3379, %v2363
        %v3381 = vpop.permute.xlu0 %3380
        %3384 = vset.pattern.permute.xlu0 0
        %3385 = vperm.xlu0 %3384, %v2364
        %v3386 = vpop.permute.xlu0 %3385
        %3389 = vset.pattern.permute.xlu0 0
        %3390 = vperm.xlu0 %3389, %v2365
        %v3391 = vpop.permute.xlu0 %3390
        %v3393 = vmul.f32 %v3337, %v3356
        %v3394 = vmul.f32 %v3338, %v3356
        %v3395 = vmul.f32 %v3339, %v3361
        %v3396 = vmul.f32 %v3340, %v3361
        %v3397 = vmul.f32 %v3341, %v3366
        %v3398 = vmul.f32 %v3342, %v3366
        %v3399 = vmul.f32 %v3343, %v3371
        %v3400 = vmul.f32 %v3344, %v3371
        %v3401 = vmul.f32 %v3345, %v3376
        %v3402 = vmul.f32 %v3346, %v3376
        %v3403 = vmul.f32 %v3347, %v3381
        %v3404 = vmul.f32 %v3348, %v3381
        %v3405 = vmul.f32 %v3349, %v3386
        %v3406 = vmul.f32 %v3350, %v3386
        %v3407 = vmul.f32 %v3351, %v3391
        %v3408 = vmul.f32 %v3352, %v3391
        %3410 = vset.pattern.permute.xlu0 0
        %3411 = vperm.xlu0 %3410, %v2366
        %v3412 = vpop.permute.xlu0 %3411
        %3415 = vset.pattern.permute.xlu0 0
        %3416 = vperm.xlu0 %3415, %v2367
        %v3417 = vpop.permute.xlu0 %3416
        %3420 = vset.pattern.permute.xlu0 0
        %3421 = vperm.xlu0 %3420, %v2368
        %v3422 = vpop.permute.xlu0 %3421
        %3425 = vset.pattern.permute.xlu0 0
        %3426 = vperm.xlu0 %3425, %v2369
        %v3427 = vpop.permute.xlu0 %3426
        %3430 = vset.pattern.permute.xlu0 0
        %3431 = vperm.xlu0 %3430, %v2370
        %v3432 = vpop.permute.xlu0 %3431
        %3435 = vset.pattern.permute.xlu0 0
        %3436 = vperm.xlu0 %3435, %v2371
        %v3437 = vpop.permute.xlu0 %3436
        %3440 = vset.pattern.permute.xlu0 0
        %3441 = vperm.xlu0 %3440, %v2372
        %v3442 = vpop.permute.xlu0 %3441
        %3445 = vset.pattern.permute.xlu0 0
        %3446 = vperm.xlu0 %3445, %v2373
        %v3447 = vpop.permute.xlu0 %3446
        %v3449 = vadd.f32 %v3393, %v3412
        %v3450 = vadd.f32 %v3394, %v3412
        %v3451 = vadd.f32 %v3395, %v3417
        %v3452 = vadd.f32 %v3396, %v3417
        %v3453 = vadd.f32 %v3397, %v3422
        %v3454 = vadd.f32 %v3398, %v3422
        %v3455 = vadd.f32 %v3399, %v3427
        %v3456 = vadd.f32 %v3400, %v3427
        %v3457 = vadd.f32 %v3401, %v3432
        %v3458 = vadd.f32 %v3402, %v3432
        %v3459 = vadd.f32 %v3403, %v3437
        %v3460 = vadd.f32 %v3404, %v3437
        %v3461 = vadd.f32 %v3405, %v3442
        %v3462 = vadd.f32 %v3406, %v3442
        %v3463 = vadd.f32 %v3407, %v3447
        %v3464 = vadd.f32 %v3408, %v3447
        %3481 = vrot.lane.b32.xlu0 %v3449, 17
        %v3482 = vpop.permute.xlu0 %3481
        %3483 = vrot.lane.b32.xlu0 %v3450, 17
        %v3484 = vpop.permute.xlu0 %3483
        %3485 = vrot.lane.b32.xlu0 %v3451, 17
        %v3486 = vpop.permute.xlu0 %3485
        %3487 = vrot.lane.b32.xlu0 %v3452, 17
        %v3488 = vpop.permute.xlu0 %3487
        %3489 = vrot.lane.b32.xlu0 %v3453, 17
        %v3490 = vpop.permute.xlu0 %3489
        %3491 = vrot.lane.b32.xlu0 %v3454, 17
        %v3492 = vpop.permute.xlu0 %3491
        %3493 = vrot.lane.b32.xlu0 %v3455, 17
        %v3494 = vpop.permute.xlu0 %3493
        %3495 = vrot.lane.b32.xlu0 %v3456, 17
        %v3496 = vpop.permute.xlu0 %3495
        %3497 = vrot.lane.b32.xlu0 %v3457, 17
        %v3498 = vpop.permute.xlu0 %3497
        %3499 = vrot.lane.b32.xlu0 %v3458, 17
        %v3500 = vpop.permute.xlu0 %3499
        %3501 = vrot.lane.b32.xlu0 %v3459, 17
        %v3502 = vpop.permute.xlu0 %3501
        %3503 = vrot.lane.b32.xlu0 %v3460, 17
        %v3504 = vpop.permute.xlu0 %3503
        %3505 = vrot.lane.b32.xlu0 %v3461, 17
        %v3506 = vpop.permute.xlu0 %3505
        %3507 = vrot.lane.b32.xlu0 %v3462, 17
        %v3508 = vpop.permute.xlu0 %3507
        %3509 = vrot.lane.b32.xlu0 %v3463, 17
        %v3510 = vpop.permute.xlu0 %3509
        %3511 = vrot.lane.b32.xlu0 %v3464, 17
        %v3512 = vpop.permute.xlu0 %3511
        %v3513 = vsel %vm714, %v3482, %v3484
        %v3514 = vsel %vm714, %v3486, %v3488
        %v3515 = vsel %vm714, %v3490, %v3492
        %v3516 = vsel %vm714, %v3494, %v3496
        %v3517 = vsel %vm714, %v3498, %v3500
        %v3518 = vsel %vm714, %v3502, %v3504
        %v3519 = vsel %vm714, %v3506, %v3508
        %v3520 = vsel %vm714, %v3510, %v3512
        %v3537 = vsel %vm714, 0.0, %v3482
        %v3538 = vsel %vm714, 0.0, %v3486
        %v3539 = vsel %vm714, 0.0, %v3490
        %v3540 = vsel %vm714, 0.0, %v3494
        %v3541 = vsel %vm714, 0.0, %v3498
        %v3542 = vsel %vm714, 0.0, %v3502
        %v3543 = vsel %vm714, 0.0, %v3506
        %v3544 = vsel %vm714, 0.0, %v3510
        %v3545 = vsel %vm762, %v3537, 0.0
        %v3546 = vsel %vm763, %v3513, 0.0
        %v3547 = vsel %vm762, %v3538, 0.0
        %v3548 = vsel %vm763, %v3514, 0.0
        %v3549 = vsel %vm762, %v3539, 0.0
        %v3550 = vsel %vm763, %v3515, 0.0
        %v3551 = vsel %vm762, %v3540, 0.0
        %v3552 = vsel %vm763, %v3516, 0.0
        %v3553 = vsel %vm762, %v3541, 0.0
        %v3554 = vsel %vm763, %v3517, 0.0
        %v3555 = vsel %vm762, %v3542, 0.0
        %v3556 = vsel %vm763, %v3518, 0.0
        %v3557 = vsel %vm762, %v3543, 0.0
        %v3558 = vsel %vm763, %v3519, 0.0
        %v3559 = vsel %vm762, %v3544, 0.0
        %v3560 = vsel %vm763, %v3520, 0.0
        %v3561 = vpack.c.bf16 %v3547, %v3545
        %v3562 = vpack.c.bf16 %v3548, %v3546
        %v3563 = vpack.c.bf16 %v3551, %v3549
        %v3564 = vpack.c.bf16 %v3552, %v3550
        %v3565 = vpack.c.bf16 %v3555, %v3553
        %v3566 = vpack.c.bf16 %v3556, %v3554
        %v3567 = vpack.c.bf16 %v3559, %v3557
        %v3568 = vpack.c.bf16 %v3560, %v3558
        %v3569 = vld [vmem:[%s4] sm:$0xf]
        %v3570 = vld [vmem:[%s4 + $0x4] sm:$0xf]
        %v3571 = vld [vmem:[%s4 + $0x8] sm:$0xf]
        %v3572 = vld [vmem:[%s4 + $0xc] sm:$0xf]
        %v3573 = vld [vmem:[%s4 + $0x10] sm:$0xf]
        %v3574 = vld [vmem:[%s4 + $0x14] sm:$0xf]
        %v3575 = vld [vmem:[%s4 + $0x18] sm:$0xf]
        %v3576 = vld [vmem:[%s4 + $0x1c] sm:$0xf]
        %3577 = vrot.lane.b32.xlu0 %v3449, 16
        %v3578 = vpop.permute.xlu0 %3577
        %3579 = vrot.lane.b32.xlu0 %v3450, 16
        %v3580 = vpop.permute.xlu0 %3579
        %3581 = vrot.lane.b32.xlu0 %v3451, 16
        %v3582 = vpop.permute.xlu0 %3581
        %3583 = vrot.lane.b32.xlu0 %v3452, 16
        %v3584 = vpop.permute.xlu0 %3583
        %3585 = vrot.lane.b32.xlu0 %v3453, 16
        %v3586 = vpop.permute.xlu0 %3585
        %3587 = vrot.lane.b32.xlu0 %v3454, 16
        %v3588 = vpop.permute.xlu0 %3587
        %3589 = vrot.lane.b32.xlu0 %v3455, 16
        %v3590 = vpop.permute.xlu0 %3589
        %3591 = vrot.lane.b32.xlu0 %v3456, 16
        %v3592 = vpop.permute.xlu0 %3591
        %3593 = vrot.lane.b32.xlu0 %v3457, 16
        %v3594 = vpop.permute.xlu0 %3593
        %3595 = vrot.lane.b32.xlu0 %v3458, 16
        %v3596 = vpop.permute.xlu0 %3595
        %3597 = vrot.lane.b32.xlu0 %v3459, 16
        %v3598 = vpop.permute.xlu0 %3597
        %3599 = vrot.lane.b32.xlu0 %v3460, 16
        %v3600 = vpop.permute.xlu0 %3599
        %3601 = vrot.lane.b32.xlu0 %v3461, 16
        %v3602 = vpop.permute.xlu0 %3601
        %3603 = vrot.lane.b32.xlu0 %v3462, 16
        %v3604 = vpop.permute.xlu0 %3603
        %3605 = vrot.lane.b32.xlu0 %v3463, 16
        %v3606 = vpop.permute.xlu0 %3605
        %3607 = vrot.lane.b32.xlu0 %v3464, 16
        %v3608 = vpop.permute.xlu0 %3607
        %v3609 = vsel %vm800, %v3578, %v3580
        %v3610 = vsel %vm800, %v3582, %v3584
        %v3611 = vsel %vm800, %v3586, %v3588
        %v3612 = vsel %vm800, %v3590, %v3592
        %v3613 = vsel %vm800, %v3594, %v3596
        %v3614 = vsel %vm800, %v3598, %v3600
        %v3615 = vsel %vm800, %v3602, %v3604
        %v3616 = vsel %vm800, %v3606, %v3608
        %v3633 = vsel %vm800, 0.0, %v3578
        %v3634 = vsel %vm800, 0.0, %v3582
        %v3635 = vsel %vm800, 0.0, %v3586
        %v3636 = vsel %vm800, 0.0, %v3590
        %v3637 = vsel %vm800, 0.0, %v3594
        %v3638 = vsel %vm800, 0.0, %v3598
        %v3639 = vsel %vm800, 0.0, %v3602
        %v3640 = vsel %vm800, 0.0, %v3606
        %v3641 = vpack.c.bf16 %v3634, %v3633
        %v3642 = vpack.c.bf16 %v3610, %v3609
        %v3643 = vpack.c.bf16 %v3636, %v3635
        %v3644 = vpack.c.bf16 %v3612, %v3611
        %v3645 = vpack.c.bf16 %v3638, %v3637
        %v3646 = vpack.c.bf16 %v3614, %v3613
        %v3647 = vpack.c.bf16 %v3640, %v3639
        %v3648 = vpack.c.bf16 %v3616, %v3615
        %s3649 = scalar_lea.vmem %s4, 32
        %v3650 = vld [vmem:[%s3649] sm:$0xf]
        %v3651 = vld [vmem:[%s3649 + $0x4] sm:$0xf]
        %v3652 = vld [vmem:[%s3649 + $0x8] sm:$0xf]
        %v3653 = vld [vmem:[%s3649 + $0xc] sm:$0xf]
        %v3654 = vld [vmem:[%s3649 + $0x10] sm:$0xf]
        %v3655 = vld [vmem:[%s3649 + $0x14] sm:$0xf]
        %v3656 = vld [vmem:[%s3649 + $0x18] sm:$0xf]
        %v3657 = vld [vmem:[%s3649 + $0x1c] sm:$0xf]
        %v3666 = vunpack.c.l.b16 %v3650
        %v3667 = vunpack.c.l.b16 %v3651
        %v3668 = vunpack.c.l.b16 %v3652
        %v3669 = vunpack.c.l.b16 %v3653
        %v3670 = vunpack.c.l.b16 %v3654
        %v3671 = vunpack.c.l.b16 %v3655
        %v3672 = vunpack.c.l.b16 %v3656
        %v3673 = vunpack.c.l.b16 %v3657
        %v3674 = vpack.c.b16 %v3667, %v3666
        %v3675 = vpack.c.b16 %v3669, %v3668
        %v3676 = vpack.c.b16 %v3671, %v3670
        %v3677 = vpack.c.b16 %v3673, %v3672
        %vm3678 = vcmask 523264
        %v3680 = vsel %vm3678, %v3674, 0
        %v3683 = vsel %vm3678, %v3675, 0
        %v3686 = vsel %vm3678, %v3676, 0
        %v3689 = vsel %vm3678, %v3677, 0
        %3691 = vmatprep.subr.bf16.mxu0 0
        %3692 = vmatpush1.bf16.msra.mxu0 0
        %3693 = vmatprep.subr.bf16.mxu0 0
        %3694 = vmatpush1.bf16.msra.mxu0 0
        %3695 = vmatprep.subr.bf16.mxu0 0
        %3696 = vmatpush1.bf16.msra.mxu0 0
        %3697 = vmatprep.subr.bf16.mxu0 0
        %3698 = vmatpush1.bf16.msra.mxu0 0
        %3699 = vmatprep.subr.bf16.mxu0 %v3648
        %3700 = vmatpush1.bf16.msra.mxu0 %v3647
        %3701 = vmatprep.subr.bf16.mxu0 %v3646
        %3702 = vmatpush1.bf16.msra.mxu0 %v3645
        %3703 = vmatprep.subr.bf16.mxu0 %v3644
        %3704 = vmatpush1.bf16.msra.mxu0 %v3643
        %3705 = vmatprep.subr.bf16.mxu0 %v3642
        %3706 = vmatpush1.bf16.msra.mxu0 %v3641
        %3707 = vmatprep.subr.bf16.mxu0 0
        %3708 = vmatpush2.bf16.msra.mxu0 0
        %3709 = vmatprep.subr.bf16.mxu0 0
        %3710 = vmatpush2.bf16.msra.mxu0 0
        %3711 = vmatprep.subr.bf16.mxu0 0
        %3712 = vmatpush2.bf16.msra.mxu0 0
        %3713 = vmatprep.subr.bf16.mxu0 0
        %3714 = vmatpush2.bf16.msra.mxu0 0
        %3715 = vmatprep.subr.bf16.mxu0 0
        %3716 = vmatpush2.bf16.msra.mxu0 0
        %3717 = vmatprep.subr.bf16.mxu0 0
        %3718 = vmatpush2.bf16.msra.mxu0 0
        %3719 = vmatprep.subr.bf16.mxu0 0
        %3720 = vmatpush2.bf16.msra.mxu0 0
        %3721 = vmatprep.subr.bf16.mxu0 0
        %3722 = vmatpush2.bf16.msra.mxu0 0
        %3723 = vmatprep.mubr.bf16.mxu0 0
        %3724 = vmatmul.mubr.bf16.gmra.mxu0 %v3680
        %v3725 = vpop.f32.mrf.mxu0
        %v3726 = vadd.f32 0.0, %v3725
        %v3727 = vpop.f32.mrf.mxu0
        %v3728 = vadd.f32 0.0, %v3727
        %v3729 = vpop.f32.mrf.mxu0
        %v3730 = vadd.f32 0.0, %v3729
        %v3731 = vpop.f32.mrf.mxu0
        %v3732 = vadd.f32 0.0, %v3731
        %3733 = vmatprep.mubr.bf16.mxu0 0
        %3734 = vmatmul.mubr.bf16.gmra.mxu0 %v3683
        %v3735 = vpop.f32.mrf.mxu0
        %v3736 = vadd.f32 0.0, %v3735
        %v3737 = vpop.f32.mrf.mxu0
        %v3738 = vadd.f32 0.0, %v3737
        %v3739 = vpop.f32.mrf.mxu0
        %v3740 = vadd.f32 0.0, %v3739
        %v3741 = vpop.f32.mrf.mxu0
        %v3742 = vadd.f32 0.0, %v3741
        %3743 = vmatprep.mubr.bf16.mxu0 0
        %3744 = vmatmul.mubr.bf16.gmra.mxu0 %v3686
        %v3745 = vpop.f32.mrf.mxu0
        %v3746 = vadd.f32 0.0, %v3745
        %v3747 = vpop.f32.mrf.mxu0
        %v3748 = vadd.f32 0.0, %v3747
        %v3749 = vpop.f32.mrf.mxu0
        %v3750 = vadd.f32 0.0, %v3749
        %v3751 = vpop.f32.mrf.mxu0
        %v3752 = vadd.f32 0.0, %v3751
        %3753 = vmatprep.mubr.bf16.mxu0 0
        %3754 = vmatmul.mubr.bf16.gmra.mxu0 %v3689
        %v3755 = vpop.f32.mrf.mxu0
        %v3756 = vadd.f32 0.0, %v3755
        %v3757 = vpop.f32.mrf.mxu0
        %v3758 = vadd.f32 0.0, %v3757
        %v3759 = vpop.f32.mrf.mxu0
        %v3760 = vadd.f32 0.0, %v3759
        %v3761 = vpop.f32.mrf.mxu0
        %v3762 = vadd.f32 0.0, %v3761
        %3763 = vdwg.mxu0
        %v3772 = vunpack.c.l.b16 %v3569
        %v3773 = vunpack.c.l.b16 %v3570
        %v3774 = vunpack.c.l.b16 %v3571
        %v3775 = vunpack.c.l.b16 %v3572
        %v3776 = vunpack.c.l.b16 %v3573
        %v3777 = vunpack.c.l.b16 %v3574
        %v3778 = vunpack.c.l.b16 %v3575
        %v3779 = vunpack.c.l.b16 %v3576
        %v3780 = vpack.c.b16 %v3773, %v3772
        %v3781 = vpack.c.b16 %v3775, %v3774
        %v3782 = vpack.c.b16 %v3777, %v3776
        %v3783 = vpack.c.b16 %v3779, %v3778
        %v3785 = vsel %vm3678, %v3780, 0
        %v3788 = vsel %vm3678, %v3781, 0
        %v3791 = vsel %vm3678, %v3782, 0
        %v3794 = vsel %vm3678, %v3783, 0
        %3796 = vmatprep.subr.bf16.mxu0 0
        %3797 = vmatpush1.bf16.msra.mxu0 0
        %3798 = vmatprep.subr.bf16.mxu0 0
        %3799 = vmatpush1.bf16.msra.mxu0 0
        %3800 = vmatprep.subr.bf16.mxu0 0
        %3801 = vmatpush1.bf16.msra.mxu0 0
        %3802 = vmatprep.subr.bf16.mxu0 0
        %3803 = vmatpush1.bf16.msra.mxu0 0
        %3804 = vmatprep.subr.bf16.mxu0 %v3568
        %3805 = vmatpush1.bf16.msra.mxu0 %v3567
        %3806 = vmatprep.subr.bf16.mxu0 %v3566
        %3807 = vmatpush1.bf16.msra.mxu0 %v3565
        %3808 = vmatprep.subr.bf16.mxu0 %v3564
        %3809 = vmatpush1.bf16.msra.mxu0 %v3563
        %3810 = vmatprep.subr.bf16.mxu0 %v3562
        %3811 = vmatpush1.bf16.msra.mxu0 %v3561
        %3812 = vmatprep.subr.bf16.mxu0 0
        %3813 = vmatpush2.bf16.msra.mxu0 0
        %3814 = vmatprep.subr.bf16.mxu0 0
        %3815 = vmatpush2.bf16.msra.mxu0 0
        %3816 = vmatprep.subr.bf16.mxu0 0
        %3817 = vmatpush2.bf16.msra.mxu0 0
        %3818 = vmatprep.subr.bf16.mxu0 0
        %3819 = vmatpush2.bf16.msra.mxu0 0
        %3820 = vmatprep.subr.bf16.mxu0 0
        %3821 = vmatpush2.bf16.msra.mxu0 0
        %3822 = vmatprep.subr.bf16.mxu0 0
        %3823 = vmatpush2.bf16.msra.mxu0 0
        %3824 = vmatprep.subr.bf16.mxu0 0
        %3825 = vmatpush2.bf16.msra.mxu0 0
        %3826 = vmatprep.subr.bf16.mxu0 0
        %3827 = vmatpush2.bf16.msra.mxu0 0
        %3828 = vmatprep.mubr.bf16.mxu0 0
        %3829 = vmatmul.mubr.bf16.gmra.mxu0 %v3785
        %v3830 = vpop.f32.mrf.mxu0
        %v3831 = vadd.f32 %v3726, %v3830
        %v3832 = vpop.f32.mrf.mxu0
        %v3833 = vadd.f32 %v3728, %v3832
        %v3834 = vpop.f32.mrf.mxu0
        %v3835 = vadd.f32 %v3730, %v3834
        %v3836 = vpop.f32.mrf.mxu0
        %v3837 = vadd.f32 %v3732, %v3836
        %3838 = vmatprep.mubr.bf16.mxu0 0
        %3839 = vmatmul.mubr.bf16.gmra.mxu0 %v3788
        %v3840 = vpop.f32.mrf.mxu0
        %v3841 = vadd.f32 %v3736, %v3840
        %v3842 = vpop.f32.mrf.mxu0
        %v3843 = vadd.f32 %v3738, %v3842
        %v3844 = vpop.f32.mrf.mxu0
        %v3845 = vadd.f32 %v3740, %v3844
        %v3846 = vpop.f32.mrf.mxu0
        %v3847 = vadd.f32 %v3742, %v3846
        %3848 = vmatprep.mubr.bf16.mxu0 0
        %3849 = vmatmul.mubr.bf16.gmra.mxu0 %v3791
        %v3850 = vpop.f32.mrf.mxu0
        %v3851 = vadd.f32 %v3746, %v3850
        %v3852 = vpop.f32.mrf.mxu0
        %v3853 = vadd.f32 %v3748, %v3852
        %v3854 = vpop.f32.mrf.mxu0
        %v3855 = vadd.f32 %v3750, %v3854
        %v3856 = vpop.f32.mrf.mxu0
        %v3857 = vadd.f32 %v3752, %v3856
        %3858 = vmatprep.mubr.bf16.mxu0 0
        %3859 = vmatmul.mubr.bf16.gmra.mxu0 %v3794
        %v3860 = vpop.f32.mrf.mxu0
        %v3861 = vadd.f32 %v3756, %v3860
        %v3862 = vpop.f32.mrf.mxu0
        %v3863 = vadd.f32 %v3758, %v3862
        %v3864 = vpop.f32.mrf.mxu0
        %v3865 = vadd.f32 %v3760, %v3864
        %v3866 = vpop.f32.mrf.mxu0
        %v3867 = vadd.f32 %v3762, %v3866
        %3868 = vdwg.mxu0
        %3869 = vrot.lane.b32.xlu0 %v3449, 15
        %v3870 = vpop.permute.xlu0 %3869
        %3871 = vrot.lane.b32.xlu0 %v3450, 15
        %v3872 = vpop.permute.xlu0 %3871
        %3873 = vrot.lane.b32.xlu0 %v3451, 15
        %v3874 = vpop.permute.xlu0 %3873
        %3875 = vrot.lane.b32.xlu0 %v3452, 15
        %v3876 = vpop.permute.xlu0 %3875
        %3877 = vrot.lane.b32.xlu0 %v3453, 15
        %v3878 = vpop.permute.xlu0 %3877
        %3879 = vrot.lane.b32.xlu0 %v3454, 15
        %v3880 = vpop.permute.xlu0 %3879
        %3881 = vrot.lane.b32.xlu0 %v3455, 15
        %v3882 = vpop.permute.xlu0 %3881
        %3883 = vrot.lane.b32.xlu0 %v3456, 15
        %v3884 = vpop.permute.xlu0 %3883
        %3885 = vrot.lane.b32.xlu0 %v3457, 15
        %v3886 = vpop.permute.xlu0 %3885
        %3887 = vrot.lane.b32.xlu0 %v3458, 15
        %v3888 = vpop.permute.xlu0 %3887
        %3889 = vrot.lane.b32.xlu0 %v3459, 15
        %v3890 = vpop.permute.xlu0 %3889
        %3891 = vrot.lane.b32.xlu0 %v3460, 15
        %v3892 = vpop.permute.xlu0 %3891
        %3893 = vrot.lane.b32.xlu0 %v3461, 15
        %v3894 = vpop.permute.xlu0 %3893
        %3895 = vrot.lane.b32.xlu0 %v3462, 15
        %v3896 = vpop.permute.xlu0 %3895
        %3897 = vrot.lane.b32.xlu0 %v3463, 15
        %v3898 = vpop.permute.xlu0 %3897
        %3899 = vrot.lane.b32.xlu0 %v3464, 15
        %v3900 = vpop.permute.xlu0 %3899
        %v3901 = vsel %vm1056, %v3870, %v3872
        %v3902 = vsel %vm1056, %v3874, %v3876
        %v3903 = vsel %vm1056, %v3878, %v3880
        %v3904 = vsel %vm1056, %v3882, %v3884
        %v3905 = vsel %vm1056, %v3886, %v3888
        %v3906 = vsel %vm1056, %v3890, %v3892
        %v3907 = vsel %vm1056, %v3894, %v3896
        %v3908 = vsel %vm1056, %v3898, %v3900
        %v3925 = vsel %vm1056, 0.0, %v3870
        %v3926 = vsel %vm1056, 0.0, %v3874
        %v3927 = vsel %vm1056, 0.0, %v3878
        %v3928 = vsel %vm1056, 0.0, %v3882
        %v3929 = vsel %vm1056, 0.0, %v3886
        %v3930 = vsel %vm1056, 0.0, %v3890
        %v3931 = vsel %vm1056, 0.0, %v3894
        %v3932 = vsel %vm1056, 0.0, %v3898
        %v3933 = vsel %vm1077, %v3925, 0.0
        %v3934 = vsel %vm1078, %v3901, 0.0
        %v3935 = vsel %vm1077, %v3926, 0.0
        %v3936 = vsel %vm1078, %v3902, 0.0
        %v3937 = vsel %vm1077, %v3927, 0.0
        %v3938 = vsel %vm1078, %v3903, 0.0
        %v3939 = vsel %vm1077, %v3928, 0.0
        %v3940 = vsel %vm1078, %v3904, 0.0
        %v3941 = vsel %vm1077, %v3929, 0.0
        %v3942 = vsel %vm1078, %v3905, 0.0
        %v3943 = vsel %vm1077, %v3930, 0.0
        %v3944 = vsel %vm1078, %v3906, 0.0
        %v3945 = vsel %vm1077, %v3931, 0.0
        %v3946 = vsel %vm1078, %v3907, 0.0
        %v3947 = vsel %vm1077, %v3932, 0.0
        %v3948 = vsel %vm1078, %v3908, 0.0
        %v3949 = vpack.c.bf16 %v3935, %v3933
        %v3950 = vpack.c.bf16 %v3936, %v3934
        %v3951 = vpack.c.bf16 %v3939, %v3937
        %v3952 = vpack.c.bf16 %v3940, %v3938
        %v3953 = vpack.c.bf16 %v3943, %v3941
        %v3954 = vpack.c.bf16 %v3944, %v3942
        %v3955 = vpack.c.bf16 %v3947, %v3945
        %v3956 = vpack.c.bf16 %v3948, %v3946
        %s3957 = scalar_lea.vmem %s4, 64
        %v3958 = vld [vmem:[%s3957] sm:$0xf]
        %v3959 = vld [vmem:[%s3957 + $0x4] sm:$0xf]
        %v3960 = vld [vmem:[%s3957 + $0x8] sm:$0xf]
        %v3961 = vld [vmem:[%s3957 + $0xc] sm:$0xf]
        %v3962 = vld [vmem:[%s3957 + $0x10] sm:$0xf]
        %v3963 = vld [vmem:[%s3957 + $0x14] sm:$0xf]
        %v3964 = vld [vmem:[%s3957 + $0x18] sm:$0xf]
        %v3965 = vld [vmem:[%s3957 + $0x1c] sm:$0xf]
        %v3974 = vunpack.c.l.b16 %v3958
        %v3975 = vunpack.c.l.b16 %v3959
        %v3976 = vunpack.c.l.b16 %v3960
        %v3977 = vunpack.c.l.b16 %v3961
        %v3978 = vunpack.c.l.b16 %v3962
        %v3979 = vunpack.c.l.b16 %v3963
        %v3980 = vunpack.c.l.b16 %v3964
        %v3981 = vunpack.c.l.b16 %v3965
        %v3982 = vpack.c.b16 %v3975, %v3974
        %v3983 = vpack.c.b16 %v3977, %v3976
        %v3984 = vpack.c.b16 %v3979, %v3978
        %v3985 = vpack.c.b16 %v3981, %v3980
        %v3987 = vsel %vm3678, %v3982, 0
        %v3990 = vsel %vm3678, %v3983, 0
        %v3993 = vsel %vm3678, %v3984, 0
        %v3996 = vsel %vm3678, %v3985, 0
        %3998 = vmatprep.subr.bf16.mxu0 0
        %3999 = vmatpush1.bf16.msra.mxu0 0
        %4000 = vmatprep.subr.bf16.mxu0 0
        %4001 = vmatpush1.bf16.msra.mxu0 0
        %4002 = vmatprep.subr.bf16.mxu0 0
        %4003 = vmatpush1.bf16.msra.mxu0 0
        %4004 = vmatprep.subr.bf16.mxu0 0
        %4005 = vmatpush1.bf16.msra.mxu0 0
        %4006 = vmatprep.subr.bf16.mxu0 %v3956
        %4007 = vmatpush1.bf16.msra.mxu0 %v3955
        %4008 = vmatprep.subr.bf16.mxu0 %v3954
        %4009 = vmatpush1.bf16.msra.mxu0 %v3953
        %4010 = vmatprep.subr.bf16.mxu0 %v3952
        %4011 = vmatpush1.bf16.msra.mxu0 %v3951
        %4012 = vmatprep.subr.bf16.mxu0 %v3950
        %4013 = vmatpush1.bf16.msra.mxu0 %v3949
        %4014 = vmatprep.subr.bf16.mxu0 0
        %4015 = vmatpush2.bf16.msra.mxu0 0
        %4016 = vmatprep.subr.bf16.mxu0 0
        %4017 = vmatpush2.bf16.msra.mxu0 0
        %4018 = vmatprep.subr.bf16.mxu0 0
        %4019 = vmatpush2.bf16.msra.mxu0 0
        %4020 = vmatprep.subr.bf16.mxu0 0
        %4021 = vmatpush2.bf16.msra.mxu0 0
        %4022 = vmatprep.subr.bf16.mxu0 0
        %4023 = vmatpush2.bf16.msra.mxu0 0
        %4024 = vmatprep.subr.bf16.mxu0 0
        %4025 = vmatpush2.bf16.msra.mxu0 0
        %4026 = vmatprep.subr.bf16.mxu0 0
        %4027 = vmatpush2.bf16.msra.mxu0 0
        %4028 = vmatprep.subr.bf16.mxu0 0
        %4029 = vmatpush2.bf16.msra.mxu0 0
        %4030 = vmatprep.mubr.bf16.mxu0 0
        %4031 = vmatmul.mubr.bf16.gmra.mxu0 %v3987
        %v4032 = vpop.f32.mrf.mxu0
        %v4033 = vadd.f32 0.0, %v4032
        %v4034 = vpop.f32.mrf.mxu0
        %v4035 = vadd.f32 0.0, %v4034
        %v4036 = vpop.f32.mrf.mxu0
        %v4037 = vadd.f32 0.0, %v4036
        %v4038 = vpop.f32.mrf.mxu0
        %v4039 = vadd.f32 0.0, %v4038
        %4040 = vmatprep.mubr.bf16.mxu0 0
        %4041 = vmatmul.mubr.bf16.gmra.mxu0 %v3990
        %v4042 = vpop.f32.mrf.mxu0
        %v4043 = vadd.f32 0.0, %v4042
        %v4044 = vpop.f32.mrf.mxu0
        %v4045 = vadd.f32 0.0, %v4044
        %v4046 = vpop.f32.mrf.mxu0
        %v4047 = vadd.f32 0.0, %v4046
        %v4048 = vpop.f32.mrf.mxu0
        %v4049 = vadd.f32 0.0, %v4048
        %4050 = vmatprep.mubr.bf16.mxu0 0
        %4051 = vmatmul.mubr.bf16.gmra.mxu0 %v3993
        %v4052 = vpop.f32.mrf.mxu0
        %v4053 = vadd.f32 0.0, %v4052
        %v4054 = vpop.f32.mrf.mxu0
        %v4055 = vadd.f32 0.0, %v4054
        %v4056 = vpop.f32.mrf.mxu0
        %v4057 = vadd.f32 0.0, %v4056
        %v4058 = vpop.f32.mrf.mxu0
        %v4059 = vadd.f32 0.0, %v4058
        %4060 = vmatprep.mubr.bf16.mxu0 0
        %4061 = vmatmul.mubr.bf16.gmra.mxu0 %v3996
        %v4062 = vpop.f32.mrf.mxu0
        %v4063 = vadd.f32 0.0, %v4062
        %v4064 = vpop.f32.mrf.mxu0
        %v4065 = vadd.f32 0.0, %v4064
        %v4066 = vpop.f32.mrf.mxu0
        %v4067 = vadd.f32 0.0, %v4066
        %v4068 = vpop.f32.mrf.mxu0
        %v4069 = vadd.f32 0.0, %v4068
        %4070 = vdwg.mxu0
        %v4071 = vadd.f32 %v3831, %v4033
        %v4072 = vadd.f32 %v3833, %v4035
        %v4073 = vadd.f32 %v3835, %v4037
        %v4074 = vadd.f32 %v3837, %v4039
        %v4075 = vadd.f32 %v3841, %v4043
        %v4076 = vadd.f32 %v3843, %v4045
        %v4077 = vadd.f32 %v3845, %v4047
        %v4078 = vadd.f32 %v3847, %v4049
        %v4079 = vadd.f32 %v3851, %v4053
        %v4080 = vadd.f32 %v3853, %v4055
        %v4081 = vadd.f32 %v3855, %v4057
        %v4082 = vadd.f32 %v3857, %v4059
        %v4083 = vadd.f32 %v3861, %v4063
        %v4084 = vadd.f32 %v3863, %v4065
        %v4085 = vadd.f32 %v3865, %v4067
        %v4086 = vadd.f32 %v3867, %v4069
        %4087 = vrot.lane.b32.xlu0 %v3449, 1
        %v4088 = vpop.permute.xlu0 %4087
        %4089 = vrot.lane.b32.xlu0 %v3450, 1
        %v4090 = vpop.permute.xlu0 %4089
        %4091 = vrot.lane.b32.xlu0 %v3451, 1
        %v4092 = vpop.permute.xlu0 %4091
        %4093 = vrot.lane.b32.xlu0 %v3452, 1
        %v4094 = vpop.permute.xlu0 %4093
        %4095 = vrot.lane.b32.xlu0 %v3453, 1
        %v4096 = vpop.permute.xlu0 %4095
        %4097 = vrot.lane.b32.xlu0 %v3454, 1
        %v4098 = vpop.permute.xlu0 %4097
        %4099 = vrot.lane.b32.xlu0 %v3455, 1
        %v4100 = vpop.permute.xlu0 %4099
        %4101 = vrot.lane.b32.xlu0 %v3456, 1
        %v4102 = vpop.permute.xlu0 %4101
        %4103 = vrot.lane.b32.xlu0 %v3457, 1
        %v4104 = vpop.permute.xlu0 %4103
        %4105 = vrot.lane.b32.xlu0 %v3458, 1
        %v4106 = vpop.permute.xlu0 %4105
        %4107 = vrot.lane.b32.xlu0 %v3459, 1
        %v4108 = vpop.permute.xlu0 %4107
        %4109 = vrot.lane.b32.xlu0 %v3460, 1
        %v4110 = vpop.permute.xlu0 %4109
        %4111 = vrot.lane.b32.xlu0 %v3461, 1
        %v4112 = vpop.permute.xlu0 %4111
        %4113 = vrot.lane.b32.xlu0 %v3462, 1
        %v4114 = vpop.permute.xlu0 %4113
        %4115 = vrot.lane.b32.xlu0 %v3463, 1
        %v4116 = vpop.permute.xlu0 %4115
        %4117 = vrot.lane.b32.xlu0 %v3464, 1
        %v4118 = vpop.permute.xlu0 %4117
        %v4119 = vsel %vm1237, %v4088, %v4090
        %v4120 = vsel %vm1237, %v4092, %v4094
        %v4121 = vsel %vm1237, %v4096, %v4098
        %v4122 = vsel %vm1237, %v4100, %v4102
        %v4123 = vsel %vm1237, %v4104, %v4106
        %v4124 = vsel %vm1237, %v4108, %v4110
        %v4125 = vsel %vm1237, %v4112, %v4114
        %v4126 = vsel %vm1237, %v4116, %v4118
        %v4143 = vsel %vm1237, 0.0, %v4088
        %v4144 = vsel %vm1237, 0.0, %v4092
        %v4145 = vsel %vm1237, 0.0, %v4096
        %v4146 = vsel %vm1237, 0.0, %v4100
        %v4147 = vsel %vm1237, 0.0, %v4104
        %v4148 = vsel %vm1237, 0.0, %v4108
        %v4149 = vsel %vm1237, 0.0, %v4112
        %v4150 = vsel %vm1237, 0.0, %v4116
        %v4151 = vsel %vm762, %v4143, 0.0
        %v4152 = vsel %vm763, %v4119, 0.0
        %v4153 = vsel %vm762, %v4144, 0.0
        %v4154 = vsel %vm763, %v4120, 0.0
        %v4155 = vsel %vm762, %v4145, 0.0
        %v4156 = vsel %vm763, %v4121, 0.0
        %v4157 = vsel %vm762, %v4146, 0.0
        %v4158 = vsel %vm763, %v4122, 0.0
        %v4159 = vsel %vm762, %v4147, 0.0
        %v4160 = vsel %vm763, %v4123, 0.0
        %v4161 = vsel %vm762, %v4148, 0.0
        %v4162 = vsel %vm763, %v4124, 0.0
        %v4163 = vsel %vm762, %v4149, 0.0
        %v4164 = vsel %vm763, %v4125, 0.0
        %v4165 = vsel %vm762, %v4150, 0.0
        %v4166 = vsel %vm763, %v4126, 0.0
        %v4167 = vpack.c.bf16 %v4153, %v4151
        %v4168 = vpack.c.bf16 %v4154, %v4152
        %v4169 = vpack.c.bf16 %v4157, %v4155
        %v4170 = vpack.c.bf16 %v4158, %v4156
        %v4171 = vpack.c.bf16 %v4161, %v4159
        %v4172 = vpack.c.bf16 %v4162, %v4160
        %v4173 = vpack.c.bf16 %v4165, %v4163
        %v4174 = vpack.c.bf16 %v4166, %v4164
        %s4175 = scalar_lea.vmem %s4, 96
        %v4176 = vld [vmem:[%s4175] sm:$0xf]
        %v4177 = vld [vmem:[%s4175 + $0x4] sm:$0xf]
        %v4178 = vld [vmem:[%s4175 + $0x8] sm:$0xf]
        %v4179 = vld [vmem:[%s4175 + $0xc] sm:$0xf]
        %v4180 = vld [vmem:[%s4175 + $0x10] sm:$0xf]
        %v4181 = vld [vmem:[%s4175 + $0x14] sm:$0xf]
        %v4182 = vld [vmem:[%s4175 + $0x18] sm:$0xf]
        %v4183 = vld [vmem:[%s4175 + $0x1c] sm:$0xf]
        %v4192 = vunpack.c.l.b16 %v4176
        %v4193 = vunpack.c.l.b16 %v4177
        %v4194 = vunpack.c.l.b16 %v4178
        %v4195 = vunpack.c.l.b16 %v4179
        %v4196 = vunpack.c.l.b16 %v4180
        %v4197 = vunpack.c.l.b16 %v4181
        %v4198 = vunpack.c.l.b16 %v4182
        %v4199 = vunpack.c.l.b16 %v4183
        %v4200 = vpack.c.b16 %v4193, %v4192
        %v4201 = vpack.c.b16 %v4195, %v4194
        %v4202 = vpack.c.b16 %v4197, %v4196
        %v4203 = vpack.c.b16 %v4199, %v4198
        %v4205 = vsel %vm3678, %v4200, 0
        %v4208 = vsel %vm3678, %v4201, 0
        %v4211 = vsel %vm3678, %v4202, 0
        %v4214 = vsel %vm3678, %v4203, 0
        %4216 = vmatprep.subr.bf16.mxu0 0
        %4217 = vmatpush1.bf16.msra.mxu0 0
        %4218 = vmatprep.subr.bf16.mxu0 0
        %4219 = vmatpush1.bf16.msra.mxu0 0
        %4220 = vmatprep.subr.bf16.mxu0 0
        %4221 = vmatpush1.bf16.msra.mxu0 0
        %4222 = vmatprep.subr.bf16.mxu0 0
        %4223 = vmatpush1.bf16.msra.mxu0 0
        %4224 = vmatprep.subr.bf16.mxu0 %v4174
        %4225 = vmatpush1.bf16.msra.mxu0 %v4173
        %4226 = vmatprep.subr.bf16.mxu0 %v4172
        %4227 = vmatpush1.bf16.msra.mxu0 %v4171
        %4228 = vmatprep.subr.bf16.mxu0 %v4170
        %4229 = vmatpush1.bf16.msra.mxu0 %v4169
        %4230 = vmatprep.subr.bf16.mxu0 %v4168
        %4231 = vmatpush1.bf16.msra.mxu0 %v4167
        %4232 = vmatprep.subr.bf16.mxu0 0
        %4233 = vmatpush2.bf16.msra.mxu0 0
        %4234 = vmatprep.subr.bf16.mxu0 0
        %4235 = vmatpush2.bf16.msra.mxu0 0
        %4236 = vmatprep.subr.bf16.mxu0 0
        %4237 = vmatpush2.bf16.msra.mxu0 0
        %4238 = vmatprep.subr.bf16.mxu0 0
        %4239 = vmatpush2.bf16.msra.mxu0 0
        %4240 = vmatprep.subr.bf16.mxu0 0
        %4241 = vmatpush2.bf16.msra.mxu0 0
        %4242 = vmatprep.subr.bf16.mxu0 0
        %4243 = vmatpush2.bf16.msra.mxu0 0
        %4244 = vmatprep.subr.bf16.mxu0 0
        %4245 = vmatpush2.bf16.msra.mxu0 0
        %4246 = vmatprep.subr.bf16.mxu0 0
        %4247 = vmatpush2.bf16.msra.mxu0 0
        %4248 = vmatprep.mubr.bf16.mxu0 0
        %4249 = vmatmul.mubr.bf16.gmra.mxu0 %v4205
        %v4250 = vpop.f32.mrf.mxu0
        %v4251 = vadd.f32 0.0, %v4250
        %v4252 = vpop.f32.mrf.mxu0
        %v4253 = vadd.f32 0.0, %v4252
        %v4254 = vpop.f32.mrf.mxu0
        %v4255 = vadd.f32 0.0, %v4254
        %v4256 = vpop.f32.mrf.mxu0
        %v4257 = vadd.f32 0.0, %v4256
        %4258 = vmatprep.mubr.bf16.mxu0 0
        %4259 = vmatmul.mubr.bf16.gmra.mxu0 %v4208
        %v4260 = vpop.f32.mrf.mxu0
        %v4261 = vadd.f32 0.0, %v4260
        %v4262 = vpop.f32.mrf.mxu0
        %v4263 = vadd.f32 0.0, %v4262
        %v4264 = vpop.f32.mrf.mxu0
        %v4265 = vadd.f32 0.0, %v4264
        %v4266 = vpop.f32.mrf.mxu0
        %v4267 = vadd.f32 0.0, %v4266
        %4268 = vmatprep.mubr.bf16.mxu0 0
        %4269 = vmatmul.mubr.bf16.gmra.mxu0 %v4211
        %v4270 = vpop.f32.mrf.mxu0
        %v4271 = vadd.f32 0.0, %v4270
        %v4272 = vpop.f32.mrf.mxu0
        %v4273 = vadd.f32 0.0, %v4272
        %v4274 = vpop.f32.mrf.mxu0
        %v4275 = vadd.f32 0.0, %v4274
        %v4276 = vpop.f32.mrf.mxu0
        %v4277 = vadd.f32 0.0, %v4276
        %4278 = vmatprep.mubr.bf16.mxu0 0
        %4279 = vmatmul.mubr.bf16.gmra.mxu0 %v4214
        %v4280 = vpop.f32.mrf.mxu0
        %v4281 = vadd.f32 0.0, %v4280
        %v4282 = vpop.f32.mrf.mxu0
        %v4283 = vadd.f32 0.0, %v4282
        %v4284 = vpop.f32.mrf.mxu0
        %v4285 = vadd.f32 0.0, %v4284
        %v4286 = vpop.f32.mrf.mxu0
        %v4287 = vadd.f32 0.0, %v4286
        %4288 = vdwg.mxu0
        %v4289 = vadd.f32 %v4071, %v4251
        %v4290 = vadd.f32 %v4072, %v4253
        %v4291 = vadd.f32 %v4073, %v4255
        %v4292 = vadd.f32 %v4074, %v4257
        %v4293 = vadd.f32 %v4075, %v4261
        %v4294 = vadd.f32 %v4076, %v4263
        %v4295 = vadd.f32 %v4077, %v4265
        %v4296 = vadd.f32 %v4078, %v4267
        %v4297 = vadd.f32 %v4079, %v4271
        %v4298 = vadd.f32 %v4080, %v4273
        %v4299 = vadd.f32 %v4081, %v4275
        %v4300 = vadd.f32 %v4082, %v4277
        %v4301 = vadd.f32 %v4083, %v4281
        %v4302 = vadd.f32 %v4084, %v4283
        %v4303 = vadd.f32 %v4085, %v4285
        %v4304 = vadd.f32 %v4086, %v4287
        %v4305 = vpack.c.bf16 %v3451, %v3449
        %v4306 = vpack.c.bf16 %v3452, %v3450
        %v4307 = vpack.c.bf16 %v3455, %v3453
        %v4308 = vpack.c.bf16 %v3456, %v3454
        %v4309 = vpack.c.bf16 %v3459, %v3457
        %v4310 = vpack.c.bf16 %v3460, %v3458
        %v4311 = vpack.c.bf16 %v3463, %v3461
        %v4312 = vpack.c.bf16 %v3464, %v3462
        %s4313 = scalar_lea.vmem %s4, 128
        %v4314 = vld [vmem:[%s4313] sm:$0xf]
        %v4315 = vld [vmem:[%s4313 + $0x4] sm:$0xf]
        %v4316 = vld [vmem:[%s4313 + $0x8] sm:$0xf]
        %v4317 = vld [vmem:[%s4313 + $0xc] sm:$0xf]
        %v4318 = vld [vmem:[%s4313 + $0x10] sm:$0xf]
        %v4319 = vld [vmem:[%s4313 + $0x14] sm:$0xf]
        %v4320 = vld [vmem:[%s4313 + $0x18] sm:$0xf]
        %v4321 = vld [vmem:[%s4313 + $0x1c] sm:$0xf]
        %v4330 = vunpack.c.l.b16 %v4314
        %v4331 = vunpack.c.l.b16 %v4315
        %v4332 = vunpack.c.l.b16 %v4316
        %v4333 = vunpack.c.l.b16 %v4317
        %v4334 = vunpack.c.l.b16 %v4318
        %v4335 = vunpack.c.l.b16 %v4319
        %v4336 = vunpack.c.l.b16 %v4320
        %v4337 = vunpack.c.l.b16 %v4321
        %v4338 = vpack.c.b16 %v4331, %v4330
        %v4339 = vpack.c.b16 %v4333, %v4332
        %v4340 = vpack.c.b16 %v4335, %v4334
        %v4341 = vpack.c.b16 %v4337, %v4336
        %v4343 = vsel %vm3678, %v4338, 0
        %v4346 = vsel %vm3678, %v4339, 0
        %v4349 = vsel %vm3678, %v4340, 0
        %v4352 = vsel %vm3678, %v4341, 0
        %4354 = vmatprep.subr.bf16.mxu0 0
        %4355 = vmatpush1.bf16.msra.mxu0 0
        %4356 = vmatprep.subr.bf16.mxu0 0
        %4357 = vmatpush1.bf16.msra.mxu0 0
        %4358 = vmatprep.subr.bf16.mxu0 0
        %4359 = vmatpush1.bf16.msra.mxu0 0
        %4360 = vmatprep.subr.bf16.mxu0 0
        %4361 = vmatpush1.bf16.msra.mxu0 0
        %4362 = vmatprep.subr.bf16.mxu0 %v4312
        %4363 = vmatpush1.bf16.msra.mxu0 %v4311
        %4364 = vmatprep.subr.bf16.mxu0 %v4310
        %4365 = vmatpush1.bf16.msra.mxu0 %v4309
        %4366 = vmatprep.subr.bf16.mxu0 %v4308
        %4367 = vmatpush1.bf16.msra.mxu0 %v4307
        %4368 = vmatprep.subr.bf16.mxu0 %v4306
        %4369 = vmatpush1.bf16.msra.mxu0 %v4305
        %4370 = vmatprep.subr.bf16.mxu0 0
        %4371 = vmatpush2.bf16.msra.mxu0 0
        %4372 = vmatprep.subr.bf16.mxu0 0
        %4373 = vmatpush2.bf16.msra.mxu0 0
        %4374 = vmatprep.subr.bf16.mxu0 0
        %4375 = vmatpush2.bf16.msra.mxu0 0
        %4376 = vmatprep.subr.bf16.mxu0 0
        %4377 = vmatpush2.bf16.msra.mxu0 0
        %4378 = vmatprep.subr.bf16.mxu0 0
        %4379 = vmatpush2.bf16.msra.mxu0 0
        %4380 = vmatprep.subr.bf16.mxu0 0
        %4381 = vmatpush2.bf16.msra.mxu0 0
        %4382 = vmatprep.subr.bf16.mxu0 0
        %4383 = vmatpush2.bf16.msra.mxu0 0
        %4384 = vmatprep.subr.bf16.mxu0 0
        %4385 = vmatpush2.bf16.msra.mxu0 0
        %4386 = vmatprep.mubr.bf16.mxu0 0
        %4387 = vmatmul.mubr.bf16.gmra.mxu0 %v4343
        %v4388 = vpop.f32.mrf.mxu0
        %v4389 = vadd.f32 0.0, %v4388
        %v4390 = vpop.f32.mrf.mxu0
        %v4391 = vadd.f32 0.0, %v4390
        %v4392 = vpop.f32.mrf.mxu0
        %v4393 = vadd.f32 0.0, %v4392
        %v4394 = vpop.f32.mrf.mxu0
        %v4395 = vadd.f32 0.0, %v4394
        %4396 = vmatprep.mubr.bf16.mxu0 0
        %4397 = vmatmul.mubr.bf16.gmra.mxu0 %v4346
        %v4398 = vpop.f32.mrf.mxu0
        %v4399 = vadd.f32 0.0, %v4398
        %v4400 = vpop.f32.mrf.mxu0
        %v4401 = vadd.f32 0.0, %v4400
        %v4402 = vpop.f32.mrf.mxu0
        %v4403 = vadd.f32 0.0, %v4402
        %v4404 = vpop.f32.mrf.mxu0
        %v4405 = vadd.f32 0.0, %v4404
        %4406 = vmatprep.mubr.bf16.mxu0 0
        %4407 = vmatmul.mubr.bf16.gmra.mxu0 %v4349
        %v4408 = vpop.f32.mrf.mxu0
        %v4409 = vadd.f32 0.0, %v4408
        %v4410 = vpop.f32.mrf.mxu0
        %v4411 = vadd.f32 0.0, %v4410
        %v4412 = vpop.f32.mrf.mxu0
        %v4413 = vadd.f32 0.0, %v4412
        %v4414 = vpop.f32.mrf.mxu0
        %v4415 = vadd.f32 0.0, %v4414
        %4416 = vmatprep.mubr.bf16.mxu0 0
        %4417 = vmatmul.mubr.bf16.gmra.mxu0 %v4352
        %v4418 = vpop.f32.mrf.mxu0
        %v4419 = vadd.f32 0.0, %v4418
        %v4420 = vpop.f32.mrf.mxu0
        %v4421 = vadd.f32 0.0, %v4420
        %v4422 = vpop.f32.mrf.mxu0
        %v4423 = vadd.f32 0.0, %v4422
        %v4424 = vpop.f32.mrf.mxu0
        %v4425 = vadd.f32 0.0, %v4424
        %4426 = vdwg.mxu0
        %v4427 = vadd.f32 %v4289, %v4389
        %v4428 = vadd.f32 %v4290, %v4391
        %v4429 = vadd.f32 %v4291, %v4393
        %v4430 = vadd.f32 %v4292, %v4395
        %v4431 = vadd.f32 %v4293, %v4399
        %v4432 = vadd.f32 %v4294, %v4401
        %v4433 = vadd.f32 %v4295, %v4403
        %v4434 = vadd.f32 %v4296, %v4405
        %v4435 = vadd.f32 %v4297, %v4409
        %v4436 = vadd.f32 %v4298, %v4411
        %v4437 = vadd.f32 %v4299, %v4413
        %v4438 = vadd.f32 %v4300, %v4415
        %v4439 = vadd.f32 %v4301, %v4419
        %v4440 = vadd.f32 %v4302, %v4421
        %v4441 = vadd.f32 %v4303, %v4423
        %v4442 = vadd.f32 %v4304, %v4425
        %4443 = vrot.lane.b32.xlu0 %v3449, 127
        %v4444 = vpop.permute.xlu0 %4443
        %4445 = vrot.lane.b32.xlu0 %v3450, 127
        %v4446 = vpop.permute.xlu0 %4445
        %4447 = vrot.lane.b32.xlu0 %v3451, 127
        %v4448 = vpop.permute.xlu0 %4447
        %4449 = vrot.lane.b32.xlu0 %v3452, 127
        %v4450 = vpop.permute.xlu0 %4449
        %4451 = vrot.lane.b32.xlu0 %v3453, 127
        %v4452 = vpop.permute.xlu0 %4451
        %4453 = vrot.lane.b32.xlu0 %v3454, 127
        %v4454 = vpop.permute.xlu0 %4453
        %4455 = vrot.lane.b32.xlu0 %v3455, 127
        %v4456 = vpop.permute.xlu0 %4455
        %4457 = vrot.lane.b32.xlu0 %v3456, 127
        %v4458 = vpop.permute.xlu0 %4457
        %4459 = vrot.lane.b32.xlu0 %v3457, 127
        %v4460 = vpop.permute.xlu0 %4459
        %4461 = vrot.lane.b32.xlu0 %v3458, 127
        %v4462 = vpop.permute.xlu0 %4461
        %4463 = vrot.lane.b32.xlu0 %v3459, 127
        %v4464 = vpop.permute.xlu0 %4463
        %4465 = vrot.lane.b32.xlu0 %v3460, 127
        %v4466 = vpop.permute.xlu0 %4465
        %4467 = vrot.lane.b32.xlu0 %v3461, 127
        %v4468 = vpop.permute.xlu0 %4467
        %4469 = vrot.lane.b32.xlu0 %v3462, 127
        %v4470 = vpop.permute.xlu0 %4469
        %4471 = vrot.lane.b32.xlu0 %v3463, 127
        %v4472 = vpop.permute.xlu0 %4471
        %4473 = vrot.lane.b32.xlu0 %v3464, 127
        %v4474 = vpop.permute.xlu0 %4473
        %v4475 = vsel %vm1546, %v4444, %v4446
        %v4476 = vsel %vm1546, %v4448, %v4450
        %v4477 = vsel %vm1546, %v4452, %v4454
        %v4478 = vsel %vm1546, %v4456, %v4458
        %v4479 = vsel %vm1546, %v4460, %v4462
        %v4480 = vsel %vm1546, %v4464, %v4466
        %v4481 = vsel %vm1546, %v4468, %v4470
        %v4482 = vsel %vm1546, %v4472, %v4474
        %v4499 = vsel %vm1546, %v4446, 0.0
        %v4500 = vsel %vm1546, %v4450, 0.0
        %v4501 = vsel %vm1546, %v4454, 0.0
        %v4502 = vsel %vm1546, %v4458, 0.0
        %v4503 = vsel %vm1546, %v4462, 0.0
        %v4504 = vsel %vm1546, %v4466, 0.0
        %v4505 = vsel %vm1546, %v4470, 0.0
        %v4506 = vsel %vm1546, %v4474, 0.0
        %v4507 = vsel %vm1077, %v4475, 0.0
        %v4508 = vsel %vm1078, %v4499, 0.0
        %v4509 = vsel %vm1077, %v4476, 0.0
        %v4510 = vsel %vm1078, %v4500, 0.0
        %v4511 = vsel %vm1077, %v4477, 0.0
        %v4512 = vsel %vm1078, %v4501, 0.0
        %v4513 = vsel %vm1077, %v4478, 0.0
        %v4514 = vsel %vm1078, %v4502, 0.0
        %v4515 = vsel %vm1077, %v4479, 0.0
        %v4516 = vsel %vm1078, %v4503, 0.0
        %v4517 = vsel %vm1077, %v4480, 0.0
        %v4518 = vsel %vm1078, %v4504, 0.0
        %v4519 = vsel %vm1077, %v4481, 0.0
        %v4520 = vsel %vm1078, %v4505, 0.0
        %v4521 = vsel %vm1077, %v4482, 0.0
        %v4522 = vsel %vm1078, %v4506, 0.0
        %v4523 = vpack.c.bf16 %v4509, %v4507
        %v4524 = vpack.c.bf16 %v4510, %v4508
        %v4525 = vpack.c.bf16 %v4513, %v4511
        %v4526 = vpack.c.bf16 %v4514, %v4512
        %v4527 = vpack.c.bf16 %v4517, %v4515
        %v4528 = vpack.c.bf16 %v4518, %v4516
        %v4529 = vpack.c.bf16 %v4521, %v4519
        %v4530 = vpack.c.bf16 %v4522, %v4520
        %s4531 = scalar_lea.vmem %s4, 160
        %v4532 = vld [vmem:[%s4531] sm:$0xf]
        %v4533 = vld [vmem:[%s4531 + $0x4] sm:$0xf]
        %v4534 = vld [vmem:[%s4531 + $0x8] sm:$0xf]
        %v4535 = vld [vmem:[%s4531 + $0xc] sm:$0xf]
        %v4536 = vld [vmem:[%s4531 + $0x10] sm:$0xf]
        %v4537 = vld [vmem:[%s4531 + $0x14] sm:$0xf]
        %v4538 = vld [vmem:[%s4531 + $0x18] sm:$0xf]
        %v4539 = vld [vmem:[%s4531 + $0x1c] sm:$0xf]
        %v4548 = vunpack.c.l.b16 %v4532
        %v4549 = vunpack.c.l.b16 %v4533
        %v4550 = vunpack.c.l.b16 %v4534
        %v4551 = vunpack.c.l.b16 %v4535
        %v4552 = vunpack.c.l.b16 %v4536
        %v4553 = vunpack.c.l.b16 %v4537
        %v4554 = vunpack.c.l.b16 %v4538
        %v4555 = vunpack.c.l.b16 %v4539
        %v4556 = vpack.c.b16 %v4549, %v4548
        %v4557 = vpack.c.b16 %v4551, %v4550
        %v4558 = vpack.c.b16 %v4553, %v4552
        %v4559 = vpack.c.b16 %v4555, %v4554
        %v4561 = vsel %vm3678, %v4556, 0
        %v4564 = vsel %vm3678, %v4557, 0
        %v4567 = vsel %vm3678, %v4558, 0
        %v4570 = vsel %vm3678, %v4559, 0
        %4572 = vmatprep.subr.bf16.mxu0 0
        %4573 = vmatpush1.bf16.msra.mxu0 0
        %4574 = vmatprep.subr.bf16.mxu0 0
        %4575 = vmatpush1.bf16.msra.mxu0 0
        %4576 = vmatprep.subr.bf16.mxu0 0
        %4577 = vmatpush1.bf16.msra.mxu0 0
        %4578 = vmatprep.subr.bf16.mxu0 0
        %4579 = vmatpush1.bf16.msra.mxu0 0
        %4580 = vmatprep.subr.bf16.mxu0 %v4530
        %4581 = vmatpush1.bf16.msra.mxu0 %v4529
        %4582 = vmatprep.subr.bf16.mxu0 %v4528
        %4583 = vmatpush1.bf16.msra.mxu0 %v4527
        %4584 = vmatprep.subr.bf16.mxu0 %v4526
        %4585 = vmatpush1.bf16.msra.mxu0 %v4525
        %4586 = vmatprep.subr.bf16.mxu0 %v4524
        %4587 = vmatpush1.bf16.msra.mxu0 %v4523
        %4588 = vmatprep.subr.bf16.mxu0 0
        %4589 = vmatpush2.bf16.msra.mxu0 0
        %4590 = vmatprep.subr.bf16.mxu0 0
        %4591 = vmatpush2.bf16.msra.mxu0 0
        %4592 = vmatprep.subr.bf16.mxu0 0
        %4593 = vmatpush2.bf16.msra.mxu0 0
        %4594 = vmatprep.subr.bf16.mxu0 0
        %4595 = vmatpush2.bf16.msra.mxu0 0
        %4596 = vmatprep.subr.bf16.mxu0 0
        %4597 = vmatpush2.bf16.msra.mxu0 0
        %4598 = vmatprep.subr.bf16.mxu0 0
        %4599 = vmatpush2.bf16.msra.mxu0 0
        %4600 = vmatprep.subr.bf16.mxu0 0
        %4601 = vmatpush2.bf16.msra.mxu0 0
        %4602 = vmatprep.subr.bf16.mxu0 0
        %4603 = vmatpush2.bf16.msra.mxu0 0
        %4604 = vmatprep.mubr.bf16.mxu0 0
        %4605 = vmatmul.mubr.bf16.gmra.mxu0 %v4561
        %v4606 = vpop.f32.mrf.mxu0
        %v4607 = vadd.f32 0.0, %v4606
        %v4608 = vpop.f32.mrf.mxu0
        %v4609 = vadd.f32 0.0, %v4608
        %v4610 = vpop.f32.mrf.mxu0
        %v4611 = vadd.f32 0.0, %v4610
        %v4612 = vpop.f32.mrf.mxu0
        %v4613 = vadd.f32 0.0, %v4612
        %4614 = vmatprep.mubr.bf16.mxu0 0
        %4615 = vmatmul.mubr.bf16.gmra.mxu0 %v4564
        %v4616 = vpop.f32.mrf.mxu0
        %v4617 = vadd.f32 0.0, %v4616
        %v4618 = vpop.f32.mrf.mxu0
        %v4619 = vadd.f32 0.0, %v4618
        %v4620 = vpop.f32.mrf.mxu0
        %v4621 = vadd.f32 0.0, %v4620
        %v4622 = vpop.f32.mrf.mxu0
        %v4623 = vadd.f32 0.0, %v4622
        %4624 = vmatprep.mubr.bf16.mxu0 0
        %4625 = vmatmul.mubr.bf16.gmra.mxu0 %v4567
        %v4626 = vpop.f32.mrf.mxu0
        %v4627 = vadd.f32 0.0, %v4626
        %v4628 = vpop.f32.mrf.mxu0
        %v4629 = vadd.f32 0.0, %v4628
        %v4630 = vpop.f32.mrf.mxu0
        %v4631 = vadd.f32 0.0, %v4630
        %v4632 = vpop.f32.mrf.mxu0
        %v4633 = vadd.f32 0.0, %v4632
        %4634 = vmatprep.mubr.bf16.mxu0 0
        %4635 = vmatmul.mubr.bf16.gmra.mxu0 %v4570
        %v4636 = vpop.f32.mrf.mxu0
        %v4637 = vadd.f32 0.0, %v4636
        %v4638 = vpop.f32.mrf.mxu0
        %v4639 = vadd.f32 0.0, %v4638
        %v4640 = vpop.f32.mrf.mxu0
        %v4641 = vadd.f32 0.0, %v4640
        %v4642 = vpop.f32.mrf.mxu0
        %v4643 = vadd.f32 0.0, %v4642
        %4644 = vdwg.mxu0
        %v4645 = vadd.f32 %v4427, %v4607
        %v4646 = vadd.f32 %v4428, %v4609
        %v4647 = vadd.f32 %v4429, %v4611
        %v4648 = vadd.f32 %v4430, %v4613
        %v4649 = vadd.f32 %v4431, %v4617
        %v4650 = vadd.f32 %v4432, %v4619
        %v4651 = vadd.f32 %v4433, %v4621
        %v4652 = vadd.f32 %v4434, %v4623
        %v4653 = vadd.f32 %v4435, %v4627
        %v4654 = vadd.f32 %v4436, %v4629
        %v4655 = vadd.f32 %v4437, %v4631
        %v4656 = vadd.f32 %v4438, %v4633
        %v4657 = vadd.f32 %v4439, %v4637
        %v4658 = vadd.f32 %v4440, %v4639
        %v4659 = vadd.f32 %v4441, %v4641
        %v4660 = vadd.f32 %v4442, %v4643
        %4661 = vrot.lane.b32.xlu0 %v3449, 113
        %v4662 = vpop.permute.xlu0 %4661
        %4663 = vrot.lane.b32.xlu0 %v3450, 113
        %v4664 = vpop.permute.xlu0 %4663
        %4665 = vrot.lane.b32.xlu0 %v3451, 113
        %v4666 = vpop.permute.xlu0 %4665
        %4667 = vrot.lane.b32.xlu0 %v3452, 113
        %v4668 = vpop.permute.xlu0 %4667
        %4669 = vrot.lane.b32.xlu0 %v3453, 113
        %v4670 = vpop.permute.xlu0 %4669
        %4671 = vrot.lane.b32.xlu0 %v3454, 113
        %v4672 = vpop.permute.xlu0 %4671
        %4673 = vrot.lane.b32.xlu0 %v3455, 113
        %v4674 = vpop.permute.xlu0 %4673
        %4675 = vrot.lane.b32.xlu0 %v3456, 113
        %v4676 = vpop.permute.xlu0 %4675
        %4677 = vrot.lane.b32.xlu0 %v3457, 113
        %v4678 = vpop.permute.xlu0 %4677
        %4679 = vrot.lane.b32.xlu0 %v3458, 113
        %v4680 = vpop.permute.xlu0 %4679
        %4681 = vrot.lane.b32.xlu0 %v3459, 113
        %v4682 = vpop.permute.xlu0 %4681
        %4683 = vrot.lane.b32.xlu0 %v3460, 113
        %v4684 = vpop.permute.xlu0 %4683
        %4685 = vrot.lane.b32.xlu0 %v3461, 113
        %v4686 = vpop.permute.xlu0 %4685
        %4687 = vrot.lane.b32.xlu0 %v3462, 113
        %v4688 = vpop.permute.xlu0 %4687
        %4689 = vrot.lane.b32.xlu0 %v3463, 113
        %v4690 = vpop.permute.xlu0 %4689
        %4691 = vrot.lane.b32.xlu0 %v3464, 113
        %v4692 = vpop.permute.xlu0 %4691
        %v4693 = vsel %vm1721, %v4662, %v4664
        %v4694 = vsel %vm1721, %v4666, %v4668
        %v4695 = vsel %vm1721, %v4670, %v4672
        %v4696 = vsel %vm1721, %v4674, %v4676
        %v4697 = vsel %vm1721, %v4678, %v4680
        %v4698 = vsel %vm1721, %v4682, %v4684
        %v4699 = vsel %vm1721, %v4686, %v4688
        %v4700 = vsel %vm1721, %v4690, %v4692
        %v4717 = vsel %vm1721, %v4664, 0.0
        %v4718 = vsel %vm1721, %v4668, 0.0
        %v4719 = vsel %vm1721, %v4672, 0.0
        %v4720 = vsel %vm1721, %v4676, 0.0
        %v4721 = vsel %vm1721, %v4680, 0.0
        %v4722 = vsel %vm1721, %v4684, 0.0
        %v4723 = vsel %vm1721, %v4688, 0.0
        %v4724 = vsel %vm1721, %v4692, 0.0
        %v4725 = vsel %vm762, %v4693, 0.0
        %v4726 = vsel %vm763, %v4717, 0.0
        %v4727 = vsel %vm762, %v4694, 0.0
        %v4728 = vsel %vm763, %v4718, 0.0
        %v4729 = vsel %vm762, %v4695, 0.0
        %v4730 = vsel %vm763, %v4719, 0.0
        %v4731 = vsel %vm762, %v4696, 0.0
        %v4732 = vsel %vm763, %v4720, 0.0
        %v4733 = vsel %vm762, %v4697, 0.0
        %v4734 = vsel %vm763, %v4721, 0.0
        %v4735 = vsel %vm762, %v4698, 0.0
        %v4736 = vsel %vm763, %v4722, 0.0
        %v4737 = vsel %vm762, %v4699, 0.0
        %v4738 = vsel %vm763, %v4723, 0.0
        %v4739 = vsel %vm762, %v4700, 0.0
        %v4740 = vsel %vm763, %v4724, 0.0
        %v4741 = vpack.c.bf16 %v4727, %v4725
        %v4742 = vpack.c.bf16 %v4728, %v4726
        %v4743 = vpack.c.bf16 %v4731, %v4729
        %v4744 = vpack.c.bf16 %v4732, %v4730
        %v4745 = vpack.c.bf16 %v4735, %v4733
        %v4746 = vpack.c.bf16 %v4736, %v4734
        %v4747 = vpack.c.bf16 %v4739, %v4737
        %v4748 = vpack.c.bf16 %v4740, %v4738
        %s4749 = scalar_lea.vmem %s4, 192
        %v4750 = vld [vmem:[%s4749] sm:$0xf]
        %v4751 = vld [vmem:[%s4749 + $0x4] sm:$0xf]
        %v4752 = vld [vmem:[%s4749 + $0x8] sm:$0xf]
        %v4753 = vld [vmem:[%s4749 + $0xc] sm:$0xf]
        %v4754 = vld [vmem:[%s4749 + $0x10] sm:$0xf]
        %v4755 = vld [vmem:[%s4749 + $0x14] sm:$0xf]
        %v4756 = vld [vmem:[%s4749 + $0x18] sm:$0xf]
        %v4757 = vld [vmem:[%s4749 + $0x1c] sm:$0xf]
        %v4766 = vunpack.c.l.b16 %v4750
        %v4767 = vunpack.c.l.b16 %v4751
        %v4768 = vunpack.c.l.b16 %v4752
        %v4769 = vunpack.c.l.b16 %v4753
        %v4770 = vunpack.c.l.b16 %v4754
        %v4771 = vunpack.c.l.b16 %v4755
        %v4772 = vunpack.c.l.b16 %v4756
        %v4773 = vunpack.c.l.b16 %v4757
        %v4774 = vpack.c.b16 %v4767, %v4766
        %v4775 = vpack.c.b16 %v4769, %v4768
        %v4776 = vpack.c.b16 %v4771, %v4770
        %v4777 = vpack.c.b16 %v4773, %v4772
        %v4779 = vsel %vm3678, %v4774, 0
        %v4782 = vsel %vm3678, %v4775, 0
        %v4785 = vsel %vm3678, %v4776, 0
        %v4788 = vsel %vm3678, %v4777, 0
        %4790 = vmatprep.subr.bf16.mxu0 0
        %4791 = vmatpush1.bf16.msra.mxu0 0
        %4792 = vmatprep.subr.bf16.mxu0 0
        %4793 = vmatpush1.bf16.msra.mxu0 0
        %4794 = vmatprep.subr.bf16.mxu0 0
        %4795 = vmatpush1.bf16.msra.mxu0 0
        %4796 = vmatprep.subr.bf16.mxu0 0
        %4797 = vmatpush1.bf16.msra.mxu0 0
        %4798 = vmatprep.subr.bf16.mxu0 %v4748
        %4799 = vmatpush1.bf16.msra.mxu0 %v4747
        %4800 = vmatprep.subr.bf16.mxu0 %v4746
        %4801 = vmatpush1.bf16.msra.mxu0 %v4745
        %4802 = vmatprep.subr.bf16.mxu0 %v4744
        %4803 = vmatpush1.bf16.msra.mxu0 %v4743
        %4804 = vmatprep.subr.bf16.mxu0 %v4742
        %4805 = vmatpush1.bf16.msra.mxu0 %v4741
        %4806 = vmatprep.subr.bf16.mxu0 0
        %4807 = vmatpush2.bf16.msra.mxu0 0
        %4808 = vmatprep.subr.bf16.mxu0 0
        %4809 = vmatpush2.bf16.msra.mxu0 0
        %4810 = vmatprep.subr.bf16.mxu0 0
        %4811 = vmatpush2.bf16.msra.mxu0 0
        %4812 = vmatprep.subr.bf16.mxu0 0
        %4813 = vmatpush2.bf16.msra.mxu0 0
        %4814 = vmatprep.subr.bf16.mxu0 0
        %4815 = vmatpush2.bf16.msra.mxu0 0
        %4816 = vmatprep.subr.bf16.mxu0 0
        %4817 = vmatpush2.bf16.msra.mxu0 0
        %4818 = vmatprep.subr.bf16.mxu0 0
        %4819 = vmatpush2.bf16.msra.mxu0 0
        %4820 = vmatprep.subr.bf16.mxu0 0
        %4821 = vmatpush2.bf16.msra.mxu0 0
        %4822 = vmatprep.mubr.bf16.mxu0 0
        %4823 = vmatmul.mubr.bf16.gmra.mxu0 %v4779
        %v4824 = vpop.f32.mrf.mxu0
        %v4825 = vadd.f32 0.0, %v4824
        %v4826 = vpop.f32.mrf.mxu0
        %v4827 = vadd.f32 0.0, %v4826
        %v4828 = vpop.f32.mrf.mxu0
        %v4829 = vadd.f32 0.0, %v4828
        %v4830 = vpop.f32.mrf.mxu0
        %v4831 = vadd.f32 0.0, %v4830
        %4832 = vmatprep.mubr.bf16.mxu0 0
        %4833 = vmatmul.mubr.bf16.gmra.mxu0 %v4782
        %v4834 = vpop.f32.mrf.mxu0
        %v4835 = vadd.f32 0.0, %v4834
        %v4836 = vpop.f32.mrf.mxu0
        %v4837 = vadd.f32 0.0, %v4836
        %v4838 = vpop.f32.mrf.mxu0
        %v4839 = vadd.f32 0.0, %v4838
        %v4840 = vpop.f32.mrf.mxu0
        %v4841 = vadd.f32 0.0, %v4840
        %4842 = vmatprep.mubr.bf16.mxu0 0
        %4843 = vmatmul.mubr.bf16.gmra.mxu0 %v4785
        %v4844 = vpop.f32.mrf.mxu0
        %v4845 = vadd.f32 0.0, %v4844
        %v4846 = vpop.f32.mrf.mxu0
        %v4847 = vadd.f32 0.0, %v4846
        %v4848 = vpop.f32.mrf.mxu0
        %v4849 = vadd.f32 0.0, %v4848
        %v4850 = vpop.f32.mrf.mxu0
        %v4851 = vadd.f32 0.0, %v4850
        %4852 = vmatprep.mubr.bf16.mxu0 0
        %4853 = vmatmul.mubr.bf16.gmra.mxu0 %v4788
        %v4854 = vpop.f32.mrf.mxu0
        %v4855 = vadd.f32 0.0, %v4854
        %v4856 = vpop.f32.mrf.mxu0
        %v4857 = vadd.f32 0.0, %v4856
        %v4858 = vpop.f32.mrf.mxu0
        %v4859 = vadd.f32 0.0, %v4858
        %v4860 = vpop.f32.mrf.mxu0
        %v4861 = vadd.f32 0.0, %v4860
        %4862 = vdwg.mxu0
        %v4863 = vadd.f32 %v4645, %v4825
        %v4864 = vadd.f32 %v4646, %v4827
        %v4865 = vadd.f32 %v4647, %v4829
        %v4866 = vadd.f32 %v4648, %v4831
        %v4867 = vadd.f32 %v4649, %v4835
        %v4868 = vadd.f32 %v4650, %v4837
        %v4869 = vadd.f32 %v4651, %v4839
        %v4870 = vadd.f32 %v4652, %v4841
        %v4871 = vadd.f32 %v4653, %v4845
        %v4872 = vadd.f32 %v4654, %v4847
        %v4873 = vadd.f32 %v4655, %v4849
        %v4874 = vadd.f32 %v4656, %v4851
        %v4875 = vadd.f32 %v4657, %v4855
        %v4876 = vadd.f32 %v4658, %v4857
        %v4877 = vadd.f32 %v4659, %v4859
        %v4878 = vadd.f32 %v4660, %v4861
        %4879 = vrot.lane.b32.xlu0 %v3449, 112
        %v4880 = vpop.permute.xlu0 %4879
        %4881 = vrot.lane.b32.xlu0 %v3450, 112
        %v4882 = vpop.permute.xlu0 %4881
        %4883 = vrot.lane.b32.xlu0 %v3451, 112
        %v4884 = vpop.permute.xlu0 %4883
        %4885 = vrot.lane.b32.xlu0 %v3452, 112
        %v4886 = vpop.permute.xlu0 %4885
        %4887 = vrot.lane.b32.xlu0 %v3453, 112
        %v4888 = vpop.permute.xlu0 %4887
        %4889 = vrot.lane.b32.xlu0 %v3454, 112
        %v4890 = vpop.permute.xlu0 %4889
        %4891 = vrot.lane.b32.xlu0 %v3455, 112
        %v4892 = vpop.permute.xlu0 %4891
        %4893 = vrot.lane.b32.xlu0 %v3456, 112
        %v4894 = vpop.permute.xlu0 %4893
        %4895 = vrot.lane.b32.xlu0 %v3457, 112
        %v4896 = vpop.permute.xlu0 %4895
        %4897 = vrot.lane.b32.xlu0 %v3458, 112
        %v4898 = vpop.permute.xlu0 %4897
        %4899 = vrot.lane.b32.xlu0 %v3459, 112
        %v4900 = vpop.permute.xlu0 %4899
        %4901 = vrot.lane.b32.xlu0 %v3460, 112
        %v4902 = vpop.permute.xlu0 %4901
        %4903 = vrot.lane.b32.xlu0 %v3461, 112
        %v4904 = vpop.permute.xlu0 %4903
        %4905 = vrot.lane.b32.xlu0 %v3462, 112
        %v4906 = vpop.permute.xlu0 %4905
        %4907 = vrot.lane.b32.xlu0 %v3463, 112
        %v4908 = vpop.permute.xlu0 %4907
        %4909 = vrot.lane.b32.xlu0 %v3464, 112
        %v4910 = vpop.permute.xlu0 %4909
        %v4911 = vsel %vm1896, %v4880, %v4882
        %v4912 = vsel %vm1896, %v4884, %v4886
        %v4913 = vsel %vm1896, %v4888, %v4890
        %v4914 = vsel %vm1896, %v4892, %v4894
        %v4915 = vsel %vm1896, %v4896, %v4898
        %v4916 = vsel %vm1896, %v4900, %v4902
        %v4917 = vsel %vm1896, %v4904, %v4906
        %v4918 = vsel %vm1896, %v4908, %v4910
        %v4935 = vsel %vm1896, %v4882, 0.0
        %v4936 = vsel %vm1896, %v4886, 0.0
        %v4937 = vsel %vm1896, %v4890, 0.0
        %v4938 = vsel %vm1896, %v4894, 0.0
        %v4939 = vsel %vm1896, %v4898, 0.0
        %v4940 = vsel %vm1896, %v4902, 0.0
        %v4941 = vsel %vm1896, %v4906, 0.0
        %v4942 = vsel %vm1896, %v4910, 0.0
        %v4943 = vpack.c.bf16 %v4912, %v4911
        %v4944 = vpack.c.bf16 %v4936, %v4935
        %v4945 = vpack.c.bf16 %v4914, %v4913
        %v4946 = vpack.c.bf16 %v4938, %v4937
        %v4947 = vpack.c.bf16 %v4916, %v4915
        %v4948 = vpack.c.bf16 %v4940, %v4939
        %v4949 = vpack.c.bf16 %v4918, %v4917
        %v4950 = vpack.c.bf16 %v4942, %v4941
        %s4951 = scalar_lea.vmem %s4, 224
        %v4952 = vld [vmem:[%s4951] sm:$0xf]
        %v4953 = vld [vmem:[%s4951 + $0x4] sm:$0xf]
        %v4954 = vld [vmem:[%s4951 + $0x8] sm:$0xf]
        %v4955 = vld [vmem:[%s4951 + $0xc] sm:$0xf]
        %v4956 = vld [vmem:[%s4951 + $0x10] sm:$0xf]
        %v4957 = vld [vmem:[%s4951 + $0x14] sm:$0xf]
        %v4958 = vld [vmem:[%s4951 + $0x18] sm:$0xf]
        %v4959 = vld [vmem:[%s4951 + $0x1c] sm:$0xf]
        %v4968 = vunpack.c.l.b16 %v4952
        %v4969 = vunpack.c.l.b16 %v4953
        %v4970 = vunpack.c.l.b16 %v4954
        %v4971 = vunpack.c.l.b16 %v4955
        %v4972 = vunpack.c.l.b16 %v4956
        %v4973 = vunpack.c.l.b16 %v4957
        %v4974 = vunpack.c.l.b16 %v4958
        %v4975 = vunpack.c.l.b16 %v4959
        %v4976 = vpack.c.b16 %v4969, %v4968
        %v4977 = vpack.c.b16 %v4971, %v4970
        %v4978 = vpack.c.b16 %v4973, %v4972
        %v4979 = vpack.c.b16 %v4975, %v4974
        %v4981 = vsel %vm3678, %v4976, 0
        %v4984 = vsel %vm3678, %v4977, 0
        %v4987 = vsel %vm3678, %v4978, 0
        %v4990 = vsel %vm3678, %v4979, 0
        %4992 = vmatprep.subr.bf16.mxu0 0
        %4993 = vmatpush1.bf16.msra.mxu0 0
        %4994 = vmatprep.subr.bf16.mxu0 0
        %4995 = vmatpush1.bf16.msra.mxu0 0
        %4996 = vmatprep.subr.bf16.mxu0 0
        %4997 = vmatpush1.bf16.msra.mxu0 0
        %4998 = vmatprep.subr.bf16.mxu0 0
        %4999 = vmatpush1.bf16.msra.mxu0 0
        %5000 = vmatprep.subr.bf16.mxu0 %v4950
        %5001 = vmatpush1.bf16.msra.mxu0 %v4949
        %5002 = vmatprep.subr.bf16.mxu0 %v4948
        %5003 = vmatpush1.bf16.msra.mxu0 %v4947
        %5004 = vmatprep.subr.bf16.mxu0 %v4946
        %5005 = vmatpush1.bf16.msra.mxu0 %v4945
        %5006 = vmatprep.subr.bf16.mxu0 %v4944
        %5007 = vmatpush1.bf16.msra.mxu0 %v4943
        %5008 = vmatprep.subr.bf16.mxu0 0
        %5009 = vmatpush2.bf16.msra.mxu0 0
        %5010 = vmatprep.subr.bf16.mxu0 0
        %5011 = vmatpush2.bf16.msra.mxu0 0
        %5012 = vmatprep.subr.bf16.mxu0 0
        %5013 = vmatpush2.bf16.msra.mxu0 0
        %5014 = vmatprep.subr.bf16.mxu0 0
        %5015 = vmatpush2.bf16.msra.mxu0 0
        %5016 = vmatprep.subr.bf16.mxu0 0
        %5017 = vmatpush2.bf16.msra.mxu0 0
        %5018 = vmatprep.subr.bf16.mxu0 0
        %5019 = vmatpush2.bf16.msra.mxu0 0
        %5020 = vmatprep.subr.bf16.mxu0 0
        %5021 = vmatpush2.bf16.msra.mxu0 0
        %5022 = vmatprep.subr.bf16.mxu0 0
        %5023 = vmatpush2.bf16.msra.mxu0 0
        %5024 = vmatprep.mubr.bf16.mxu0 0
        %5025 = vmatmul.mubr.bf16.gmra.mxu0 %v4981
        %v5026 = vpop.f32.mrf.mxu0
        %v5027 = vadd.f32 0.0, %v5026
        %v5028 = vpop.f32.mrf.mxu0
        %v5029 = vadd.f32 0.0, %v5028
        %v5030 = vpop.f32.mrf.mxu0
        %v5031 = vadd.f32 0.0, %v5030
        %v5032 = vpop.f32.mrf.mxu0
        %v5033 = vadd.f32 0.0, %v5032
        %5034 = vmatprep.mubr.bf16.mxu0 0
        %5035 = vmatmul.mubr.bf16.gmra.mxu0 %v4984
        %v5036 = vpop.f32.mrf.mxu0
        %v5037 = vadd.f32 0.0, %v5036
        %v5038 = vpop.f32.mrf.mxu0
        %v5039 = vadd.f32 0.0, %v5038
        %v5040 = vpop.f32.mrf.mxu0
        %v5041 = vadd.f32 0.0, %v5040
        %v5042 = vpop.f32.mrf.mxu0
        %v5043 = vadd.f32 0.0, %v5042
        %5044 = vmatprep.mubr.bf16.mxu0 0
        %5045 = vmatmul.mubr.bf16.gmra.mxu0 %v4987
        %v5046 = vpop.f32.mrf.mxu0
        %v5047 = vadd.f32 0.0, %v5046
        %v5048 = vpop.f32.mrf.mxu0
        %v5049 = vadd.f32 0.0, %v5048
        %v5050 = vpop.f32.mrf.mxu0
        %v5051 = vadd.f32 0.0, %v5050
        %v5052 = vpop.f32.mrf.mxu0
        %v5053 = vadd.f32 0.0, %v5052
        %5054 = vmatprep.mubr.bf16.mxu0 0
        %5055 = vmatmul.mubr.bf16.gmra.mxu0 %v4990
        %v5056 = vpop.f32.mrf.mxu0
        %v5057 = vadd.f32 0.0, %v5056
        %v5058 = vpop.f32.mrf.mxu0
        %v5059 = vadd.f32 0.0, %v5058
        %v5060 = vpop.f32.mrf.mxu0
        %v5061 = vadd.f32 0.0, %v5060
        %v5062 = vpop.f32.mrf.mxu0
        %v5063 = vadd.f32 0.0, %v5062
        %5064 = vdwg.mxu0
        %v5065 = vadd.f32 %v4863, %v5027
        %v5066 = vadd.f32 %v4864, %v5029
        %v5067 = vadd.f32 %v4865, %v5031
        %v5068 = vadd.f32 %v4866, %v5033
        %v5069 = vadd.f32 %v4867, %v5037
        %v5070 = vadd.f32 %v4868, %v5039
        %v5071 = vadd.f32 %v4869, %v5041
        %v5072 = vadd.f32 %v4870, %v5043
        %v5073 = vadd.f32 %v4871, %v5047
        %v5074 = vadd.f32 %v4872, %v5049
        %v5075 = vadd.f32 %v4873, %v5051
        %v5076 = vadd.f32 %v4874, %v5053
        %v5077 = vadd.f32 %v4875, %v5057
        %v5078 = vadd.f32 %v4876, %v5059
        %v5079 = vadd.f32 %v4877, %v5061
        %v5080 = vadd.f32 %v4878, %v5063
        %5081 = vrot.lane.b32.xlu0 %v3449, 111
        %v5082 = vpop.permute.xlu0 %5081
        %5083 = vrot.lane.b32.xlu0 %v3450, 111
        %v5084 = vpop.permute.xlu0 %5083
        %5085 = vrot.lane.b32.xlu0 %v3451, 111
        %v5086 = vpop.permute.xlu0 %5085
        %5087 = vrot.lane.b32.xlu0 %v3452, 111
        %v5088 = vpop.permute.xlu0 %5087
        %5089 = vrot.lane.b32.xlu0 %v3453, 111
        %v5090 = vpop.permute.xlu0 %5089
        %5091 = vrot.lane.b32.xlu0 %v3454, 111
        %v5092 = vpop.permute.xlu0 %5091
        %5093 = vrot.lane.b32.xlu0 %v3455, 111
        %v5094 = vpop.permute.xlu0 %5093
        %5095 = vrot.lane.b32.xlu0 %v3456, 111
        %v5096 = vpop.permute.xlu0 %5095
        %5097 = vrot.lane.b32.xlu0 %v3457, 111
        %v5098 = vpop.permute.xlu0 %5097
        %5099 = vrot.lane.b32.xlu0 %v3458, 111
        %v5100 = vpop.permute.xlu0 %5099
        %5101 = vrot.lane.b32.xlu0 %v3459, 111
        %v5102 = vpop.permute.xlu0 %5101
        %5103 = vrot.lane.b32.xlu0 %v3460, 111
        %v5104 = vpop.permute.xlu0 %5103
        %5105 = vrot.lane.b32.xlu0 %v3461, 111
        %v5106 = vpop.permute.xlu0 %5105
        %5107 = vrot.lane.b32.xlu0 %v3462, 111
        %v5108 = vpop.permute.xlu0 %5107
        %5109 = vrot.lane.b32.xlu0 %v3463, 111
        %v5110 = vpop.permute.xlu0 %5109
        %5111 = vrot.lane.b32.xlu0 %v3464, 111
        %v5112 = vpop.permute.xlu0 %5111
        %v5113 = vsel %vm2063, %v5082, %v5084
        %v5114 = vsel %vm2063, %v5086, %v5088
        %v5115 = vsel %vm2063, %v5090, %v5092
        %v5116 = vsel %vm2063, %v5094, %v5096
        %v5117 = vsel %vm2063, %v5098, %v5100
        %v5118 = vsel %vm2063, %v5102, %v5104
        %v5119 = vsel %vm2063, %v5106, %v5108
        %v5120 = vsel %vm2063, %v5110, %v5112
        %v5137 = vsel %vm2063, %v5084, 0.0
        %v5138 = vsel %vm2063, %v5088, 0.0
        %v5139 = vsel %vm2063, %v5092, 0.0
        %v5140 = vsel %vm2063, %v5096, 0.0
        %v5141 = vsel %vm2063, %v5100, 0.0
        %v5142 = vsel %vm2063, %v5104, 0.0
        %v5143 = vsel %vm2063, %v5108, 0.0
        %v5144 = vsel %vm2063, %v5112, 0.0
        %v5145 = vsel %vm1077, %v5113, 0.0
        %v5146 = vsel %vm1078, %v5137, 0.0
        %v5147 = vsel %vm1077, %v5114, 0.0
        %v5148 = vsel %vm1078, %v5138, 0.0
        %v5149 = vsel %vm1077, %v5115, 0.0
        %v5150 = vsel %vm1078, %v5139, 0.0
        %v5151 = vsel %vm1077, %v5116, 0.0
        %v5152 = vsel %vm1078, %v5140, 0.0
        %v5153 = vsel %vm1077, %v5117, 0.0
        %v5154 = vsel %vm1078, %v5141, 0.0
        %v5155 = vsel %vm1077, %v5118, 0.0
        %v5156 = vsel %vm1078, %v5142, 0.0
        %v5157 = vsel %vm1077, %v5119, 0.0
        %v5158 = vsel %vm1078, %v5143, 0.0
        %v5159 = vsel %vm1077, %v5120, 0.0
        %v5160 = vsel %vm1078, %v5144, 0.0
        %v5161 = vpack.c.bf16 %v5147, %v5145
        %v5162 = vpack.c.bf16 %v5148, %v5146
        %v5163 = vpack.c.bf16 %v5151, %v5149
        %v5164 = vpack.c.bf16 %v5152, %v5150
        %v5165 = vpack.c.bf16 %v5155, %v5153
        %v5166 = vpack.c.bf16 %v5156, %v5154
        %v5167 = vpack.c.bf16 %v5159, %v5157
        %v5168 = vpack.c.bf16 %v5160, %v5158
        %s5169 = scalar_lea.vmem %s4, 256
        %v5170 = vld [vmem:[%s5169] sm:$0xf]
        %v5171 = vld [vmem:[%s5169 + $0x4] sm:$0xf]
        %v5172 = vld [vmem:[%s5169 + $0x8] sm:$0xf]
        %v5173 = vld [vmem:[%s5169 + $0xc] sm:$0xf]
        %v5174 = vld [vmem:[%s5169 + $0x10] sm:$0xf]
        %v5175 = vld [vmem:[%s5169 + $0x14] sm:$0xf]
        %v5176 = vld [vmem:[%s5169 + $0x18] sm:$0xf]
        %v5177 = vld [vmem:[%s5169 + $0x1c] sm:$0xf]
        %v5186 = vunpack.c.l.b16 %v5170
        %v5187 = vunpack.c.l.b16 %v5171
        %v5188 = vunpack.c.l.b16 %v5172
        %v5189 = vunpack.c.l.b16 %v5173
        %v5190 = vunpack.c.l.b16 %v5174
        %v5191 = vunpack.c.l.b16 %v5175
        %v5192 = vunpack.c.l.b16 %v5176
        %v5193 = vunpack.c.l.b16 %v5177
        %v5194 = vpack.c.b16 %v5187, %v5186
        %v5195 = vpack.c.b16 %v5189, %v5188
        %v5196 = vpack.c.b16 %v5191, %v5190
        %v5197 = vpack.c.b16 %v5193, %v5192
        %v5199 = vsel %vm3678, %v5194, 0
        %v5202 = vsel %vm3678, %v5195, 0
        %v5205 = vsel %vm3678, %v5196, 0
        %v5208 = vsel %vm3678, %v5197, 0
        %5210 = vmatprep.subr.bf16.mxu0 0
        %5211 = vmatpush1.bf16.msra.mxu0 0
        %5212 = vmatprep.subr.bf16.mxu0 0
        %5213 = vmatpush1.bf16.msra.mxu0 0
        %5214 = vmatprep.subr.bf16.mxu0 0
        %5215 = vmatpush1.bf16.msra.mxu0 0
        %5216 = vmatprep.subr.bf16.mxu0 0
        %5217 = vmatpush1.bf16.msra.mxu0 0
        %5218 = vmatprep.subr.bf16.mxu0 %v5168
        %5219 = vmatpush1.bf16.msra.mxu0 %v5167
        %5220 = vmatprep.subr.bf16.mxu0 %v5166
        %5221 = vmatpush1.bf16.msra.mxu0 %v5165
        %5222 = vmatprep.subr.bf16.mxu0 %v5164
        %5223 = vmatpush1.bf16.msra.mxu0 %v5163
        %5224 = vmatprep.subr.bf16.mxu0 %v5162
        %5225 = vmatpush1.bf16.msra.mxu0 %v5161
        %5226 = vmatprep.subr.bf16.mxu0 0
        %5227 = vmatpush2.bf16.msra.mxu0 0
        %5228 = vmatprep.subr.bf16.mxu0 0
        %5229 = vmatpush2.bf16.msra.mxu0 0
        %5230 = vmatprep.subr.bf16.mxu0 0
        %5231 = vmatpush2.bf16.msra.mxu0 0
        %5232 = vmatprep.subr.bf16.mxu0 0
        %5233 = vmatpush2.bf16.msra.mxu0 0
        %5234 = vmatprep.subr.bf16.mxu0 0
        %5235 = vmatpush2.bf16.msra.mxu0 0
        %5236 = vmatprep.subr.bf16.mxu0 0
        %5237 = vmatpush2.bf16.msra.mxu0 0
        %5238 = vmatprep.subr.bf16.mxu0 0
        %5239 = vmatpush2.bf16.msra.mxu0 0
        %5240 = vmatprep.subr.bf16.mxu0 0
        %5241 = vmatpush2.bf16.msra.mxu0 0
        %5242 = vmatprep.mubr.bf16.mxu0 0
        %5243 = vmatmul.mubr.bf16.gmra.mxu0 %v5199
        %v5244 = vpop.f32.mrf.mxu0
        %v5245 = vadd.f32 0.0, %v5244
        %v5246 = vpop.f32.mrf.mxu0
        %v5247 = vadd.f32 0.0, %v5246
        %v5248 = vpop.f32.mrf.mxu0
        %v5249 = vadd.f32 0.0, %v5248
        %v5250 = vpop.f32.mrf.mxu0
        %v5251 = vadd.f32 0.0, %v5250
        %5252 = vmatprep.mubr.bf16.mxu0 0
        %5253 = vmatmul.mubr.bf16.gmra.mxu0 %v5202
        %v5254 = vpop.f32.mrf.mxu0
        %v5255 = vadd.f32 0.0, %v5254
        %v5256 = vpop.f32.mrf.mxu0
        %v5257 = vadd.f32 0.0, %v5256
        %v5258 = vpop.f32.mrf.mxu0
        %v5259 = vadd.f32 0.0, %v5258
        %v5260 = vpop.f32.mrf.mxu0
        %v5261 = vadd.f32 0.0, %v5260
        %5262 = vmatprep.mubr.bf16.mxu0 0
        %5263 = vmatmul.mubr.bf16.gmra.mxu0 %v5205
        %v5264 = vpop.f32.mrf.mxu0
        %v5265 = vadd.f32 0.0, %v5264
        %v5266 = vpop.f32.mrf.mxu0
        %v5267 = vadd.f32 0.0, %v5266
        %v5268 = vpop.f32.mrf.mxu0
        %v5269 = vadd.f32 0.0, %v5268
        %v5270 = vpop.f32.mrf.mxu0
        %v5271 = vadd.f32 0.0, %v5270
        %5272 = vmatprep.mubr.bf16.mxu0 0
        %5273 = vmatmul.mubr.bf16.gmra.mxu0 %v5208
        %v5274 = vpop.f32.mrf.mxu0
        %v5275 = vadd.f32 0.0, %v5274
        %v5276 = vpop.f32.mrf.mxu0
        %v5277 = vadd.f32 0.0, %v5276
        %v5278 = vpop.f32.mrf.mxu0
        %v5279 = vadd.f32 0.0, %v5278
        %v5280 = vpop.f32.mrf.mxu0
        %v5281 = vadd.f32 0.0, %v5280
        %5282 = vdwg.mxu0
        %v5283 = vadd.f32 %v5065, %v5245
        %v5284 = vadd.f32 %v5066, %v5247
        %v5285 = vadd.f32 %v5067, %v5249
        %v5286 = vadd.f32 %v5068, %v5251
        %v5287 = vadd.f32 %v5069, %v5255
        %v5288 = vadd.f32 %v5070, %v5257
        %v5289 = vadd.f32 %v5071, %v5259
        %v5290 = vadd.f32 %v5072, %v5261
        %v5291 = vadd.f32 %v5073, %v5265
        %v5292 = vadd.f32 %v5074, %v5267
        %v5293 = vadd.f32 %v5075, %v5269
        %v5294 = vadd.f32 %v5076, %v5271
        %v5295 = vadd.f32 %v5077, %v5275
        %v5296 = vadd.f32 %v5078, %v5277
        %v5297 = vadd.f32 %v5079, %v5279
        %v5298 = vadd.f32 %v5080, %v5281
        %v5299 = vld [vmem:[%s5] sm:$0xff]
        %v5300 = vld [vmem:[%s5 + $0x8] sm:$0xff]
        %v5301 = vld [vmem:[%s5 + $0x10] sm:$0xff]
        %v5302 = vld [vmem:[%s5 + $0x18] sm:$0xff]
        %v5303 = vld [vmem:[%s5 + $0x20] sm:$0xff]
        %v5304 = vld [vmem:[%s5 + $0x28] sm:$0xff]
        %v5305 = vld [vmem:[%s5 + $0x30] sm:$0xff]
        %v5306 = vld [vmem:[%s5 + $0x38] sm:$0xff]
        %5308 = vset.pattern.permute.xlu0 0
        %5309 = vperm.xlu0 %5308, %v5299
        %v5310 = vpop.permute.xlu0 %5309
        %5313 = vset.pattern.permute.xlu0 0
        %5314 = vperm.xlu0 %5313, %v5300
        %v5315 = vpop.permute.xlu0 %5314
        %5318 = vset.pattern.permute.xlu0 0
        %5319 = vperm.xlu0 %5318, %v5301
        %v5320 = vpop.permute.xlu0 %5319
        %5323 = vset.pattern.permute.xlu0 0
        %5324 = vperm.xlu0 %5323, %v5302
        %v5325 = vpop.permute.xlu0 %5324
        %5328 = vset.pattern.permute.xlu0 0
        %5329 = vperm.xlu0 %5328, %v5303
        %v5330 = vpop.permute.xlu0 %5329
        %5333 = vset.pattern.permute.xlu0 0
        %5334 = vperm.xlu0 %5333, %v5304
        %v5335 = vpop.permute.xlu0 %5334
        %5338 = vset.pattern.permute.xlu0 0
        %5339 = vperm.xlu0 %5338, %v5305
        %v5340 = vpop.permute.xlu0 %5339
        %5343 = vset.pattern.permute.xlu0 0
        %5344 = vperm.xlu0 %5343, %v5306
        %v5345 = vpop.permute.xlu0 %5344
        %v5347 = vadd.f32 %v5283, %v5310
        %v5348 = vadd.f32 %v5284, %v5310
        %v5349 = vadd.f32 %v5285, %v5315
        %v5350 = vadd.f32 %v5286, %v5315
        %v5351 = vadd.f32 %v5287, %v5320
        %v5352 = vadd.f32 %v5288, %v5320
        %v5353 = vadd.f32 %v5289, %v5325
        %v5354 = vadd.f32 %v5290, %v5325
        %v5355 = vadd.f32 %v5291, %v5330
        %v5356 = vadd.f32 %v5292, %v5330
        %v5357 = vadd.f32 %v5293, %v5335
        %v5358 = vadd.f32 %v5294, %v5335
        %v5359 = vadd.f32 %v5295, %v5340
        %v5360 = vadd.f32 %v5296, %v5340
        %v5361 = vadd.f32 %v5297, %v5345
        %v5362 = vadd.f32 %v5298, %v5345
        %v5363 = vld [vmem:[%s6] sm:$0xf]
        %v5364 = vld [vmem:[%s6 + $0x4] sm:$0xf]
        %v5365 = vld [vmem:[%s6 + $0x8] sm:$0xf]
        %v5366 = vld [vmem:[%s6 + $0xc] sm:$0xf]
        %v5367 = vld [vmem:[%s6 + $0x10] sm:$0xf]
        %v5368 = vld [vmem:[%s6 + $0x14] sm:$0xf]
        %v5369 = vld [vmem:[%s6 + $0x18] sm:$0xf]
        %v5370 = vld [vmem:[%s6 + $0x1c] sm:$0xf]
        %v5371 = vpack.c.bf16 %v483, %v481
        %v5372 = vpack.c.bf16 %v484, %v482
        %v5373 = vpack.c.bf16 %v487, %v485
        %v5374 = vpack.c.bf16 %v488, %v486
        %v5375 = vld [vmem:[%s7] sm:$0xff]
        %v5376 = vld [vmem:[%s7 + $0x8] sm:$0xff]
        %v5377 = vld [vmem:[%s7 + $0x10] sm:$0xff]
        %v5378 = vld [vmem:[%s7 + $0x18] sm:$0xff]
        %v5379 = vld [vmem:[%s7 + $0x20] sm:$0xff]
        %v5380 = vld [vmem:[%s7 + $0x28] sm:$0xff]
        %v5381 = vld [vmem:[%s7 + $0x30] sm:$0xff]
        %v5382 = vld [vmem:[%s7 + $0x38] sm:$0xff]
        %5384 = vset.pattern.permute.xlu0 0
        %5385 = vperm.xlu0 %5384, %v5375
        %v5386 = vpop.permute.xlu0 %5385
        %5389 = vset.pattern.permute.xlu0 0
        %5390 = vperm.xlu0 %5389, %v5376
        %v5391 = vpop.permute.xlu0 %5390
        %5394 = vset.pattern.permute.xlu0 0
        %5395 = vperm.xlu0 %5394, %v5377
        %v5396 = vpop.permute.xlu0 %5395
        %5399 = vset.pattern.permute.xlu0 0
        %5400 = vperm.xlu0 %5399, %v5378
        %v5401 = vpop.permute.xlu0 %5400
        %5404 = vset.pattern.permute.xlu0 0
        %5405 = vperm.xlu0 %5404, %v5379
        %v5406 = vpop.permute.xlu0 %5405
        %5409 = vset.pattern.permute.xlu0 0
        %5410 = vperm.xlu0 %5409, %v5380
        %v5411 = vpop.permute.xlu0 %5410
        %5414 = vset.pattern.permute.xlu0 0
        %5415 = vperm.xlu0 %5414, %v5381
        %v5416 = vpop.permute.xlu0 %5415
        %5419 = vset.pattern.permute.xlu0 0
        %5420 = vperm.xlu0 %5419, %v5382
        %v5421 = vpop.permute.xlu0 %5420
        %v5431 = vunpack.c.l.b16 %v5363
        %v5432 = vunpack.c.l.b16 %v5364
        %v5433 = vunpack.c.l.b16 %v5365
        %v5434 = vunpack.c.l.b16 %v5366
        %v5435 = vunpack.c.l.b16 %v5367
        %v5436 = vunpack.c.l.b16 %v5368
        %v5437 = vunpack.c.l.b16 %v5369
        %v5438 = vunpack.c.l.b16 %v5370
        %v5439 = vpack.c.b16 %v5432, %v5431
        %v5440 = vpack.c.b16 %v5434, %v5433
        %v5441 = vpack.c.b16 %v5436, %v5435
        %v5442 = vpack.c.b16 %v5438, %v5437
        %v5444 = vsel %vm513, %v5439, 0
        %v5447 = vsel %vm513, %v5440, 0
        %v5450 = vsel %vm513, %v5441, 0
        %v5453 = vsel %vm513, %v5442, 0
        %5455 = vmatprep.subr.bf16.mxu0 0
        %5456 = vmatpush1.bf16.msra.mxu0 0
        %5457 = vmatprep.subr.bf16.mxu0 0
        %5458 = vmatpush1.bf16.msra.mxu0 0
        %5459 = vmatprep.subr.bf16.mxu0 0
        %5460 = vmatpush1.bf16.msra.mxu0 0
        %5461 = vmatprep.subr.bf16.mxu0 0
        %5462 = vmatpush1.bf16.msra.mxu0 0
        %5463 = vmatprep.subr.bf16.mxu0 0
        %5464 = vmatpush1.bf16.msra.mxu0 0
        %5465 = vmatprep.subr.bf16.mxu0 0
        %5466 = vmatpush1.bf16.msra.mxu0 0
        %5467 = vmatprep.subr.bf16.mxu0 %v5374
        %5468 = vmatpush1.bf16.msra.mxu0 %v5373
        %5469 = vmatprep.subr.bf16.mxu0 %v5372
        %5470 = vmatpush1.bf16.msra.mxu0 %v5371
        %5471 = vmatprep.subr.bf16.mxu0 0
        %5472 = vmatpush2.bf16.msra.mxu0 0
        %5473 = vmatprep.subr.bf16.mxu0 0
        %5474 = vmatpush2.bf16.msra.mxu0 0
        %5475 = vmatprep.subr.bf16.mxu0 0
        %5476 = vmatpush2.bf16.msra.mxu0 0
        %5477 = vmatprep.subr.bf16.mxu0 0
        %5478 = vmatpush2.bf16.msra.mxu0 0
        %5479 = vmatprep.subr.bf16.mxu0 0
        %5480 = vmatpush2.bf16.msra.mxu0 0
        %5481 = vmatprep.subr.bf16.mxu0 0
        %5482 = vmatpush2.bf16.msra.mxu0 0
        %5483 = vmatprep.subr.bf16.mxu0 0
        %5484 = vmatpush2.bf16.msra.mxu0 0
        %5485 = vmatprep.subr.bf16.mxu0 0
        %5486 = vmatpush2.bf16.msra.mxu0 0
        %5487 = vmatprep.mubr.bf16.mxu0 0
        %5488 = vmatmul.mubr.bf16.gmra.mxu0 %v5444
        %v5489 = vpop.f32.mrf.mxu0
        %v5490 = vadd.f32 %v5386, %v5489
        %v5491 = vpop.f32.mrf.mxu0
        %v5492 = vadd.f32 %v5386, %v5491
        %v5493 = vpop.f32.mrf.mxu0
        %v5494 = vadd.f32 %v5391, %v5493
        %v5495 = vpop.f32.mrf.mxu0
        %v5496 = vadd.f32 %v5391, %v5495
        %5497 = vmatprep.mubr.bf16.mxu0 0
        %5498 = vmatmul.mubr.bf16.gmra.mxu0 %v5447
        %v5499 = vpop.f32.mrf.mxu0
        %v5500 = vadd.f32 %v5396, %v5499
        %v5501 = vpop.f32.mrf.mxu0
        %v5502 = vadd.f32 %v5396, %v5501
        %v5503 = vpop.f32.mrf.mxu0
        %v5504 = vadd.f32 %v5401, %v5503
        %v5505 = vpop.f32.mrf.mxu0
        %v5506 = vadd.f32 %v5401, %v5505
        %5507 = vmatprep.mubr.bf16.mxu0 0
        %5508 = vmatmul.mubr.bf16.gmra.mxu0 %v5450
        %v5509 = vpop.f32.mrf.mxu0
        %v5510 = vadd.f32 %v5406, %v5509
        %v5511 = vpop.f32.mrf.mxu0
        %v5512 = vadd.f32 %v5406, %v5511
        %v5513 = vpop.f32.mrf.mxu0
        %v5514 = vadd.f32 %v5411, %v5513
        %v5515 = vpop.f32.mrf.mxu0
        %v5516 = vadd.f32 %v5411, %v5515
        %5517 = vmatprep.mubr.bf16.mxu0 0
        %5518 = vmatmul.mubr.bf16.gmra.mxu0 %v5453
        %v5519 = vpop.f32.mrf.mxu0
        %v5520 = vadd.f32 %v5416, %v5519
        %v5521 = vpop.f32.mrf.mxu0
        %v5522 = vadd.f32 %v5416, %v5521
        %v5523 = vpop.f32.mrf.mxu0
        %v5524 = vadd.f32 %v5421, %v5523
        %v5525 = vpop.f32.mrf.mxu0
        %v5526 = vadd.f32 %v5421, %v5525
        %5527 = vdwg.mxu0
        %v5528 = vadd.f32 %v5347, %v5490
        %v5529 = vadd.f32 %v5348, %v5492
        %v5530 = vadd.f32 %v5349, %v5494
        %v5531 = vadd.f32 %v5350, %v5496
        %v5532 = vadd.f32 %v5351, %v5500
        %v5533 = vadd.f32 %v5352, %v5502
        %v5534 = vadd.f32 %v5353, %v5504
        %v5535 = vadd.f32 %v5354, %v5506
        %v5536 = vadd.f32 %v5355, %v5510
        %v5537 = vadd.f32 %v5356, %v5512
        %v5538 = vadd.f32 %v5357, %v5514
        %v5539 = vadd.f32 %v5358, %v5516
        %v5540 = vadd.f32 %v5359, %v5520
        %v5541 = vadd.f32 %v5360, %v5522
        %v5542 = vadd.f32 %v5361, %v5524
        %v5543 = vadd.f32 %v5362, %v5526
        %v5544 = vmax.f32 %v5528, 0.0
        %v5545 = vmax.f32 %v5529, 0.0
        %v5546 = vmax.f32 %v5530, 0.0
        %v5547 = vmax.f32 %v5531, 0.0
        %v5548 = vmax.f32 %v5532, 0.0
        %v5549 = vmax.f32 %v5533, 0.0
        %v5550 = vmax.f32 %v5534, 0.0
        %v5551 = vmax.f32 %v5535, 0.0
        %v5552 = vmax.f32 %v5536, 0.0
        %v5553 = vmax.f32 %v5537, 0.0
        %v5554 = vmax.f32 %v5538, 0.0
        %v5555 = vmax.f32 %v5539, 0.0
        %v5556 = vmax.f32 %v5540, 0.0
        %v5557 = vmax.f32 %v5541, 0.0
        %v5558 = vmax.f32 %v5542, 0.0
        %v5559 = vmax.f32 %v5543, 0.0
        %5560 = vst [vmem:[%s471] sm:$0xff] %v5544
        %5561 = vst [vmem:[%s471 + $0x8] sm:$0xff] %v5545
        %5562 = vst [vmem:[%s471 + $0x10] sm:$0xff] %v5546
        %5563 = vst [vmem:[%s471 + $0x18] sm:$0xff] %v5547
        %5564 = vst [vmem:[%s471 + $0x20] sm:$0xff] %v5548
        %5565 = vst [vmem:[%s471 + $0x28] sm:$0xff] %v5549
        %5566 = vst [vmem:[%s471 + $0x30] sm:$0xff] %v5550
        %5567 = vst [vmem:[%s471 + $0x38] sm:$0xff] %v5551
        %5568 = vst [vmem:[%s471 + $0x40] sm:$0xff] %v5552
        %5569 = vst [vmem:[%s471 + $0x48] sm:$0xff] %v5553
        %5570 = vst [vmem:[%s471 + $0x50] sm:$0xff] %v5554
        %5571 = vst [vmem:[%s471 + $0x58] sm:$0xff] %v5555
        %5572 = vst [vmem:[%s471 + $0x60] sm:$0xff] %v5556
        %5573 = vst [vmem:[%s471 + $0x68] sm:$0xff] %v5557
        %5574 = vst [vmem:[%s471 + $0x70] sm:$0xff] %v5558
        %5575 = vst [vmem:[%s471 + $0x78] sm:$0xff] %v5559
        %s5576 = sand.u32 %s340, 1
        %s5577 = scalar_lea.sflag [#allocation3], %s5576
        %s5578 = sand.u32 %s340, 1
        %s5579 = smul.addr %s5578, 128
        %s5580 = scalar_lea.vmem [#allocation2], %s5579
        // Predicated region
        $region77: #{tpu_custom_call.1} parent=75 // pred_check
          %p5581 = pneg %p350
        $region78: #{tpu_custom_call.1} parent=75 // pred_check_branch
          %5583 = sbr.rel (%p5581) target = $region80
        $region79: #{tpu_custom_call.1} parent=75 // pred_region
          %s5585 = ssub.s32 2048, 2048
          %5586 = vsyncadd %s5577, %s5585
          %s5587 = smul.addr %s28, 16
          %s5588 = smul.addr %s5587, 128
          %s5589 = scalar_lea.hbm %s14, %s5588
          %s5590 = sshll.u32 %s5580, 4
          %s5591 = int_to_ptr.vmem [resolvable:$true] %s5590
          %5596 = dma.vmem_to_hbm [thread:$0]  %s5591, 2048, %s5589, %s5577, 256, 256, 16
        $region80: #{tpu_custom_call.1} parent=75 // pred_fallthru
          _
      $region76: #{tpu_custom_call.1} parent=5 // pred_fallthru
        _
      %p5597 = scmp.le.s32.totalorder 2, %s23
      // Predicated region
      $region81: #{tpu_custom_call.1} parent=5 // pred_check
        %p5598 = pneg %p5597
      $region82: #{tpu_custom_call.1} parent=5 // pred_check_branch
        %5600 = sbr.rel (%p5598) target = $region84
      $region83: #{tpu_custom_call.1} parent=5 // pred_region
        %s5601 = ssub.s32 %s23, 2
        // Predicated region
        $region85: #{tpu_custom_call.1} parent=83 // pred_check
          %p5602 = pneg %p356
        $region86: #{tpu_custom_call.1} parent=83 // pred_check_branch
          %5604 = sbr.rel (%p5602) target = $region88
        $region87: #{tpu_custom_call.1} parent=83 // pred_region
          %s5605 = sand.u32 %s341, 1
          %s5606 = scalar_lea.sflag [#allocation3], %s5605
          %s5607 = sand.u32 %s341, 1
          %s5608 = smul.addr %s5607, 128
          %s5609 = scalar_lea.vmem [#allocation2], %s5608
          %5610 = dma.done %s5606, 2048
        $region88: #{tpu_custom_call.1} parent=83 // pred_fallthru
          _
      $region84: #{tpu_custom_call.1} parent=5 // pred_fallthru
        _
    $region6: #{tpu_custom_call.1} parent=1 // loop_footer
      %s27 = sadd.s32 1, %s23
    $region7: #{tpu_custom_call.1} parent=1 // loop_footer_branch
      %22 = sbr.rel target = $region3
    $region8: #{tpu_custom_call.1} parent=1 // loop_exit
      _
    %5611 = vsyncpa [#allocation3], 1
    %s5612 = scalar_lea.sflag [#allocation3], 1
    %5613 = vsyncpa %s5612, 1

</llo_original>
